<compile_context>
chip_gen: v5e
topology: v5e:2x2
jax: 0.10.0
libtpu: 0.0.40
codegen_flags: <defaults>
</compile_context>

<pallas_src>
import functools
import math

import jax
import jax.numpy as jnp
import numpy as np
from jax.experimental import pallas as pl
from jax.experimental.pallas import tpu as pltpu

NB_HEAD = 3


# --------------------------------------------------------------------------
# Kernel A: masked embedding -> fused Q/K/V projection (row-blocked, one
# lane-dense output, bf16 MXU operands / f32 accumulate)
# --------------------------------------------------------------------------
def _qkv_kernel(x_ref, m_ref, w_ref, b_ref, o_ref):
    x = (x_ref[...] * m_ref[...]).astype(jnp.bfloat16)                 # (tm, H)
    qkv = jnp.dot(x, w_ref[...], preferred_element_type=jnp.float32) + b_ref[...]
    o_ref[...] = qkv.astype(o_ref.dtype)                               # (tm, 3*TH)


def qkv_projection(x, m, w_qkv_bf16, b_qkv, *, block_rows=512):
    # TODO(synk): on v5e raise vmem_limit_bytes via CompilerParams if block_rows
    # is swept past 512 (16 MiB default scoped VMEM); sweep 1024 on v6e.
    N, H = x.shape
    TH3 = w_qkv_bf16.shape[1]
    tm = N if N <= block_rows else block_rows
    return pl.pallas_call(
        _qkv_kernel,
        grid=(pl.cdiv(N, tm),),
        in_specs=[
            pl.BlockSpec((tm, H), lambda i: (i, 0)),
            pl.BlockSpec((tm, 1), lambda i: (i, 0)),
            pl.BlockSpec((H, TH3), lambda i: (0, 0)),
            pl.BlockSpec((1, TH3), lambda i: (0, 0)),
        ],
        out_specs=pl.BlockSpec((tm, TH3), lambda i: (i, 0)),
        out_shape=jax.ShapeDtypeStruct((N, TH3), jnp.bfloat16),
        compiler_params=pltpu.CompilerParams(dimension_semantics=("parallel",)),
    )(x, m, w_qkv_bf16, b_qkv)


# --------------------------------------------------------------------------
# Kernel B: code-level attention + masked mean over ALL head-batches at once
# (grid collapsed; mask pre-tiled; bf16 matmul operands)
# --------------------------------------------------------------------------
def _attn_kernel(q_ref, k_ref, v_ref, m_ref, o_ref, *, scale):
    q = q_ref[...]                                                     # (R, C, V) bf16
    k = k_ref[...]
    v = v_ref[...]
    m = m_ref[...]                                                     # (R, C) f32

    att = jax.lax.dot_general(q, k, (((2,), (2,)), ((0,), (0,))),
                              preferred_element_type=jnp.float32) * scale   # (R,C,C)
    # masked_fill(~mask_code, -inf): mask invalid key columns
    att = jnp.where(m[:, None, :] > 0.0, att, -jnp.inf)
    # masked_fill(~mask_code_new, 1): visits with no valid code -> all ones
    has_any = jnp.max(m, axis=-1, keepdims=True) > 0.0                 # (R, 1)
    att = jnp.where(has_any[:, :, None], att, 1.0)

    amax = jnp.max(att, axis=-1, keepdims=True)
    p = jnp.exp(att - amax)
    p = p * pl.reciprocal(jnp.sum(p, axis=-1, keepdims=True), approx=True)

    out = jax.lax.dot_general(p.astype(q.dtype), v, (((2,), (1,)), ((0,), (0,))),
                              preferred_element_type=jnp.float32)      # (R, C, V)
    out = out * m[:, :, None]
    nom = jnp.sum(out, axis=1)                                         # (R, V)
    den = jnp.sum(m, axis=-1, keepdims=True)                           # (R, 1)
    den = jnp.where(has_any, den, 10.0)
    # TODO(synk): pack the V (< 128) lane axis (e.g. pad / emit a wider 2-D slab)
    # for production sizes; at demo sizes the whole output is a single tiny store.
    o_ref[...] = nom * pl.reciprocal(den, approx=True)


def visit_attention(qh, kh, vh, mask3, scale, *, heads_per_block=None, seq_len=None):
    NHS, C, V = qh.shape                 # NHS = 3*B*S rows (head-batch major)
    if heads_per_block is None or seq_len is None:
        tr = NHS                          # everything in one grid step
    else:
        tr = min(heads_per_block * seq_len, NHS)
    kern = functools.partial(_attn_kernel, scale=scale)
    spec3 = pl.BlockSpec((tr, C, V), lambda i: (i, 0, 0))
    return pl.pallas_call(
        kern,
        grid=(pl.cdiv(NHS, tr),),
        in_specs=[spec3, spec3, spec3,
                  pl.BlockSpec((tr, C), lambda i: (i, 0))],
        out_specs=pl.BlockSpec((tr, V), lambda i: (i, 0)),
        out_shape=jax.ShapeDtypeStruct((NHS, V), jnp.float32),
        compiler_params=pltpu.CompilerParams(dimension_semantics=("parallel",)),
    )(qh, kh, vh, mask3)


# --------------------------------------------------------------------------
# Kernel C: bidirectional GRU (interleaved directions) + attention pooling
# --------------------------------------------------------------------------
def _gru_attn_kernel(x_ref, maskb_ref,
                     wih_f_ref, whh_f_ref, bih_f_ref, bhh_f_ref,
                     wih_b_ref, whh_b_ref, bih_b_ref, bhh_b_ref,
                     ws1_ref, ws2_ref, wsb_ref, usw_ref, usb_ref,
                     o_ref,
                     gxf_scr, gxb_scr, hf_scr, hb_scr):
    B, S, D = x_ref.shape
    H = whh_f_ref.shape[0]

    # ---- Phase 1: hoisted input-gate matmuls, written to VMEM scratch -------
    wih_f = wih_f_ref[...]
    wih_b = wih_b_ref[...]
    bih_f = bih_f_ref[...]
    bih_b = bih_b_ref[...]
    for b in range(B):   # TODO(synk): fori_loop / batch-blocked grid for large B
        xb = x_ref[b].astype(jnp.bfloat16)                             # (S, D)
        gxf_scr[b] = jnp.dot(xb, wih_f, preferred_element_type=jnp.float32) + bih_f
        gxb_scr[b] = jnp.dot(xb, wih_b, preferred_element_type=jnp.float32) + bih_b

    whh_f = whh_f_ref[...]
    whh_b = whh_b_ref[...]
    bhh_f = bhh_f_ref[...]
    bhh_b = bhh_b_ref[...]

    def gru_cell(gx, h, whh, bhh):
        gh = jnp.dot(h.astype(jnp.bfloat16), whh,
                     preferred_element_type=jnp.float32) + bhh
        r = jax.nn.sigmoid(gx[:, :H] + gh[:, :H])
        z = jax.nn.sigmoid(gx[:, H:2 * H] + gh[:, H:2 * H])
        n = jnp.tanh(gx[:, 2 * H:] + r * gh[:, 2 * H:])
        return (1.0 - z) * n + z * h

    # ---- Phase 2: interleaved fwd/bwd recurrences ---------------------------
    # Two independent latency chains per step hide each other's MXU/EUP latency.
    # Per-step hidden states go to their own (B, H) slab of a (S, B, H) scratch
    # (tile-aligned stores, no straddling / read-modify-write across steps).
    h_f = jnp.zeros((B, H), jnp.float32)
    h_b = jnp.zeros((B, H), jnp.float32)
    # TODO(synk): static unroll is fine for small S; switch to
    # lax.fori_loop(..., unroll=k) for long production sequences.
    for i in range(S):
        tf = i
        tb = S - 1 - i
        gxf = gxf_scr[:, pl.ds(tf, 1), :][:, 0, :]                     # (B, 3H)
        gxb = gxb_scr[:, pl.ds(tb, 1), :][:, 0, :]
        h_f = gru_cell(gxf, h_f, whh_f, bhh_f)
        h_b = gru_cell(gxb, h_b, whh_b, bhh_b)
        hf_scr[tf] = h_f
        hb_scr[tb] = h_b

    # ---- Phase 3: attention scores us[b, t] ---------------------------------
    ws1 = ws1_ref[...]
    ws2 = ws2_ref[...]
    wsb = wsb_ref[...]
    usw = usw_ref[...]
    usb = usb_ref[...]
    lane = jax.lax.broadcasted_iota(jnp.int32, (B, S), 1)
    us = jnp.zeros((B, S), jnp.float32)
    for t in range(S):
        u_t = jnp.tanh(
            jnp.dot(hf_scr[t].astype(jnp.bfloat16), ws1,
                    preferred_element_type=jnp.float32)
            + jnp.dot(hb_scr[t].astype(jnp.bfloat16), ws2,
                      preferred_element_type=jnp.float32)
            + wsb)                                                     # (B, H)
        s_t = jnp.sum(u_t * usw, axis=-1, keepdims=True) + usb         # (B, 1)
        us = jnp.where(lane == t, s_t, us)

    # ---- Phase 4: masked softmax over time + alpha-weighted pooling ---------
    us = jnp.where(maskb_ref[...] > 0.0, -jnp.inf, us)                 # 1.0 == padded
    mmax = jnp.max(us, axis=-1, keepdims=True)
    e = jnp.exp(us - mmax)
    alpha = e * pl.reciprocal(jnp.sum(e, axis=-1, keepdims=True), approx=True)

    pool_f = jnp.zeros((B, H), jnp.float32)
    pool_b = jnp.zeros((B, H), jnp.float32)
    for t in range(S):
        a_t = alpha[:, t:t + 1]                                        # (B, 1)
        pool_f = pool_f + a_t * hf_scr[t]
        pool_b = pool_b + a_t * hb_scr[t]
    # single fused (B, 2H) output (torch concat of fwd/bwd pooled states)
    o_ref[:, :H] = pool_f
    o_ref[:, H:2 * H] = pool_b


def gru_attention_pool(x_bsd, maskb,
                       wih_f_t, whh_f_t, bih_f, bhh_f,
                       wih_b_t, whh_b_t, bih_b, bhh_b,
                       ws1_t, ws2_t, ws_b, us_w, us_b):
    B, S, D = x_bsd.shape
    H = whh_f_t.shape[0]
    vspec = pl.BlockSpec(memory_space=pltpu.MemorySpace.VMEM)
    # TODO(synk): on v7x split the two GRU directions (or batch halves) across
    # the 2 TensorCores (core_map / grid=(2,)) and block over batch with an
    # explicit vmem_limit_bytes to respect the 64 MiB budget at production sizes.
    return pl.pallas_call(
        _gru_attn_kernel,
        in_specs=[vspec] * 15,
        out_specs=vspec,
        out_shape=jax.ShapeDtypeStruct((B, 2 * H), jnp.float32),
        scratch_shapes=[pltpu.VMEM((B, S, 3 * H), jnp.float32),
                        pltpu.VMEM((B, S, 3 * H), jnp.float32),
                        pltpu.VMEM((S, B, H), jnp.float32),
                        pltpu.VMEM((S, B, H), jnp.float32)],
    )(x_bsd, maskb, wih_f_t, whh_f_t, bih_f, bhh_f,
      wih_b_t, whh_b_t, bih_b, bhh_b, ws1_t, ws2_t, ws_b, us_w, us_b)


# --------------------------------------------------------------------------
# Get_embd.forward — Pallas-backed
# --------------------------------------------------------------------------
def get_embd_forward(params, diagnosis_codes, seq_time_step, mask_batch,
                     mask_final, mask_code, lengths):
    # seq_time_step, mask_final, lengths are unused by the original forward.
    B, S, C = diagnosis_codes.shape
    H = params['embed'].shape[1]
    TH = params['wq'].shape[0]          # 3 * visit_size
    V = TH // NB_HEAD
    D = TH

    # TODO(synk): embedding row gather stays in JAX glue (data-dependent gather).
    emb = jnp.take(params['embed'], diagnosis_codes, axis=0)            # (B,S,C,H)
    x_flat = emb.reshape(B * S * C, H).astype(jnp.float32)
    m_flat = mask_code.astype(jnp.float32).reshape(B * S * C, 1)

    # fused QKV weight / bias (weights pre-cast to bf16 for the MXU)
    w_qkv = jnp.concatenate([params['wq'].T, params['wk'].T, params['wv'].T],
                            axis=1).astype(jnp.bfloat16)                # (H, 3TH)
    b_qkv = jnp.concatenate([params['bq'], params['bk'], params['bv']]
                            ).reshape(1, 3 * TH).astype(jnp.float32)

    qkv = qkv_projection(x_flat, m_flat, w_qkv, b_qkv)                  # (N, 3TH) bf16

    # torch .view(B*3, S, C, -1): row-major reinterpretation of each flat
    # projection buffer.  TODO(synk): these are XLA relayout passes, not free
    # bitcasts; pad V/TH toward 128 or fold into kernel out_specs for prod sizes.
    NH = NB_HEAD * B
    qh = qkv[:, :TH].reshape(NH * S, C, V)
    kh = qkv[:, TH:2 * TH].reshape(NH * S, C, V)
    vh = qkv[:, 2 * TH:].reshape(NH * S, C, V)
    # torch mask_code.repeat(3,1,1,1): head-batch n uses mask_code[n % B]
    mask3 = jnp.tile(mask_code.astype(jnp.float32)[..., 0],
                     (NB_HEAD, 1, 1)).reshape(NH * S, C)

    scale = float(V // NB_HEAD) ** (-0.5)
    temp_flat = visit_attention(qh, kh, vh, mask3, scale)               # (NH*S, V)

    # torch temp.reshape(B, S, -1): same flat buffer.  Kernel C consumes the
    # batch-major layout directly -> no (S, B) transpose pass anymore.
    x_bsd = temp_flat.reshape(B, S, D)
    maskb = mask_batch[..., 0].astype(jnp.float32)                      # (B,S), 1=pad

    return gru_attention_pool(
        x_bsd, maskb,
        params['wih_f'].T.astype(jnp.bfloat16), params['whh_f'].T.astype(jnp.bfloat16),
        params['bih_f'].reshape(1, -1), params['bhh_f'].reshape(1, -1),
        params['wih_b'].T.astype(jnp.bfloat16), params['whh_b'].T.astype(jnp.bfloat16),
        params['bih_b'].reshape(1, -1), params['bhh_b'].reshape(1, -1),
        params['ws_w'][:, :H].T.astype(jnp.bfloat16),
        params['ws_w'][:, H:].T.astype(jnp.bfloat16),
        params['ws_b'].reshape(1, -1),
        params['us_w'], params['us_b'].reshape(1, 1))                   # (B, 2H)


# --------------------------------------------------------------------------
# Pure-JAX reference (mirrors the torch code, incl. its quirks) for checking
# --------------------------------------------------------------------------
def reference_forward(params, diagnosis_codes, seq_time_step, mask_batch,
                      mask_final, mask_code, lengths):
    B, S, C = diagnosis_codes.shape
    H = params['embed'].shape[1]
    TH = params['wq'].shape[0]
    V = TH // NB_HEAD
    mc = mask_code.astype(jnp.float32)
    cur = params['embed'][diagnosis_codes] * mc
    q = cur @ params['wq'].T + params['bq']
    k = cur @ params['wk'].T + params['bk']
    v = cur @ params['wv'].T + params['bv']
    q = q.reshape(NB_HEAD * B, S, C, V)
    k = k.reshape(NB_HEAD * B, S, C, V)
    v = v.reshape(NB_HEAD * B, S, C, V)
    scale = float(V // NB_HEAD) ** (-0.5)
    att = jnp.einsum('nscv,nsdv->nscd', q, k) * scale
    m3 = jnp.tile(mc[..., 0], (NB_HEAD, 1, 1))
    att = jnp.where(m3[:, :, None, :] > 0, att, -jnp.inf)
    has_any = jnp.any(m3 > 0, axis=-1)[:, :, None, None]
    att = jnp.where(has_any, att, 1.0)
    att = jax.nn.softmax(att, axis=-1)
    to = jnp.einsum('nscd,nsdv->nscv', att, v) * m3[:, :, :, None]
    nom = jnp.sum(to, axis=2)
    den = jnp.sum(m3, axis=2)[..., None]
    den = jnp.where(has_any[:, :, :, 0], den, 10.0)
    temp = (nom / den).reshape(B, S, NB_HEAD * V)

    def gru_dir(wih, whh, bih, bhh, reverse):
        def step(h, x_t):
            gx = x_t @ wih.T + bih
            gh = h @ whh.T + bhh
            r = jax.nn.sigmoid(gx[:, :H] + gh[:, :H])
            z = jax.nn.sigmoid(gx[:, H:2 * H] + gh[:, H:2 * H])
            n = jnp.tanh(gx[:, 2 * H:] + r * gh[:, 2 * H:])
            h_new = (1.0 - z) * n + z * h
            return h_new, h_new
        xs = jnp.transpose(temp, (1, 0, 2))
        if reverse:
            xs = xs[::-1]
        _, outs = jax.lax.scan(step, jnp.zeros((B, H), jnp.float32), xs)
        if reverse:
            outs = outs[::-1]
        return jnp.transpose(outs, (1, 0, 2))

    out_f = gru_dir(params['wih_f'], params['whh_f'], params['bih_f'], params['bhh_f'], False)
    out_b = gru_dir(params['wih_b'], params['whh_b'], params['bih_b'], params['bhh_b'], True)
    output = jnp.concatenate([out_f, out_b], axis=-1)
    u = jnp.tanh(output @ params['ws_w'].T + params['ws_b'])
    us = (u @ params['us_w'].T)[..., 0] + params['us_b'][0]
    us = jnp.where(mask_batch[..., 0], -jnp.inf, us)
    alpha = jax.nn.softmax(us, axis=-1)
    return jnp.einsum('bs,bsd->bd', alpha, output)


# --------------------------------------------------------------------------
# Deterministic parameter init (shapes from Get_embd.__init__)
# --------------------------------------------------------------------------
def init_params(key, num_code, hidden_size, visit_size):
    H = hidden_size
    TH = NB_HEAD * visit_size
    D = TH                      # GRU input size == temp_hidden
    ks = jax.random.split(key, 19)

    def u(k, shape, bound):
        return jax.random.uniform(k, shape, jnp.float32, -bound, bound)

    p = {}
    p['embed'] = u(ks[0], (num_code, H), 1.0 / math.sqrt(H))
    p['wq'] = u(ks[1], (TH, H), 1.0 / math.sqrt(H))
    p['bq'] = u(ks[2], (TH,), 1.0 / math.sqrt(H))
    p['wk'] = u(ks[3], (TH, H), 1.0 / math.sqrt(H))
    p['bk'] = u(ks[4], (TH,), 1.0 / math.sqrt(H))
    p['wv'] = u(ks[5], (TH, H), 1.0 / math.sqrt(H))
    p['bv'] = u(ks[6], (TH,), 1.0 / math.sqrt(H))
    b = 1.0 / math.sqrt(H)
    p['wih_f'] = u(ks[7], (3 * H, D), b)
    p['whh_f'] = u(ks[8], (3 * H, H), b)
    p['bih_f'] = u(ks[9], (3 * H,), b)
    p['bhh_f'] = u(ks[10], (3 * H,), b)
    p['wih_b'] = u(ks[11], (3 * H, D), b)
    p['whh_b'] = u(ks[12], (3 * H, H), b)
    p['bih_b'] = u(ks[13], (3 * H,), b)
    p['bhh_b'] = u(ks[14], (3 * H,), b)
    p['ws_w'] = u(ks[15], (H, 2 * H), 1.0 / math.sqrt(2 * H))
    p['ws_b'] = u(ks[16], (H,), 1.0 / math.sqrt(2 * H))
    p['us_w'] = u(ks[17], (1, H), 1.0 / math.sqrt(H))
    p['us_b'] = u(ks[18], (1,), 1.0 / math.sqrt(H))
    return p


if __name__ == "__main__":
    B, S, C = 2, 8, 5
    hidden_size = 32
    visit_size = 8
    n_diagnosis_codes = 10
    num_code = n_diagnosis_codes + 1

    root = jax.random.PRNGKey(0)
    pkey, ikey = jax.random.split(root)
    params = init_params(pkey, num_code, hidden_size, visit_size)

    kin = jax.random.split(ikey, 2)
    diagnosis_codes = jax.random.randint(kin[0], (B, S, C), 0, num_code, dtype=jnp.int32)
    mask_code = (jax.random.uniform(kin[1], (B, S, C, 1)) < 0.7).astype(jnp.float32)
    mask_code = mask_code.at[0, S - 1].set(0.0)     # one fully-empty visit (edge case)
    lengths = jnp.array([S, S - 3], dtype=jnp.int32)
    mask_batch = (jnp.arange(S)[None, :] >= lengths[:, None])[..., None]   # (B,S,1) bool, True = padded
    seq_time_step = jnp.zeros((B, S, 1), jnp.float32)  # unused by forward
    mask_final = jnp.zeros((B, S, 1), jnp.float32)     # unused by forward

    fwd = jax.jit(get_embd_forward)
    h = fwd(params, diagnosis_codes, seq_time_step, mask_batch,
            mask_final, mask_code, lengths)
    h = jax.block_until_ready(h)

    h_ref = jax.block_until_ready(
        reference_forward(params, diagnosis_codes, seq_time_step, mask_batch,
                          mask_final, mask_code, lengths))

    assert h.shape == (B, 2 * hidden_size)
    assert bool(jnp.all(jnp.isfinite(h)))
    np.testing.assert_allclose(np.asarray(h), np.asarray(h_ref), rtol=2e-2, atol=2e-2)
    print("KERNEL_OK")
</pallas_src>

<mosaic_0001>
module attributes {stable_mosaic.version = 11 : i64} {
  func.func @_qkv_kernel(%arg0: i32, %arg1: memref<80x32xf32, #tpu.memory_space<vmem>>, %arg2: memref<80x1xf32, #tpu.memory_space<vmem>>, %arg3: memref<32x72xbf16, #tpu.memory_space<vmem>>, %arg4: memref<1x72xf32, #tpu.memory_space<vmem>>, %arg5: memref<80x72xbf16, #tpu.memory_space<vmem>>) attributes {dimension_semantics = [#tpu.dimension_semantics<parallel>], iteration_bounds = array<i64: 1>, scalar_prefetch = 0 : i64, scratch_operands = 0 : i64, tpu.core_type = #tpu.core_type<tc>, window_params = [{transform_indices = @transform_0, window_bounds = array<i64: 80, 32>}, {transform_indices = @transform_1, window_bounds = array<i64: 80, 1>}, {pipeline_mode = #tpu.pipeline_mode<synchronous>, transform_indices = @transform_2, window_bounds = array<i64: 32, 72>}, {pipeline_mode = #tpu.pipeline_mode<synchronous>, transform_indices = @transform_3, window_bounds = array<i64: 1, 72>}, {transform_indices = @transform_4, window_bounds = array<i64: 80, 72>}]} {
    %c0 = arith.constant 0 : index
    %c0_0 = arith.constant 0 : index
    %0 = vector.load %arg1[%c0, %c0_0] : memref<80x32xf32, #tpu.memory_space<vmem>>, vector<80x32xf32>
    %c0_1 = arith.constant 0 : index
    %c0_2 = arith.constant 0 : index
    %1 = vector.load %arg2[%c0_1, %c0_2] : memref<80x1xf32, #tpu.memory_space<vmem>>, vector<80x1xf32>
    %2 = vector.broadcast %1 : vector<80x1xf32> to vector<80x32xf32>
    %3 = arith.mulf %0, %2 : vector<80x32xf32>
    %4 = arith.truncf %3 : vector<80x32xf32> to vector<80x32xbf16>
    %c0_3 = arith.constant 0 : index
    %c0_4 = arith.constant 0 : index
    %5 = vector.load %arg3[%c0_3, %c0_4] : memref<32x72xbf16, #tpu.memory_space<vmem>>, vector<32x72xbf16>
    %cst = arith.constant dense<0.000000e+00> : vector<80x72xf32>
    %6 = tpu.matmul %4, %5, %cst {dimension_numbers = #tpu.dot_dimension_numbers<[1], [0], [0], [1], [0, 0, 1, 1], [], []>} : vector<80x32xbf16>, vector<32x72xbf16>, vector<80x72xf32> -> vector<80x72xf32>
    %c0_5 = arith.constant 0 : index
    %c0_6 = arith.constant 0 : index
    %7 = vector.load %arg4[%c0_5, %c0_6] : memref<1x72xf32, #tpu.memory_space<vmem>>, vector<1x72xf32>
    %8 = vector.broadcast %7 : vector<1x72xf32> to vector<80x72xf32>
    %9 = arith.addf %6, %8 : vector<80x72xf32>
    %10 = arith.truncf %9 : vector<80x72xf32> to vector<80x72xbf16>
    %c0_7 = arith.constant 0 : index
    %c0_8 = arith.constant 0 : index
    %11 = vector.load %arg5[%c0_7, %c0_8] : memref<80x72xbf16, #tpu.memory_space<vmem>>, vector<80x72xbf16>
    tpu.vector_store %arg5[%c0_7, %c0_8], %10 {strides = array<i32>} : memref<80x72xbf16, #tpu.memory_space<vmem>>, vector<80x72xbf16>,
    return
  }
  func.func @transform_0(%arg0: i32) -> (i32, i32) {
    %c0_i32 = arith.constant 0 : i32
    %c0_i32_0 = arith.constant 0 : i32
    return %arg0, %c0_i32 : i32, i32
  }
  func.func @transform_1(%arg0: i32) -> (i32, i32) {
    %c0_i32 = arith.constant 0 : i32
    %c0_i32_0 = arith.constant 0 : i32
    return %arg0, %c0_i32 : i32, i32
  }
  func.func @transform_2(%arg0: i32) -> (i32, i32) {
    %c0_i32 = arith.constant 0 : i32
    %c0_i32_0 = arith.constant 0 : i32
    %c0_i32_1 = arith.constant 0 : i32
    return %c0_i32, %c0_i32_0 : i32, i32
  }
  func.func @transform_3(%arg0: i32) -> (i32, i32) {
    %c0_i32 = arith.constant 0 : i32
    %c0_i32_0 = arith.constant 0 : i32
    %c0_i32_1 = arith.constant 0 : i32
    return %c0_i32, %c0_i32_0 : i32, i32
  }
  func.func @transform_4(%arg0: i32) -> (i32, i32) {
    %c0_i32 = arith.constant 0 : i32
    %c0_i32_0 = arith.constant 0 : i32
    return %arg0, %c0_i32 : i32, i32
  }
}

module attributes {stable_mosaic.version = 11 : i64} {
  func.func @_attn_kernel(%arg0: i32, %arg1: memref<48x5x8xbf16, #tpu.memory_space<vmem>>, %arg2: memref<48x5x8xbf16, #tpu.memory_space<vmem>>, %arg3: memref<48x5x8xbf16, #tpu.memory_space<vmem>>, %arg4: memref<48x5xf32, #tpu.memory_space<vmem>>, %arg5: memref<48x8xf32, #tpu.memory_space<vmem>>) attributes {dimension_semantics = [#tpu.dimension_semantics<parallel>], iteration_bounds = array<i64: 1>, scalar_prefetch = 0 : i64, scratch_operands = 0 : i64, tpu.core_type = #tpu.core_type<tc>, window_params = [{transform_indices = @transform_0, window_bounds = array<i64: 48, 5, 8>}, {transform_indices = @transform_1, window_bounds = array<i64: 48, 5, 8>}, {transform_indices = @transform_2, window_bounds = array<i64: 48, 5, 8>}, {transform_indices = @transform_3, window_bounds = array<i64: 48, 5>}, {transform_indices = @transform_4, window_bounds = array<i64: 48, 8>}]} {
    %c0 = arith.constant 0 : index
    %c0_0 = arith.constant 0 : index
    %c0_1 = arith.constant 0 : index
    %0 = vector.load %arg1[%c0, %c0_0, %c0_1] : memref<48x5x8xbf16, #tpu.memory_space<vmem>>, vector<48x5x8xbf16>
    %c0_2 = arith.constant 0 : index
    %c0_3 = arith.constant 0 : index
    %c0_4 = arith.constant 0 : index
    %1 = vector.load %arg2[%c0_2, %c0_3, %c0_4] : memref<48x5x8xbf16, #tpu.memory_space<vmem>>, vector<48x5x8xbf16>
    %c0_5 = arith.constant 0 : index
    %c0_6 = arith.constant 0 : index
    %c0_7 = arith.constant 0 : index
    %2 = vector.load %arg3[%c0_5, %c0_6, %c0_7] : memref<48x5x8xbf16, #tpu.memory_space<vmem>>, vector<48x5x8xbf16>
    %c0_8 = arith.constant 0 : index
    %c0_9 = arith.constant 0 : index
    %3 = vector.load %arg4[%c0_8, %c0_9] : memref<48x5xf32, #tpu.memory_space<vmem>>, vector<48x5xf32>
    %cst = arith.constant dense<0.000000e+00> : vector<48x5x5xf32>
    %4 = tpu.matmul %0, %1, %cst {dimension_numbers = #tpu.dot_dimension_numbers<[2], [2], [1], [1], [0, 0, 0, 1, 1, 1], [0], [0]>} : vector<48x5x8xbf16>, vector<48x5x8xbf16>, vector<48x5x5xf32> -> vector<48x5x5xf32>
    %cst_10 = arith.constant 0.707106769 : f32
    %5 = vector.broadcast %cst_10 : f32 to vector<48x5x5xf32>
    %6 = arith.mulf %4, %5 : vector<48x5x5xf32>
    %7 = vector.shape_cast %3 : vector<48x5xf32> to vector<48x1x5xf32>
    %cst_11 = arith.constant 0.000000e+00 : f32
    %8 = vector.broadcast %cst_11 : f32 to vector<48x1x5xf32>
    %9 = arith.cmpf ogt, %7, %8 : vector<48x1x5xf32>
    %cst_12 = arith.constant 0xFF800000 : f32
    %10 = vector.shape_cast %9 : vector<48x1x5xi1> to vector<48x1x5xi1>
    %11 = vector.broadcast %10 : vector<48x1x5xi1> to vector<48x5x5xi1>
    %12 = vector.broadcast %cst_12 : f32 to vector<48x5x5xf32>
    %13 = arith.select %11, %6, %12 : vector<48x5x5xi1>, vector<48x5x5xf32>
    %cst_13 = arith.constant dense<0xFF800000> : vector<48xf32>
    %14 = vector.multi_reduction <maximumf>, %3, %cst_13 [1] : vector<48x5xf32> to vector<48xf32>
    %15 = vector.shape_cast %14 : vector<48xf32> to vector<48x1xf32>
    %cst_14 = arith.constant 0.000000e+00 : f32
    %16 = vector.broadcast %cst_14 : f32 to vector<48x1xf32>
    %17 = arith.cmpf ogt, %15, %16 : vector<48x1xf32>
    %18 = vector.shape_cast %17 : vector<48x1xi1> to vector<48x1x1xi1>
    %cst_15 = arith.constant 1.000000e+00 : f32
    %19 = vector.shape_cast %18 : vector<48x1x1xi1> to vector<48x1x1xi1>
    %20 = vector.broadcast %19 : vector<48x1x1xi1> to vector<48x5x5xi1>
    %21 = vector.broadcast %cst_15 : f32 to vector<48x5x5xf32>
    %22 = arith.select %20, %13, %21 : vector<48x5x5xi1>, vector<48x5x5xf32>
    %cst_16 = arith.constant dense<0xFF800000> : vector<48x5xf32>
    %23 = vector.multi_reduction <maximumf>, %22, %cst_16 [2] : vector<48x5x5xf32> to vector<48x5xf32>
    %24 = vector.shape_cast %23 : vector<48x5xf32> to vector<48x5x1xf32>
    %25 = vector.broadcast %24 : vector<48x5x1xf32> to vector<48x5x5xf32>
    %26 = arith.subf %22, %25 : vector<48x5x5xf32>
    %27 = math.exp %26 : vector<48x5x5xf32>
    %cst_17 = arith.constant dense<0.000000e+00> : vector<48x5xf32>
    %28 = vector.multi_reduction <add>, %27, %cst_17 [2] : vector<48x5x5xf32> to vector<48x5xf32>
    %29 = vector.shape_cast %28 : vector<48x5xf32> to vector<48x5x1xf32>
    %30 = tpu.reciprocal %29 {approx = true} : vector<48x5x1xf32> -> vector<48x5x1xf32>
    %31 = vector.broadcast %30 : vector<48x5x1xf32> to vector<48x5x5xf32>
    %32 = arith.mulf %27, %31 : vector<48x5x5xf32>
    %33 = arith.truncf %32 : vector<48x5x5xf32> to vector<48x5x5xbf16>
    %cst_18 = arith.constant dense<0.000000e+00> : vector<48x5x8xf32>
    %34 = tpu.matmul %33, %2, %cst_18 {dimension_numbers = #tpu.dot_dimension_numbers<[2], [1], [1], [2], [0, 0, 0, 1, 1, 2], [0], [0]>} : vector<48x5x5xbf16>, vector<48x5x8xbf16>, vector<48x5x8xf32> -> vector<48x5x8xf32>
    %35 = vector.shape_cast %3 : vector<48x5xf32> to vector<48x5x1xf32>
    %36 = vector.broadcast %35 : vector<48x5x1xf32> to vector<48x5x8xf32>
    %37 = arith.mulf %34, %36 : vector<48x5x8xf32>
    %cst_19 = arith.constant dense<0.000000e+00> : vector<48x8xf32>
    %38 = vector.multi_reduction <add>, %37, %cst_19 [1] : vector<48x5x8xf32> to vector<48x8xf32>
    %cst_20 = arith.constant dense<0.000000e+00> : vector<48xf32>
    %39 = vector.multi_reduction <add>, %3, %cst_20 [1] : vector<48x5xf32> to vector<48xf32>
    %40 = vector.shape_cast %39 : vector<48xf32> to vector<48x1xf32>
    %cst_21 = arith.constant 1.000000e+01 : f32
    %41 = vector.broadcast %cst_21 : f32 to vector<48x1xf32>
    %42 = arith.select %17, %40, %41 : vector<48x1xi1>, vector<48x1xf32>
    %43 = tpu.reciprocal %42 {approx = true} : vector<48x1xf32> -> vector<48x1xf32>
    %44 = vector.broadcast %43 : vector<48x1xf32> to vector<48x8xf32>
    %45 = arith.mulf %38, %44 : vector<48x8xf32>
    %c0_22 = arith.constant 0 : index
    %c0_23 = arith.constant 0 : index
    %46 = vector.load %arg5[%c0_22, %c0_23] : memref<48x8xf32, #tpu.memory_space<vmem>>, vector<48x8xf32>
    tpu.vector_store %arg5[%c0_22, %c0_23], %45 {strides = array<i32>} : memref<48x8xf32, #tpu.memory_space<vmem>>, vector<48x8xf32>,
    return
  }
  func.func @transform_0(%arg0: i32) -> (i32, i32, i32) {
    %c0_i32 = arith.constant 0 : i32
    %c0_i32_0 = arith.constant 0 : i32
    %c0_i32_1 = arith.constant 0 : i32
    return %arg0, %c0_i32, %c0_i32_0 : i32, i32, i32
  }
  func.func @transform_1(%arg0: i32) -> (i32, i32, i32) {
    %c0_i32 = arith.constant 0 : i32
    %c0_i32_0 = arith.constant 0 : i32
    %c0_i32_1 = arith.constant 0 : i32
    return %arg0, %c0_i32, %c0_i32_0 : i32, i32, i32
  }
  func.func @transform_2(%arg0: i32) -> (i32, i32, i32) {
    %c0_i32 = arith.constant 0 : i32
    %c0_i32_0 = arith.constant 0 : i32
    %c0_i32_1 = arith.constant 0 : i32
    return %arg0, %c0_i32, %c0_i32_0 : i32, i32, i32
  }
  func.func @transform_3(%arg0: i32) -> (i32, i32) {
    %c0_i32 = arith.constant 0 : i32
    %c0_i32_0 = arith.constant 0 : i32
    return %arg0, %c0_i32 : i32, i32
  }
  func.func @transform_4(%arg0: i32) -> (i32, i32) {
    %c0_i32 = arith.constant 0 : i32
    %c0_i32_0 = arith.constant 0 : i32
    return %arg0, %c0_i32 : i32, i32
  }
}

module attributes {stable_mosaic.version = 11 : i64} {
  func.func @_gru_attn_kernel(%arg0: memref<2x8x24xf32, #tpu.memory_space<vmem>>, %arg1: memref<2x8xf32, #tpu.memory_space<vmem>>, %arg2: memref<24x96xbf16, #tpu.memory_space<vmem>>, %arg3: memref<32x96xbf16, #tpu.memory_space<vmem>>, %arg4: memref<1x96xf32, #tpu.memory_space<vmem>>, %arg5: memref<1x96xf32, #tpu.memory_space<vmem>>, %arg6: memref<24x96xbf16, #tpu.memory_space<vmem>>, %arg7: memref<32x96xbf16, #tpu.memory_space<vmem>>, %arg8: memref<1x96xf32, #tpu.memory_space<vmem>>, %arg9: memref<1x96xf32, #tpu.memory_space<vmem>>, %arg10: memref<32x32xbf16, #tpu.memory_space<vmem>>, %arg11: memref<32x32xbf16, #tpu.memory_space<vmem>>, %arg12: memref<1x32xf32, #tpu.memory_space<vmem>>, %arg13: memref<1x32xf32, #tpu.memory_space<vmem>>, %arg14: memref<1x1xf32, #tpu.memory_space<vmem>>, %arg15: memref<2x64xf32, #tpu.memory_space<vmem>>, %arg16: memref<2x8x96xf32, #tpu.memory_space<vmem>>, %arg17: memref<2x8x96xf32, #tpu.memory_space<vmem>>, %arg18: memref<8x2x32xf32, #tpu.memory_space<vmem>>, %arg19: memref<8x2x32xf32, #tpu.memory_space<vmem>>) attributes {dimension_semantics = [], scalar_prefetch = 0 : i64, scratch_operands = 4 : i64, tpu.core_type = #tpu.core_type<tc>} {
    %c0 = arith.constant 0 : index
    %c0_0 = arith.constant 0 : index
    %0 = vector.load %arg2[%c0, %c0_0] : memref<24x96xbf16, #tpu.memory_space<vmem>>, vector<24x96xbf16>
    %c0_1 = arith.constant 0 : index
    %c0_2 = arith.constant 0 : index
    %1 = vector.load %arg6[%c0_1, %c0_2] : memref<24x96xbf16, #tpu.memory_space<vmem>>, vector<24x96xbf16>
    %c0_3 = arith.constant 0 : index
    %c0_4 = arith.constant 0 : index
    %2 = vector.load %arg4[%c0_3, %c0_4] : memref<1x96xf32, #tpu.memory_space<vmem>>, vector<1x96xf32>
    %c0_5 = arith.constant 0 : index
    %c0_6 = arith.constant 0 : index
    %3 = vector.load %arg8[%c0_5, %c0_6] : memref<1x96xf32, #tpu.memory_space<vmem>>, vector<1x96xf32>
    %c0_7 = arith.constant 0 : index
    %c0_8 = arith.constant 0 : index
    %c0_9 = arith.constant 0 : index
    %4 = vector.load %arg0[%c0_7, %c0_8, %c0_9] : memref<2x8x24xf32, #tpu.memory_space<vmem>>, vector<1x8x24xf32>
    %5 = vector.shape_cast %4 : vector<1x8x24xf32> to vector<8x24xf32>
    %6 = arith.truncf %5 : vector<8x24xf32> to vector<8x24xbf16>
    %cst = arith.constant dense<0.000000e+00> : vector<8x96xf32>
    %7 = tpu.matmul %6, %0, %cst {dimension_numbers = #tpu.dot_dimension_numbers<[1], [0], [0], [1], [0, 0, 1, 1], [], []>} : vector<8x24xbf16>, vector<24x96xbf16>, vector<8x96xf32> -> vector<8x96xf32>
    %8 = vector.broadcast %2 : vector<1x96xf32> to vector<8x96xf32>
    %9 = arith.addf %7, %8 : vector<8x96xf32>
    %c0_10 = arith.constant 0 : index
    %c0_11 = arith.constant 0 : index
    %c0_12 = arith.constant 0 : index
    %10 = vector.load %arg16[%c0_10, %c0_11, %c0_12] : memref<2x8x96xf32, #tpu.memory_space<vmem>>, vector<1x8x96xf32>
    %11 = vector.shape_cast %10 : vector<1x8x96xf32> to vector<8x96xf32>
    %12 = vector.shape_cast %9 : vector<8x96xf32> to vector<1x8x96xf32>
    tpu.vector_store %arg16[%c0_10, %c0_11, %c0_12], %12 {strides = array<i32>} : memref<2x8x96xf32, #tpu.memory_space<vmem>>, vector<1x8x96xf32>,
    %cst_13 = arith.constant dense<0.000000e+00> : vector<8x96xf32>
    %13 = tpu.matmul %6, %1, %cst_13 {dimension_numbers = #tpu.dot_dimension_numbers<[1], [0], [0], [1], [0, 0, 1, 1], [], []>} : vector<8x24xbf16>, vector<24x96xbf16>, vector<8x96xf32> -> vector<8x96xf32>
    %14 = vector.broadcast %3 : vector<1x96xf32> to vector<8x96xf32>
    %15 = arith.addf %13, %14 : vector<8x96xf32>
    %c0_14 = arith.constant 0 : index
    %c0_15 = arith.constant 0 : index
    %c0_16 = arith.constant 0 : index
    %16 = vector.load %arg17[%c0_14, %c0_15, %c0_16] : memref<2x8x96xf32, #tpu.memory_space<vmem>>, vector<1x8x96xf32>
    %17 = vector.shape_cast %16 : vector<1x8x96xf32> to vector<8x96xf32>
    %18 = vector.shape_cast %15 : vector<8x96xf32> to vector<1x8x96xf32>
    tpu.vector_store %arg17[%c0_14, %c0_15, %c0_16], %18 {strides = array<i32>} : memref<2x8x96xf32, #tpu.memory_space<vmem>>, vector<1x8x96xf32>,
    %c1 = arith.constant 1 : index
    %c0_17 = arith.constant 0 : index
    %c0_18 = arith.constant 0 : index
    %19 = vector.load %arg0[%c1, %c0_17, %c0_18] : memref<2x8x24xf32, #tpu.memory_space<vmem>>, vector<1x8x24xf32>
    %20 = vector.shape_cast %19 : vector<1x8x24xf32> to vector<8x24xf32>
    %21 = arith.truncf %20 : vector<8x24xf32> to vector<8x24xbf16>
    %cst_19 = arith.constant dense<0.000000e+00> : vector<8x96xf32>
    %22 = tpu.matmul %21, %0, %cst_19 {dimension_numbers = #tpu.dot_dimension_numbers<[1], [0], [0], [1], [0, 0, 1, 1], [], []>} : vector<8x24xbf16>, vector<24x96xbf16>, vector<8x96xf32> -> vector<8x96xf32>
    %23 = vector.broadcast %2 : vector<1x96xf32> to vector<8x96xf32>
    %24 = arith.addf %22, %23 : vector<8x96xf32>
    %c1_20 = arith.constant 1 : index
    %c0_21 = arith.constant 0 : index
    %c0_22 = arith.constant 0 : index
    %25 = vector.load %arg16[%c1_20, %c0_21, %c0_22] : memref<2x8x96xf32, #tpu.memory_space<vmem>>, vector<1x8x96xf32>
    %26 = vector.shape_cast %25 : vector<1x8x96xf32> to vector<8x96xf32>
    %27 = vector.shape_cast %24 : vector<8x96xf32> to vector<1x8x96xf32>
    tpu.vector_store %arg16[%c1_20, %c0_21, %c0_22], %27 {strides = array<i32>} : memref<2x8x96xf32, #tpu.memory_space<vmem>>, vector<1x8x96xf32>,
    %cst_23 = arith.constant dense<0.000000e+00> : vector<8x96xf32>
    %28 = tpu.matmul %21, %1, %cst_23 {dimension_numbers = #tpu.dot_dimension_numbers<[1], [0], [0], [1], [0, 0, 1, 1], [], []>} : vector<8x24xbf16>, vector<24x96xbf16>, vector<8x96xf32> -> vector<8x96xf32>
    %29 = vector.broadcast %3 : vector<1x96xf32> to vector<8x96xf32>
    %30 = arith.addf %28, %29 : vector<8x96xf32>
    %c1_24 = arith.constant 1 : index
    %c0_25 = arith.constant 0 : index
    %c0_26 = arith.constant 0 : index
    %31 = vector.load %arg17[%c1_24, %c0_25, %c0_26] : memref<2x8x96xf32, #tpu.memory_space<vmem>>, vector<1x8x96xf32>
    %32 = vector.shape_cast %31 : vector<1x8x96xf32> to vector<8x96xf32>
    %33 = vector.shape_cast %30 : vector<8x96xf32> to vector<1x8x96xf32>
    tpu.vector_store %arg17[%c1_24, %c0_25, %c0_26], %33 {strides = array<i32>} : memref<2x8x96xf32, #tpu.memory_space<vmem>>, vector<1x8x96xf32>,
    %c0_27 = arith.constant 0 : index
    %c0_28 = arith.constant 0 : index
    %34 = vector.load %arg3[%c0_27, %c0_28] : memref<32x96xbf16, #tpu.memory_space<vmem>>, vector<32x96xbf16>
    %c0_29 = arith.constant 0 : index
    %c0_30 = arith.constant 0 : index
    %35 = vector.load %arg7[%c0_29, %c0_30] : memref<32x96xbf16, #tpu.memory_space<vmem>>, vector<32x96xbf16>
    %c0_31 = arith.constant 0 : index
    %c0_32 = arith.constant 0 : index
    %36 = vector.load %arg5[%c0_31, %c0_32] : memref<1x96xf32, #tpu.memory_space<vmem>>, vector<1x96xf32>
    %c0_33 = arith.constant 0 : index
    %c0_34 = arith.constant 0 : index
    %37 = vector.load %arg9[%c0_33, %c0_34] : memref<1x96xf32, #tpu.memory_space<vmem>>, vector<1x96xf32>
    %cst_35 = arith.constant 0.000000e+00 : f32
    %38 = vector.broadcast %cst_35 : f32 to vector<2x32xf32>
    %cst_36 = arith.constant 0.000000e+00 : f32
    %39 = vector.broadcast %cst_36 : f32 to vector<2x32xf32>
    %c0_37 = arith.constant 0 : index
    %c0_38 = arith.constant 0 : index
    %c0_39 = arith.constant 0 : index
    %40 = vector.load %arg16[%c0_37, %c0_38, %c0_39] : memref<2x8x96xf32, #tpu.memory_space<vmem>>, vector<2x1x96xf32>
    %41 = vector.shape_cast %40 : vector<2x1x96xf32> to vector<2x96xf32>
    %c0_40 = arith.constant 0 : index
    %c7 = arith.constant 7 : index
    %c0_41 = arith.constant 0 : index
    %42 = vector.load %arg17[%c0_40, %c7, %c0_41] : memref<2x8x96xf32, #tpu.memory_space<vmem>>, vector<2x1x96xf32>
    %43 = vector.shape_cast %42 : vector<2x1x96xf32> to vector<2x96xf32>
    %44 = arith.truncf %38 : vector<2x32xf32> to vector<2x32xbf16>
    %cst_42 = arith.constant dense<0.000000e+00> : vector<2x96xf32>
    %45 = tpu.matmul %44, %34, %cst_42 {dimension_numbers = #tpu.dot_dimension_numbers<[1], [0], [0], [1], [0, 0, 1, 1], [], []>} : vector<2x32xbf16>, vector<32x96xbf16>, vector<2x96xf32> -> vector<2x96xf32>
    %46 = vector.broadcast %36 : vector<1x96xf32> to vector<2x96xf32>
    %47 = arith.addf %45, %46 : vector<2x96xf32>
    %48 = vector.extract_strided_slice %41 {offsets = [0, 0], sizes = [2, 32], strides = [1, 1]} : vector<2x96xf32> to vector<2x32xf32>
    %49 = vector.extract_strided_slice %47 {offsets = [0, 0], sizes = [2, 32], strides = [1, 1]} : vector<2x96xf32> to vector<2x32xf32>
    %50 = arith.addf %48, %49 : vector<2x32xf32>
    %51 = arith.negf %50 : vector<2x32xf32>
    %52 = math.exp %51 : vector<2x32xf32>
    %cst_43 = arith.constant 1.000000e+00 : f32
    %53 = vector.broadcast %cst_43 : f32 to vector<2x32xf32>
    %54 = arith.addf %53, %52 : vector<2x32xf32>
    %55 = arith.divf %53, %54 : vector<2x32xf32>
    %56 = vector.extract_strided_slice %41 {offsets = [0, 32], sizes = [2, 32], strides = [1, 1]} : vector<2x96xf32> to vector<2x32xf32>
    %57 = vector.extract_strided_slice %47 {offsets = [0, 32], sizes = [2, 32], strides = [1, 1]} : vector<2x96xf32> to vector<2x32xf32>
    %58 = arith.addf %56, %57 : vector<2x32xf32>
    %59 = arith.negf %58 : vector<2x32xf32>
    %60 = math.exp %59 : vector<2x32xf32>
    %cst_44 = arith.constant 1.000000e+00 : f32
    %61 = vector.broadcast %cst_44 : f32 to vector<2x32xf32>
    %62 = arith.addf %61, %60 : vector<2x32xf32>
    %63 = arith.divf %61, %62 : vector<2x32xf32>
    %64 = vector.extract_strided_slice %41 {offsets = [0, 64], sizes = [2, 32], strides = [1, 1]} : vector<2x96xf32> to vector<2x32xf32>
    %65 = vector.extract_strided_slice %47 {offsets = [0, 64], sizes = [2, 32], strides = [1, 1]} : vector<2x96xf32> to vector<2x32xf32>
    %66 = arith.mulf %55, %65 : vector<2x32xf32>
    %67 = arith.addf %64, %66 : vector<2x32xf32>
    %68 = math.tanh %67 : vector<2x32xf32>
    %cst_45 = arith.constant 1.000000e+00 : f32
    %69 = vector.broadcast %cst_45 : f32 to vector<2x32xf32>
    %70 = arith.subf %69, %63 : vector<2x32xf32>
    %71 = arith.mulf %70, %68 : vector<2x32xf32>
    %72 = arith.mulf %63, %38 : vector<2x32xf32>
    %73 = arith.addf %71, %72 : vector<2x32xf32>
    %74 = arith.truncf %39 : vector<2x32xf32> to vector<2x32xbf16>
    %cst_46 = arith.constant dense<0.000000e+00> : vector<2x96xf32>
    %75 = tpu.matmul %74, %35, %cst_46 {dimension_numbers = #tpu.dot_dimension_numbers<[1], [0], [0], [1], [0, 0, 1, 1], [], []>} : vector<2x32xbf16>, vector<32x96xbf16>, vector<2x96xf32> -> vector<2x96xf32>
    %76 = vector.broadcast %37 : vector<1x96xf32> to vector<2x96xf32>
    %77 = arith.addf %75, %76 : vector<2x96xf32>
    %78 = vector.extract_strided_slice %43 {offsets = [0, 0], sizes = [2, 32], strides = [1, 1]} : vector<2x96xf32> to vector<2x32xf32>
    %79 = vector.extract_strided_slice %77 {offsets = [0, 0], sizes = [2, 32], strides = [1, 1]} : vector<2x96xf32> to vector<2x32xf32>
    %80 = arith.addf %78, %79 : vector<2x32xf32>
    %81 = arith.negf %80 : vector<2x32xf32>
    %82 = math.exp %81 : vector<2x32xf32>
    %cst_47 = arith.constant 1.000000e+00 : f32
    %83 = vector.broadcast %cst_47 : f32 to vector<2x32xf32>
    %84 = arith.addf %83, %82 : vector<2x32xf32>
    %85 = arith.divf %83, %84 : vector<2x32xf32>
    %86 = vector.extract_strided_slice %43 {offsets = [0, 32], sizes = [2, 32], strides = [1, 1]} : vector<2x96xf32> to vector<2x32xf32>
    %87 = vector.extract_strided_slice %77 {offsets = [0, 32], sizes = [2, 32], strides = [1, 1]} : vector<2x96xf32> to vector<2x32xf32>
    %88 = arith.addf %86, %87 : vector<2x32xf32>
    %89 = arith.negf %88 : vector<2x32xf32>
    %90 = math.exp %89 : vector<2x32xf32>
    %cst_48 = arith.constant 1.000000e+00 : f32
    %91 = vector.broadcast %cst_48 : f32 to vector<2x32xf32>
    %92 = arith.addf %91, %90 : vector<2x32xf32>
    %93 = arith.divf %91, %92 : vector<2x32xf32>
    %94 = vector.extract_strided_slice %43 {offsets = [0, 64], sizes = [2, 32], strides = [1, 1]} : vector<2x96xf32> to vector<2x32xf32>
    %95 = vector.extract_strided_slice %77 {offsets = [0, 64], sizes = [2, 32], strides = [1, 1]} : vector<2x96xf32> to vector<2x32xf32>
    %96 = arith.mulf %85, %95 : vector<2x32xf32>
    %97 = arith.addf %94, %96 : vector<2x32xf32>
    %98 = math.tanh %97 : vector<2x32xf32>
    %cst_49 = arith.constant 1.000000e+00 : f32
    %99 = vector.broadcast %cst_49 : f32 to vector<2x32xf32>
    %100 = arith.subf %99, %93 : vector<2x32xf32>
    %101 = arith.mulf %100, %98 : vector<2x32xf32>
    %102 = arith.mulf %93, %39 : vector<2x32xf32>
    %103 = arith.addf %101, %102 : vector<2x32xf32>
    %c0_50 = arith.constant 0 : index
    %c0_51 = arith.constant 0 : index
    %c0_52 = arith.constant 0 : index
    %104 = vector.load %arg18[%c0_50, %c0_51, %c0_52] : memref<8x2x32xf32, #tpu.memory_space<vmem>>, vector<1x2x32xf32>
    %105 = vector.shape_cast %104 : vector<1x2x32xf32> to vector<2x32xf32>
    %106 = vector.shape_cast %73 : vector<2x32xf32> to vector<1x2x32xf32>
    tpu.vector_store %arg18[%c0_50, %c0_51, %c0_52], %106 {strides = array<i32>} : memref<8x2x32xf32, #tpu.memory_space<vmem>>, vector<1x2x32xf32>,
    %c7_53 = arith.constant 7 : index
    %c0_54 = arith.constant 0 : index
    %c0_55 = arith.constant 0 : index
    %107 = vector.load %arg19[%c7_53, %c0_54, %c0_55] : memref<8x2x32xf32, #tpu.memory_space<vmem>>, vector<1x2x32xf32>
    %108 = vector.shape_cast %107 : vector<1x2x32xf32> to vector<2x32xf32>
    %109 = vector.shape_cast %103 : vector<2x32xf32> to vector<1x2x32xf32>
    tpu.vector_store %arg19[%c7_53, %c0_54, %c0_55], %109 {strides = array<i32>} : memref<8x2x32xf32, #tpu.memory_space<vmem>>, vector<1x2x32xf32>,
    %c0_56 = arith.constant 0 : index
    %c1_57 = arith.constant 1 : index
    %c0_58 = arith.constant 0 : index
    %110 = vector.load %arg16[%c0_56, %c1_57, %c0_58] : memref<2x8x96xf32, #tpu.memory_space<vmem>>, vector<2x1x96xf32>
    %111 = vector.shape_cast %110 : vector<2x1x96xf32> to vector<2x96xf32>
    %c0_59 = arith.constant 0 : index
    %c6 = arith.constant 6 : index
    %c0_60 = arith.constant 0 : index
    %112 = vector.load %arg17[%c0_59, %c6, %c0_60] : memref<2x8x96xf32, #tpu.memory_space<vmem>>, vector<2x1x96xf32>
    %113 = vector.shape_cast %112 : vector<2x1x96xf32> to vector<2x96xf32>
    %114 = arith.truncf %73 : vector<2x32xf32> to vector<2x32xbf16>
    %cst_61 = arith.constant dense<0.000000e+00> : vector<2x96xf32>
    %115 = tpu.matmul %114, %34, %cst_61 {dimension_numbers = #tpu.dot_dimension_numbers<[1], [0], [0], [1], [0, 0, 1, 1], [], []>} : vector<2x32xbf16>, vector<32x96xbf16>, vector<2x96xf32> -> vector<2x96xf32>
    %116 = vector.broadcast %36 : vector<1x96xf32> to vector<2x96xf32>
    %117 = arith.addf %115, %116 : vector<2x96xf32>
    %118 = vector.extract_strided_slice %111 {offsets = [0, 0], sizes = [2, 32], strides = [1, 1]} : vector<2x96xf32> to vector<2x32xf32>
    %119 = vector.extract_strided_slice %117 {offsets = [0, 0], sizes = [2, 32], strides = [1, 1]} : vector<2x96xf32> to vector<2x32xf32>
    %120 = arith.addf %118, %119 : vector<2x32xf32>
    %121 = arith.negf %120 : vector<2x32xf32>
    %122 = math.exp %121 : vector<2x32xf32>
    %cst_62 = arith.constant 1.000000e+00 : f32
    %123 = vector.broadcast %cst_62 : f32 to vector<2x32xf32>
    %124 = arith.addf %123, %122 : vector<2x32xf32>
    %125 = arith.divf %123, %124 : vector<2x32xf32>
    %126 = vector.extract_strided_slice %111 {offsets = [0, 32], sizes = [2, 32], strides = [1, 1]} : vector<2x96xf32> to vector<2x32xf32>
    %127 = vector.extract_strided_slice %117 {offsets = [0, 32], sizes = [2, 32], strides = [1, 1]} : vector<2x96xf32> to vector<2x32xf32>
    %128 = arith.addf %126, %127 : vector<2x32xf32>
    %129 = arith.negf %128 : vector<2x32xf32>
    %130 = math.exp %129 : vector<2x32xf32>
    %cst_63 = arith.constant 1.000000e+00 : f32
    %131 = vector.broadcast %cst_63 : f32 to vector<2x32xf32>
    %132 = arith.addf %131, %130 : vector<2x32xf32>
    %133 = arith.divf %131, %132 : vector<2x32xf32>
    %134 = vector.extract_strided_slice %111 {offsets = [0, 64], sizes = [2, 32], strides = [1, 1]} : vector<2x96xf32> to vector<2x32xf32>
    %135 = vector.extract_strided_slice %117 {offsets = [0, 64], sizes = [2, 32], strides = [1, 1]} : vector<2x96xf32> to vector<2x32xf32>
    %136 = arith.mulf %125, %135 : vector<2x32xf32>
    %137 = arith.addf %134, %136 : vector<2x32xf32>
    %138 = math.tanh %137 : vector<2x32xf32>
    %cst_64 = arith.constant 1.000000e+00 : f32
    %139 = vector.broadcast %cst_64 : f32 to vector<2x32xf32>
    %140 = arith.subf %139, %133 : vector<2x32xf32>
    %141 = arith.mulf %140, %138 : vector<2x32xf32>
    %142 = arith.mulf %133, %73 : vector<2x32xf32>
    %143 = arith.addf %141, %142 : vector<2x32xf32>
    %144 = arith.truncf %103 : vector<2x32xf32> to vector<2x32xbf16>
    %cst_65 = arith.constant dense<0.000000e+00> : vector<2x96xf32>
    %145 = tpu.matmul %144, %35, %cst_65 {dimension_numbers = #tpu.dot_dimension_numbers<[1], [0], [0], [1], [0, 0, 1, 1], [], []>} : vector<2x32xbf16>, vector<32x96xbf16>, vector<2x96xf32> -> vector<2x96xf32>
    %146 = vector.broadcast %37 : vector<1x96xf32> to vector<2x96xf32>
    %147 = arith.addf %145, %146 : vector<2x96xf32>
    %148 = vector.extract_strided_slice %113 {offsets = [0, 0], sizes = [2, 32], strides = [1, 1]} : vector<2x96xf32> to vector<2x32xf32>
    %149 = vector.extract_strided_slice %147 {offsets = [0, 0], sizes = [2, 32], strides = [1, 1]} : vector<2x96xf32> to vector<2x32xf32>
    %150 = arith.addf %148, %149 : vector<2x32xf32>
    %151 = arith.negf %150 : vector<2x32xf32>
    %152 = math.exp %151 : vector<2x32xf32>
    %cst_66 = arith.constant 1.000000e+00 : f32
    %153 = vector.broadcast %cst_66 : f32 to vector<2x32xf32>
    %154 = arith.addf %153, %152 : vector<2x32xf32>
    %155 = arith.divf %153, %154 : vector<2x32xf32>
    %156 = vector.extract_strided_slice %113 {offsets = [0, 32], sizes = [2, 32], strides = [1, 1]} : vector<2x96xf32> to vector<2x32xf32>
    %157 = vector.extract_strided_slice %147 {offsets = [0, 32], sizes = [2, 32], strides = [1, 1]} : vector<2x96xf32> to vector<2x32xf32>
    %158 = arith.addf %156, %157 : vector<2x32xf32>
    %159 = arith.negf %158 : vector<2x32xf32>
    %160 = math.exp %159 : vector<2x32xf32>
    %cst_67 = arith.constant 1.000000e+00 : f32
    %161 = vector.broadcast %cst_67 : f32 to vector<2x32xf32>
    %162 = arith.addf %161, %160 : vector<2x32xf32>
    %163 = arith.divf %161, %162 : vector<2x32xf32>
    %164 = vector.extract_strided_slice %113 {offsets = [0, 64], sizes = [2, 32], strides = [1, 1]} : vector<2x96xf32> to vector<2x32xf32>
    %165 = vector.extract_strided_slice %147 {offsets = [0, 64], sizes = [2, 32], strides = [1, 1]} : vector<2x96xf32> to vector<2x32xf32>
    %166 = arith.mulf %155, %165 : vector<2x32xf32>
    %167 = arith.addf %164, %166 : vector<2x32xf32>
    %168 = math.tanh %167 : vector<2x32xf32>
    %cst_68 = arith.constant 1.000000e+00 : f32
    %169 = vector.broadcast %cst_68 : f32 to vector<2x32xf32>
    %170 = arith.subf %169, %163 : vector<2x32xf32>
    %171 = arith.mulf %170, %168 : vector<2x32xf32>
    %172 = arith.mulf %163, %103 : vector<2x32xf32>
    %173 = arith.addf %171, %172 : vector<2x32xf32>
    %c1_69 = arith.constant 1 : index
    %c0_70 = arith.constant 0 : index
    %c0_71 = arith.constant 0 : index
    %174 = vector.load %arg18[%c1_69, %c0_70, %c0_71] : memref<8x2x32xf32, #tpu.memory_space<vmem>>, vector<1x2x32xf32>
    %175 = vector.shape_cast %174 : vector<1x2x32xf32> to vector<2x32xf32>
    %176 = vector.shape_cast %143 : vector<2x32xf32> to vector<1x2x32xf32>
    tpu.vector_store %arg18[%c1_69, %c0_70, %c0_71], %176 {strides = array<i32>} : memref<8x2x32xf32, #tpu.memory_space<vmem>>, vector<1x2x32xf32>,
    %c6_72 = arith.constant 6 : index
    %c0_73 = arith.constant 0 : index
    %c0_74 = arith.constant 0 : index
    %177 = vector.load %arg19[%c6_72, %c0_73, %c0_74] : memref<8x2x32xf32, #tpu.memory_space<vmem>>, vector<1x2x32xf32>
    %178 = vector.shape_cast %177 : vector<1x2x32xf32> to vector<2x32xf32>
    %179 = vector.shape_cast %173 : vector<2x32xf32> to vector<1x2x32xf32>
    tpu.vector_store %arg19[%c6_72, %c0_73, %c0_74], %179 {strides = array<i32>} : memref<8x2x32xf32, #tpu.memory_space<vmem>>, vector<1x2x32xf32>,
    %c0_75 = arith.constant 0 : index
    %c2 = arith.constant 2 : index
    %c0_76 = arith.constant 0 : index
    %180 = vector.load %arg16[%c0_75, %c2, %c0_76] : memref<2x8x96xf32, #tpu.memory_space<vmem>>, vector<2x1x96xf32>
    %181 = vector.shape_cast %180 : vector<2x1x96xf32> to vector<2x96xf32>
    %c0_77 = arith.constant 0 : index
    %c5 = arith.constant 5 : index
    %c0_78 = arith.constant 0 : index
    %182 = vector.load %arg17[%c0_77, %c5, %c0_78] : memref<2x8x96xf32, #tpu.memory_space<vmem>>, vector<2x1x96xf32>
    %183 = vector.shape_cast %182 : vector<2x1x96xf32> to vector<2x96xf32>
    %184 = arith.truncf %143 : vector<2x32xf32> to vector<2x32xbf16>
    %cst_79 = arith.constant dense<0.000000e+00> : vector<2x96xf32>
    %185 = tpu.matmul %184, %34, %cst_79 {dimension_numbers = #tpu.dot_dimension_numbers<[1], [0], [0], [1], [0, 0, 1, 1], [], []>} : vector<2x32xbf16>, vector<32x96xbf16>, vector<2x96xf32> -> vector<2x96xf32>
    %186 = vector.broadcast %36 : vector<1x96xf32> to vector<2x96xf32>
    %187 = arith.addf %185, %186 : vector<2x96xf32>
    %188 = vector.extract_strided_slice %181 {offsets = [0, 0], sizes = [2, 32], strides = [1, 1]} : vector<2x96xf32> to vector<2x32xf32>
    %189 = vector.extract_strided_slice %187 {offsets = [0, 0], sizes = [2, 32], strides = [1, 1]} : vector<2x96xf32> to vector<2x32xf32>
    %190 = arith.addf %188, %189 : vector<2x32xf32>
    %191 = arith.negf %190 : vector<2x32xf32>
    %192 = math.exp %191 : vector<2x32xf32>
    %cst_80 = arith.constant 1.000000e+00 : f32
    %193 = vector.broadcast %cst_80 : f32 to vector<2x32xf32>
    %194 = arith.addf %193, %192 : vector<2x32xf32>
    %195 = arith.divf %193, %194 : vector<2x32xf32>
    %196 = vector.extract_strided_slice %181 {offsets = [0, 32], sizes = [2, 32], strides = [1, 1]} : vector<2x96xf32> to vector<2x32xf32>
    %197 = vector.extract_strided_slice %187 {offsets = [0, 32], sizes = [2, 32], strides = [1, 1]} : vector<2x96xf32> to vector<2x32xf32>
    %198 = arith.addf %196, %197 : vector<2x32xf32>
    %199 = arith.negf %198 : vector<2x32xf32>
    %200 = math.exp %199 : vector<2x32xf32>
    %cst_81 = arith.constant 1.000000e+00 : f32
    %201 = vector.broadcast %cst_81 : f32 to vector<2x32xf32>
    %202 = arith.addf %201, %200 : vector<2x32xf32>
    %203 = arith.divf %201, %202 : vector<2x32xf32>
    %204 = vector.extract_strided_slice %181 {offsets = [0, 64], sizes = [2, 32], strides = [1, 1]} : vector<2x96xf32> to vector<2x32xf32>
    %205 = vector.extract_strided_slice %187 {offsets = [0, 64], sizes = [2, 32], strides = [1, 1]} : vector<2x96xf32> to vector<2x32xf32>
    %206 = arith.mulf %195, %205 : vector<2x32xf32>
    %207 = arith.addf %204, %206 : vector<2x32xf32>
    %208 = math.tanh %207 : vector<2x32xf32>
    %cst_82 = arith.constant 1.000000e+00 : f32
    %209 = vector.broadcast %cst_82 : f32 to vector<2x32xf32>
    %210 = arith.subf %209, %203 : vector<2x32xf32>
    %211 = arith.mulf %210, %208 : vector<2x32xf32>
    %212 = arith.mulf %203, %143 : vector<2x32xf32>
    %213 = arith.addf %211, %212 : vector<2x32xf32>
    %214 = arith.truncf %173 : vector<2x32xf32> to vector<2x32xbf16>
    %cst_83 = arith.constant dense<0.000000e+00> : vector<2x96xf32>
    %215 = tpu.matmul %214, %35, %cst_83 {dimension_numbers = #tpu.dot_dimension_numbers<[1], [0], [0], [1], [0, 0, 1, 1], [], []>} : vector<2x32xbf16>, vector<32x96xbf16>, vector<2x96xf32> -> vector<2x96xf32>
    %216 = vector.broadcast %37 : vector<1x96xf32> to vector<2x96xf32>
    %217 = arith.addf %215, %216 : vector<2x96xf32>
    %218 = vector.extract_strided_slice %183 {offsets = [0, 0], sizes = [2, 32], strides = [1, 1]} : vector<2x96xf32> to vector<2x32xf32>
    %219 = vector.extract_strided_slice %217 {offsets = [0, 0], sizes = [2, 32], strides = [1, 1]} : vector<2x96xf32> to vector<2x32xf32>
    %220 = arith.addf %218, %219 : vector<2x32xf32>
    %221 = arith.negf %220 : vector<2x32xf32>
    %222 = math.exp %221 : vector<2x32xf32>
    %cst_84 = arith.constant 1.000000e+00 : f32
    %223 = vector.broadcast %cst_84 : f32 to vector<2x32xf32>
    %224 = arith.addf %223, %222 : vector<2x32xf32>
    %225 = arith.divf %223, %224 : vector<2x32xf32>
    %226 = vector.extract_strided_slice %183 {offsets = [0, 32], sizes = [2, 32], strides = [1, 1]} : vector<2x96xf32> to vector<2x32xf32>
    %227 = vector.extract_strided_slice %217 {offsets = [0, 32], sizes = [2, 32], strides = [1, 1]} : vector<2x96xf32> to vector<2x32xf32>
    %228 = arith.addf %226, %227 : vector<2x32xf32>
    %229 = arith.negf %228 : vector<2x32xf32>
    %230 = math.exp %229 : vector<2x32xf32>
    %cst_85 = arith.constant 1.000000e+00 : f32
    %231 = vector.broadcast %cst_85 : f32 to vector<2x32xf32>
    %232 = arith.addf %231, %230 : vector<2x32xf32>
    %233 = arith.divf %231, %232 : vector<2x32xf32>
    %234 = vector.extract_strided_slice %183 {offsets = [0, 64], sizes = [2, 32], strides = [1, 1]} : vector<2x96xf32> to vector<2x32xf32>
    %235 = vector.extract_strided_slice %217 {offsets = [0, 64], sizes = [2, 32], strides = [1, 1]} : vector<2x96xf32> to vector<2x32xf32>
    %236 = arith.mulf %225, %235 : vector<2x32xf32>
    %237 = arith.addf %234, %236 : vector<2x32xf32>
    %238 = math.tanh %237 : vector<2x32xf32>
    %cst_86 = arith.constant 1.000000e+00 : f32
    %239 = vector.broadcast %cst_86 : f32 to vector<2x32xf32>
    %240 = arith.subf %239, %233 : vector<2x32xf32>
    %241 = arith.mulf %240, %238 : vector<2x32xf32>
    %242 = arith.mulf %233, %173 : vector<2x32xf32>
    %243 = arith.addf %241, %242 : vector<2x32xf32>
    %c2_87 = arith.constant 2 : index
    %c0_88 = arith.constant 0 : index
    %c0_89 = arith.constant 0 : index
    %244 = vector.load %arg18[%c2_87, %c0_88, %c0_89] : memref<8x2x32xf32, #tpu.memory_space<vmem>>, vector<1x2x32xf32>
    %245 = vector.shape_cast %244 : vector<1x2x32xf32> to vector<2x32xf32>
    %246 = vector.shape_cast %213 : vector<2x32xf32> to vector<1x2x32xf32>
    tpu.vector_store %arg18[%c2_87, %c0_88, %c0_89], %246 {strides = array<i32>} : memref<8x2x32xf32, #tpu.memory_space<vmem>>, vector<1x2x32xf32>,
    %c5_90 = arith.constant 5 : index
    %c0_91 = arith.constant 0 : index
    %c0_92 = arith.constant 0 : index
    %247 = vector.load %arg19[%c5_90, %c0_91, %c0_92] : memref<8x2x32xf32, #tpu.memory_space<vmem>>, vector<1x2x32xf32>
    %248 = vector.shape_cast %247 : vector<1x2x32xf32> to vector<2x32xf32>
    %249 = vector.shape_cast %243 : vector<2x32xf32> to vector<1x2x32xf32>
    tpu.vector_store %arg19[%c5_90, %c0_91, %c0_92], %249 {strides = array<i32>} : memref<8x2x32xf32, #tpu.memory_space<vmem>>, vector<1x2x32xf32>,
    %c0_93 = arith.constant 0 : index
    %c3 = arith.constant 3 : index
    %c0_94 = arith.constant 0 : index
    %250 = vector.load %arg16[%c0_93, %c3, %c0_94] : memref<2x8x96xf32, #tpu.memory_space<vmem>>, vector<2x1x96xf32>
    %251 = vector.shape_cast %250 : vector<2x1x96xf32> to vector<2x96xf32>
    %c0_95 = arith.constant 0 : index
    %c4 = arith.constant 4 : index
    %c0_96 = arith.constant 0 : index
    %252 = vector.load %arg17[%c0_95, %c4, %c0_96] : memref<2x8x96xf32, #tpu.memory_space<vmem>>, vector<2x1x96xf32>
    %253 = vector.shape_cast %252 : vector<2x1x96xf32> to vector<2x96xf32>
    %254 = arith.truncf %213 : vector<2x32xf32> to vector<2x32xbf16>
    %cst_97 = arith.constant dense<0.000000e+00> : vector<2x96xf32>
    %255 = tpu.matmul %254, %34, %cst_97 {dimension_numbers = #tpu.dot_dimension_numbers<[1], [0], [0], [1], [0, 0, 1, 1], [], []>} : vector<2x32xbf16>, vector<32x96xbf16>, vector<2x96xf32> -> vector<2x96xf32>
    %256 = vector.broadcast %36 : vector<1x96xf32> to vector<2x96xf32>
    %257 = arith.addf %255, %256 : vector<2x96xf32>
    %258 = vector.extract_strided_slice %251 {offsets = [0, 0], sizes = [2, 32], strides = [1, 1]} : vector<2x96xf32> to vector<2x32xf32>
    %259 = vector.extract_strided_slice %257 {offsets = [0, 0], sizes = [2, 32], strides = [1, 1]} : vector<2x96xf32> to vector<2x32xf32>
    %260 = arith.addf %258, %259 : vector<2x32xf32>
    %261 = arith.negf %260 : vector<2x32xf32>
    %262 = math.exp %261 : vector<2x32xf32>
    %cst_98 = arith.constant 1.000000e+00 : f32
    %263 = vector.broadcast %cst_98 : f32 to vector<2x32xf32>
    %264 = arith.addf %263, %262 : vector<2x32xf32>
    %265 = arith.divf %263, %264 : vector<2x32xf32>
    %266 = vector.extract_strided_slice %251 {offsets = [0, 32], sizes = [2, 32], strides = [1, 1]} : vector<2x96xf32> to vector<2x32xf32>
    %267 = vector.extract_strided_slice %257 {offsets = [0, 32], sizes = [2, 32], strides = [1, 1]} : vector<2x96xf32> to vector<2x32xf32>
    %268 = arith.addf %266, %267 : vector<2x32xf32>
    %269 = arith.negf %268 : vector<2x32xf32>
    %270 = math.exp %269 : vector<2x32xf32>
    %cst_99 = arith.constant 1.000000e+00 : f32
    %271 = vector.broadcast %cst_99 : f32 to vector<2x32xf32>
    %272 = arith.addf %271, %270 : vector<2x32xf32>
    %273 = arith.divf %271, %272 : vector<2x32xf32>
    %274 = vector.extract_strided_slice %251 {offsets = [0, 64], sizes = [2, 32], strides = [1, 1]} : vector<2x96xf32> to vector<2x32xf32>
    %275 = vector.extract_strided_slice %257 {offsets = [0, 64], sizes = [2, 32], strides = [1, 1]} : vector<2x96xf32> to vector<2x32xf32>
    %276 = arith.mulf %265, %275 : vector<2x32xf32>
    %277 = arith.addf %274, %276 : vector<2x32xf32>
    %278 = math.tanh %277 : vector<2x32xf32>
    %cst_100 = arith.constant 1.000000e+00 : f32
    %279 = vector.broadcast %cst_100 : f32 to vector<2x32xf32>
    %280 = arith.subf %279, %273 : vector<2x32xf32>
    %281 = arith.mulf %280, %278 : vector<2x32xf32>
    %282 = arith.mulf %273, %213 : vector<2x32xf32>
    %283 = arith.addf %281, %282 : vector<2x32xf32>
    %284 = arith.truncf %243 : vector<2x32xf32> to vector<2x32xbf16>
    %cst_101 = arith.constant dense<0.000000e+00> : vector<2x96xf32>
    %285 = tpu.matmul %284, %35, %cst_101 {dimension_numbers = #tpu.dot_dimension_numbers<[1], [0], [0], [1], [0, 0, 1, 1], [], []>} : vector<2x32xbf16>, vector<32x96xbf16>, vector<2x96xf32> -> vector<2x96xf32>
    %286 = vector.broadcast %37 : vector<1x96xf32> to vector<2x96xf32>
    %287 = arith.addf %285, %286 : vector<2x96xf32>
    %288 = vector.extract_strided_slice %253 {offsets = [0, 0], sizes = [2, 32], strides = [1, 1]} : vector<2x96xf32> to vector<2x32xf32>
    %289 = vector.extract_strided_slice %287 {offsets = [0, 0], sizes = [2, 32], strides = [1, 1]} : vector<2x96xf32> to vector<2x32xf32>
    %290 = arith.addf %288, %289 : vector<2x32xf32>
    %291 = arith.negf %290 : vector<2x32xf32>
    %292 = math.exp %291 : vector<2x32xf32>
    %cst_102 = arith.constant 1.000000e+00 : f32
    %293 = vector.broadcast %cst_102 : f32 to vector<2x32xf32>
    %294 = arith.addf %293, %292 : vector<2x32xf32>
    %295 = arith.divf %293, %294 : vector<2x32xf32>
    %296 = vector.extract_strided_slice %253 {offsets = [0, 32], sizes = [2, 32], strides = [1, 1]} : vector<2x96xf32> to vector<2x32xf32>
    %297 = vector.extract_strided_slice %287 {offsets = [0, 32], sizes = [2, 32], strides = [1, 1]} : vector<2x96xf32> to vector<2x32xf32>
    %298 = arith.addf %296, %297 : vector<2x32xf32>
    %299 = arith.negf %298 : vector<2x32xf32>
    %300 = math.exp %299 : vector<2x32xf32>
    %cst_103 = arith.constant 1.000000e+00 : f32
    %301 = vector.broadcast %cst_103 : f32 to vector<2x32xf32>
    %302 = arith.addf %301, %300 : vector<2x32xf32>
    %303 = arith.divf %301, %302 : vector<2x32xf32>
    %304 = vector.extract_strided_slice %253 {offsets = [0, 64], sizes = [2, 32], strides = [1, 1]} : vector<2x96xf32> to vector<2x32xf32>
    %305 = vector.extract_strided_slice %287 {offsets = [0, 64], sizes = [2, 32], strides = [1, 1]} : vector<2x96xf32> to vector<2x32xf32>
    %306 = arith.mulf %295, %305 : vector<2x32xf32>
    %307 = arith.addf %304, %306 : vector<2x32xf32>
    %308 = math.tanh %307 : vector<2x32xf32>
    %cst_104 = arith.constant 1.000000e+00 : f32
    %309 = vector.broadcast %cst_104 : f32 to vector<2x32xf32>
    %310 = arith.subf %309, %303 : vector<2x32xf32>
    %311 = arith.mulf %310, %308 : vector<2x32xf32>
    %312 = arith.mulf %303, %243 : vector<2x32xf32>
    %313 = arith.addf %311, %312 : vector<2x32xf32>
    %c3_105 = arith.constant 3 : index
    %c0_106 = arith.constant 0 : index
    %c0_107 = arith.constant 0 : index
    %314 = vector.load %arg18[%c3_105, %c0_106, %c0_107] : memref<8x2x32xf32, #tpu.memory_space<vmem>>, vector<1x2x32xf32>
    %315 = vector.shape_cast %314 : vector<1x2x32xf32> to vector<2x32xf32>
    %316 = vector.shape_cast %283 : vector<2x32xf32> to vector<1x2x32xf32>
    tpu.vector_store %arg18[%c3_105, %c0_106, %c0_107], %316 {strides = array<i32>} : memref<8x2x32xf32, #tpu.memory_space<vmem>>, vector<1x2x32xf32>,
    %c4_108 = arith.constant 4 : index
    %c0_109 = arith.constant 0 : index
    %c0_110 = arith.constant 0 : index
    %317 = vector.load %arg19[%c4_108, %c0_109, %c0_110] : memref<8x2x32xf32, #tpu.memory_space<vmem>>, vector<1x2x32xf32>
    %318 = vector.shape_cast %317 : vector<1x2x32xf32> to vector<2x32xf32>
    %319 = vector.shape_cast %313 : vector<2x32xf32> to vector<1x2x32xf32>
    tpu.vector_store %arg19[%c4_108, %c0_109, %c0_110], %319 {strides = array<i32>} : memref<8x2x32xf32, #tpu.memory_space<vmem>>, vector<1x2x32xf32>,
    %c0_111 = arith.constant 0 : index
    %c4_112 = arith.constant 4 : index
    %c0_113 = arith.constant 0 : index
    %320 = vector.load %arg16[%c0_111, %c4_112, %c0_113] : memref<2x8x96xf32, #tpu.memory_space<vmem>>, vector<2x1x96xf32>
    %321 = vector.shape_cast %320 : vector<2x1x96xf32> to vector<2x96xf32>
    %c0_114 = arith.constant 0 : index
    %c3_115 = arith.constant 3 : index
    %c0_116 = arith.constant 0 : index
    %322 = vector.load %arg17[%c0_114, %c3_115, %c0_116] : memref<2x8x96xf32, #tpu.memory_space<vmem>>, vector<2x1x96xf32>
    %323 = vector.shape_cast %322 : vector<2x1x96xf32> to vector<2x96xf32>
    %324 = arith.truncf %283 : vector<2x32xf32> to vector<2x32xbf16>
    %cst_117 = arith.constant dense<0.000000e+00> : vector<2x96xf32>
    %325 = tpu.matmul %324, %34, %cst_117 {dimension_numbers = #tpu.dot_dimension_numbers<[1], [0], [0], [1], [0, 0, 1, 1], [], []>} : vector<2x32xbf16>, vector<32x96xbf16>, vector<2x96xf32> -> vector<2x96xf32>
    %326 = vector.broadcast %36 : vector<1x96xf32> to vector<2x96xf32>
    %327 = arith.addf %325, %326 : vector<2x96xf32>
    %328 = vector.extract_strided_slice %321 {offsets = [0, 0], sizes = [2, 32], strides = [1, 1]} : vector<2x96xf32> to vector<2x32xf32>
    %329 = vector.extract_strided_slice %327 {offsets = [0, 0], sizes = [2, 32], strides = [1, 1]} : vector<2x96xf32> to vector<2x32xf32>
    %330 = arith.addf %328, %329 : vector<2x32xf32>
    %331 = arith.negf %330 : vector<2x32xf32>
    %332 = math.exp %331 : vector<2x32xf32>
    %cst_118 = arith.constant 1.000000e+00 : f32
    %333 = vector.broadcast %cst_118 : f32 to vector<2x32xf32>
    %334 = arith.addf %333, %332 : vector<2x32xf32>
    %335 = arith.divf %333, %334 : vector<2x32xf32>
    %336 = vector.extract_strided_slice %321 {offsets = [0, 32], sizes = [2, 32], strides = [1, 1]} : vector<2x96xf32> to vector<2x32xf32>
    %337 = vector.extract_strided_slice %327 {offsets = [0, 32], sizes = [2, 32], strides = [1, 1]} : vector<2x96xf32> to vector<2x32xf32>
    %338 = arith.addf %336, %337 : vector<2x32xf32>
    %339 = arith.negf %338 : vector<2x32xf32>
    %340 = math.exp %339 : vector<2x32xf32>
    %cst_119 = arith.constant 1.000000e+00 : f32
    %341 = vector.broadcast %cst_119 : f32 to vector<2x32xf32>
    %342 = arith.addf %341, %340 : vector<2x32xf32>
    %343 = arith.divf %341, %342 : vector<2x32xf32>
    %344 = vector.extract_strided_slice %321 {offsets = [0, 64], sizes = [2, 32], strides = [1, 1]} : vector<2x96xf32> to vector<2x32xf32>
    %345 = vector.extract_strided_slice %327 {offsets = [0, 64], sizes = [2, 32], strides = [1, 1]} : vector<2x96xf32> to vector<2x32xf32>
    %346 = arith.mulf %335, %345 : vector<2x32xf32>
    %347 = arith.addf %344, %346 : vector<2x32xf32>
    %348 = math.tanh %347 : vector<2x32xf32>
    %cst_120 = arith.constant 1.000000e+00 : f32
    %349 = vector.broadcast %cst_120 : f32 to vector<2x32xf32>
    %350 = arith.subf %349, %343 : vector<2x32xf32>
    %351 = arith.mulf %350, %348 : vector<2x32xf32>
    %352 = arith.mulf %343, %283 : vector<2x32xf32>
    %353 = arith.addf %351, %352 : vector<2x32xf32>
    %354 = arith.truncf %313 : vector<2x32xf32> to vector<2x32xbf16>
    %cst_121 = arith.constant dense<0.000000e+00> : vector<2x96xf32>
    %355 = tpu.matmul %354, %35, %cst_121 {dimension_numbers = #tpu.dot_dimension_numbers<[1], [0], [0], [1], [0, 0, 1, 1], [], []>} : vector<2x32xbf16>, vector<32x96xbf16>, vector<2x96xf32> -> vector<2x96xf32>
    %356 = vector.broadcast %37 : vector<1x96xf32> to vector<2x96xf32>
    %357 = arith.addf %355, %356 : vector<2x96xf32>
    %358 = vector.extract_strided_slice %323 {offsets = [0, 0], sizes = [2, 32], strides = [1, 1]} : vector<2x96xf32> to vector<2x32xf32>
    %359 = vector.extract_strided_slice %357 {offsets = [0, 0], sizes = [2, 32], strides = [1, 1]} : vector<2x96xf32> to vector<2x32xf32>
    %360 = arith.addf %358, %359 : vector<2x32xf32>
    %361 = arith.negf %360 : vector<2x32xf32>
    %362 = math.exp %361 : vector<2x32xf32>
    %cst_122 = arith.constant 1.000000e+00 : f32
    %363 = vector.broadcast %cst_122 : f32 to vector<2x32xf32>
    %364 = arith.addf %363, %362 : vector<2x32xf32>
    %365 = arith.divf %363, %364 : vector<2x32xf32>
    %366 = vector.extract_strided_slice %323 {offsets = [0, 32], sizes = [2, 32], strides = [1, 1]} : vector<2x96xf32> to vector<2x32xf32>
    %367 = vector.extract_strided_slice %357 {offsets = [0, 32], sizes = [2, 32], strides = [1, 1]} : vector<2x96xf32> to vector<2x32xf32>
    %368 = arith.addf %366, %367 : vector<2x32xf32>
    %369 = arith.negf %368 : vector<2x32xf32>
    %370 = math.exp %369 : vector<2x32xf32>
    %cst_123 = arith.constant 1.000000e+00 : f32
    %371 = vector.broadcast %cst_123 : f32 to vector<2x32xf32>
    %372 = arith.addf %371, %370 : vector<2x32xf32>
    %373 = arith.divf %371, %372 : vector<2x32xf32>
    %374 = vector.extract_strided_slice %323 {offsets = [0, 64], sizes = [2, 32], strides = [1, 1]} : vector<2x96xf32> to vector<2x32xf32>
    %375 = vector.extract_strided_slice %357 {offsets = [0, 64], sizes = [2, 32], strides = [1, 1]} : vector<2x96xf32> to vector<2x32xf32>
    %376 = arith.mulf %365, %375 : vector<2x32xf32>
    %377 = arith.addf %374, %376 : vector<2x32xf32>
    %378 = math.tanh %377 : vector<2x32xf32>
    %cst_124 = arith.constant 1.000000e+00 : f32
    %379 = vector.broadcast %cst_124 : f32 to vector<2x32xf32>
    %380 = arith.subf %379, %373 : vector<2x32xf32>
    %381 = arith.mulf %380, %378 : vector<2x32xf32>
    %382 = arith.mulf %373, %313 : vector<2x32xf32>
    %383 = arith.addf %381, %382 : vector<2x32xf32>
    %c4_125 = arith.constant 4 : index
    %c0_126 = arith.constant 0 : index
    %c0_127 = arith.constant 0 : index
    %384 = vector.load %arg18[%c4_125, %c0_126, %c0_127] : memref<8x2x32xf32, #tpu.memory_space<vmem>>, vector<1x2x32xf32>
    %385 = vector.shape_cast %384 : vector<1x2x32xf32> to vector<2x32xf32>
    %386 = vector.shape_cast %353 : vector<2x32xf32> to vector<1x2x32xf32>
    tpu.vector_store %arg18[%c4_125, %c0_126, %c0_127], %386 {strides = array<i32>} : memref<8x2x32xf32, #tpu.memory_space<vmem>>, vector<1x2x32xf32>,
    %c3_128 = arith.constant 3 : index
    %c0_129 = arith.constant 0 : index
    %c0_130 = arith.constant 0 : index
    %387 = vector.load %arg19[%c3_128, %c0_129, %c0_130] : memref<8x2x32xf32, #tpu.memory_space<vmem>>, vector<1x2x32xf32>
    %388 = vector.shape_cast %387 : vector<1x2x32xf32> to vector<2x32xf32>
    %389 = vector.shape_cast %383 : vector<2x32xf32> to vector<1x2x32xf32>
    tpu.vector_store %arg19[%c3_128, %c0_129, %c0_130], %389 {strides = array<i32>} : memref<8x2x32xf32, #tpu.memory_space<vmem>>, vector<1x2x32xf32>,
    %c0_131 = arith.constant 0 : index
    %c5_132 = arith.constant 5 : index
    %c0_133 = arith.constant 0 : index
    %390 = vector.load %arg16[%c0_131, %c5_132, %c0_133] : memref<2x8x96xf32, #tpu.memory_space<vmem>>, vector<2x1x96xf32>
    %391 = vector.shape_cast %390 : vector<2x1x96xf32> to vector<2x96xf32>
    %c0_134 = arith.constant 0 : index
    %c2_135 = arith.constant 2 : index
    %c0_136 = arith.constant 0 : index
    %392 = vector.load %arg17[%c0_134, %c2_135, %c0_136] : memref<2x8x96xf32, #tpu.memory_space<vmem>>, vector<2x1x96xf32>
    %393 = vector.shape_cast %392 : vector<2x1x96xf32> to vector<2x96xf32>
    %394 = arith.truncf %353 : vector<2x32xf32> to vector<2x32xbf16>
    %cst_137 = arith.constant dense<0.000000e+00> : vector<2x96xf32>
    %395 = tpu.matmul %394, %34, %cst_137 {dimension_numbers = #tpu.dot_dimension_numbers<[1], [0], [0], [1], [0, 0, 1, 1], [], []>} : vector<2x32xbf16>, vector<32x96xbf16>, vector<2x96xf32> -> vector<2x96xf32>
    %396 = vector.broadcast %36 : vector<1x96xf32> to vector<2x96xf32>
    %397 = arith.addf %395, %396 : vector<2x96xf32>
    %398 = vector.extract_strided_slice %391 {offsets = [0, 0], sizes = [2, 32], strides = [1, 1]} : vector<2x96xf32> to vector<2x32xf32>
    %399 = vector.extract_strided_slice %397 {offsets = [0, 0], sizes = [2, 32], strides = [1, 1]} : vector<2x96xf32> to vector<2x32xf32>
    %400 = arith.addf %398, %399 : vector<2x32xf32>
    %401 = arith.negf %400 : vector<2x32xf32>
    %402 = math.exp %401 : vector<2x32xf32>
    %cst_138 = arith.constant 1.000000e+00 : f32
    %403 = vector.broadcast %cst_138 : f32 to vector<2x32xf32>
    %404 = arith.addf %403, %402 : vector<2x32xf32>
    %405 = arith.divf %403, %404 : vector<2x32xf32>
    %406 = vector.extract_strided_slice %391 {offsets = [0, 32], sizes = [2, 32], strides = [1, 1]} : vector<2x96xf32> to vector<2x32xf32>
    %407 = vector.extract_strided_slice %397 {offsets = [0, 32], sizes = [2, 32], strides = [1, 1]} : vector<2x96xf32> to vector<2x32xf32>
    %408 = arith.addf %406, %407 : vector<2x32xf32>
    %409 = arith.negf %408 : vector<2x32xf32>
    %410 = math.exp %409 : vector<2x32xf32>
    %cst_139 = arith.constant 1.000000e+00 : f32
    %411 = vector.broadcast %cst_139 : f32 to vector<2x32xf32>
    %412 = arith.addf %411, %410 : vector<2x32xf32>
    %413 = arith.divf %411, %412 : vector<2x32xf32>
    %414 = vector.extract_strided_slice %391 {offsets = [0, 64], sizes = [2, 32], strides = [1, 1]} : vector<2x96xf32> to vector<2x32xf32>
    %415 = vector.extract_strided_slice %397 {offsets = [0, 64], sizes = [2, 32], strides = [1, 1]} : vector<2x96xf32> to vector<2x32xf32>
    %416 = arith.mulf %405, %415 : vector<2x32xf32>
    %417 = arith.addf %414, %416 : vector<2x32xf32>
    %418 = math.tanh %417 : vector<2x32xf32>
    %cst_140 = arith.constant 1.000000e+00 : f32
    %419 = vector.broadcast %cst_140 : f32 to vector<2x32xf32>
    %420 = arith.subf %419, %413 : vector<2x32xf32>
    %421 = arith.mulf %420, %418 : vector<2x32xf32>
    %422 = arith.mulf %413, %353 : vector<2x32xf32>
    %423 = arith.addf %421, %422 : vector<2x32xf32>
    %424 = arith.truncf %383 : vector<2x32xf32> to vector<2x32xbf16>
    %cst_141 = arith.constant dense<0.000000e+00> : vector<2x96xf32>
    %425 = tpu.matmul %424, %35, %cst_141 {dimension_numbers = #tpu.dot_dimension_numbers<[1], [0], [0], [1], [0, 0, 1, 1], [], []>} : vector<2x32xbf16>, vector<32x96xbf16>, vector<2x96xf32> -> vector<2x96xf32>
    %426 = vector.broadcast %37 : vector<1x96xf32> to vector<2x96xf32>
    %427 = arith.addf %425, %426 : vector<2x96xf32>
    %428 = vector.extract_strided_slice %393 {offsets = [0, 0], sizes = [2, 32], strides = [1, 1]} : vector<2x96xf32> to vector<2x32xf32>
    %429 = vector.extract_strided_slice %427 {offsets = [0, 0], sizes = [2, 32], strides = [1, 1]} : vector<2x96xf32> to vector<2x32xf32>
    %430 = arith.addf %428, %429 : vector<2x32xf32>
    %431 = arith.negf %430 : vector<2x32xf32>
    %432 = math.exp %431 : vector<2x32xf32>
    %cst_142 = arith.constant 1.000000e+00 : f32
    %433 = vector.broadcast %cst_142 : f32 to vector<2x32xf32>
    %434 = arith.addf %433, %432 : vector<2x32xf32>
    %435 = arith.divf %433, %434 : vector<2x32xf32>
    %436 = vector.extract_strided_slice %393 {offsets = [0, 32], sizes = [2, 32], strides = [1, 1]} : vector<2x96xf32> to vector<2x32xf32>
    %437 = vector.extract_strided_slice %427 {offsets = [0, 32], sizes = [2, 32], strides = [1, 1]} : vector<2x96xf32> to vector<2x32xf32>
    %438 = arith.addf %436, %437 : vector<2x32xf32>
    %439 = arith.negf %438 : vector<2x32xf32>
    %440 = math.exp %439 : vector<2x32xf32>
    %cst_143 = arith.constant 1.000000e+00 : f32
    %441 = vector.broadcast %cst_143 : f32 to vector<2x32xf32>
    %442 = arith.addf %441, %440 : vector<2x32xf32>
    %443 = arith.divf %441, %442 : vector<2x32xf32>
    %444 = vector.extract_strided_slice %393 {offsets = [0, 64], sizes = [2, 32], strides = [1, 1]} : vector<2x96xf32> to vector<2x32xf32>
    %445 = vector.extract_strided_slice %427 {offsets = [0, 64], sizes = [2, 32], strides = [1, 1]} : vector<2x96xf32> to vector<2x32xf32>
    %446 = arith.mulf %435, %445 : vector<2x32xf32>
    %447 = arith.addf %444, %446 : vector<2x32xf32>
    %448 = math.tanh %447 : vector<2x32xf32>
    %cst_144 = arith.constant 1.000000e+00 : f32
    %449 = vector.broadcast %cst_144 : f32 to vector<2x32xf32>
    %450 = arith.subf %449, %443 : vector<2x32xf32>
    %451 = arith.mulf %450, %448 : vector<2x32xf32>
    %452 = arith.mulf %443, %383 : vector<2x32xf32>
    %453 = arith.addf %451, %452 : vector<2x32xf32>
    %c5_145 = arith.constant 5 : index
    %c0_146 = arith.constant 0 : index
    %c0_147 = arith.constant 0 : index
    %454 = vector.load %arg18[%c5_145, %c0_146, %c0_147] : memref<8x2x32xf32, #tpu.memory_space<vmem>>, vector<1x2x32xf32>
    %455 = vector.shape_cast %454 : vector<1x2x32xf32> to vector<2x32xf32>
    %456 = vector.shape_cast %423 : vector<2x32xf32> to vector<1x2x32xf32>
    tpu.vector_store %arg18[%c5_145, %c0_146, %c0_147], %456 {strides = array<i32>} : memref<8x2x32xf32, #tpu.memory_space<vmem>>, vector<1x2x32xf32>,
    %c2_148 = arith.constant 2 : index
    %c0_149 = arith.constant 0 : index
    %c0_150 = arith.constant 0 : index
    %457 = vector.load %arg19[%c2_148, %c0_149, %c0_150] : memref<8x2x32xf32, #tpu.memory_space<vmem>>, vector<1x2x32xf32>
    %458 = vector.shape_cast %457 : vector<1x2x32xf32> to vector<2x32xf32>
    %459 = vector.shape_cast %453 : vector<2x32xf32> to vector<1x2x32xf32>
    tpu.vector_store %arg19[%c2_148, %c0_149, %c0_150], %459 {strides = array<i32>} : memref<8x2x32xf32, #tpu.memory_space<vmem>>, vector<1x2x32xf32>,
    %c0_151 = arith.constant 0 : index
    %c6_152 = arith.constant 6 : index
    %c0_153 = arith.constant 0 : index
    %460 = vector.load %arg16[%c0_151, %c6_152, %c0_153] : memref<2x8x96xf32, #tpu.memory_space<vmem>>, vector<2x1x96xf32>
    %461 = vector.shape_cast %460 : vector<2x1x96xf32> to vector<2x96xf32>
    %c0_154 = arith.constant 0 : index
    %c1_155 = arith.constant 1 : index
    %c0_156 = arith.constant 0 : index
    %462 = vector.load %arg17[%c0_154, %c1_155, %c0_156] : memref<2x8x96xf32, #tpu.memory_space<vmem>>, vector<2x1x96xf32>
    %463 = vector.shape_cast %462 : vector<2x1x96xf32> to vector<2x96xf32>
    %464 = arith.truncf %423 : vector<2x32xf32> to vector<2x32xbf16>
    %cst_157 = arith.constant dense<0.000000e+00> : vector<2x96xf32>
    %465 = tpu.matmul %464, %34, %cst_157 {dimension_numbers = #tpu.dot_dimension_numbers<[1], [0], [0], [1], [0, 0, 1, 1], [], []>} : vector<2x32xbf16>, vector<32x96xbf16>, vector<2x96xf32> -> vector<2x96xf32>
    %466 = vector.broadcast %36 : vector<1x96xf32> to vector<2x96xf32>
    %467 = arith.addf %465, %466 : vector<2x96xf32>
    %468 = vector.extract_strided_slice %461 {offsets = [0, 0], sizes = [2, 32], strides = [1, 1]} : vector<2x96xf32> to vector<2x32xf32>
    %469 = vector.extract_strided_slice %467 {offsets = [0, 0], sizes = [2, 32], strides = [1, 1]} : vector<2x96xf32> to vector<2x32xf32>
    %470 = arith.addf %468, %469 : vector<2x32xf32>
    %471 = arith.negf %470 : vector<2x32xf32>
    %472 = math.exp %471 : vector<2x32xf32>
    %cst_158 = arith.constant 1.000000e+00 : f32
    %473 = vector.broadcast %cst_158 : f32 to vector<2x32xf32>
    %474 = arith.addf %473, %472 : vector<2x32xf32>
    %475 = arith.divf %473, %474 : vector<2x32xf32>
    %476 = vector.extract_strided_slice %461 {offsets = [0, 32], sizes = [2, 32], strides = [1, 1]} : vector<2x96xf32> to vector<2x32xf32>
    %477 = vector.extract_strided_slice %467 {offsets = [0, 32], sizes = [2, 32], strides = [1, 1]} : vector<2x96xf32> to vector<2x32xf32>
    %478 = arith.addf %476, %477 : vector<2x32xf32>
    %479 = arith.negf %478 : vector<2x32xf32>
    %480 = math.exp %479 : vector<2x32xf32>
    %cst_159 = arith.constant 1.000000e+00 : f32
    %481 = vector.broadcast %cst_159 : f32 to vector<2x32xf32>
    %482 = arith.addf %481, %480 : vector<2x32xf32>
    %483 = arith.divf %481, %482 : vector<2x32xf32>
    %484 = vector.extract_strided_slice %461 {offsets = [0, 64], sizes = [2, 32], strides = [1, 1]} : vector<2x96xf32> to vector<2x32xf32>
    %485 = vector.extract_strided_slice %467 {offsets = [0, 64], sizes = [2, 32], strides = [1, 1]} : vector<2x96xf32> to vector<2x32xf32>
    %486 = arith.mulf %475, %485 : vector<2x32xf32>
    %487 = arith.addf %484, %486 : vector<2x32xf32>
    %488 = math.tanh %487 : vector<2x32xf32>
    %cst_160 = arith.constant 1.000000e+00 : f32
    %489 = vector.broadcast %cst_160 : f32 to vector<2x32xf32>
    %490 = arith.subf %489, %483 : vector<2x32xf32>
    %491 = arith.mulf %490, %488 : vector<2x32xf32>
    %492 = arith.mulf %483, %423 : vector<2x32xf32>
    %493 = arith.addf %491, %492 : vector<2x32xf32>
    %494 = arith.truncf %453 : vector<2x32xf32> to vector<2x32xbf16>
    %cst_161 = arith.constant dense<0.000000e+00> : vector<2x96xf32>
    %495 = tpu.matmul %494, %35, %cst_161 {dimension_numbers = #tpu.dot_dimension_numbers<[1], [0], [0], [1], [0, 0, 1, 1], [], []>} : vector<2x32xbf16>, vector<32x96xbf16>, vector<2x96xf32> -> vector<2x96xf32>
    %496 = vector.broadcast %37 : vector<1x96xf32> to vector<2x96xf32>
    %497 = arith.addf %495, %496 : vector<2x96xf32>
    %498 = vector.extract_strided_slice %463 {offsets = [0, 0], sizes = [2, 32], strides = [1, 1]} : vector<2x96xf32> to vector<2x32xf32>
    %499 = vector.extract_strided_slice %497 {offsets = [0, 0], sizes = [2, 32], strides = [1, 1]} : vector<2x96xf32> to vector<2x32xf32>
    %500 = arith.addf %498, %499 : vector<2x32xf32>
    %501 = arith.negf %500 : vector<2x32xf32>
    %502 = math.exp %501 : vector<2x32xf32>
    %cst_162 = arith.constant 1.000000e+00 : f32
    %503 = vector.broadcast %cst_162 : f32 to vector<2x32xf32>
    %504 = arith.addf %503, %502 : vector<2x32xf32>
    %505 = arith.divf %503, %504 : vector<2x32xf32>
    %506 = vector.extract_strided_slice %463 {offsets = [0, 32], sizes = [2, 32], strides = [1, 1]} : vector<2x96xf32> to vector<2x32xf32>
    %507 = vector.extract_strided_slice %497 {offsets = [0, 32], sizes = [2, 32], strides = [1, 1]} : vector<2x96xf32> to vector<2x32xf32>
    %508 = arith.addf %506, %507 : vector<2x32xf32>
    %509 = arith.negf %508 : vector<2x32xf32>
    %510 = math.exp %509 : vector<2x32xf32>
    %cst_163 = arith.constant 1.000000e+00 : f32
    %511 = vector.broadcast %cst_163 : f32 to vector<2x32xf32>
    %512 = arith.addf %511, %510 : vector<2x32xf32>
    %513 = arith.divf %511, %512 : vector<2x32xf32>
    %514 = vector.extract_strided_slice %463 {offsets = [0, 64], sizes = [2, 32], strides = [1, 1]} : vector<2x96xf32> to vector<2x32xf32>
    %515 = vector.extract_strided_slice %497 {offsets = [0, 64], sizes = [2, 32], strides = [1, 1]} : vector<2x96xf32> to vector<2x32xf32>
    %516 = arith.mulf %505, %515 : vector<2x32xf32>
    %517 = arith.addf %514, %516 : vector<2x32xf32>
    %518 = math.tanh %517 : vector<2x32xf32>
    %cst_164 = arith.constant 1.000000e+00 : f32
    %519 = vector.broadcast %cst_164 : f32 to vector<2x32xf32>
    %520 = arith.subf %519, %513 : vector<2x32xf32>
    %521 = arith.mulf %520, %518 : vector<2x32xf32>
    %522 = arith.mulf %513, %453 : vector<2x32xf32>
    %523 = arith.addf %521, %522 : vector<2x32xf32>
    %c6_165 = arith.constant 6 : index
    %c0_166 = arith.constant 0 : index
    %c0_167 = arith.constant 0 : index
    %524 = vector.load %arg18[%c6_165, %c0_166, %c0_167] : memref<8x2x32xf32, #tpu.memory_space<vmem>>, vector<1x2x32xf32>
    %525 = vector.shape_cast %524 : vector<1x2x32xf32> to vector<2x32xf32>
    %526 = vector.shape_cast %493 : vector<2x32xf32> to vector<1x2x32xf32>
    tpu.vector_store %arg18[%c6_165, %c0_166, %c0_167], %526 {strides = array<i32>} : memref<8x2x32xf32, #tpu.memory_space<vmem>>, vector<1x2x32xf32>,
    %c1_168 = arith.constant 1 : index
    %c0_169 = arith.constant 0 : index
    %c0_170 = arith.constant 0 : index
    %527 = vector.load %arg19[%c1_168, %c0_169, %c0_170] : memref<8x2x32xf32, #tpu.memory_space<vmem>>, vector<1x2x32xf32>
    %528 = vector.shape_cast %527 : vector<1x2x32xf32> to vector<2x32xf32>
    %529 = vector.shape_cast %523 : vector<2x32xf32> to vector<1x2x32xf32>
    tpu.vector_store %arg19[%c1_168, %c0_169, %c0_170], %529 {strides = array<i32>} : memref<8x2x32xf32, #tpu.memory_space<vmem>>, vector<1x2x32xf32>,
    %c0_171 = arith.constant 0 : index
    %c7_172 = arith.constant 7 : index
    %c0_173 = arith.constant 0 : index
    %530 = vector.load %arg16[%c0_171, %c7_172, %c0_173] : memref<2x8x96xf32, #tpu.memory_space<vmem>>, vector<2x1x96xf32>
    %531 = vector.shape_cast %530 : vector<2x1x96xf32> to vector<2x96xf32>
    %c0_174 = arith.constant 0 : index
    %c0_175 = arith.constant 0 : index
    %c0_176 = arith.constant 0 : index
    %532 = vector.load %arg17[%c0_174, %c0_175, %c0_176] : memref<2x8x96xf32, #tpu.memory_space<vmem>>, vector<2x1x96xf32>
    %533 = vector.shape_cast %532 : vector<2x1x96xf32> to vector<2x96xf32>
    %534 = arith.truncf %493 : vector<2x32xf32> to vector<2x32xbf16>
    %cst_177 = arith.constant dense<0.000000e+00> : vector<2x96xf32>
    %535 = tpu.matmul %534, %34, %cst_177 {dimension_numbers = #tpu.dot_dimension_numbers<[1], [0], [0], [1], [0, 0, 1, 1], [], []>} : vector<2x32xbf16>, vector<32x96xbf16>, vector<2x96xf32> -> vector<2x96xf32>
    %536 = vector.broadcast %36 : vector<1x96xf32> to vector<2x96xf32>
    %537 = arith.addf %535, %536 : vector<2x96xf32>
    %538 = vector.extract_strided_slice %531 {offsets = [0, 0], sizes = [2, 32], strides = [1, 1]} : vector<2x96xf32> to vector<2x32xf32>
    %539 = vector.extract_strided_slice %537 {offsets = [0, 0], sizes = [2, 32], strides = [1, 1]} : vector<2x96xf32> to vector<2x32xf32>
    %540 = arith.addf %538, %539 : vector<2x32xf32>
    %541 = arith.negf %540 : vector<2x32xf32>
    %542 = math.exp %541 : vector<2x32xf32>
    %cst_178 = arith.constant 1.000000e+00 : f32
    %543 = vector.broadcast %cst_178 : f32 to vector<2x32xf32>
    %544 = arith.addf %543, %542 : vector<2x32xf32>
    %545 = arith.divf %543, %544 : vector<2x32xf32>
    %546 = vector.extract_strided_slice %531 {offsets = [0, 32], sizes = [2, 32], strides = [1, 1]} : vector<2x96xf32> to vector<2x32xf32>
    %547 = vector.extract_strided_slice %537 {offsets = [0, 32], sizes = [2, 32], strides = [1, 1]} : vector<2x96xf32> to vector<2x32xf32>
    %548 = arith.addf %546, %547 : vector<2x32xf32>
    %549 = arith.negf %548 : vector<2x32xf32>
    %550 = math.exp %549 : vector<2x32xf32>
    %cst_179 = arith.constant 1.000000e+00 : f32
    %551 = vector.broadcast %cst_179 : f32 to vector<2x32xf32>
    %552 = arith.addf %551, %550 : vector<2x32xf32>
    %553 = arith.divf %551, %552 : vector<2x32xf32>
    %554 = vector.extract_strided_slice %531 {offsets = [0, 64], sizes = [2, 32], strides = [1, 1]} : vector<2x96xf32> to vector<2x32xf32>
    %555 = vector.extract_strided_slice %537 {offsets = [0, 64], sizes = [2, 32], strides = [1, 1]} : vector<2x96xf32> to vector<2x32xf32>
    %556 = arith.mulf %545, %555 : vector<2x32xf32>
    %557 = arith.addf %554, %556 : vector<2x32xf32>
    %558 = math.tanh %557 : vector<2x32xf32>
    %cst_180 = arith.constant 1.000000e+00 : f32
    %559 = vector.broadcast %cst_180 : f32 to vector<2x32xf32>
    %560 = arith.subf %559, %553 : vector<2x32xf32>
    %561 = arith.mulf %560, %558 : vector<2x32xf32>
    %562 = arith.mulf %553, %493 : vector<2x32xf32>
    %563 = arith.addf %561, %562 : vector<2x32xf32>
    %564 = arith.truncf %523 : vector<2x32xf32> to vector<2x32xbf16>
    %cst_181 = arith.constant dense<0.000000e+00> : vector<2x96xf32>
    %565 = tpu.matmul %564, %35, %cst_181 {dimension_numbers = #tpu.dot_dimension_numbers<[1], [0], [0], [1], [0, 0, 1, 1], [], []>} : vector<2x32xbf16>, vector<32x96xbf16>, vector<2x96xf32> -> vector<2x96xf32>
    %566 = vector.broadcast %37 : vector<1x96xf32> to vector<2x96xf32>
    %567 = arith.addf %565, %566 : vector<2x96xf32>
    %568 = vector.extract_strided_slice %533 {offsets = [0, 0], sizes = [2, 32], strides = [1, 1]} : vector<2x96xf32> to vector<2x32xf32>
    %569 = vector.extract_strided_slice %567 {offsets = [0, 0], sizes = [2, 32], strides = [1, 1]} : vector<2x96xf32> to vector<2x32xf32>
    %570 = arith.addf %568, %569 : vector<2x32xf32>
    %571 = arith.negf %570 : vector<2x32xf32>
    %572 = math.exp %571 : vector<2x32xf32>
    %cst_182 = arith.constant 1.000000e+00 : f32
    %573 = vector.broadcast %cst_182 : f32 to vector<2x32xf32>
    %574 = arith.addf %573, %572 : vector<2x32xf32>
    %575 = arith.divf %573, %574 : vector<2x32xf32>
    %576 = vector.extract_strided_slice %533 {offsets = [0, 32], sizes = [2, 32], strides = [1, 1]} : vector<2x96xf32> to vector<2x32xf32>
    %577 = vector.extract_strided_slice %567 {offsets = [0, 32], sizes = [2, 32], strides = [1, 1]} : vector<2x96xf32> to vector<2x32xf32>
    %578 = arith.addf %576, %577 : vector<2x32xf32>
    %579 = arith.negf %578 : vector<2x32xf32>
    %580 = math.exp %579 : vector<2x32xf32>
    %cst_183 = arith.constant 1.000000e+00 : f32
    %581 = vector.broadcast %cst_183 : f32 to vector<2x32xf32>
    %582 = arith.addf %581, %580 : vector<2x32xf32>
    %583 = arith.divf %581, %582 : vector<2x32xf32>
    %584 = vector.extract_strided_slice %533 {offsets = [0, 64], sizes = [2, 32], strides = [1, 1]} : vector<2x96xf32> to vector<2x32xf32>
    %585 = vector.extract_strided_slice %567 {offsets = [0, 64], sizes = [2, 32], strides = [1, 1]} : vector<2x96xf32> to vector<2x32xf32>
    %586 = arith.mulf %575, %585 : vector<2x32xf32>
    %587 = arith.addf %584, %586 : vector<2x32xf32>
    %588 = math.tanh %587 : vector<2x32xf32>
    %cst_184 = arith.constant 1.000000e+00 : f32
    %589 = vector.broadcast %cst_184 : f32 to vector<2x32xf32>
    %590 = arith.subf %589, %583 : vector<2x32xf32>
    %591 = arith.mulf %590, %588 : vector<2x32xf32>
    %592 = arith.mulf %583, %523 : vector<2x32xf32>
    %593 = arith.addf %591, %592 : vector<2x32xf32>
    %c7_185 = arith.constant 7 : index
    %c0_186 = arith.constant 0 : index
    %c0_187 = arith.constant 0 : index
    %594 = vector.load %arg18[%c7_185, %c0_186, %c0_187] : memref<8x2x32xf32, #tpu.memory_space<vmem>>, vector<1x2x32xf32>
    %595 = vector.shape_cast %594 : vector<1x2x32xf32> to vector<2x32xf32>
    %596 = vector.shape_cast %563 : vector<2x32xf32> to vector<1x2x32xf32>
    tpu.vector_store %arg18[%c7_185, %c0_186, %c0_187], %596 {strides = array<i32>} : memref<8x2x32xf32, #tpu.memory_space<vmem>>, vector<1x2x32xf32>,
    %c0_188 = arith.constant 0 : index
    %c0_189 = arith.constant 0 : index
    %c0_190 = arith.constant 0 : index
    %597 = vector.load %arg19[%c0_188, %c0_189, %c0_190] : memref<8x2x32xf32, #tpu.memory_space<vmem>>, vector<1x2x32xf32>
    %598 = vector.shape_cast %597 : vector<1x2x32xf32> to vector<2x32xf32>
    %599 = vector.shape_cast %593 : vector<2x32xf32> to vector<1x2x32xf32>
    tpu.vector_store %arg19[%c0_188, %c0_189, %c0_190], %599 {strides = array<i32>} : memref<8x2x32xf32, #tpu.memory_space<vmem>>, vector<1x2x32xf32>,
    %c0_191 = arith.constant 0 : index
    %c0_192 = arith.constant 0 : index
    %600 = vector.load %arg10[%c0_191, %c0_192] : memref<32x32xbf16, #tpu.memory_space<vmem>>, vector<32x32xbf16>
    %c0_193 = arith.constant 0 : index
    %c0_194 = arith.constant 0 : index
    %601 = vector.load %arg11[%c0_193, %c0_194] : memref<32x32xbf16, #tpu.memory_space<vmem>>, vector<32x32xbf16>
    %c0_195 = arith.constant 0 : index
    %c0_196 = arith.constant 0 : index
    %602 = vector.load %arg12[%c0_195, %c0_196] : memref<1x32xf32, #tpu.memory_space<vmem>>, vector<1x32xf32>
    %c0_197 = arith.constant 0 : index
    %c0_198 = arith.constant 0 : index
    %603 = vector.load %arg13[%c0_197, %c0_198] : memref<1x32xf32, #tpu.memory_space<vmem>>, vector<1x32xf32>
    %c0_199 = arith.constant 0 : index
    %c0_200 = arith.constant 0 : index
    %604 = vector.load %arg14[%c0_199, %c0_200] : memref<1x1xf32, #tpu.memory_space<vmem>>, vector<1x1xf32>
    %605 = tpu.iota {dimensions = array<i32: 1>} : vector<2x8xi32>
    %cst_201 = arith.constant 0.000000e+00 : f32
    %606 = vector.broadcast %cst_201 : f32 to vector<2x8xf32>
    %c0_202 = arith.constant 0 : index
    %c0_203 = arith.constant 0 : index
    %c0_204 = arith.constant 0 : index
    %607 = vector.load %arg18[%c0_202, %c0_203, %c0_204] : memref<8x2x32xf32, #tpu.memory_space<vmem>>, vector<1x2x32xf32>
    %608 = vector.shape_cast %607 : vector<1x2x32xf32> to vector<2x32xf32>
    %609 = arith.truncf %608 : vector<2x32xf32> to vector<2x32xbf16>
    %cst_205 = arith.constant dense<0.000000e+00> : vector<2x32xf32>
    %610 = tpu.matmul %609, %600, %cst_205 {dimension_numbers = #tpu.dot_dimension_numbers<[1], [0], [0], [1], [0, 0, 1, 1], [], []>} : vector<2x32xbf16>, vector<32x32xbf16>, vector<2x32xf32> -> vector<2x32xf32>
    %c0_206 = arith.constant 0 : index
    %c0_207 = arith.constant 0 : index
    %c0_208 = arith.constant 0 : index
    %611 = vector.load %arg19[%c0_206, %c0_207, %c0_208] : memref<8x2x32xf32, #tpu.memory_space<vmem>>, vector<1x2x32xf32>
    %612 = vector.shape_cast %611 : vector<1x2x32xf32> to vector<2x32xf32>
    %613 = arith.truncf %612 : vector<2x32xf32> to vector<2x32xbf16>
    %cst_209 = arith.constant dense<0.000000e+00> : vector<2x32xf32>
    %614 = tpu.matmul %613, %601, %cst_209 {dimension_numbers = #tpu.dot_dimension_numbers<[1], [0], [0], [1], [0, 0, 1, 1], [], []>} : vector<2x32xbf16>, vector<32x32xbf16>, vector<2x32xf32> -> vector<2x32xf32>
    %615 = arith.addf %610, %614 : vector<2x32xf32>
    %616 = vector.broadcast %602 : vector<1x32xf32> to vector<2x32xf32>
    %617 = arith.addf %615, %616 : vector<2x32xf32>
    %618 = math.tanh %617 : vector<2x32xf32>
    %619 = vector.broadcast %603 : vector<1x32xf32> to vector<2x32xf32>
    %620 = arith.mulf %618, %619 : vector<2x32xf32>
    %cst_210 = arith.constant dense<0.000000e+00> : vector<2xf32>
    %621 = vector.multi_reduction <add>, %620, %cst_210 [1] : vector<2x32xf32> to vector<2xf32>
    %622 = vector.shape_cast %621 : vector<2xf32> to vector<2x1xf32>
    %623 = vector.broadcast %604 : vector<1x1xf32> to vector<2x1xf32>
    %624 = arith.addf %622, %623 : vector<2x1xf32>
    %c0_i32 = arith.constant 0 : i32
    %625 = vector.broadcast %c0_i32 : i32 to vector<2x8xi32>
    %626 = arith.cmpi eq, %605, %625 : vector<2x8xi32>
    %627 = vector.shape_cast %624 : vector<2x1xf32> to vector<2x1xf32>
    %628 = vector.broadcast %627 : vector<2x1xf32> to vector<2x8xf32>
    %629 = arith.select %626, %628, %606 : vector<2x8xi1>, vector<2x8xf32>
    %c1_211 = arith.constant 1 : index
    %c0_212 = arith.constant 0 : index
    %c0_213 = arith.constant 0 : index
    %630 = vector.load %arg18[%c1_211, %c0_212, %c0_213] : memref<8x2x32xf32, #tpu.memory_space<vmem>>, vector<1x2x32xf32>
    %631 = vector.shape_cast %630 : vector<1x2x32xf32> to vector<2x32xf32>
    %632 = arith.truncf %631 : vector<2x32xf32> to vector<2x32xbf16>
    %cst_214 = arith.constant dense<0.000000e+00> : vector<2x32xf32>
    %633 = tpu.matmul %632, %600, %cst_214 {dimension_numbers = #tpu.dot_dimension_numbers<[1], [0], [0], [1], [0, 0, 1, 1], [], []>} : vector<2x32xbf16>, vector<32x32xbf16>, vector<2x32xf32> -> vector<2x32xf32>
    %c1_215 = arith.constant 1 : index
    %c0_216 = arith.constant 0 : index
    %c0_217 = arith.constant 0 : index
    %634 = vector.load %arg19[%c1_215, %c0_216, %c0_217] : memref<8x2x32xf32, #tpu.memory_space<vmem>>, vector<1x2x32xf32>
    %635 = vector.shape_cast %634 : vector<1x2x32xf32> to vector<2x32xf32>
    %636 = arith.truncf %635 : vector<2x32xf32> to vector<2x32xbf16>
    %cst_218 = arith.constant dense<0.000000e+00> : vector<2x32xf32>
    %637 = tpu.matmul %636, %601, %cst_218 {dimension_numbers = #tpu.dot_dimension_numbers<[1], [0], [0], [1], [0, 0, 1, 1], [], []>} : vector<2x32xbf16>, vector<32x32xbf16>, vector<2x32xf32> -> vector<2x32xf32>
    %638 = arith.addf %633, %637 : vector<2x32xf32>
    %639 = vector.broadcast %602 : vector<1x32xf32> to vector<2x32xf32>
    %640 = arith.addf %638, %639 : vector<2x32xf32>
    %641 = math.tanh %640 : vector<2x32xf32>
    %642 = vector.broadcast %603 : vector<1x32xf32> to vector<2x32xf32>
    %643 = arith.mulf %641, %642 : vector<2x32xf32>
    %cst_219 = arith.constant dense<0.000000e+00> : vector<2xf32>
    %644 = vector.multi_reduction <add>, %643, %cst_219 [1] : vector<2x32xf32> to vector<2xf32>
    %645 = vector.shape_cast %644 : vector<2xf32> to vector<2x1xf32>
    %646 = vector.broadcast %604 : vector<1x1xf32> to vector<2x1xf32>
    %647 = arith.addf %645, %646 : vector<2x1xf32>
    %c1_i32 = arith.constant 1 : i32
    %648 = vector.broadcast %c1_i32 : i32 to vector<2x8xi32>
    %649 = arith.cmpi eq, %605, %648 : vector<2x8xi32>
    %650 = vector.shape_cast %647 : vector<2x1xf32> to vector<2x1xf32>
    %651 = vector.broadcast %650 : vector<2x1xf32> to vector<2x8xf32>
    %652 = arith.select %649, %651, %629 : vector<2x8xi1>, vector<2x8xf32>
    %c2_220 = arith.constant 2 : index
    %c0_221 = arith.constant 0 : index
    %c0_222 = arith.constant 0 : index
    %653 = vector.load %arg18[%c2_220, %c0_221, %c0_222] : memref<8x2x32xf32, #tpu.memory_space<vmem>>, vector<1x2x32xf32>
    %654 = vector.shape_cast %653 : vector<1x2x32xf32> to vector<2x32xf32>
    %655 = arith.truncf %654 : vector<2x32xf32> to vector<2x32xbf16>
    %cst_223 = arith.constant dense<0.000000e+00> : vector<2x32xf32>
    %656 = tpu.matmul %655, %600, %cst_223 {dimension_numbers = #tpu.dot_dimension_numbers<[1], [0], [0], [1], [0, 0, 1, 1], [], []>} : vector<2x32xbf16>, vector<32x32xbf16>, vector<2x32xf32> -> vector<2x32xf32>
    %c2_224 = arith.constant 2 : index
    %c0_225 = arith.constant 0 : index
    %c0_226 = arith.constant 0 : index
    %657 = vector.load %arg19[%c2_224, %c0_225, %c0_226] : memref<8x2x32xf32, #tpu.memory_space<vmem>>, vector<1x2x32xf32>
    %658 = vector.shape_cast %657 : vector<1x2x32xf32> to vector<2x32xf32>
    %659 = arith.truncf %658 : vector<2x32xf32> to vector<2x32xbf16>
    %cst_227 = arith.constant dense<0.000000e+00> : vector<2x32xf32>
    %660 = tpu.matmul %659, %601, %cst_227 {dimension_numbers = #tpu.dot_dimension_numbers<[1], [0], [0], [1], [0, 0, 1, 1], [], []>} : vector<2x32xbf16>, vector<32x32xbf16>, vector<2x32xf32> -> vector<2x32xf32>
    %661 = arith.addf %656, %660 : vector<2x32xf32>
    %662 = vector.broadcast %602 : vector<1x32xf32> to vector<2x32xf32>
    %663 = arith.addf %661, %662 : vector<2x32xf32>
    %664 = math.tanh %663 : vector<2x32xf32>
    %665 = vector.broadcast %603 : vector<1x32xf32> to vector<2x32xf32>
    %666 = arith.mulf %664, %665 : vector<2x32xf32>
    %cst_228 = arith.constant dense<0.000000e+00> : vector<2xf32>
    %667 = vector.multi_reduction <add>, %666, %cst_228 [1] : vector<2x32xf32> to vector<2xf32>
    %668 = vector.shape_cast %667 : vector<2xf32> to vector<2x1xf32>
    %669 = vector.broadcast %604 : vector<1x1xf32> to vector<2x1xf32>
    %670 = arith.addf %668, %669 : vector<2x1xf32>
    %c2_i32 = arith.constant 2 : i32
    %671 = vector.broadcast %c2_i32 : i32 to vector<2x8xi32>
    %672 = arith.cmpi eq, %605, %671 : vector<2x8xi32>
    %673 = vector.shape_cast %670 : vector<2x1xf32> to vector<2x1xf32>
    %674 = vector.broadcast %673 : vector<2x1xf32> to vector<2x8xf32>
    %675 = arith.select %672, %674, %652 : vector<2x8xi1>, vector<2x8xf32>
    %c3_229 = arith.constant 3 : index
    %c0_230 = arith.constant 0 : index
    %c0_231 = arith.constant 0 : index
    %676 = vector.load %arg18[%c3_229, %c0_230, %c0_231] : memref<8x2x32xf32, #tpu.memory_space<vmem>>, vector<1x2x32xf32>
    %677 = vector.shape_cast %676 : vector<1x2x32xf32> to vector<2x32xf32>
    %678 = arith.truncf %677 : vector<2x32xf32> to vector<2x32xbf16>
    %cst_232 = arith.constant dense<0.000000e+00> : vector<2x32xf32>
    %679 = tpu.matmul %678, %600, %cst_232 {dimension_numbers = #tpu.dot_dimension_numbers<[1], [0], [0], [1], [0, 0, 1, 1], [], []>} : vector<2x32xbf16>, vector<32x32xbf16>, vector<2x32xf32> -> vector<2x32xf32>
    %c3_233 = arith.constant 3 : index
    %c0_234 = arith.constant 0 : index
    %c0_235 = arith.constant 0 : index
    %680 = vector.load %arg19[%c3_233, %c0_234, %c0_235] : memref<8x2x32xf32, #tpu.memory_space<vmem>>, vector<1x2x32xf32>
    %681 = vector.shape_cast %680 : vector<1x2x32xf32> to vector<2x32xf32>
    %682 = arith.truncf %681 : vector<2x32xf32> to vector<2x32xbf16>
    %cst_236 = arith.constant dense<0.000000e+00> : vector<2x32xf32>
    %683 = tpu.matmul %682, %601, %cst_236 {dimension_numbers = #tpu.dot_dimension_numbers<[1], [0], [0], [1], [0, 0, 1, 1], [], []>} : vector<2x32xbf16>, vector<32x32xbf16>, vector<2x32xf32> -> vector<2x32xf32>
    %684 = arith.addf %679, %683 : vector<2x32xf32>
    %685 = vector.broadcast %602 : vector<1x32xf32> to vector<2x32xf32>
    %686 = arith.addf %684, %685 : vector<2x32xf32>
    %687 = math.tanh %686 : vector<2x32xf32>
    %688 = vector.broadcast %603 : vector<1x32xf32> to vector<2x32xf32>
    %689 = arith.mulf %687, %688 : vector<2x32xf32>
    %cst_237 = arith.constant dense<0.000000e+00> : vector<2xf32>
    %690 = vector.multi_reduction <add>, %689, %cst_237 [1] : vector<2x32xf32> to vector<2xf32>
    %691 = vector.shape_cast %690 : vector<2xf32> to vector<2x1xf32>
    %692 = vector.broadcast %604 : vector<1x1xf32> to vector<2x1xf32>
    %693 = arith.addf %691, %692 : vector<2x1xf32>
    %c3_i32 = arith.constant 3 : i32
    %694 = vector.broadcast %c3_i32 : i32 to vector<2x8xi32>
    %695 = arith.cmpi eq, %605, %694 : vector<2x8xi32>
    %696 = vector.shape_cast %693 : vector<2x1xf32> to vector<2x1xf32>
    %697 = vector.broadcast %696 : vector<2x1xf32> to vector<2x8xf32>
    %698 = arith.select %695, %697, %675 : vector<2x8xi1>, vector<2x8xf32>
    %c4_238 = arith.constant 4 : index
    %c0_239 = arith.constant 0 : index
    %c0_240 = arith.constant 0 : index
    %699 = vector.load %arg18[%c4_238, %c0_239, %c0_240] : memref<8x2x32xf32, #tpu.memory_space<vmem>>, vector<1x2x32xf32>
    %700 = vector.shape_cast %699 : vector<1x2x32xf32> to vector<2x32xf32>
    %701 = arith.truncf %700 : vector<2x32xf32> to vector<2x32xbf16>
    %cst_241 = arith.constant dense<0.000000e+00> : vector<2x32xf32>
    %702 = tpu.matmul %701, %600, %cst_241 {dimension_numbers = #tpu.dot_dimension_numbers<[1], [0], [0], [1], [0, 0, 1, 1], [], []>} : vector<2x32xbf16>, vector<32x32xbf16>, vector<2x32xf32> -> vector<2x32xf32>
    %c4_242 = arith.constant 4 : index
    %c0_243 = arith.constant 0 : index
    %c0_244 = arith.constant 0 : index
    %703 = vector.load %arg19[%c4_242, %c0_243, %c0_244] : memref<8x2x32xf32, #tpu.memory_space<vmem>>, vector<1x2x32xf32>
    %704 = vector.shape_cast %703 : vector<1x2x32xf32> to vector<2x32xf32>
    %705 = arith.truncf %704 : vector<2x32xf32> to vector<2x32xbf16>
    %cst_245 = arith.constant dense<0.000000e+00> : vector<2x32xf32>
    %706 = tpu.matmul %705, %601, %cst_245 {dimension_numbers = #tpu.dot_dimension_numbers<[1], [0], [0], [1], [0, 0, 1, 1], [], []>} : vector<2x32xbf16>, vector<32x32xbf16>, vector<2x32xf32> -> vector<2x32xf32>
    %707 = arith.addf %702, %706 : vector<2x32xf32>
    %708 = vector.broadcast %602 : vector<1x32xf32> to vector<2x32xf32>
    %709 = arith.addf %707, %708 : vector<2x32xf32>
    %710 = math.tanh %709 : vector<2x32xf32>
    %711 = vector.broadcast %603 : vector<1x32xf32> to vector<2x32xf32>
    %712 = arith.mulf %710, %711 : vector<2x32xf32>
    %cst_246 = arith.constant dense<0.000000e+00> : vector<2xf32>
    %713 = vector.multi_reduction <add>, %712, %cst_246 [1] : vector<2x32xf32> to vector<2xf32>
    %714 = vector.shape_cast %713 : vector<2xf32> to vector<2x1xf32>
    %715 = vector.broadcast %604 : vector<1x1xf32> to vector<2x1xf32>
    %716 = arith.addf %714, %715 : vector<2x1xf32>
    %c4_i32 = arith.constant 4 : i32
    %717 = vector.broadcast %c4_i32 : i32 to vector<2x8xi32>
    %718 = arith.cmpi eq, %605, %717 : vector<2x8xi32>
    %719 = vector.shape_cast %716 : vector<2x1xf32> to vector<2x1xf32>
    %720 = vector.broadcast %719 : vector<2x1xf32> to vector<2x8xf32>
    %721 = arith.select %718, %720, %698 : vector<2x8xi1>, vector<2x8xf32>
    %c5_247 = arith.constant 5 : index
    %c0_248 = arith.constant 0 : index
    %c0_249 = arith.constant 0 : index
    %722 = vector.load %arg18[%c5_247, %c0_248, %c0_249] : memref<8x2x32xf32, #tpu.memory_space<vmem>>, vector<1x2x32xf32>
    %723 = vector.shape_cast %722 : vector<1x2x32xf32> to vector<2x32xf32>
    %724 = arith.truncf %723 : vector<2x32xf32> to vector<2x32xbf16>
    %cst_250 = arith.constant dense<0.000000e+00> : vector<2x32xf32>
    %725 = tpu.matmul %724, %600, %cst_250 {dimension_numbers = #tpu.dot_dimension_numbers<[1], [0], [0], [1], [0, 0, 1, 1], [], []>} : vector<2x32xbf16>, vector<32x32xbf16>, vector<2x32xf32> -> vector<2x32xf32>
    %c5_251 = arith.constant 5 : index
    %c0_252 = arith.constant 0 : index
    %c0_253 = arith.constant 0 : index
    %726 = vector.load %arg19[%c5_251, %c0_252, %c0_253] : memref<8x2x32xf32, #tpu.memory_space<vmem>>, vector<1x2x32xf32>
    %727 = vector.shape_cast %726 : vector<1x2x32xf32> to vector<2x32xf32>
    %728 = arith.truncf %727 : vector<2x32xf32> to vector<2x32xbf16>
    %cst_254 = arith.constant dense<0.000000e+00> : vector<2x32xf32>
    %729 = tpu.matmul %728, %601, %cst_254 {dimension_numbers = #tpu.dot_dimension_numbers<[1], [0], [0], [1], [0, 0, 1, 1], [], []>} : vector<2x32xbf16>, vector<32x32xbf16>, vector<2x32xf32> -> vector<2x32xf32>
    %730 = arith.addf %725, %729 : vector<2x32xf32>
    %731 = vector.broadcast %602 : vector<1x32xf32> to vector<2x32xf32>
    %732 = arith.addf %730, %731 : vector<2x32xf32>
    %733 = math.tanh %732 : vector<2x32xf32>
    %734 = vector.broadcast %603 : vector<1x32xf32> to vector<2x32xf32>
    %735 = arith.mulf %733, %734 : vector<2x32xf32>
    %cst_255 = arith.constant dense<0.000000e+00> : vector<2xf32>
    %736 = vector.multi_reduction <add>, %735, %cst_255 [1] : vector<2x32xf32> to vector<2xf32>
    %737 = vector.shape_cast %736 : vector<2xf32> to vector<2x1xf32>
    %738 = vector.broadcast %604 : vector<1x1xf32> to vector<2x1xf32>
    %739 = arith.addf %737, %738 : vector<2x1xf32>
    %c5_i32 = arith.constant 5 : i32
    %740 = vector.broadcast %c5_i32 : i32 to vector<2x8xi32>
    %741 = arith.cmpi eq, %605, %740 : vector<2x8xi32>
    %742 = vector.shape_cast %739 : vector<2x1xf32> to vector<2x1xf32>
    %743 = vector.broadcast %742 : vector<2x1xf32> to vector<2x8xf32>
    %744 = arith.select %741, %743, %721 : vector<2x8xi1>, vector<2x8xf32>
    %c6_256 = arith.constant 6 : index
    %c0_257 = arith.constant 0 : index
    %c0_258 = arith.constant 0 : index
    %745 = vector.load %arg18[%c6_256, %c0_257, %c0_258] : memref<8x2x32xf32, #tpu.memory_space<vmem>>, vector<1x2x32xf32>
    %746 = vector.shape_cast %745 : vector<1x2x32xf32> to vector<2x32xf32>
    %747 = arith.truncf %746 : vector<2x32xf32> to vector<2x32xbf16>
    %cst_259 = arith.constant dense<0.000000e+00> : vector<2x32xf32>
    %748 = tpu.matmul %747, %600, %cst_259 {dimension_numbers = #tpu.dot_dimension_numbers<[1], [0], [0], [1], [0, 0, 1, 1], [], []>} : vector<2x32xbf16>, vector<32x32xbf16>, vector<2x32xf32> -> vector<2x32xf32>
    %c6_260 = arith.constant 6 : index
    %c0_261 = arith.constant 0 : index
    %c0_262 = arith.constant 0 : index
    %749 = vector.load %arg19[%c6_260, %c0_261, %c0_262] : memref<8x2x32xf32, #tpu.memory_space<vmem>>, vector<1x2x32xf32>
    %750 = vector.shape_cast %749 : vector<1x2x32xf32> to vector<2x32xf32>
    %751 = arith.truncf %750 : vector<2x32xf32> to vector<2x32xbf16>
    %cst_263 = arith.constant dense<0.000000e+00> : vector<2x32xf32>
    %752 = tpu.matmul %751, %601, %cst_263 {dimension_numbers = #tpu.dot_dimension_numbers<[1], [0], [0], [1], [0, 0, 1, 1], [], []>} : vector<2x32xbf16>, vector<32x32xbf16>, vector<2x32xf32> -> vector<2x32xf32>
    %753 = arith.addf %748, %752 : vector<2x32xf32>
    %754 = vector.broadcast %602 : vector<1x32xf32> to vector<2x32xf32>
    %755 = arith.addf %753, %754 : vector<2x32xf32>
    %756 = math.tanh %755 : vector<2x32xf32>
    %757 = vector.broadcast %603 : vector<1x32xf32> to vector<2x32xf32>
    %758 = arith.mulf %756, %757 : vector<2x32xf32>
    %cst_264 = arith.constant dense<0.000000e+00> : vector<2xf32>
    %759 = vector.multi_reduction <add>, %758, %cst_264 [1] : vector<2x32xf32> to vector<2xf32>
    %760 = vector.shape_cast %759 : vector<2xf32> to vector<2x1xf32>
    %761 = vector.broadcast %604 : vector<1x1xf32> to vector<2x1xf32>
    %762 = arith.addf %760, %761 : vector<2x1xf32>
    %c6_i32 = arith.constant 6 : i32
    %763 = vector.broadcast %c6_i32 : i32 to vector<2x8xi32>
    %764 = arith.cmpi eq, %605, %763 : vector<2x8xi32>
    %765 = vector.shape_cast %762 : vector<2x1xf32> to vector<2x1xf32>
    %766 = vector.broadcast %765 : vector<2x1xf32> to vector<2x8xf32>
    %767 = arith.select %764, %766, %744 : vector<2x8xi1>, vector<2x8xf32>
    %c7_265 = arith.constant 7 : index
    %c0_266 = arith.constant 0 : index
    %c0_267 = arith.constant 0 : index
    %768 = vector.load %arg18[%c7_265, %c0_266, %c0_267] : memref<8x2x32xf32, #tpu.memory_space<vmem>>, vector<1x2x32xf32>
    %769 = vector.shape_cast %768 : vector<1x2x32xf32> to vector<2x32xf32>
    %770 = arith.truncf %769 : vector<2x32xf32> to vector<2x32xbf16>
    %cst_268 = arith.constant dense<0.000000e+00> : vector<2x32xf32>
    %771 = tpu.matmul %770, %600, %cst_268 {dimension_numbers = #tpu.dot_dimension_numbers<[1], [0], [0], [1], [0, 0, 1, 1], [], []>} : vector<2x32xbf16>, vector<32x32xbf16>, vector<2x32xf32> -> vector<2x32xf32>
    %c7_269 = arith.constant 7 : index
    %c0_270 = arith.constant 0 : index
    %c0_271 = arith.constant 0 : index
    %772 = vector.load %arg19[%c7_269, %c0_270, %c0_271] : memref<8x2x32xf32, #tpu.memory_space<vmem>>, vector<1x2x32xf32>
    %773 = vector.shape_cast %772 : vector<1x2x32xf32> to vector<2x32xf32>
    %774 = arith.truncf %773 : vector<2x32xf32> to vector<2x32xbf16>
    %cst_272 = arith.constant dense<0.000000e+00> : vector<2x32xf32>
    %775 = tpu.matmul %774, %601, %cst_272 {dimension_numbers = #tpu.dot_dimension_numbers<[1], [0], [0], [1], [0, 0, 1, 1], [], []>} : vector<2x32xbf16>, vector<32x32xbf16>, vector<2x32xf32> -> vector<2x32xf32>
    %776 = arith.addf %771, %775 : vector<2x32xf32>
    %777 = vector.broadcast %602 : vector<1x32xf32> to vector<2x32xf32>
    %778 = arith.addf %776, %777 : vector<2x32xf32>
    %779 = math.tanh %778 : vector<2x32xf32>
    %780 = vector.broadcast %603 : vector<1x32xf32> to vector<2x32xf32>
    %781 = arith.mulf %779, %780 : vector<2x32xf32>
    %cst_273 = arith.constant dense<0.000000e+00> : vector<2xf32>
    %782 = vector.multi_reduction <add>, %781, %cst_273 [1] : vector<2x32xf32> to vector<2xf32>
    %783 = vector.shape_cast %782 : vector<2xf32> to vector<2x1xf32>
    %784 = vector.broadcast %604 : vector<1x1xf32> to vector<2x1xf32>
    %785 = arith.addf %783, %784 : vector<2x1xf32>
    %c7_i32 = arith.constant 7 : i32
    %786 = vector.broadcast %c7_i32 : i32 to vector<2x8xi32>
    %787 = arith.cmpi eq, %605, %786 : vector<2x8xi32>
    %788 = vector.shape_cast %785 : vector<2x1xf32> to vector<2x1xf32>
    %789 = vector.broadcast %788 : vector<2x1xf32> to vector<2x8xf32>
    %790 = arith.select %787, %789, %767 : vector<2x8xi1>, vector<2x8xf32>
    %c0_274 = arith.constant 0 : index
    %c0_275 = arith.constant 0 : index
    %791 = vector.load %arg1[%c0_274, %c0_275] : memref<2x8xf32, #tpu.memory_space<vmem>>, vector<2x8xf32>
    %cst_276 = arith.constant 0.000000e+00 : f32
    %792 = vector.broadcast %cst_276 : f32 to vector<2x8xf32>
    %793 = arith.cmpf ogt, %791, %792 : vector<2x8xf32>
    %cst_277 = arith.constant 0xFF800000 : f32
    %794 = vector.broadcast %cst_277 : f32 to vector<2x8xf32>
    %795 = arith.select %793, %794, %790 : vector<2x8xi1>, vector<2x8xf32>
    %cst_278 = arith.constant dense<0xFF800000> : vector<2xf32>
    %796 = vector.multi_reduction <maximumf>, %795, %cst_278 [1] : vector<2x8xf32> to vector<2xf32>
    %797 = vector.shape_cast %796 : vector<2xf32> to vector<2x1xf32>
    %798 = vector.broadcast %797 : vector<2x1xf32> to vector<2x8xf32>
    %799 = arith.subf %795, %798 : vector<2x8xf32>
    %800 = math.exp %799 : vector<2x8xf32>
    %cst_279 = arith.constant dense<0.000000e+00> : vector<2xf32>
    %801 = vector.multi_reduction <add>, %800, %cst_279 [1] : vector<2x8xf32> to vector<2xf32>
    %802 = vector.shape_cast %801 : vector<2xf32> to vector<2x1xf32>
    %803 = tpu.reciprocal %802 {approx = true} : vector<2x1xf32> -> vector<2x1xf32>
    %804 = vector.broadcast %803 : vector<2x1xf32> to vector<2x8xf32>
    %805 = arith.mulf %800, %804 : vector<2x8xf32>
    %cst_280 = arith.constant 0.000000e+00 : f32
    %806 = vector.broadcast %cst_280 : f32 to vector<2x32xf32>
    %cst_281 = arith.constant 0.000000e+00 : f32
    %807 = vector.broadcast %cst_281 : f32 to vector<2x32xf32>
    %808 = vector.extract_strided_slice %805 {offsets = [0, 0], sizes = [2, 1], strides = [1, 1]} : vector<2x8xf32> to vector<2x1xf32>
    %c0_282 = arith.constant 0 : index
    %c0_283 = arith.constant 0 : index
    %c0_284 = arith.constant 0 : index
    %809 = vector.load %arg18[%c0_282, %c0_283, %c0_284] : memref<8x2x32xf32, #tpu.memory_space<vmem>>, vector<1x2x32xf32>
    %810 = vector.shape_cast %809 : vector<1x2x32xf32> to vector<2x32xf32>
    %811 = vector.broadcast %808 : vector<2x1xf32> to vector<2x32xf32>
    %812 = arith.mulf %811, %810 : vector<2x32xf32>
    %813 = arith.addf %806, %812 : vector<2x32xf32>
    %c0_285 = arith.constant 0 : index
    %c0_286 = arith.constant 0 : index
    %c0_287 = arith.constant 0 : index
    %814 = vector.load %arg19[%c0_285, %c0_286, %c0_287] : memref<8x2x32xf32, #tpu.memory_space<vmem>>, vector<1x2x32xf32>
    %815 = vector.shape_cast %814 : vector<1x2x32xf32> to vector<2x32xf32>
    %816 = vector.broadcast %808 : vector<2x1xf32> to vector<2x32xf32>
    %817 = arith.mulf %816, %815 : vector<2x32xf32>
    %818 = arith.addf %807, %817 : vector<2x32xf32>
    %819 = vector.extract_strided_slice %805 {offsets = [0, 1], sizes = [2, 1], strides = [1, 1]} : vector<2x8xf32> to vector<2x1xf32>
    %c1_288 = arith.constant 1 : index
    %c0_289 = arith.constant 0 : index
    %c0_290 = arith.constant 0 : index
    %820 = vector.load %arg18[%c1_288, %c0_289, %c0_290] : memref<8x2x32xf32, #tpu.memory_space<vmem>>, vector<1x2x32xf32>
    %821 = vector.shape_cast %820 : vector<1x2x32xf32> to vector<2x32xf32>
    %822 = vector.broadcast %819 : vector<2x1xf32> to vector<2x32xf32>
    %823 = arith.mulf %822, %821 : vector<2x32xf32>
    %824 = arith.addf %813, %823 : vector<2x32xf32>
    %c1_291 = arith.constant 1 : index
    %c0_292 = arith.constant 0 : index
    %c0_293 = arith.constant 0 : index
    %825 = vector.load %arg19[%c1_291, %c0_292, %c0_293] : memref<8x2x32xf32, #tpu.memory_space<vmem>>, vector<1x2x32xf32>
    %826 = vector.shape_cast %825 : vector<1x2x32xf32> to vector<2x32xf32>
    %827 = vector.broadcast %819 : vector<2x1xf32> to vector<2x32xf32>
    %828 = arith.mulf %827, %826 : vector<2x32xf32>
    %829 = arith.addf %818, %828 : vector<2x32xf32>
    %830 = vector.extract_strided_slice %805 {offsets = [0, 2], sizes = [2, 1], strides = [1, 1]} : vector<2x8xf32> to vector<2x1xf32>
    %c2_294 = arith.constant 2 : index
    %c0_295 = arith.constant 0 : index
    %c0_296 = arith.constant 0 : index
    %831 = vector.load %arg18[%c2_294, %c0_295, %c0_296] : memref<8x2x32xf32, #tpu.memory_space<vmem>>, vector<1x2x32xf32>
    %832 = vector.shape_cast %831 : vector<1x2x32xf32> to vector<2x32xf32>
    %833 = vector.broadcast %830 : vector<2x1xf32> to vector<2x32xf32>
    %834 = arith.mulf %833, %832 : vector<2x32xf32>
    %835 = arith.addf %824, %834 : vector<2x32xf32>
    %c2_297 = arith.constant 2 : index
    %c0_298 = arith.constant 0 : index
    %c0_299 = arith.constant 0 : index
    %836 = vector.load %arg19[%c2_297, %c0_298, %c0_299] : memref<8x2x32xf32, #tpu.memory_space<vmem>>, vector<1x2x32xf32>
    %837 = vector.shape_cast %836 : vector<1x2x32xf32> to vector<2x32xf32>
    %838 = vector.broadcast %830 : vector<2x1xf32> to vector<2x32xf32>
    %839 = arith.mulf %838, %837 : vector<2x32xf32>
    %840 = arith.addf %829, %839 : vector<2x32xf32>
    %841 = vector.extract_strided_slice %805 {offsets = [0, 3], sizes = [2, 1], strides = [1, 1]} : vector<2x8xf32> to vector<2x1xf32>
    %c3_300 = arith.constant 3 : index
    %c0_301 = arith.constant 0 : index
    %c0_302 = arith.constant 0 : index
    %842 = vector.load %arg18[%c3_300, %c0_301, %c0_302] : memref<8x2x32xf32, #tpu.memory_space<vmem>>, vector<1x2x32xf32>
    %843 = vector.shape_cast %842 : vector<1x2x32xf32> to vector<2x32xf32>
    %844 = vector.broadcast %841 : vector<2x1xf32> to vector<2x32xf32>
    %845 = arith.mulf %844, %843 : vector<2x32xf32>
    %846 = arith.addf %835, %845 : vector<2x32xf32>
    %c3_303 = arith.constant 3 : index
    %c0_304 = arith.constant 0 : index
    %c0_305 = arith.constant 0 : index
    %847 = vector.load %arg19[%c3_303, %c0_304, %c0_305] : memref<8x2x32xf32, #tpu.memory_space<vmem>>, vector<1x2x32xf32>
    %848 = vector.shape_cast %847 : vector<1x2x32xf32> to vector<2x32xf32>
    %849 = vector.broadcast %841 : vector<2x1xf32> to vector<2x32xf32>
    %850 = arith.mulf %849, %848 : vector<2x32xf32>
    %851 = arith.addf %840, %850 : vector<2x32xf32>
    %852 = vector.extract_strided_slice %805 {offsets = [0, 4], sizes = [2, 1], strides = [1, 1]} : vector<2x8xf32> to vector<2x1xf32>
    %c4_306 = arith.constant 4 : index
    %c0_307 = arith.constant 0 : index
    %c0_308 = arith.constant 0 : index
    %853 = vector.load %arg18[%c4_306, %c0_307, %c0_308] : memref<8x2x32xf32, #tpu.memory_space<vmem>>, vector<1x2x32xf32>
    %854 = vector.shape_cast %853 : vector<1x2x32xf32> to vector<2x32xf32>
    %855 = vector.broadcast %852 : vector<2x1xf32> to vector<2x32xf32>
    %856 = arith.mulf %855, %854 : vector<2x32xf32>
    %857 = arith.addf %846, %856 : vector<2x32xf32>
    %c4_309 = arith.constant 4 : index
    %c0_310 = arith.constant 0 : index
    %c0_311 = arith.constant 0 : index
    %858 = vector.load %arg19[%c4_309, %c0_310, %c0_311] : memref<8x2x32xf32, #tpu.memory_space<vmem>>, vector<1x2x32xf32>
    %859 = vector.shape_cast %858 : vector<1x2x32xf32> to vector<2x32xf32>
    %860 = vector.broadcast %852 : vector<2x1xf32> to vector<2x32xf32>
    %861 = arith.mulf %860, %859 : vector<2x32xf32>
    %862 = arith.addf %851, %861 : vector<2x32xf32>
    %863 = vector.extract_strided_slice %805 {offsets = [0, 5], sizes = [2, 1], strides = [1, 1]} : vector<2x8xf32> to vector<2x1xf32>
    %c5_312 = arith.constant 5 : index
    %c0_313 = arith.constant 0 : index
    %c0_314 = arith.constant 0 : index
    %864 = vector.load %arg18[%c5_312, %c0_313, %c0_314] : memref<8x2x32xf32, #tpu.memory_space<vmem>>, vector<1x2x32xf32>
    %865 = vector.shape_cast %864 : vector<1x2x32xf32> to vector<2x32xf32>
    %866 = vector.broadcast %863 : vector<2x1xf32> to vector<2x32xf32>
    %867 = arith.mulf %866, %865 : vector<2x32xf32>
    %868 = arith.addf %857, %867 : vector<2x32xf32>
    %c5_315 = arith.constant 5 : index
    %c0_316 = arith.constant 0 : index
    %c0_317 = arith.constant 0 : index
    %869 = vector.load %arg19[%c5_315, %c0_316, %c0_317] : memref<8x2x32xf32, #tpu.memory_space<vmem>>, vector<1x2x32xf32>
    %870 = vector.shape_cast %869 : vector<1x2x32xf32> to vector<2x32xf32>
    %871 = vector.broadcast %863 : vector<2x1xf32> to vector<2x32xf32>
    %872 = arith.mulf %871, %870 : vector<2x32xf32>
    %873 = arith.addf %862, %872 : vector<2x32xf32>
    %874 = vector.extract_strided_slice %805 {offsets = [0, 6], sizes = [2, 1], strides = [1, 1]} : vector<2x8xf32> to vector<2x1xf32>
    %c6_318 = arith.constant 6 : index
    %c0_319 = arith.constant 0 : index
    %c0_320 = arith.constant 0 : index
    %875 = vector.load %arg18[%c6_318, %c0_319, %c0_320] : memref<8x2x32xf32, #tpu.memory_space<vmem>>, vector<1x2x32xf32>
    %876 = vector.shape_cast %875 : vector<1x2x32xf32> to vector<2x32xf32>
    %877 = vector.broadcast %874 : vector<2x1xf32> to vector<2x32xf32>
    %878 = arith.mulf %877, %876 : vector<2x32xf32>
    %879 = arith.addf %868, %878 : vector<2x32xf32>
    %c6_321 = arith.constant 6 : index
    %c0_322 = arith.constant 0 : index
    %c0_323 = arith.constant 0 : index
    %880 = vector.load %arg19[%c6_321, %c0_322, %c0_323] : memref<8x2x32xf32, #tpu.memory_space<vmem>>, vector<1x2x32xf32>
    %881 = vector.shape_cast %880 : vector<1x2x32xf32> to vector<2x32xf32>
    %882 = vector.broadcast %874 : vector<2x1xf32> to vector<2x32xf32>
    %883 = arith.mulf %882, %881 : vector<2x32xf32>
    %884 = arith.addf %873, %883 : vector<2x32xf32>
    %885 = vector.extract_strided_slice %805 {offsets = [0, 7], sizes = [2, 1], strides = [1, 1]} : vector<2x8xf32> to vector<2x1xf32>
    %c7_324 = arith.constant 7 : index
    %c0_325 = arith.constant 0 : index
    %c0_326 = arith.constant 0 : index
    %886 = vector.load %arg18[%c7_324, %c0_325, %c0_326] : memref<8x2x32xf32, #tpu.memory_space<vmem>>, vector<1x2x32xf32>
    %887 = vector.shape_cast %886 : vector<1x2x32xf32> to vector<2x32xf32>
    %888 = vector.broadcast %885 : vector<2x1xf32> to vector<2x32xf32>
    %889 = arith.mulf %888, %887 : vector<2x32xf32>
    %890 = arith.addf %879, %889 : vector<2x32xf32>
    %c7_327 = arith.constant 7 : index
    %c0_328 = arith.constant 0 : index
    %c0_329 = arith.constant 0 : index
    %891 = vector.load %arg19[%c7_327, %c0_328, %c0_329] : memref<8x2x32xf32, #tpu.memory_space<vmem>>, vector<1x2x32xf32>
    %892 = vector.shape_cast %891 : vector<1x2x32xf32> to vector<2x32xf32>
    %893 = vector.broadcast %885 : vector<2x1xf32> to vector<2x32xf32>
    %894 = arith.mulf %893, %892 : vector<2x32xf32>
    %895 = arith.addf %884, %894 : vector<2x32xf32>
    %c0_330 = arith.constant 0 : index
    %c0_331 = arith.constant 0 : index
    %896 = vector.load %arg15[%c0_330, %c0_331] : memref<2x64xf32, #tpu.memory_space<vmem>>, vector<2x32xf32>
    tpu.vector_store %arg15[%c0_330, %c0_331], %890 {strides = array<i32>} : memref<2x64xf32, #tpu.memory_space<vmem>>, vector<2x32xf32>,
    %c0_332 = arith.constant 0 : index
    %c32 = arith.constant 32 : index
    %897 = vector.load %arg15[%c0_332, %c32] : memref<2x64xf32, #tpu.memory_space<vmem>>, vector<2x32xf32>
    tpu.vector_store %arg15[%c0_332, %c32], %895 {strides = array<i32>} : memref<2x64xf32, #tpu.memory_space<vmem>>, vector<2x32xf32>,
    return
  }
}

</mosaic_0001>

<llo_original>
// kernel: get_embd_forward.3
$region0: #{get_embd_forward.3}
  #allocation0 [shape = 'u32[]', space=smem, size = 0x4, offset = 0x4, fixed_abs, tag = 'smem constant byte address 0x4 - core index']
  #allocation1 [shape = 'u32[72,128]{1,0:T(1,128)}', space=vmem, size = 0x9000, scoped, tag = 'internal scratch']
  %s0 = inlined_call_operand.vmem [shape: f32[80,32], index: 0, kind: input, shape index: {}]
  %s1 = inlined_call_operand.vmem [shape: f32[80,1], index: 1, kind: input, shape index: {}]
  %s2 = inlined_call_operand.vmem [shape: bf16[32,72], index: 2, kind: input, shape index: {}]
  %s3 = inlined_call_operand.vmem [shape: f32[1,72], index: 3, kind: input, shape index: {}]
  %s4 = inlined_call_operand.vmem [shape: bf16[80,72], index: 4, kind: output, shape index: {}]
  %s5 = sld [smem:[#allocation0]]
  $region26: #{get_embd_forward.3} parent=0
    _
  %s7 = ssub.s32 1, %s5
  %s8 = scalar_select 0, %s7, %s5
  // Predicated region
  $region2: #{get_embd_forward.3} parent=0 // pred_check
    _
  $region3: #{get_embd_forward.3} parent=0 // pred_check_branch
    %10 = sbr.rel (0) target = $region5
  $region4: #{get_embd_forward.3} parent=0 // pred_region
    _
  $region5: #{get_embd_forward.3} parent=0 // pred_fallthru
    _
  // Predicated region
  $region6: #{get_embd_forward.3} parent=0 // pred_check
    _
  $region7: #{get_embd_forward.3} parent=0 // pred_check_branch
    %12 = sbr.rel (0) target = $region9
  $region8: #{get_embd_forward.3} parent=0 // pred_region
    _
  $region9: #{get_embd_forward.3} parent=0 // pred_fallthru
    _
  // Predicated region
  $region10: #{get_embd_forward.3} parent=0 // pred_check
    _
  $region11: #{get_embd_forward.3} parent=0 // pred_check_branch
    %14 = sbr.rel (0) target = $region13
  $region12: #{get_embd_forward.3} parent=0 // pred_region
    _
  $region13: #{get_embd_forward.3} parent=0 // pred_fallthru
    _
  // Predicated region
  $region14: #{get_embd_forward.3} parent=0 // pred_check
    _
  $region15: #{get_embd_forward.3} parent=0 // pred_check_branch
    %16 = sbr.rel (0) target = $region17
  $region16: #{get_embd_forward.3} parent=0 // pred_region
    _
  $region17: #{get_embd_forward.3} parent=0 // pred_fallthru
    _
  %v18 = vld [vmem:[%s0] sm:$0xff]
  %v19 = vld [vmem:[%s0 + $0x8] sm:$0xff]
  %v20 = vld [vmem:[%s0 + $0x10] sm:$0xff]
  %v21 = vld [vmem:[%s0 + $0x18] sm:$0xff]
  %v22 = vld [vmem:[%s0 + $0x20] sm:$0xff]
  %v23 = vld [vmem:[%s0 + $0x28] sm:$0xff]
  %v24 = vld [vmem:[%s0 + $0x30] sm:$0xff]
  %v25 = vld [vmem:[%s0 + $0x38] sm:$0xff]
  %v26 = vld [vmem:[%s0 + $0x40] sm:$0xff]
  %v27 = vld [vmem:[%s0 + $0x48] sm:$0xff]
  %v28 = vld [vmem:[%s1] sm:$0xff]
  %v29 = vld [vmem:[%s1 + $0x8] sm:$0xff]
  %v30 = vld [vmem:[%s1 + $0x10] sm:$0xff]
  %v31 = vld [vmem:[%s1 + $0x18] sm:$0xff]
  %v32 = vld [vmem:[%s1 + $0x20] sm:$0xff]
  %v33 = vld [vmem:[%s1 + $0x28] sm:$0xff]
  %v34 = vld [vmem:[%s1 + $0x30] sm:$0xff]
  %v35 = vld [vmem:[%s1 + $0x38] sm:$0xff]
  %v36 = vld [vmem:[%s1 + $0x40] sm:$0xff]
  %v37 = vld [vmem:[%s1 + $0x48] sm:$0xff]
  %39 = vset.pattern.permute.xlu0 0
  %40 = vperm.xlu0 %39, %v28
  %v41 = vpop.permute.xlu0 %40
  %44 = vset.pattern.permute.xlu0 0
  %45 = vperm.xlu0 %44, %v29
  %v46 = vpop.permute.xlu0 %45
  %49 = vset.pattern.permute.xlu0 0
  %50 = vperm.xlu0 %49, %v30
  %v51 = vpop.permute.xlu0 %50
  %54 = vset.pattern.permute.xlu0 0
  %55 = vperm.xlu0 %54, %v31
  %v56 = vpop.permute.xlu0 %55
  %59 = vset.pattern.permute.xlu0 0
  %60 = vperm.xlu0 %59, %v32
  %v61 = vpop.permute.xlu0 %60
  %64 = vset.pattern.permute.xlu0 0
  %65 = vperm.xlu0 %64, %v33
  %v66 = vpop.permute.xlu0 %65
  %69 = vset.pattern.permute.xlu0 0
  %70 = vperm.xlu0 %69, %v34
  %v71 = vpop.permute.xlu0 %70
  %74 = vset.pattern.permute.xlu0 0
  %75 = vperm.xlu0 %74, %v35
  %v76 = vpop.permute.xlu0 %75
  %79 = vset.pattern.permute.xlu0 0
  %80 = vperm.xlu0 %79, %v36
  %v81 = vpop.permute.xlu0 %80
  %84 = vset.pattern.permute.xlu0 0
  %85 = vperm.xlu0 %84, %v37
  %v86 = vpop.permute.xlu0 %85
  %v88 = vmul.f32 %v18, %v41
  %v89 = vmul.f32 %v19, %v46
  %v90 = vmul.f32 %v20, %v51
  %v91 = vmul.f32 %v21, %v56
  %v92 = vmul.f32 %v22, %v61
  %v93 = vmul.f32 %v23, %v66
  %v94 = vmul.f32 %v24, %v71
  %v95 = vmul.f32 %v25, %v76
  %v96 = vmul.f32 %v26, %v81
  %v97 = vmul.f32 %v27, %v86
  %v98 = vpack.c.bf16 %v89, %v88
  %v99 = vpack.c.bf16 %v91, %v90
  %v100 = vpack.c.bf16 %v93, %v92
  %v101 = vpack.c.bf16 %v95, %v94
  %v102 = vpack.c.bf16 %v97, %v96
  %v103 = vld [vmem:[%s2] sm:$0xf]
  %v104 = vld [vmem:[%s2 + $0x4] sm:$0xf]
  %v105 = vld [vmem:[%s2 + $0x8] sm:$0xf]
  %v106 = vld [vmem:[%s2 + $0xc] sm:$0xf]
  %v107 = vld [vmem:[%s3] sm:$0x1]
  %v109 = vperm.slane %v107, 0
  %v115 = vunpack.c.l.b16 %v103
  %v116 = vunpack.c.l.b16 %v104
  %v117 = vunpack.c.l.b16 %v105
  %v118 = vunpack.c.l.b16 %v106
  %v119 = vpack.c.b16 %v116, %v115
  %v120 = vpack.c.b16 %v118, %v117
  %vm123 = vcmask 261120
  %v125 = vsel %vm123, %v98, 0
  %v128 = vsel %vm123, %v99, 0
  %v131 = vsel %vm123, %v100, 0
  %v134 = vsel %vm123, %v101, 0
  %v137 = vsel %vm123, %v102, 0
  %139 = vmatpush.bf16.msra.mxu0 0
  %140 = vmatpush.bf16.msra.mxu0 0
  %141 = vmatpush.bf16.msra.mxu0 0
  %142 = vmatpush.bf16.msra.mxu0 0
  %143 = vmatpush.bf16.msra.mxu0 0
  %144 = vmatpush.bf16.msra.mxu0 0
  %145 = vmatpush.bf16.msra.mxu0 %v120
  %146 = vmatpush.bf16.msra.mxu0 %v119
  %147 = vmatmul.bf16.gmra.mxu0 %v125
  %v148 = vpop.f32.mrf.mxu0
  %v149 = vadd.f32 %v109, %v148
  %v150 = vpop.f32.mrf.mxu0
  %v151 = vadd.f32 %v109, %v150
  %152 = vmatmul.bf16.gmra.mxu0 %v128
  %v153 = vpop.f32.mrf.mxu0
  %v154 = vadd.f32 %v109, %v153
  %v155 = vpop.f32.mrf.mxu0
  %v156 = vadd.f32 %v109, %v155
  %157 = vmatmul.bf16.gmra.mxu0 %v131
  %v158 = vpop.f32.mrf.mxu0
  %v159 = vadd.f32 %v109, %v158
  %v160 = vpop.f32.mrf.mxu0
  %v161 = vadd.f32 %v109, %v160
  %162 = vmatmul.bf16.gmra.mxu0 %v134
  %v163 = vpop.f32.mrf.mxu0
  %v164 = vadd.f32 %v109, %v163
  %v165 = vpop.f32.mrf.mxu0
  %v166 = vadd.f32 %v109, %v165
  %167 = vmatmul.bf16.gmra.mxu0 %v137
  %v168 = vpop.f32.mrf.mxu0
  %v169 = vadd.f32 %v109, %v168
  %v170 = vpop.f32.mrf.mxu0
  %v171 = vadd.f32 %v109, %v170
  %172 = vdwg.mxu0
  %v173 = vpack.c.bf16 %v149, %v149
  %v174 = vpack.c.bf16 %v151, %v151
  %v175 = vpack.c.bf16 %v154, %v154
  %v176 = vpack.c.bf16 %v156, %v156
  %v177 = vpack.c.bf16 %v159, %v159
  %v178 = vpack.c.bf16 %v161, %v161
  %v179 = vpack.c.bf16 %v164, %v164
  %v180 = vpack.c.bf16 %v166, %v166
  %v181 = vpack.c.bf16 %v169, %v169
  %v182 = vpack.c.bf16 %v171, %v171
  %vm183 = vcmask 584704
  %184 = vst.msk [vmem:[%s4] sm:$0xf] %vm183, %v173
  %185 = vst.msk [vmem:[%s4 + $0x4] sm:$0xf] %vm183, %v174
  %186 = vst.msk [vmem:[%s4 + $0x8] sm:$0xf] %vm183, %v175
  %187 = vst.msk [vmem:[%s4 + $0xc] sm:$0xf] %vm183, %v176
  %188 = vst.msk [vmem:[%s4 + $0x10] sm:$0xf] %vm183, %v177
  %189 = vst.msk [vmem:[%s4 + $0x14] sm:$0xf] %vm183, %v178
  %190 = vst.msk [vmem:[%s4 + $0x18] sm:$0xf] %vm183, %v179
  %191 = vst.msk [vmem:[%s4 + $0x1c] sm:$0xf] %vm183, %v180
  %192 = vst.msk [vmem:[%s4 + $0x20] sm:$0xf] %vm183, %v181
  %193 = vst.msk [vmem:[%s4 + $0x24] sm:$0xf] %vm183, %v182
  // Predicated region
  $region18: #{get_embd_forward.3} parent=0 // pred_check
    _
  $region19: #{get_embd_forward.3} parent=0 // pred_check_branch
    %195 = sbr.rel (0) target = $region21
  $region20: #{get_embd_forward.3} parent=0 // pred_region
    _
  $region21: #{get_embd_forward.3} parent=0 // pred_fallthru
    _
  // Predicated region
  $region22: #{get_embd_forward.3} parent=0 // pred_check
    _
  $region23: #{get_embd_forward.3} parent=0 // pred_check_branch
    %197 = sbr.rel (0) target = $region25
  $region24: #{get_embd_forward.3} parent=0 // pred_region
    _
  $region25: #{get_embd_forward.3} parent=0 // pred_fallthru
    _

// kernel: get_embd_forward.5
$region0: #{get_embd_forward.5}
  #allocation0 [shape = 'u32[]', space=smem, size = 0x4, offset = 0x4, fixed_abs, tag = 'smem constant byte address 0x4 - core index']
  #allocation1 [shape = 'u32[72,128]{1,0:T(1,128)}', space=vmem, size = 0x9000, scoped, tag = 'internal scratch']
  #allocation2 [shape = 'f32[2,8,96]{2,1,0:T(8,128)}', space=vmem, size = 0x2000, scoped, tag = 'scratch operand']
  #allocation3 [shape = 'f32[2,8,96]{2,1,0:T(8,128)}', space=vmem, size = 0x2000, scoped, tag = 'scratch operand']
  #allocation4 [shape = 'f32[8,2,32]{2,1,0:T(2,128)}', space=vmem, size = 0x2000, scoped, tag = 'scratch operand']
  #allocation5 [shape = 'f32[8,2,32]{2,1,0:T(2,128)}', space=vmem, size = 0x2000, scoped, tag = 'scratch operand']
  #allocation6 [shape = 'f32[1,1]{1,0:T(1,128)S(1)}', space=vmem, size = 0x200, scoped, tag = 'scoped memory for get_embd_forward.5']
  %s0 = inlined_call_operand.vmem [shape: f32[2,8,24], index: 0, kind: input, shape index: {}]
  %s1 = inlined_call_operand.vmem [shape: f32[2,8], index: 1, kind: input, shape index: {}]
  %s2 = inlined_call_operand.vmem [shape: bf16[24,96], index: 2, kind: input, shape index: {}]
  %s3 = inlined_call_operand.vmem [shape: bf16[32,96], index: 3, kind: input, shape index: {}]
  %s4 = inlined_call_operand.vmem [shape: f32[1,96], index: 4, kind: input, shape index: {}]
  %s5 = inlined_call_operand.vmem [shape: f32[1,96], index: 5, kind: input, shape index: {}]
  %s6 = inlined_call_operand.vmem [shape: bf16[24,96], index: 6, kind: input, shape index: {}]
  %s7 = inlined_call_operand.vmem [shape: bf16[32,96], index: 7, kind: input, shape index: {}]
  %s8 = inlined_call_operand.vmem [shape: f32[1,96], index: 8, kind: input, shape index: {}]
  %s9 = inlined_call_operand.vmem [shape: f32[1,96], index: 9, kind: input, shape index: {}]
  %s10 = inlined_call_operand.vmem [shape: bf16[32,32], index: 10, kind: input, shape index: {}]
  %s11 = inlined_call_operand.vmem [shape: bf16[32,32], index: 11, kind: input, shape index: {}]
  %s12 = inlined_call_operand.vmem [shape: f32[1,32], index: 12, kind: input, shape index: {}]
  %s13 = inlined_call_operand.vmem [shape: f32[1,32], index: 13, kind: input, shape index: {}]
  %s14 = inlined_call_operand.<no memory space> [shape: f32[1,1], index: 14, kind: input, shape index: {}]
  %s15 = inlined_call_operand.hbm [shape: f32[2,64], index: 15, kind: output, shape index: {}]
  %s16 = sld [smem:[#allocation0]]
  $region70: #{get_embd_forward.5} parent=0
    _
  %s18 = ssub.s32 1, %s16
  %s19 = scalar_select 0, %s18, %s16
  %v20 = vstv %s14
  %21 = vst [vmem:[#allocation6] sm:$0x1] %v20
  $region1: #{get_embd_forward.5} parent=0
    #allocation7 [shape = 'u8[1024]{0}', space=vmem, size = 0x400, scoped, tag = 'output window, operand 0, single buffered']
    #allocation8 [shape = 's32[1]{0}', space=sflag, size = 0x4, scoped, tag = 'scoped memory for get_embd_forward.5']
    %22 = vsyncpa [#allocation8], 0
    // Predicated region
    $region2: #{get_embd_forward.5} parent=1 // pred_check
      _
    $region3: #{get_embd_forward.5} parent=1 // pred_check_branch
      %24 = sbr.rel (0) target = $region5
    $region4: #{get_embd_forward.5} parent=1 // pred_region
      _
    $region5: #{get_embd_forward.5} parent=1 // pred_fallthru
      _
    // Predicated region
    $region6: #{get_embd_forward.5} parent=1 // pred_check
      _
    $region7: #{get_embd_forward.5} parent=1 // pred_check_branch
      %26 = sbr.rel (0) target = $region9
    $region8: #{get_embd_forward.5} parent=1 // pred_region
      _
    $region9: #{get_embd_forward.5} parent=1 // pred_fallthru
      _
    // Predicated region
    $region10: #{get_embd_forward.5} parent=1 // pred_check
      _
    $region11: #{get_embd_forward.5} parent=1 // pred_check_branch
      %28 = sbr.rel (0) target = $region13
    $region12: #{get_embd_forward.5} parent=1 // pred_region
      _
    $region13: #{get_embd_forward.5} parent=1 // pred_fallthru
      _
    // Predicated region
    $region14: #{get_embd_forward.5} parent=1 // pred_check
      _
    $region15: #{get_embd_forward.5} parent=1 // pred_check_branch
      %30 = sbr.rel (0) target = $region17
    $region16: #{get_embd_forward.5} parent=1 // pred_region
      _
    $region17: #{get_embd_forward.5} parent=1 // pred_fallthru
      _
    // Predicated region
    $region18: #{get_embd_forward.5} parent=1 // pred_check
      _
    $region19: #{get_embd_forward.5} parent=1 // pred_check_branch
      %32 = sbr.rel (0) target = $region21
    $region20: #{get_embd_forward.5} parent=1 // pred_region
      _
    $region21: #{get_embd_forward.5} parent=1 // pred_fallthru
      _
    // Predicated region
    $region22: #{get_embd_forward.5} parent=1 // pred_check
      _
    $region23: #{get_embd_forward.5} parent=1 // pred_check_branch
      %34 = sbr.rel (0) target = $region25
    $region24: #{get_embd_forward.5} parent=1 // pred_region
      _
    $region25: #{get_embd_forward.5} parent=1 // pred_fallthru
      _
    // Predicated region
    $region26: #{get_embd_forward.5} parent=1 // pred_check
      _
    $region27: #{get_embd_forward.5} parent=1 // pred_check_branch
      %36 = sbr.rel (0) target = $region29
    $region28: #{get_embd_forward.5} parent=1 // pred_region
      _
    $region29: #{get_embd_forward.5} parent=1 // pred_fallthru
      _
    // Predicated region
    $region30: #{get_embd_forward.5} parent=1 // pred_check
      _
    $region31: #{get_embd_forward.5} parent=1 // pred_check_branch
      %38 = sbr.rel (0) target = $region33
    $region32: #{get_embd_forward.5} parent=1 // pred_region
      _
    $region33: #{get_embd_forward.5} parent=1 // pred_fallthru
      _
    // Predicated region
    $region34: #{get_embd_forward.5} parent=1 // pred_check
      _
    $region35: #{get_embd_forward.5} parent=1 // pred_check_branch
      %40 = sbr.rel (0) target = $region37
    $region36: #{get_embd_forward.5} parent=1 // pred_region
      _
    $region37: #{get_embd_forward.5} parent=1 // pred_fallthru
      _
    // Predicated region
    $region38: #{get_embd_forward.5} parent=1 // pred_check
      _
    $region39: #{get_embd_forward.5} parent=1 // pred_check_branch
      %42 = sbr.rel (0) target = $region41
    $region40: #{get_embd_forward.5} parent=1 // pred_region
      _
    $region41: #{get_embd_forward.5} parent=1 // pred_fallthru
      _
    // Predicated region
    $region42: #{get_embd_forward.5} parent=1 // pred_check
      _
    $region43: #{get_embd_forward.5} parent=1 // pred_check_branch
      %44 = sbr.rel (0) target = $region45
    $region44: #{get_embd_forward.5} parent=1 // pred_region
      _
    $region45: #{get_embd_forward.5} parent=1 // pred_fallthru
      _
    // Predicated region
    $region46: #{get_embd_forward.5} parent=1 // pred_check
      _
    $region47: #{get_embd_forward.5} parent=1 // pred_check_branch
      %46 = sbr.rel (0) target = $region49
    $region48: #{get_embd_forward.5} parent=1 // pred_region
      _
    $region49: #{get_embd_forward.5} parent=1 // pred_fallthru
      _
    // Predicated region
    $region50: #{get_embd_forward.5} parent=1 // pred_check
      _
    $region51: #{get_embd_forward.5} parent=1 // pred_check_branch
      %48 = sbr.rel (0) target = $region53
    $region52: #{get_embd_forward.5} parent=1 // pred_region
      _
    $region53: #{get_embd_forward.5} parent=1 // pred_fallthru
      _
    // Predicated region
    $region54: #{get_embd_forward.5} parent=1 // pred_check
      _
    $region55: #{get_embd_forward.5} parent=1 // pred_check_branch
      %50 = sbr.rel (0) target = $region57
    $region56: #{get_embd_forward.5} parent=1 // pred_region
      _
    $region57: #{get_embd_forward.5} parent=1 // pred_fallthru
      _
    // Predicated region
    $region58: #{get_embd_forward.5} parent=1 // pred_check
      _
    $region59: #{get_embd_forward.5} parent=1 // pred_check_branch
      %52 = sbr.rel (0) target = $region61
    $region60: #{get_embd_forward.5} parent=1 // pred_region
      _
    $region61: #{get_embd_forward.5} parent=1 // pred_fallthru
      _
    %v54 = vld [vmem:[%s2] sm:$0xf]
    %v55 = vld [vmem:[%s2 + $0x4] sm:$0xf]
    %v56 = vld [vmem:[%s2 + $0x8] sm:$0xf]
    %v57 = vld [vmem:[%s6] sm:$0xf]
    %v58 = vld [vmem:[%s6 + $0x4] sm:$0xf]
    %v59 = vld [vmem:[%s6 + $0x8] sm:$0xf]
    %v60 = vld [vmem:[%s4] sm:$0x1]
    %v61 = vld [vmem:[%s8] sm:$0x1]
    %v62 = vld [vmem:[%s0] sm:$0xff]
    %v63 = vpack.c.bf16 %v62, %v62
    %v65 = vperm.slane %v60, 0
    %v70 = vunpack.c.l.b16 %v54
    %v71 = vunpack.c.l.b16 %v55
    %v72 = vunpack.c.l.b16 %v56
    %v73 = vpack.c.b16 %v71, %v70
    %v74 = vpack.c.b16 %v72, %v72
    %vm76 = vcmask 195584
    %v78 = vsel %vm76, %v63, 0
    %vm80 = vcmask 1043456
    %v82 = vsel %vm80, %v74, 0
    %84 = vmatpush.bf16.msra.mxu0 0
    %85 = vmatpush.bf16.msra.mxu0 0
    %86 = vmatpush.bf16.msra.mxu0 0
    %87 = vmatpush.bf16.msra.mxu0 0
    %88 = vmatpush.bf16.msra.mxu0 0
    %89 = vmatpush.bf16.msra.mxu0 0
    %90 = vmatpush.bf16.msra.mxu0 %v82
    %91 = vmatpush.bf16.msra.mxu0 %v73
    %92 = vmatmul.bf16.gmra.mxu0 %v78
    %v93 = vpop.f32.mrf.mxu0
    %v94 = vadd.f32 %v65, %v93
    %v95 = vpop.f32.mrf.mxu0
    %96 = vdwg.mxu0
    %vm97 = vcmask 785408
    %98 = vst.msk [vmem:[#allocation2] sm:$0xff] %vm97, %v94
    %v100 = vperm.slane %v61, 0
    %v105 = vunpack.c.l.b16 %v57
    %v106 = vunpack.c.l.b16 %v58
    %v107 = vunpack.c.l.b16 %v59
    %v108 = vpack.c.b16 %v106, %v105
    %v109 = vpack.c.b16 %v107, %v107
    %v112 = vsel %vm80, %v109, 0
    %114 = vmatpush.bf16.msra.mxu0 0
    %115 = vmatpush.bf16.msra.mxu0 0
    %116 = vmatpush.bf16.msra.mxu0 0
    %117 = vmatpush.bf16.msra.mxu0 0
    %118 = vmatpush.bf16.msra.mxu0 0
    %119 = vmatpush.bf16.msra.mxu0 0
    %120 = vmatpush.bf16.msra.mxu0 %v112
    %121 = vmatpush.bf16.msra.mxu0 %v108
    %122 = vmatmul.bf16.gmra.mxu0 %v78
    %v123 = vpop.f32.mrf.mxu0
    %v124 = vadd.f32 %v100, %v123
    %v125 = vpop.f32.mrf.mxu0
    %126 = vdwg.mxu0
    %127 = vst.msk [vmem:[#allocation3] sm:$0xff] %vm97, %v124
    %s128 = scalar_lea.vmem %s0, 8
    %v129 = vld [vmem:[%s128] sm:$0xff]
    %v130 = vpack.c.bf16 %v129, %v129
    %v132 = vsel %vm76, %v130, 0
    %134 = vmatpush.bf16.msra.mxu0 0
    %135 = vmatpush.bf16.msra.mxu0 0
    %136 = vmatpush.bf16.msra.mxu0 0
    %137 = vmatpush.bf16.msra.mxu0 0
    %138 = vmatpush.bf16.msra.mxu0 0
    %139 = vmatpush.bf16.msra.mxu0 0
    %140 = vmatpush.bf16.msra.mxu0 %v82
    %141 = vmatpush.bf16.msra.mxu0 %v73
    %142 = vmatmul.bf16.gmra.mxu0 %v132
    %v143 = vpop.f32.mrf.mxu0
    %v144 = vadd.f32 %v65, %v143
    %v145 = vpop.f32.mrf.mxu0
    %146 = vdwg.mxu0
    %s147 = scalar_lea.vmem [#allocation2], 8
    %148 = vst.msk [vmem:[%s147] sm:$0xff] %vm97, %v144
    %149 = vmatpush.bf16.msra.mxu0 0
    %150 = vmatpush.bf16.msra.mxu0 0
    %151 = vmatpush.bf16.msra.mxu0 0
    %152 = vmatpush.bf16.msra.mxu0 0
    %153 = vmatpush.bf16.msra.mxu0 0
    %154 = vmatpush.bf16.msra.mxu0 0
    %155 = vmatpush.bf16.msra.mxu0 %v112
    %156 = vmatpush.bf16.msra.mxu0 %v108
    %157 = vmatmul.bf16.gmra.mxu0 %v132
    %v158 = vpop.f32.mrf.mxu0
    %v159 = vadd.f32 %v100, %v158
    %v160 = vpop.f32.mrf.mxu0
    %161 = vdwg.mxu0
    %s162 = scalar_lea.vmem [#allocation3], 8
    %163 = vst.msk [vmem:[%s162] sm:$0xff] %vm97, %v159
    %v164 = vld [vmem:[%s3] sm:$0xf]
    %v165 = vld [vmem:[%s3 + $0x4] sm:$0xf]
    %v166 = vld [vmem:[%s3 + $0x8] sm:$0xf]
    %v167 = vld [vmem:[%s3 + $0xc] sm:$0xf]
    %v168 = vld [vmem:[%s7] sm:$0xf]
    %v169 = vld [vmem:[%s7 + $0x4] sm:$0xf]
    %v170 = vld [vmem:[%s7 + $0x8] sm:$0xf]
    %v171 = vld [vmem:[%s7 + $0xc] sm:$0xf]
    %v172 = vld [vmem:[%s5] sm:$0x1]
    %v173 = vld [vmem:[%s9] sm:$0x1]
    %v174 = vld [vmem:[#allocation2] sm:$0x1]
    %v175 = vld [vmem:[#allocation2 + $0x8] sm:$0x1]
    %v176 = vld [vmem:[#allocation3 + $0x7] sm:$0x1]
    %v177 = vld [vmem:[#allocation3 + $0xf] sm:$0x1]
    %v179 = vperm.slane %v172, 0
    %v185 = vunpack.c.l.b16 %v164
    %v186 = vunpack.c.l.b16 %v165
    %v187 = vunpack.c.l.b16 %v166
    %v188 = vunpack.c.l.b16 %v167
    %v189 = vpack.c.b16 %v186, %v185
    %v190 = vpack.c.b16 %v188, %v187
    %vm193 = vcmask 261120
    %v195 = vsel %vm193, 0, 0
    %197 = vmatpush.bf16.msra.mxu0 0
    %198 = vmatpush.bf16.msra.mxu0 0
    %199 = vmatpush.bf16.msra.mxu0 0
    %200 = vmatpush.bf16.msra.mxu0 0
    %201 = vmatpush.bf16.msra.mxu0 0
    %202 = vmatpush.bf16.msra.mxu0 0
    %203 = vmatpush.bf16.msra.mxu0 %v190
    %204 = vmatpush.bf16.msra.mxu0 %v189
    %205 = vmatmul.bf16.gmra.mxu0 %v195
    %v206 = vpop.f32.mrf.mxu0
    %v207 = vadd.f32 %v179, %v206
    %v208 = vpop.f32.mrf.mxu0
    %209 = vdwg.mxu0
    %v211 = vrot.slane %v207, 1
    %v214 = vadd.f32 %v174, %v207
    %v215 = vadd.f32 %v175, %v211
    %v216 = vxor.u32 %v214, 2147483648
    %v217 = vxor.u32 %v215, 2147483648
    %v218 = vmul.f32 %v216, 1.442695
    %v219 = vpow.pop %v218
    %v220 = vmul.f32 %v217, 1.442695
    %v221 = vpow.pop %v220
    %v222 = vadd.f32 %v219, 1.0
    %v223 = vadd.f32 %v221, 1.0
    %v224 = vrcp.pop %v222
    %v225 = vmul.f32 %v222, %v224
    %v226 = vsub.f32 1.0, %v225
    %v227 = vmul.f32 %v224, %v226
    %v228 = vadd.f32 %v224, %v227
    %vm229 = vweird.f32 %v222
    %vm230 = vweird.f32 %v224
    %vm231 = vmor %vm229, %vm230
    %v232 = vsel %vm231, %v224, %v228
    %v233 = vand.u32 2147483647, %v222
    %vm234 = vcmp.eq.f32.partialorder %v233, 8.507059e+37
    %v235 = vand.u32 %v222, 2147483648
    %v236 = vor.u32 1.1754944e-38, %v235
    %v237 = vsel %vm234, %v236, %v232
    %v238 = vmul.f32 1.0, %v237
    %v239 = vrcp.pop %v223
    %v240 = vmul.f32 %v223, %v239
    %v241 = vsub.f32 1.0, %v240
    %v242 = vmul.f32 %v239, %v241
    %v243 = vadd.f32 %v239, %v242
    %vm244 = vweird.f32 %v223
    %vm245 = vweird.f32 %v239
    %vm246 = vmor %vm244, %vm245
    %v247 = vsel %vm246, %v239, %v243
    %v248 = vand.u32 2147483647, %v223
    %vm249 = vcmp.eq.f32.partialorder %v248, 8.507059e+37
    %v250 = vand.u32 %v223, 2147483648
    %v251 = vor.u32 1.1754944e-38, %v250
    %v252 = vsel %vm249, %v251, %v247
    %v253 = vmul.f32 1.0, %v252
    %254 = vrot.lane.b32.xlu0 %v207, 64
    %v255 = vpop.permute.xlu0 %254
    %256 = vrot.lane.b32.xlu0 %v211, 64
    %v257 = vpop.permute.xlu0 %256
    %v260 = vmul.f32 %v238, %v255
    %v261 = vmul.f32 %v253, %v257
    %264 = vrot.lane.b32.xlu0 %v260, 64
    %v265 = vpop.permute.xlu0 %264
    %266 = vrot.lane.b32.xlu0 %v261, 64
    %v267 = vpop.permute.xlu0 %266
    %v270 = vadd.f32 %v174, %v265
    %v271 = vadd.f32 %v175, %v267
    %v272 = vtanh.pop %v270
    %v273 = vtanh.pop %v271
    %v274 = vsub.f32 1.0, %v238
    %v275 = vsub.f32 1.0, %v253
    %278 = vrot.lane.b32.xlu0 %v272, 96
    %v279 = vpop.permute.xlu0 %278
    %280 = vrot.lane.b32.xlu0 %v273, 96
    %v281 = vpop.permute.xlu0 %280
    %v284 = vmul.f32 %v274, %v279
    %v285 = vmul.f32 %v275, %v281
    %v286 = vmul.f32 %v238, 0.0
    %v287 = vmul.f32 %v253, 0.0
    %v288 = vadd.f32 %v284, %v286
    %v289 = vadd.f32 %v285, %v287
    %v291 = vperm.slane %v173, 0
    %v297 = vunpack.c.l.b16 %v168
    %v298 = vunpack.c.l.b16 %v169
    %v299 = vunpack.c.l.b16 %v170
    %v300 = vunpack.c.l.b16 %v171
    %v301 = vpack.c.b16 %v298, %v297
    %v302 = vpack.c.b16 %v300, %v299
    %305 = vmatpush.bf16.msra.mxu0 0
    %306 = vmatpush.bf16.msra.mxu0 0
    %307 = vmatpush.bf16.msra.mxu0 0
    %308 = vmatpush.bf16.msra.mxu0 0
    %309 = vmatpush.bf16.msra.mxu0 0
    %310 = vmatpush.bf16.msra.mxu0 0
    %311 = vmatpush.bf16.msra.mxu0 %v302
    %312 = vmatpush.bf16.msra.mxu0 %v301
    %313 = vmatmul.bf16.gmra.mxu0 %v195
    %v314 = vpop.f32.mrf.mxu0
    %v315 = vadd.f32 %v291, %v314
    %v316 = vpop.f32.mrf.mxu0
    %317 = vdwg.mxu0
    %v319 = vrot.slane %v315, 1
    %v322 = vadd.f32 %v176, %v315
    %v323 = vadd.f32 %v177, %v319
    %v324 = vxor.u32 %v322, 2147483648
    %v325 = vxor.u32 %v323, 2147483648
    %v326 = vmul.f32 %v324, 1.442695
    %v327 = vpow.pop %v326
    %v328 = vmul.f32 %v325, 1.442695
    %v329 = vpow.pop %v328
    %v330 = vadd.f32 %v327, 1.0
    %v331 = vadd.f32 %v329, 1.0
    %v332 = vrcp.pop %v330
    %v333 = vmul.f32 %v330, %v332
    %v334 = vsub.f32 1.0, %v333
    %v335 = vmul.f32 %v332, %v334
    %v336 = vadd.f32 %v332, %v335
    %vm337 = vweird.f32 %v330
    %vm338 = vweird.f32 %v332
    %vm339 = vmor %vm337, %vm338
    %v340 = vsel %vm339, %v332, %v336
    %v341 = vand.u32 2147483647, %v330
    %vm342 = vcmp.eq.f32.partialorder %v341, 8.507059e+37
    %v343 = vand.u32 %v330, 2147483648
    %v344 = vor.u32 1.1754944e-38, %v343
    %v345 = vsel %vm342, %v344, %v340
    %v346 = vmul.f32 1.0, %v345
    %v347 = vrcp.pop %v331
    %v348 = vmul.f32 %v331, %v347
    %v349 = vsub.f32 1.0, %v348
    %v350 = vmul.f32 %v347, %v349
    %v351 = vadd.f32 %v347, %v350
    %vm352 = vweird.f32 %v331
    %vm353 = vweird.f32 %v347
    %vm354 = vmor %vm352, %vm353
    %v355 = vsel %vm354, %v347, %v351
    %v356 = vand.u32 2147483647, %v331
    %vm357 = vcmp.eq.f32.partialorder %v356, 8.507059e+37
    %v358 = vand.u32 %v331, 2147483648
    %v359 = vor.u32 1.1754944e-38, %v358
    %v360 = vsel %vm357, %v359, %v355
    %v361 = vmul.f32 1.0, %v360
    %362 = vrot.lane.b32.xlu0 %v315, 64
    %v363 = vpop.permute.xlu0 %362
    %364 = vrot.lane.b32.xlu0 %v319, 64
    %v365 = vpop.permute.xlu0 %364
    %v368 = vmul.f32 %v346, %v363
    %v369 = vmul.f32 %v361, %v365
    %372 = vrot.lane.b32.xlu0 %v368, 64
    %v373 = vpop.permute.xlu0 %372
    %374 = vrot.lane.b32.xlu0 %v369, 64
    %v375 = vpop.permute.xlu0 %374
    %v378 = vadd.f32 %v176, %v373
    %v379 = vadd.f32 %v177, %v375
    %v380 = vtanh.pop %v378
    %v381 = vtanh.pop %v379
    %v382 = vsub.f32 1.0, %v346
    %v383 = vsub.f32 1.0, %v361
    %386 = vrot.lane.b32.xlu0 %v380, 96
    %v387 = vpop.permute.xlu0 %386
    %388 = vrot.lane.b32.xlu0 %v381, 96
    %v389 = vpop.permute.xlu0 %388
    %v392 = vmul.f32 %v382, %v387
    %v393 = vmul.f32 %v383, %v389
    %v394 = vmul.f32 %v346, 0.0
    %v395 = vmul.f32 %v361, 0.0
    %v396 = vadd.f32 %v392, %v394
    %v397 = vadd.f32 %v393, %v395
    %v400 = vrot.slane %v289, 7
    %vm401 = vcmask 1041409
    %v402 = vsel %vm401, %v400, %v288
    %403 = vrot.lane.b32.xlu0 %v402, 96
    %v404 = vpop.permute.xlu0 %403
    %vm406 = vcmask 254976
    %407 = vst.msk [vmem:[#allocation4] sm:$0x3] %vm406, %v404
    %v410 = vrot.slane %v397, 7
    %v411 = vsel %vm401, %v410, %v396
    %412 = vrot.lane.b32.xlu0 %v411, 96
    %v413 = vpop.permute.xlu0 %412
    %s415 = scalar_lea.vmem [#allocation5], 14
    %416 = vst.msk [vmem:[%s415] sm:$0x3] %vm406, %v413
    %v417 = vld [vmem:[#allocation2 + $0x1] sm:$0x1]
    %v418 = vld [vmem:[#allocation2 + $0x9] sm:$0x1]
    %v419 = vld [vmem:[#allocation3 + $0x6] sm:$0x1]
    %v420 = vld [vmem:[#allocation3 + $0xe] sm:$0x1]
    %v421 = vpack.c.bf16 %v288, %v288
    %v422 = vpack.c.bf16 %v289, %v289
    %v425 = vunpack.c.l.b16 %v421
    %v426 = vunpack.c.l.b16 %v422
    %v427 = vrot.slane %v426, 7
    %v428 = vsel %vm401, %v427, %v425
    %v429 = vpack.c.b16 %v428, %v428
    %430 = vrot.lane.b32.xlu0 %v429, 96
    %v431 = vpop.permute.xlu0 %430
    %v433 = vsel %vm193, %v431, 0
    %435 = vmatpush.bf16.msra.mxu0 0
    %436 = vmatpush.bf16.msra.mxu0 0
    %437 = vmatpush.bf16.msra.mxu0 0
    %438 = vmatpush.bf16.msra.mxu0 0
    %439 = vmatpush.bf16.msra.mxu0 0
    %440 = vmatpush.bf16.msra.mxu0 0
    %441 = vmatpush.bf16.msra.mxu0 %v190
    %442 = vmatpush.bf16.msra.mxu0 %v189
    %443 = vmatmul.bf16.gmra.mxu0 %v433
    %v444 = vpop.f32.mrf.mxu0
    %v445 = vadd.f32 %v179, %v444
    %v446 = vpop.f32.mrf.mxu0
    %447 = vdwg.mxu0
    %v449 = vrot.slane %v445, 1
    %v452 = vadd.f32 %v417, %v445
    %v453 = vadd.f32 %v418, %v449
    %v454 = vxor.u32 %v452, 2147483648
    %v455 = vxor.u32 %v453, 2147483648
    %v456 = vmul.f32 %v454, 1.442695
    %v457 = vpow.pop %v456
    %v458 = vmul.f32 %v455, 1.442695
    %v459 = vpow.pop %v458
    %v460 = vadd.f32 %v457, 1.0
    %v461 = vadd.f32 %v459, 1.0
    %v462 = vrcp.pop %v460
    %v463 = vmul.f32 %v460, %v462
    %v464 = vsub.f32 1.0, %v463
    %v465 = vmul.f32 %v462, %v464
    %v466 = vadd.f32 %v462, %v465
    %vm467 = vweird.f32 %v460
    %vm468 = vweird.f32 %v462
    %vm469 = vmor %vm467, %vm468
    %v470 = vsel %vm469, %v462, %v466
    %v471 = vand.u32 2147483647, %v460
    %vm472 = vcmp.eq.f32.partialorder %v471, 8.507059e+37
    %v473 = vand.u32 %v460, 2147483648
    %v474 = vor.u32 1.1754944e-38, %v473
    %v475 = vsel %vm472, %v474, %v470
    %v476 = vmul.f32 1.0, %v475
    %v477 = vrcp.pop %v461
    %v478 = vmul.f32 %v461, %v477
    %v479 = vsub.f32 1.0, %v478
    %v480 = vmul.f32 %v477, %v479
    %v481 = vadd.f32 %v477, %v480
    %vm482 = vweird.f32 %v461
    %vm483 = vweird.f32 %v477
    %vm484 = vmor %vm482, %vm483
    %v485 = vsel %vm484, %v477, %v481
    %v486 = vand.u32 2147483647, %v461
    %vm487 = vcmp.eq.f32.partialorder %v486, 8.507059e+37
    %v488 = vand.u32 %v461, 2147483648
    %v489 = vor.u32 1.1754944e-38, %v488
    %v490 = vsel %vm487, %v489, %v485
    %v491 = vmul.f32 1.0, %v490
    %492 = vrot.lane.b32.xlu0 %v445, 64
    %v493 = vpop.permute.xlu0 %492
    %494 = vrot.lane.b32.xlu0 %v449, 64
    %v495 = vpop.permute.xlu0 %494
    %v498 = vmul.f32 %v476, %v493
    %v499 = vmul.f32 %v491, %v495
    %502 = vrot.lane.b32.xlu0 %v498, 64
    %v503 = vpop.permute.xlu0 %502
    %504 = vrot.lane.b32.xlu0 %v499, 64
    %v505 = vpop.permute.xlu0 %504
    %v508 = vadd.f32 %v417, %v503
    %v509 = vadd.f32 %v418, %v505
    %v510 = vtanh.pop %v508
    %v511 = vtanh.pop %v509
    %v512 = vsub.f32 1.0, %v476
    %v513 = vsub.f32 1.0, %v491
    %516 = vrot.lane.b32.xlu0 %v510, 96
    %v517 = vpop.permute.xlu0 %516
    %518 = vrot.lane.b32.xlu0 %v511, 96
    %v519 = vpop.permute.xlu0 %518
    %v522 = vmul.f32 %v512, %v517
    %v523 = vmul.f32 %v513, %v519
    %v524 = vmul.f32 %v476, %v288
    %v525 = vmul.f32 %v491, %v289
    %v526 = vadd.f32 %v522, %v524
    %v527 = vadd.f32 %v523, %v525
    %v528 = vpack.c.bf16 %v396, %v396
    %v529 = vpack.c.bf16 %v397, %v397
    %v532 = vunpack.c.l.b16 %v528
    %v533 = vunpack.c.l.b16 %v529
    %v534 = vrot.slane %v533, 7
    %v535 = vsel %vm401, %v534, %v532
    %v536 = vpack.c.b16 %v535, %v535
    %537 = vrot.lane.b32.xlu0 %v536, 96
    %v538 = vpop.permute.xlu0 %537
    %v540 = vsel %vm193, %v538, 0
    %542 = vmatpush.bf16.msra.mxu0 0
    %543 = vmatpush.bf16.msra.mxu0 0
    %544 = vmatpush.bf16.msra.mxu0 0
    %545 = vmatpush.bf16.msra.mxu0 0
    %546 = vmatpush.bf16.msra.mxu0 0
    %547 = vmatpush.bf16.msra.mxu0 0
    %548 = vmatpush.bf16.msra.mxu0 %v302
    %549 = vmatpush.bf16.msra.mxu0 %v301
    %550 = vmatmul.bf16.gmra.mxu0 %v540
    %v551 = vpop.f32.mrf.mxu0
    %v552 = vadd.f32 %v291, %v551
    %v553 = vpop.f32.mrf.mxu0
    %554 = vdwg.mxu0
    %v556 = vrot.slane %v552, 1
    %v559 = vadd.f32 %v419, %v552
    %v560 = vadd.f32 %v420, %v556
    %v561 = vxor.u32 %v559, 2147483648
    %v562 = vxor.u32 %v560, 2147483648
    %v563 = vmul.f32 %v561, 1.442695
    %v564 = vpow.pop %v563
    %v565 = vmul.f32 %v562, 1.442695
    %v566 = vpow.pop %v565
    %v567 = vadd.f32 %v564, 1.0
    %v568 = vadd.f32 %v566, 1.0
    %v569 = vrcp.pop %v567
    %v570 = vmul.f32 %v567, %v569
    %v571 = vsub.f32 1.0, %v570
    %v572 = vmul.f32 %v569, %v571
    %v573 = vadd.f32 %v569, %v572
    %vm574 = vweird.f32 %v567
    %vm575 = vweird.f32 %v569
    %vm576 = vmor %vm574, %vm575
    %v577 = vsel %vm576, %v569, %v573
    %v578 = vand.u32 2147483647, %v567
    %vm579 = vcmp.eq.f32.partialorder %v578, 8.507059e+37
    %v580 = vand.u32 %v567, 2147483648
    %v581 = vor.u32 1.1754944e-38, %v580
    %v582 = vsel %vm579, %v581, %v577
    %v583 = vmul.f32 1.0, %v582
    %v584 = vrcp.pop %v568
    %v585 = vmul.f32 %v568, %v584
    %v586 = vsub.f32 1.0, %v585
    %v587 = vmul.f32 %v584, %v586
    %v588 = vadd.f32 %v584, %v587
    %vm589 = vweird.f32 %v568
    %vm590 = vweird.f32 %v584
    %vm591 = vmor %vm589, %vm590
    %v592 = vsel %vm591, %v584, %v588
    %v593 = vand.u32 2147483647, %v568
    %vm594 = vcmp.eq.f32.partialorder %v593, 8.507059e+37
    %v595 = vand.u32 %v568, 2147483648
    %v596 = vor.u32 1.1754944e-38, %v595
    %v597 = vsel %vm594, %v596, %v592
    %v598 = vmul.f32 1.0, %v597
    %599 = vrot.lane.b32.xlu0 %v552, 64
    %v600 = vpop.permute.xlu0 %599
    %601 = vrot.lane.b32.xlu0 %v556, 64
    %v602 = vpop.permute.xlu0 %601
    %v605 = vmul.f32 %v583, %v600
    %v606 = vmul.f32 %v598, %v602
    %609 = vrot.lane.b32.xlu0 %v605, 64
    %v610 = vpop.permute.xlu0 %609
    %611 = vrot.lane.b32.xlu0 %v606, 64
    %v612 = vpop.permute.xlu0 %611
    %v615 = vadd.f32 %v419, %v610
    %v616 = vadd.f32 %v420, %v612
    %v617 = vtanh.pop %v615
    %v618 = vtanh.pop %v616
    %v619 = vsub.f32 1.0, %v583
    %v620 = vsub.f32 1.0, %v598
    %623 = vrot.lane.b32.xlu0 %v617, 96
    %v624 = vpop.permute.xlu0 %623
    %625 = vrot.lane.b32.xlu0 %v618, 96
    %v626 = vpop.permute.xlu0 %625
    %v629 = vmul.f32 %v619, %v624
    %v630 = vmul.f32 %v620, %v626
    %v631 = vmul.f32 %v583, %v396
    %v632 = vmul.f32 %v598, %v397
    %v633 = vadd.f32 %v629, %v631
    %v634 = vadd.f32 %v630, %v632
    %v637 = vrot.slane %v527, 7
    %v638 = vsel %vm401, %v637, %v526
    %639 = vrot.lane.b32.xlu0 %v638, 96
    %v640 = vpop.permute.xlu0 %639
    %s642 = scalar_lea.vmem [#allocation4], 2
    %643 = vst.msk [vmem:[%s642] sm:$0x3] %vm406, %v640
    %v646 = vrot.slane %v634, 7
    %v647 = vsel %vm401, %v646, %v633
    %648 = vrot.lane.b32.xlu0 %v647, 96
    %v649 = vpop.permute.xlu0 %648
    %s651 = scalar_lea.vmem [#allocation5], 12
    %652 = vst.msk [vmem:[%s651] sm:$0x3] %vm406, %v649
    %v653 = vld [vmem:[#allocation2 + $0x2] sm:$0x1]
    %v654 = vld [vmem:[#allocation2 + $0xa] sm:$0x1]
    %v655 = vld [vmem:[#allocation3 + $0x5] sm:$0x1]
    %v656 = vld [vmem:[#allocation3 + $0xd] sm:$0x1]
    %v657 = vpack.c.bf16 %v526, %v526
    %v658 = vpack.c.bf16 %v527, %v527
    %v661 = vunpack.c.l.b16 %v657
    %v662 = vunpack.c.l.b16 %v658
    %v663 = vrot.slane %v662, 7
    %v664 = vsel %vm401, %v663, %v661
    %v665 = vpack.c.b16 %v664, %v664
    %666 = vrot.lane.b32.xlu0 %v665, 96
    %v667 = vpop.permute.xlu0 %666
    %v669 = vsel %vm193, %v667, 0
    %671 = vmatpush.bf16.msra.mxu0 0
    %672 = vmatpush.bf16.msra.mxu0 0
    %673 = vmatpush.bf16.msra.mxu0 0
    %674 = vmatpush.bf16.msra.mxu0 0
    %675 = vmatpush.bf16.msra.mxu0 0
    %676 = vmatpush.bf16.msra.mxu0 0
    %677 = vmatpush.bf16.msra.mxu0 %v190
    %678 = vmatpush.bf16.msra.mxu0 %v189
    %679 = vmatmul.bf16.gmra.mxu0 %v669
    %v680 = vpop.f32.mrf.mxu0
    %v681 = vadd.f32 %v179, %v680
    %v682 = vpop.f32.mrf.mxu0
    %683 = vdwg.mxu0
    %v685 = vrot.slane %v681, 1
    %v688 = vadd.f32 %v653, %v681
    %v689 = vadd.f32 %v654, %v685
    %v690 = vxor.u32 %v688, 2147483648
    %v691 = vxor.u32 %v689, 2147483648
    %v692 = vmul.f32 %v690, 1.442695
    %v693 = vpow.pop %v692
    %v694 = vmul.f32 %v691, 1.442695
    %v695 = vpow.pop %v694
    %v696 = vadd.f32 %v693, 1.0
    %v697 = vadd.f32 %v695, 1.0
    %v698 = vrcp.pop %v696
    %v699 = vmul.f32 %v696, %v698
    %v700 = vsub.f32 1.0, %v699
    %v701 = vmul.f32 %v698, %v700
    %v702 = vadd.f32 %v698, %v701
    %vm703 = vweird.f32 %v696
    %vm704 = vweird.f32 %v698
    %vm705 = vmor %vm703, %vm704
    %v706 = vsel %vm705, %v698, %v702
    %v707 = vand.u32 2147483647, %v696
    %vm708 = vcmp.eq.f32.partialorder %v707, 8.507059e+37
    %v709 = vand.u32 %v696, 2147483648
    %v710 = vor.u32 1.1754944e-38, %v709
    %v711 = vsel %vm708, %v710, %v706
    %v712 = vmul.f32 1.0, %v711
    %v713 = vrcp.pop %v697
    %v714 = vmul.f32 %v697, %v713
    %v715 = vsub.f32 1.0, %v714
    %v716 = vmul.f32 %v713, %v715
    %v717 = vadd.f32 %v713, %v716
    %vm718 = vweird.f32 %v697
    %vm719 = vweird.f32 %v713
    %vm720 = vmor %vm718, %vm719
    %v721 = vsel %vm720, %v713, %v717
    %v722 = vand.u32 2147483647, %v697
    %vm723 = vcmp.eq.f32.partialorder %v722, 8.507059e+37
    %v724 = vand.u32 %v697, 2147483648
    %v725 = vor.u32 1.1754944e-38, %v724
    %v726 = vsel %vm723, %v725, %v721
    %v727 = vmul.f32 1.0, %v726
    %728 = vrot.lane.b32.xlu0 %v681, 64
    %v729 = vpop.permute.xlu0 %728
    %730 = vrot.lane.b32.xlu0 %v685, 64
    %v731 = vpop.permute.xlu0 %730
    %v734 = vmul.f32 %v712, %v729
    %v735 = vmul.f32 %v727, %v731
    %738 = vrot.lane.b32.xlu0 %v734, 64
    %v739 = vpop.permute.xlu0 %738
    %740 = vrot.lane.b32.xlu0 %v735, 64
    %v741 = vpop.permute.xlu0 %740
    %v744 = vadd.f32 %v653, %v739
    %v745 = vadd.f32 %v654, %v741
    %v746 = vtanh.pop %v744
    %v747 = vtanh.pop %v745
    %v748 = vsub.f32 1.0, %v712
    %v749 = vsub.f32 1.0, %v727
    %752 = vrot.lane.b32.xlu0 %v746, 96
    %v753 = vpop.permute.xlu0 %752
    %754 = vrot.lane.b32.xlu0 %v747, 96
    %v755 = vpop.permute.xlu0 %754
    %v758 = vmul.f32 %v748, %v753
    %v759 = vmul.f32 %v749, %v755
    %v760 = vmul.f32 %v712, %v526
    %v761 = vmul.f32 %v727, %v527
    %v762 = vadd.f32 %v758, %v760
    %v763 = vadd.f32 %v759, %v761
    %v764 = vpack.c.bf16 %v633, %v633
    %v765 = vpack.c.bf16 %v634, %v634
    %v768 = vunpack.c.l.b16 %v764
    %v769 = vunpack.c.l.b16 %v765
    %v770 = vrot.slane %v769, 7
    %v771 = vsel %vm401, %v770, %v768
    %v772 = vpack.c.b16 %v771, %v771
    %773 = vrot.lane.b32.xlu0 %v772, 96
    %v774 = vpop.permute.xlu0 %773
    %v776 = vsel %vm193, %v774, 0
    %778 = vmatpush.bf16.msra.mxu0 0
    %779 = vmatpush.bf16.msra.mxu0 0
    %780 = vmatpush.bf16.msra.mxu0 0
    %781 = vmatpush.bf16.msra.mxu0 0
    %782 = vmatpush.bf16.msra.mxu0 0
    %783 = vmatpush.bf16.msra.mxu0 0
    %784 = vmatpush.bf16.msra.mxu0 %v302
    %785 = vmatpush.bf16.msra.mxu0 %v301
    %786 = vmatmul.bf16.gmra.mxu0 %v776
    %v787 = vpop.f32.mrf.mxu0
    %v788 = vadd.f32 %v291, %v787
    %v789 = vpop.f32.mrf.mxu0
    %790 = vdwg.mxu0
    %v792 = vrot.slane %v788, 1
    %v795 = vadd.f32 %v655, %v788
    %v796 = vadd.f32 %v656, %v792
    %v797 = vxor.u32 %v795, 2147483648
    %v798 = vxor.u32 %v796, 2147483648
    %v799 = vmul.f32 %v797, 1.442695
    %v800 = vpow.pop %v799
    %v801 = vmul.f32 %v798, 1.442695
    %v802 = vpow.pop %v801
    %v803 = vadd.f32 %v800, 1.0
    %v804 = vadd.f32 %v802, 1.0
    %v805 = vrcp.pop %v803
    %v806 = vmul.f32 %v803, %v805
    %v807 = vsub.f32 1.0, %v806
    %v808 = vmul.f32 %v805, %v807
    %v809 = vadd.f32 %v805, %v808
    %vm810 = vweird.f32 %v803
    %vm811 = vweird.f32 %v805
    %vm812 = vmor %vm810, %vm811
    %v813 = vsel %vm812, %v805, %v809
    %v814 = vand.u32 2147483647, %v803
    %vm815 = vcmp.eq.f32.partialorder %v814, 8.507059e+37
    %v816 = vand.u32 %v803, 2147483648
    %v817 = vor.u32 1.1754944e-38, %v816
    %v818 = vsel %vm815, %v817, %v813
    %v819 = vmul.f32 1.0, %v818
    %v820 = vrcp.pop %v804
    %v821 = vmul.f32 %v804, %v820
    %v822 = vsub.f32 1.0, %v821
    %v823 = vmul.f32 %v820, %v822
    %v824 = vadd.f32 %v820, %v823
    %vm825 = vweird.f32 %v804
    %vm826 = vweird.f32 %v820
    %vm827 = vmor %vm825, %vm826
    %v828 = vsel %vm827, %v820, %v824
    %v829 = vand.u32 2147483647, %v804
    %vm830 = vcmp.eq.f32.partialorder %v829, 8.507059e+37
    %v831 = vand.u32 %v804, 2147483648
    %v832 = vor.u32 1.1754944e-38, %v831
    %v833 = vsel %vm830, %v832, %v828
    %v834 = vmul.f32 1.0, %v833
    %835 = vrot.lane.b32.xlu0 %v788, 64
    %v836 = vpop.permute.xlu0 %835
    %837 = vrot.lane.b32.xlu0 %v792, 64
    %v838 = vpop.permute.xlu0 %837
    %v841 = vmul.f32 %v819, %v836
    %v842 = vmul.f32 %v834, %v838
    %845 = vrot.lane.b32.xlu0 %v841, 64
    %v846 = vpop.permute.xlu0 %845
    %847 = vrot.lane.b32.xlu0 %v842, 64
    %v848 = vpop.permute.xlu0 %847
    %v851 = vadd.f32 %v655, %v846
    %v852 = vadd.f32 %v656, %v848
    %v853 = vtanh.pop %v851
    %v854 = vtanh.pop %v852
    %v855 = vsub.f32 1.0, %v819
    %v856 = vsub.f32 1.0, %v834
    %859 = vrot.lane.b32.xlu0 %v853, 96
    %v860 = vpop.permute.xlu0 %859
    %861 = vrot.lane.b32.xlu0 %v854, 96
    %v862 = vpop.permute.xlu0 %861
    %v865 = vmul.f32 %v855, %v860
    %v866 = vmul.f32 %v856, %v862
    %v867 = vmul.f32 %v819, %v633
    %v868 = vmul.f32 %v834, %v634
    %v869 = vadd.f32 %v865, %v867
    %v870 = vadd.f32 %v866, %v868
    %v873 = vrot.slane %v763, 7
    %v874 = vsel %vm401, %v873, %v762
    %875 = vrot.lane.b32.xlu0 %v874, 96
    %v876 = vpop.permute.xlu0 %875
    %s878 = scalar_lea.vmem [#allocation4], 4
    %879 = vst.msk [vmem:[%s878] sm:$0x3] %vm406, %v876
    %v882 = vrot.slane %v870, 7
    %v883 = vsel %vm401, %v882, %v869
    %884 = vrot.lane.b32.xlu0 %v883, 96
    %v885 = vpop.permute.xlu0 %884
    %s887 = scalar_lea.vmem [#allocation5], 10
    %888 = vst.msk [vmem:[%s887] sm:$0x3] %vm406, %v885
    %v889 = vld [vmem:[#allocation2 + $0x3] sm:$0x1]
    %v890 = vld [vmem:[#allocation2 + $0xb] sm:$0x1]
    %v891 = vld [vmem:[#allocation3 + $0x4] sm:$0x1]
    %v892 = vld [vmem:[#allocation3 + $0xc] sm:$0x1]
    %v893 = vpack.c.bf16 %v762, %v762
    %v894 = vpack.c.bf16 %v763, %v763
    %v897 = vunpack.c.l.b16 %v893
    %v898 = vunpack.c.l.b16 %v894
    %v899 = vrot.slane %v898, 7
    %v900 = vsel %vm401, %v899, %v897
    %v901 = vpack.c.b16 %v900, %v900
    %902 = vrot.lane.b32.xlu0 %v901, 96
    %v903 = vpop.permute.xlu0 %902
    %v905 = vsel %vm193, %v903, 0
    %907 = vmatpush.bf16.msra.mxu0 0
    %908 = vmatpush.bf16.msra.mxu0 0
    %909 = vmatpush.bf16.msra.mxu0 0
    %910 = vmatpush.bf16.msra.mxu0 0
    %911 = vmatpush.bf16.msra.mxu0 0
    %912 = vmatpush.bf16.msra.mxu0 0
    %913 = vmatpush.bf16.msra.mxu0 %v190
    %914 = vmatpush.bf16.msra.mxu0 %v189
    %915 = vmatmul.bf16.gmra.mxu0 %v905
    %v916 = vpop.f32.mrf.mxu0
    %v917 = vadd.f32 %v179, %v916
    %v918 = vpop.f32.mrf.mxu0
    %919 = vdwg.mxu0
    %v921 = vrot.slane %v917, 1
    %v924 = vadd.f32 %v889, %v917
    %v925 = vadd.f32 %v890, %v921
    %v926 = vxor.u32 %v924, 2147483648
    %v927 = vxor.u32 %v925, 2147483648
    %v928 = vmul.f32 %v926, 1.442695
    %v929 = vpow.pop %v928
    %v930 = vmul.f32 %v927, 1.442695
    %v931 = vpow.pop %v930
    %v932 = vadd.f32 %v929, 1.0
    %v933 = vadd.f32 %v931, 1.0
    %v934 = vrcp.pop %v932
    %v935 = vmul.f32 %v932, %v934
    %v936 = vsub.f32 1.0, %v935
    %v937 = vmul.f32 %v934, %v936
    %v938 = vadd.f32 %v934, %v937
    %vm939 = vweird.f32 %v932
    %vm940 = vweird.f32 %v934
    %vm941 = vmor %vm939, %vm940
    %v942 = vsel %vm941, %v934, %v938
    %v943 = vand.u32 2147483647, %v932
    %vm944 = vcmp.eq.f32.partialorder %v943, 8.507059e+37
    %v945 = vand.u32 %v932, 2147483648
    %v946 = vor.u32 1.1754944e-38, %v945
    %v947 = vsel %vm944, %v946, %v942
    %v948 = vmul.f32 1.0, %v947
    %v949 = vrcp.pop %v933
    %v950 = vmul.f32 %v933, %v949
    %v951 = vsub.f32 1.0, %v950
    %v952 = vmul.f32 %v949, %v951
    %v953 = vadd.f32 %v949, %v952
    %vm954 = vweird.f32 %v933
    %vm955 = vweird.f32 %v949
    %vm956 = vmor %vm954, %vm955
    %v957 = vsel %vm956, %v949, %v953
    %v958 = vand.u32 2147483647, %v933
    %vm959 = vcmp.eq.f32.partialorder %v958, 8.507059e+37
    %v960 = vand.u32 %v933, 2147483648
    %v961 = vor.u32 1.1754944e-38, %v960
    %v962 = vsel %vm959, %v961, %v957
    %v963 = vmul.f32 1.0, %v962
    %964 = vrot.lane.b32.xlu0 %v917, 64
    %v965 = vpop.permute.xlu0 %964
    %966 = vrot.lane.b32.xlu0 %v921, 64
    %v967 = vpop.permute.xlu0 %966
    %v970 = vmul.f32 %v948, %v965
    %v971 = vmul.f32 %v963, %v967
    %974 = vrot.lane.b32.xlu0 %v970, 64
    %v975 = vpop.permute.xlu0 %974
    %976 = vrot.lane.b32.xlu0 %v971, 64
    %v977 = vpop.permute.xlu0 %976
    %v980 = vadd.f32 %v889, %v975
    %v981 = vadd.f32 %v890, %v977
    %v982 = vtanh.pop %v980
    %v983 = vtanh.pop %v981
    %v984 = vsub.f32 1.0, %v948
    %v985 = vsub.f32 1.0, %v963
    %988 = vrot.lane.b32.xlu0 %v982, 96
    %v989 = vpop.permute.xlu0 %988
    %990 = vrot.lane.b32.xlu0 %v983, 96
    %v991 = vpop.permute.xlu0 %990
    %v994 = vmul.f32 %v984, %v989
    %v995 = vmul.f32 %v985, %v991
    %v996 = vmul.f32 %v948, %v762
    %v997 = vmul.f32 %v963, %v763
    %v998 = vadd.f32 %v994, %v996
    %v999 = vadd.f32 %v995, %v997
    %v1000 = vpack.c.bf16 %v869, %v869
    %v1001 = vpack.c.bf16 %v870, %v870
    %v1004 = vunpack.c.l.b16 %v1000
    %v1005 = vunpack.c.l.b16 %v1001
    %v1006 = vrot.slane %v1005, 7
    %v1007 = vsel %vm401, %v1006, %v1004
    %v1008 = vpack.c.b16 %v1007, %v1007
    %1009 = vrot.lane.b32.xlu0 %v1008, 96
    %v1010 = vpop.permute.xlu0 %1009
    %v1012 = vsel %vm193, %v1010, 0
    %1014 = vmatpush.bf16.msra.mxu0 0
    %1015 = vmatpush.bf16.msra.mxu0 0
    %1016 = vmatpush.bf16.msra.mxu0 0
    %1017 = vmatpush.bf16.msra.mxu0 0
    %1018 = vmatpush.bf16.msra.mxu0 0
    %1019 = vmatpush.bf16.msra.mxu0 0
    %1020 = vmatpush.bf16.msra.mxu0 %v302
    %1021 = vmatpush.bf16.msra.mxu0 %v301
    %1022 = vmatmul.bf16.gmra.mxu0 %v1012
    %v1023 = vpop.f32.mrf.mxu0
    %v1024 = vadd.f32 %v291, %v1023
    %v1025 = vpop.f32.mrf.mxu0
    %1026 = vdwg.mxu0
    %v1028 = vrot.slane %v1024, 1
    %v1031 = vadd.f32 %v891, %v1024
    %v1032 = vadd.f32 %v892, %v1028
    %v1033 = vxor.u32 %v1031, 2147483648
    %v1034 = vxor.u32 %v1032, 2147483648
    %v1035 = vmul.f32 %v1033, 1.442695
    %v1036 = vpow.pop %v1035
    %v1037 = vmul.f32 %v1034, 1.442695
    %v1038 = vpow.pop %v1037
    %v1039 = vadd.f32 %v1036, 1.0
    %v1040 = vadd.f32 %v1038, 1.0
    %v1041 = vrcp.pop %v1039
    %v1042 = vmul.f32 %v1039, %v1041
    %v1043 = vsub.f32 1.0, %v1042
    %v1044 = vmul.f32 %v1041, %v1043
    %v1045 = vadd.f32 %v1041, %v1044
    %vm1046 = vweird.f32 %v1039
    %vm1047 = vweird.f32 %v1041
    %vm1048 = vmor %vm1046, %vm1047
    %v1049 = vsel %vm1048, %v1041, %v1045
    %v1050 = vand.u32 2147483647, %v1039
    %vm1051 = vcmp.eq.f32.partialorder %v1050, 8.507059e+37
    %v1052 = vand.u32 %v1039, 2147483648
    %v1053 = vor.u32 1.1754944e-38, %v1052
    %v1054 = vsel %vm1051, %v1053, %v1049
    %v1055 = vmul.f32 1.0, %v1054
    %v1056 = vrcp.pop %v1040
    %v1057 = vmul.f32 %v1040, %v1056
    %v1058 = vsub.f32 1.0, %v1057
    %v1059 = vmul.f32 %v1056, %v1058
    %v1060 = vadd.f32 %v1056, %v1059
    %vm1061 = vweird.f32 %v1040
    %vm1062 = vweird.f32 %v1056
    %vm1063 = vmor %vm1061, %vm1062
    %v1064 = vsel %vm1063, %v1056, %v1060
    %v1065 = vand.u32 2147483647, %v1040
    %vm1066 = vcmp.eq.f32.partialorder %v1065, 8.507059e+37
    %v1067 = vand.u32 %v1040, 2147483648
    %v1068 = vor.u32 1.1754944e-38, %v1067
    %v1069 = vsel %vm1066, %v1068, %v1064
    %v1070 = vmul.f32 1.0, %v1069
    %1071 = vrot.lane.b32.xlu0 %v1024, 64
    %v1072 = vpop.permute.xlu0 %1071
    %1073 = vrot.lane.b32.xlu0 %v1028, 64
    %v1074 = vpop.permute.xlu0 %1073
    %v1077 = vmul.f32 %v1055, %v1072
    %v1078 = vmul.f32 %v1070, %v1074
    %1081 = vrot.lane.b32.xlu0 %v1077, 64
    %v1082 = vpop.permute.xlu0 %1081
    %1083 = vrot.lane.b32.xlu0 %v1078, 64
    %v1084 = vpop.permute.xlu0 %1083
    %v1087 = vadd.f32 %v891, %v1082
    %v1088 = vadd.f32 %v892, %v1084
    %v1089 = vtanh.pop %v1087
    %v1090 = vtanh.pop %v1088
    %v1091 = vsub.f32 1.0, %v1055
    %v1092 = vsub.f32 1.0, %v1070
    %1095 = vrot.lane.b32.xlu0 %v1089, 96
    %v1096 = vpop.permute.xlu0 %1095
    %1097 = vrot.lane.b32.xlu0 %v1090, 96
    %v1098 = vpop.permute.xlu0 %1097
    %v1101 = vmul.f32 %v1091, %v1096
    %v1102 = vmul.f32 %v1092, %v1098
    %v1103 = vmul.f32 %v1055, %v869
    %v1104 = vmul.f32 %v1070, %v870
    %v1105 = vadd.f32 %v1101, %v1103
    %v1106 = vadd.f32 %v1102, %v1104
    %v1109 = vrot.slane %v999, 7
    %v1110 = vsel %vm401, %v1109, %v998
    %1111 = vrot.lane.b32.xlu0 %v1110, 96
    %v1112 = vpop.permute.xlu0 %1111
    %s1114 = scalar_lea.vmem [#allocation4], 6
    %1115 = vst.msk [vmem:[%s1114] sm:$0x3] %vm406, %v1112
    %v1118 = vrot.slane %v1106, 7
    %v1119 = vsel %vm401, %v1118, %v1105
    %1120 = vrot.lane.b32.xlu0 %v1119, 96
    %v1121 = vpop.permute.xlu0 %1120
    %s1123 = scalar_lea.vmem [#allocation5], 8
    %1124 = vst.msk [vmem:[%s1123] sm:$0x3] %vm406, %v1121
    %v1125 = vld [vmem:[#allocation2 + $0x4] sm:$0x1]
    %v1126 = vld [vmem:[#allocation2 + $0xc] sm:$0x1]
    %v1127 = vld [vmem:[#allocation3 + $0x3] sm:$0x1]
    %v1128 = vld [vmem:[#allocation3 + $0xb] sm:$0x1]
    %v1129 = vpack.c.bf16 %v998, %v998
    %v1130 = vpack.c.bf16 %v999, %v999
    %v1133 = vunpack.c.l.b16 %v1129
    %v1134 = vunpack.c.l.b16 %v1130
    %v1135 = vrot.slane %v1134, 7
    %v1136 = vsel %vm401, %v1135, %v1133
    %v1137 = vpack.c.b16 %v1136, %v1136
    %1138 = vrot.lane.b32.xlu0 %v1137, 96
    %v1139 = vpop.permute.xlu0 %1138
    %v1141 = vsel %vm193, %v1139, 0
    %1143 = vmatpush.bf16.msra.mxu0 0
    %1144 = vmatpush.bf16.msra.mxu0 0
    %1145 = vmatpush.bf16.msra.mxu0 0
    %1146 = vmatpush.bf16.msra.mxu0 0
    %1147 = vmatpush.bf16.msra.mxu0 0
    %1148 = vmatpush.bf16.msra.mxu0 0
    %1149 = vmatpush.bf16.msra.mxu0 %v190
    %1150 = vmatpush.bf16.msra.mxu0 %v189
    %1151 = vmatmul.bf16.gmra.mxu0 %v1141
    %v1152 = vpop.f32.mrf.mxu0
    %v1153 = vadd.f32 %v179, %v1152
    %v1154 = vpop.f32.mrf.mxu0
    %1155 = vdwg.mxu0
    %v1157 = vrot.slane %v1153, 1
    %v1160 = vadd.f32 %v1125, %v1153
    %v1161 = vadd.f32 %v1126, %v1157
    %v1162 = vxor.u32 %v1160, 2147483648
    %v1163 = vxor.u32 %v1161, 2147483648
    %v1164 = vmul.f32 %v1162, 1.442695
    %v1165 = vpow.pop %v1164
    %v1166 = vmul.f32 %v1163, 1.442695
    %v1167 = vpow.pop %v1166
    %v1168 = vadd.f32 %v1165, 1.0
    %v1169 = vadd.f32 %v1167, 1.0
    %v1170 = vrcp.pop %v1168
    %v1171 = vmul.f32 %v1168, %v1170
    %v1172 = vsub.f32 1.0, %v1171
    %v1173 = vmul.f32 %v1170, %v1172
    %v1174 = vadd.f32 %v1170, %v1173
    %vm1175 = vweird.f32 %v1168
    %vm1176 = vweird.f32 %v1170
    %vm1177 = vmor %vm1175, %vm1176
    %v1178 = vsel %vm1177, %v1170, %v1174
    %v1179 = vand.u32 2147483647, %v1168
    %vm1180 = vcmp.eq.f32.partialorder %v1179, 8.507059e+37
    %v1181 = vand.u32 %v1168, 2147483648
    %v1182 = vor.u32 1.1754944e-38, %v1181
    %v1183 = vsel %vm1180, %v1182, %v1178
    %v1184 = vmul.f32 1.0, %v1183
    %v1185 = vrcp.pop %v1169
    %v1186 = vmul.f32 %v1169, %v1185
    %v1187 = vsub.f32 1.0, %v1186
    %v1188 = vmul.f32 %v1185, %v1187
    %v1189 = vadd.f32 %v1185, %v1188
    %vm1190 = vweird.f32 %v1169
    %vm1191 = vweird.f32 %v1185
    %vm1192 = vmor %vm1190, %vm1191
    %v1193 = vsel %vm1192, %v1185, %v1189
    %v1194 = vand.u32 2147483647, %v1169
    %vm1195 = vcmp.eq.f32.partialorder %v1194, 8.507059e+37
    %v1196 = vand.u32 %v1169, 2147483648
    %v1197 = vor.u32 1.1754944e-38, %v1196
    %v1198 = vsel %vm1195, %v1197, %v1193
    %v1199 = vmul.f32 1.0, %v1198
    %1200 = vrot.lane.b32.xlu0 %v1153, 64
    %v1201 = vpop.permute.xlu0 %1200
    %1202 = vrot.lane.b32.xlu0 %v1157, 64
    %v1203 = vpop.permute.xlu0 %1202
    %v1206 = vmul.f32 %v1184, %v1201
    %v1207 = vmul.f32 %v1199, %v1203
    %1210 = vrot.lane.b32.xlu0 %v1206, 64
    %v1211 = vpop.permute.xlu0 %1210
    %1212 = vrot.lane.b32.xlu0 %v1207, 64
    %v1213 = vpop.permute.xlu0 %1212
    %v1216 = vadd.f32 %v1125, %v1211
    %v1217 = vadd.f32 %v1126, %v1213
    %v1218 = vtanh.pop %v1216
    %v1219 = vtanh.pop %v1217
    %v1220 = vsub.f32 1.0, %v1184
    %v1221 = vsub.f32 1.0, %v1199
    %1224 = vrot.lane.b32.xlu0 %v1218, 96
    %v1225 = vpop.permute.xlu0 %1224
    %1226 = vrot.lane.b32.xlu0 %v1219, 96
    %v1227 = vpop.permute.xlu0 %1226
    %v1230 = vmul.f32 %v1220, %v1225
    %v1231 = vmul.f32 %v1221, %v1227
    %v1232 = vmul.f32 %v1184, %v998
    %v1233 = vmul.f32 %v1199, %v999
    %v1234 = vadd.f32 %v1230, %v1232
    %v1235 = vadd.f32 %v1231, %v1233
    %v1236 = vpack.c.bf16 %v1105, %v1105
    %v1237 = vpack.c.bf16 %v1106, %v1106
    %v1240 = vunpack.c.l.b16 %v1236
    %v1241 = vunpack.c.l.b16 %v1237
    %v1242 = vrot.slane %v1241, 7
    %v1243 = vsel %vm401, %v1242, %v1240
    %v1244 = vpack.c.b16 %v1243, %v1243
    %1245 = vrot.lane.b32.xlu0 %v1244, 96
    %v1246 = vpop.permute.xlu0 %1245
    %v1248 = vsel %vm193, %v1246, 0
    %1250 = vmatpush.bf16.msra.mxu0 0
    %1251 = vmatpush.bf16.msra.mxu0 0
    %1252 = vmatpush.bf16.msra.mxu0 0
    %1253 = vmatpush.bf16.msra.mxu0 0
    %1254 = vmatpush.bf16.msra.mxu0 0
    %1255 = vmatpush.bf16.msra.mxu0 0
    %1256 = vmatpush.bf16.msra.mxu0 %v302
    %1257 = vmatpush.bf16.msra.mxu0 %v301
    %1258 = vmatmul.bf16.gmra.mxu0 %v1248
    %v1259 = vpop.f32.mrf.mxu0
    %v1260 = vadd.f32 %v291, %v1259
    %v1261 = vpop.f32.mrf.mxu0
    %1262 = vdwg.mxu0
    %v1264 = vrot.slane %v1260, 1
    %v1267 = vadd.f32 %v1127, %v1260
    %v1268 = vadd.f32 %v1128, %v1264
    %v1269 = vxor.u32 %v1267, 2147483648
    %v1270 = vxor.u32 %v1268, 2147483648
    %v1271 = vmul.f32 %v1269, 1.442695
    %v1272 = vpow.pop %v1271
    %v1273 = vmul.f32 %v1270, 1.442695
    %v1274 = vpow.pop %v1273
    %v1275 = vadd.f32 %v1272, 1.0
    %v1276 = vadd.f32 %v1274, 1.0
    %v1277 = vrcp.pop %v1275
    %v1278 = vmul.f32 %v1275, %v1277
    %v1279 = vsub.f32 1.0, %v1278
    %v1280 = vmul.f32 %v1277, %v1279
    %v1281 = vadd.f32 %v1277, %v1280
    %vm1282 = vweird.f32 %v1275
    %vm1283 = vweird.f32 %v1277
    %vm1284 = vmor %vm1282, %vm1283
    %v1285 = vsel %vm1284, %v1277, %v1281
    %v1286 = vand.u32 2147483647, %v1275
    %vm1287 = vcmp.eq.f32.partialorder %v1286, 8.507059e+37
    %v1288 = vand.u32 %v1275, 2147483648
    %v1289 = vor.u32 1.1754944e-38, %v1288
    %v1290 = vsel %vm1287, %v1289, %v1285
    %v1291 = vmul.f32 1.0, %v1290
    %v1292 = vrcp.pop %v1276
    %v1293 = vmul.f32 %v1276, %v1292
    %v1294 = vsub.f32 1.0, %v1293
    %v1295 = vmul.f32 %v1292, %v1294
    %v1296 = vadd.f32 %v1292, %v1295
    %vm1297 = vweird.f32 %v1276
    %vm1298 = vweird.f32 %v1292
    %vm1299 = vmor %vm1297, %vm1298
    %v1300 = vsel %vm1299, %v1292, %v1296
    %v1301 = vand.u32 2147483647, %v1276
    %vm1302 = vcmp.eq.f32.partialorder %v1301, 8.507059e+37
    %v1303 = vand.u32 %v1276, 2147483648
    %v1304 = vor.u32 1.1754944e-38, %v1303
    %v1305 = vsel %vm1302, %v1304, %v1300
    %v1306 = vmul.f32 1.0, %v1305
    %1307 = vrot.lane.b32.xlu0 %v1260, 64
    %v1308 = vpop.permute.xlu0 %1307
    %1309 = vrot.lane.b32.xlu0 %v1264, 64
    %v1310 = vpop.permute.xlu0 %1309
    %v1313 = vmul.f32 %v1291, %v1308
    %v1314 = vmul.f32 %v1306, %v1310
    %1317 = vrot.lane.b32.xlu0 %v1313, 64
    %v1318 = vpop.permute.xlu0 %1317
    %1319 = vrot.lane.b32.xlu0 %v1314, 64
    %v1320 = vpop.permute.xlu0 %1319
    %v1323 = vadd.f32 %v1127, %v1318
    %v1324 = vadd.f32 %v1128, %v1320
    %v1325 = vtanh.pop %v1323
    %v1326 = vtanh.pop %v1324
    %v1327 = vsub.f32 1.0, %v1291
    %v1328 = vsub.f32 1.0, %v1306
    %1331 = vrot.lane.b32.xlu0 %v1325, 96
    %v1332 = vpop.permute.xlu0 %1331
    %1333 = vrot.lane.b32.xlu0 %v1326, 96
    %v1334 = vpop.permute.xlu0 %1333
    %v1337 = vmul.f32 %v1327, %v1332
    %v1338 = vmul.f32 %v1328, %v1334
    %v1339 = vmul.f32 %v1291, %v1105
    %v1340 = vmul.f32 %v1306, %v1106
    %v1341 = vadd.f32 %v1337, %v1339
    %v1342 = vadd.f32 %v1338, %v1340
    %v1345 = vrot.slane %v1235, 7
    %v1346 = vsel %vm401, %v1345, %v1234
    %1347 = vrot.lane.b32.xlu0 %v1346, 96
    %v1348 = vpop.permute.xlu0 %1347
    %s1350 = scalar_lea.vmem [#allocation4], 8
    %1351 = vst.msk [vmem:[%s1350] sm:$0x3] %vm406, %v1348
    %v1354 = vrot.slane %v1342, 7
    %v1355 = vsel %vm401, %v1354, %v1341
    %1356 = vrot.lane.b32.xlu0 %v1355, 96
    %v1357 = vpop.permute.xlu0 %1356
    %s1359 = scalar_lea.vmem [#allocation5], 6
    %1360 = vst.msk [vmem:[%s1359] sm:$0x3] %vm406, %v1357
    %v1361 = vld [vmem:[#allocation2 + $0x5] sm:$0x1]
    %v1362 = vld [vmem:[#allocation2 + $0xd] sm:$0x1]
    %v1363 = vld [vmem:[#allocation3 + $0x2] sm:$0x1]
    %v1364 = vld [vmem:[#allocation3 + $0xa] sm:$0x1]
    %v1365 = vpack.c.bf16 %v1234, %v1234
    %v1366 = vpack.c.bf16 %v1235, %v1235
    %v1369 = vunpack.c.l.b16 %v1365
    %v1370 = vunpack.c.l.b16 %v1366
    %v1371 = vrot.slane %v1370, 7
    %v1372 = vsel %vm401, %v1371, %v1369
    %v1373 = vpack.c.b16 %v1372, %v1372
    %1374 = vrot.lane.b32.xlu0 %v1373, 96
    %v1375 = vpop.permute.xlu0 %1374
    %v1377 = vsel %vm193, %v1375, 0
    %1379 = vmatpush.bf16.msra.mxu0 0
    %1380 = vmatpush.bf16.msra.mxu0 0
    %1381 = vmatpush.bf16.msra.mxu0 0
    %1382 = vmatpush.bf16.msra.mxu0 0
    %1383 = vmatpush.bf16.msra.mxu0 0
    %1384 = vmatpush.bf16.msra.mxu0 0
    %1385 = vmatpush.bf16.msra.mxu0 %v190
    %1386 = vmatpush.bf16.msra.mxu0 %v189
    %1387 = vmatmul.bf16.gmra.mxu0 %v1377
    %v1388 = vpop.f32.mrf.mxu0
    %v1389 = vadd.f32 %v179, %v1388
    %v1390 = vpop.f32.mrf.mxu0
    %1391 = vdwg.mxu0
    %v1393 = vrot.slane %v1389, 1
    %v1396 = vadd.f32 %v1361, %v1389
    %v1397 = vadd.f32 %v1362, %v1393
    %v1398 = vxor.u32 %v1396, 2147483648
    %v1399 = vxor.u32 %v1397, 2147483648
    %v1400 = vmul.f32 %v1398, 1.442695
    %v1401 = vpow.pop %v1400
    %v1402 = vmul.f32 %v1399, 1.442695
    %v1403 = vpow.pop %v1402
    %v1404 = vadd.f32 %v1401, 1.0
    %v1405 = vadd.f32 %v1403, 1.0
    %v1406 = vrcp.pop %v1404
    %v1407 = vmul.f32 %v1404, %v1406
    %v1408 = vsub.f32 1.0, %v1407
    %v1409 = vmul.f32 %v1406, %v1408
    %v1410 = vadd.f32 %v1406, %v1409
    %vm1411 = vweird.f32 %v1404
    %vm1412 = vweird.f32 %v1406
    %vm1413 = vmor %vm1411, %vm1412
    %v1414 = vsel %vm1413, %v1406, %v1410
    %v1415 = vand.u32 2147483647, %v1404
    %vm1416 = vcmp.eq.f32.partialorder %v1415, 8.507059e+37
    %v1417 = vand.u32 %v1404, 2147483648
    %v1418 = vor.u32 1.1754944e-38, %v1417
    %v1419 = vsel %vm1416, %v1418, %v1414
    %v1420 = vmul.f32 1.0, %v1419
    %v1421 = vrcp.pop %v1405
    %v1422 = vmul.f32 %v1405, %v1421
    %v1423 = vsub.f32 1.0, %v1422
    %v1424 = vmul.f32 %v1421, %v1423
    %v1425 = vadd.f32 %v1421, %v1424
    %vm1426 = vweird.f32 %v1405
    %vm1427 = vweird.f32 %v1421
    %vm1428 = vmor %vm1426, %vm1427
    %v1429 = vsel %vm1428, %v1421, %v1425
    %v1430 = vand.u32 2147483647, %v1405
    %vm1431 = vcmp.eq.f32.partialorder %v1430, 8.507059e+37
    %v1432 = vand.u32 %v1405, 2147483648
    %v1433 = vor.u32 1.1754944e-38, %v1432
    %v1434 = vsel %vm1431, %v1433, %v1429
    %v1435 = vmul.f32 1.0, %v1434
    %1436 = vrot.lane.b32.xlu0 %v1389, 64
    %v1437 = vpop.permute.xlu0 %1436
    %1438 = vrot.lane.b32.xlu0 %v1393, 64
    %v1439 = vpop.permute.xlu0 %1438
    %v1442 = vmul.f32 %v1420, %v1437
    %v1443 = vmul.f32 %v1435, %v1439
    %1446 = vrot.lane.b32.xlu0 %v1442, 64
    %v1447 = vpop.permute.xlu0 %1446
    %1448 = vrot.lane.b32.xlu0 %v1443, 64
    %v1449 = vpop.permute.xlu0 %1448
    %v1452 = vadd.f32 %v1361, %v1447
    %v1453 = vadd.f32 %v1362, %v1449
    %v1454 = vtanh.pop %v1452
    %v1455 = vtanh.pop %v1453
    %v1456 = vsub.f32 1.0, %v1420
    %v1457 = vsub.f32 1.0, %v1435
    %1460 = vrot.lane.b32.xlu0 %v1454, 96
    %v1461 = vpop.permute.xlu0 %1460
    %1462 = vrot.lane.b32.xlu0 %v1455, 96
    %v1463 = vpop.permute.xlu0 %1462
    %v1466 = vmul.f32 %v1456, %v1461
    %v1467 = vmul.f32 %v1457, %v1463
    %v1468 = vmul.f32 %v1420, %v1234
    %v1469 = vmul.f32 %v1435, %v1235
    %v1470 = vadd.f32 %v1466, %v1468
    %v1471 = vadd.f32 %v1467, %v1469
    %v1472 = vpack.c.bf16 %v1341, %v1341
    %v1473 = vpack.c.bf16 %v1342, %v1342
    %v1476 = vunpack.c.l.b16 %v1472
    %v1477 = vunpack.c.l.b16 %v1473
    %v1478 = vrot.slane %v1477, 7
    %v1479 = vsel %vm401, %v1478, %v1476
    %v1480 = vpack.c.b16 %v1479, %v1479
    %1481 = vrot.lane.b32.xlu0 %v1480, 96
    %v1482 = vpop.permute.xlu0 %1481
    %v1484 = vsel %vm193, %v1482, 0
    %1486 = vmatpush.bf16.msra.mxu0 0
    %1487 = vmatpush.bf16.msra.mxu0 0
    %1488 = vmatpush.bf16.msra.mxu0 0
    %1489 = vmatpush.bf16.msra.mxu0 0
    %1490 = vmatpush.bf16.msra.mxu0 0
    %1491 = vmatpush.bf16.msra.mxu0 0
    %1492 = vmatpush.bf16.msra.mxu0 %v302
    %1493 = vmatpush.bf16.msra.mxu0 %v301
    %1494 = vmatmul.bf16.gmra.mxu0 %v1484
    %v1495 = vpop.f32.mrf.mxu0
    %v1496 = vadd.f32 %v291, %v1495
    %v1497 = vpop.f32.mrf.mxu0
    %1498 = vdwg.mxu0
    %v1500 = vrot.slane %v1496, 1
    %v1503 = vadd.f32 %v1363, %v1496
    %v1504 = vadd.f32 %v1364, %v1500
    %v1505 = vxor.u32 %v1503, 2147483648
    %v1506 = vxor.u32 %v1504, 2147483648
    %v1507 = vmul.f32 %v1505, 1.442695
    %v1508 = vpow.pop %v1507
    %v1509 = vmul.f32 %v1506, 1.442695
    %v1510 = vpow.pop %v1509
    %v1511 = vadd.f32 %v1508, 1.0
    %v1512 = vadd.f32 %v1510, 1.0
    %v1513 = vrcp.pop %v1511
    %v1514 = vmul.f32 %v1511, %v1513
    %v1515 = vsub.f32 1.0, %v1514
    %v1516 = vmul.f32 %v1513, %v1515
    %v1517 = vadd.f32 %v1513, %v1516
    %vm1518 = vweird.f32 %v1511
    %vm1519 = vweird.f32 %v1513
    %vm1520 = vmor %vm1518, %vm1519
    %v1521 = vsel %vm1520, %v1513, %v1517
    %v1522 = vand.u32 2147483647, %v1511
    %vm1523 = vcmp.eq.f32.partialorder %v1522, 8.507059e+37
    %v1524 = vand.u32 %v1511, 2147483648
    %v1525 = vor.u32 1.1754944e-38, %v1524
    %v1526 = vsel %vm1523, %v1525, %v1521
    %v1527 = vmul.f32 1.0, %v1526
    %v1528 = vrcp.pop %v1512
    %v1529 = vmul.f32 %v1512, %v1528
    %v1530 = vsub.f32 1.0, %v1529
    %v1531 = vmul.f32 %v1528, %v1530
    %v1532 = vadd.f32 %v1528, %v1531
    %vm1533 = vweird.f32 %v1512
    %vm1534 = vweird.f32 %v1528
    %vm1535 = vmor %vm1533, %vm1534
    %v1536 = vsel %vm1535, %v1528, %v1532
    %v1537 = vand.u32 2147483647, %v1512
    %vm1538 = vcmp.eq.f32.partialorder %v1537, 8.507059e+37
    %v1539 = vand.u32 %v1512, 2147483648
    %v1540 = vor.u32 1.1754944e-38, %v1539
    %v1541 = vsel %vm1538, %v1540, %v1536
    %v1542 = vmul.f32 1.0, %v1541
    %1543 = vrot.lane.b32.xlu0 %v1496, 64
    %v1544 = vpop.permute.xlu0 %1543
    %1545 = vrot.lane.b32.xlu0 %v1500, 64
    %v1546 = vpop.permute.xlu0 %1545
    %v1549 = vmul.f32 %v1527, %v1544
    %v1550 = vmul.f32 %v1542, %v1546
    %1553 = vrot.lane.b32.xlu0 %v1549, 64
    %v1554 = vpop.permute.xlu0 %1553
    %1555 = vrot.lane.b32.xlu0 %v1550, 64
    %v1556 = vpop.permute.xlu0 %1555
    %v1559 = vadd.f32 %v1363, %v1554
    %v1560 = vadd.f32 %v1364, %v1556
    %v1561 = vtanh.pop %v1559
    %v1562 = vtanh.pop %v1560
    %v1563 = vsub.f32 1.0, %v1527
    %v1564 = vsub.f32 1.0, %v1542
    %1567 = vrot.lane.b32.xlu0 %v1561, 96
    %v1568 = vpop.permute.xlu0 %1567
    %1569 = vrot.lane.b32.xlu0 %v1562, 96
    %v1570 = vpop.permute.xlu0 %1569
    %v1573 = vmul.f32 %v1563, %v1568
    %v1574 = vmul.f32 %v1564, %v1570
    %v1575 = vmul.f32 %v1527, %v1341
    %v1576 = vmul.f32 %v1542, %v1342
    %v1577 = vadd.f32 %v1573, %v1575
    %v1578 = vadd.f32 %v1574, %v1576
    %v1581 = vrot.slane %v1471, 7
    %v1582 = vsel %vm401, %v1581, %v1470
    %1583 = vrot.lane.b32.xlu0 %v1582, 96
    %v1584 = vpop.permute.xlu0 %1583
    %s1586 = scalar_lea.vmem [#allocation4], 10
    %1587 = vst.msk [vmem:[%s1586] sm:$0x3] %vm406, %v1584
    %v1590 = vrot.slane %v1578, 7
    %v1591 = vsel %vm401, %v1590, %v1577
    %1592 = vrot.lane.b32.xlu0 %v1591, 96
    %v1593 = vpop.permute.xlu0 %1592
    %s1595 = scalar_lea.vmem [#allocation5], 4
    %1596 = vst.msk [vmem:[%s1595] sm:$0x3] %vm406, %v1593
    %v1597 = vld [vmem:[#allocation2 + $0x6] sm:$0x1]
    %v1598 = vld [vmem:[#allocation2 + $0xe] sm:$0x1]
    %v1599 = vld [vmem:[#allocation3 + $0x1] sm:$0x1]
    %v1600 = vld [vmem:[#allocation3 + $0x9] sm:$0x1]
    %v1601 = vpack.c.bf16 %v1470, %v1470
    %v1602 = vpack.c.bf16 %v1471, %v1471
    %v1605 = vunpack.c.l.b16 %v1601
    %v1606 = vunpack.c.l.b16 %v1602
    %v1607 = vrot.slane %v1606, 7
    %v1608 = vsel %vm401, %v1607, %v1605
    %v1609 = vpack.c.b16 %v1608, %v1608
    %1610 = vrot.lane.b32.xlu0 %v1609, 96
    %v1611 = vpop.permute.xlu0 %1610
    %v1613 = vsel %vm193, %v1611, 0
    %1615 = vmatpush.bf16.msra.mxu0 0
    %1616 = vmatpush.bf16.msra.mxu0 0
    %1617 = vmatpush.bf16.msra.mxu0 0
    %1618 = vmatpush.bf16.msra.mxu0 0
    %1619 = vmatpush.bf16.msra.mxu0 0
    %1620 = vmatpush.bf16.msra.mxu0 0
    %1621 = vmatpush.bf16.msra.mxu0 %v190
    %1622 = vmatpush.bf16.msra.mxu0 %v189
    %1623 = vmatmul.bf16.gmra.mxu0 %v1613
    %v1624 = vpop.f32.mrf.mxu0
    %v1625 = vadd.f32 %v179, %v1624
    %v1626 = vpop.f32.mrf.mxu0
    %1627 = vdwg.mxu0
    %v1629 = vrot.slane %v1625, 1
    %v1632 = vadd.f32 %v1597, %v1625
    %v1633 = vadd.f32 %v1598, %v1629
    %v1634 = vxor.u32 %v1632, 2147483648
    %v1635 = vxor.u32 %v1633, 2147483648
    %v1636 = vmul.f32 %v1634, 1.442695
    %v1637 = vpow.pop %v1636
    %v1638 = vmul.f32 %v1635, 1.442695
    %v1639 = vpow.pop %v1638
    %v1640 = vadd.f32 %v1637, 1.0
    %v1641 = vadd.f32 %v1639, 1.0
    %v1642 = vrcp.pop %v1640
    %v1643 = vmul.f32 %v1640, %v1642
    %v1644 = vsub.f32 1.0, %v1643
    %v1645 = vmul.f32 %v1642, %v1644
    %v1646 = vadd.f32 %v1642, %v1645
    %vm1647 = vweird.f32 %v1640
    %vm1648 = vweird.f32 %v1642
    %vm1649 = vmor %vm1647, %vm1648
    %v1650 = vsel %vm1649, %v1642, %v1646
    %v1651 = vand.u32 2147483647, %v1640
    %vm1652 = vcmp.eq.f32.partialorder %v1651, 8.507059e+37
    %v1653 = vand.u32 %v1640, 2147483648
    %v1654 = vor.u32 1.1754944e-38, %v1653
    %v1655 = vsel %vm1652, %v1654, %v1650
    %v1656 = vmul.f32 1.0, %v1655
    %v1657 = vrcp.pop %v1641
    %v1658 = vmul.f32 %v1641, %v1657
    %v1659 = vsub.f32 1.0, %v1658
    %v1660 = vmul.f32 %v1657, %v1659
    %v1661 = vadd.f32 %v1657, %v1660
    %vm1662 = vweird.f32 %v1641
    %vm1663 = vweird.f32 %v1657
    %vm1664 = vmor %vm1662, %vm1663
    %v1665 = vsel %vm1664, %v1657, %v1661
    %v1666 = vand.u32 2147483647, %v1641
    %vm1667 = vcmp.eq.f32.partialorder %v1666, 8.507059e+37
    %v1668 = vand.u32 %v1641, 2147483648
    %v1669 = vor.u32 1.1754944e-38, %v1668
    %v1670 = vsel %vm1667, %v1669, %v1665
    %v1671 = vmul.f32 1.0, %v1670
    %1672 = vrot.lane.b32.xlu0 %v1625, 64
    %v1673 = vpop.permute.xlu0 %1672
    %1674 = vrot.lane.b32.xlu0 %v1629, 64
    %v1675 = vpop.permute.xlu0 %1674
    %v1678 = vmul.f32 %v1656, %v1673
    %v1679 = vmul.f32 %v1671, %v1675
    %1682 = vrot.lane.b32.xlu0 %v1678, 64
    %v1683 = vpop.permute.xlu0 %1682
    %1684 = vrot.lane.b32.xlu0 %v1679, 64
    %v1685 = vpop.permute.xlu0 %1684
    %v1688 = vadd.f32 %v1597, %v1683
    %v1689 = vadd.f32 %v1598, %v1685
    %v1690 = vtanh.pop %v1688
    %v1691 = vtanh.pop %v1689
    %v1692 = vsub.f32 1.0, %v1656
    %v1693 = vsub.f32 1.0, %v1671
    %1696 = vrot.lane.b32.xlu0 %v1690, 96
    %v1697 = vpop.permute.xlu0 %1696
    %1698 = vrot.lane.b32.xlu0 %v1691, 96
    %v1699 = vpop.permute.xlu0 %1698
    %v1702 = vmul.f32 %v1692, %v1697
    %v1703 = vmul.f32 %v1693, %v1699
    %v1704 = vmul.f32 %v1656, %v1470
    %v1705 = vmul.f32 %v1671, %v1471
    %v1706 = vadd.f32 %v1702, %v1704
    %v1707 = vadd.f32 %v1703, %v1705
    %v1708 = vpack.c.bf16 %v1577, %v1577
    %v1709 = vpack.c.bf16 %v1578, %v1578
    %v1712 = vunpack.c.l.b16 %v1708
    %v1713 = vunpack.c.l.b16 %v1709
    %v1714 = vrot.slane %v1713, 7
    %v1715 = vsel %vm401, %v1714, %v1712
    %v1716 = vpack.c.b16 %v1715, %v1715
    %1717 = vrot.lane.b32.xlu0 %v1716, 96
    %v1718 = vpop.permute.xlu0 %1717
    %v1720 = vsel %vm193, %v1718, 0
    %1722 = vmatpush.bf16.msra.mxu0 0
    %1723 = vmatpush.bf16.msra.mxu0 0
    %1724 = vmatpush.bf16.msra.mxu0 0
    %1725 = vmatpush.bf16.msra.mxu0 0
    %1726 = vmatpush.bf16.msra.mxu0 0
    %1727 = vmatpush.bf16.msra.mxu0 0
    %1728 = vmatpush.bf16.msra.mxu0 %v302
    %1729 = vmatpush.bf16.msra.mxu0 %v301
    %1730 = vmatmul.bf16.gmra.mxu0 %v1720
    %v1731 = vpop.f32.mrf.mxu0
    %v1732 = vadd.f32 %v291, %v1731
    %v1733 = vpop.f32.mrf.mxu0
    %1734 = vdwg.mxu0
    %v1736 = vrot.slane %v1732, 1
    %v1739 = vadd.f32 %v1599, %v1732
    %v1740 = vadd.f32 %v1600, %v1736
    %v1741 = vxor.u32 %v1739, 2147483648
    %v1742 = vxor.u32 %v1740, 2147483648
    %v1743 = vmul.f32 %v1741, 1.442695
    %v1744 = vpow.pop %v1743
    %v1745 = vmul.f32 %v1742, 1.442695
    %v1746 = vpow.pop %v1745
    %v1747 = vadd.f32 %v1744, 1.0
    %v1748 = vadd.f32 %v1746, 1.0
    %v1749 = vrcp.pop %v1747
    %v1750 = vmul.f32 %v1747, %v1749
    %v1751 = vsub.f32 1.0, %v1750
    %v1752 = vmul.f32 %v1749, %v1751
    %v1753 = vadd.f32 %v1749, %v1752
    %vm1754 = vweird.f32 %v1747
    %vm1755 = vweird.f32 %v1749
    %vm1756 = vmor %vm1754, %vm1755
    %v1757 = vsel %vm1756, %v1749, %v1753
    %v1758 = vand.u32 2147483647, %v1747
    %vm1759 = vcmp.eq.f32.partialorder %v1758, 8.507059e+37
    %v1760 = vand.u32 %v1747, 2147483648
    %v1761 = vor.u32 1.1754944e-38, %v1760
    %v1762 = vsel %vm1759, %v1761, %v1757
    %v1763 = vmul.f32 1.0, %v1762
    %v1764 = vrcp.pop %v1748
    %v1765 = vmul.f32 %v1748, %v1764
    %v1766 = vsub.f32 1.0, %v1765
    %v1767 = vmul.f32 %v1764, %v1766
    %v1768 = vadd.f32 %v1764, %v1767
    %vm1769 = vweird.f32 %v1748
    %vm1770 = vweird.f32 %v1764
    %vm1771 = vmor %vm1769, %vm1770
    %v1772 = vsel %vm1771, %v1764, %v1768
    %v1773 = vand.u32 2147483647, %v1748
    %vm1774 = vcmp.eq.f32.partialorder %v1773, 8.507059e+37
    %v1775 = vand.u32 %v1748, 2147483648
    %v1776 = vor.u32 1.1754944e-38, %v1775
    %v1777 = vsel %vm1774, %v1776, %v1772
    %v1778 = vmul.f32 1.0, %v1777
    %1779 = vrot.lane.b32.xlu0 %v1732, 64
    %v1780 = vpop.permute.xlu0 %1779
    %1781 = vrot.lane.b32.xlu0 %v1736, 64
    %v1782 = vpop.permute.xlu0 %1781
    %v1785 = vmul.f32 %v1763, %v1780
    %v1786 = vmul.f32 %v1778, %v1782
    %1789 = vrot.lane.b32.xlu0 %v1785, 64
    %v1790 = vpop.permute.xlu0 %1789
    %1791 = vrot.lane.b32.xlu0 %v1786, 64
    %v1792 = vpop.permute.xlu0 %1791
    %v1795 = vadd.f32 %v1599, %v1790
    %v1796 = vadd.f32 %v1600, %v1792
    %v1797 = vtanh.pop %v1795
    %v1798 = vtanh.pop %v1796
    %v1799 = vsub.f32 1.0, %v1763
    %v1800 = vsub.f32 1.0, %v1778
    %1803 = vrot.lane.b32.xlu0 %v1797, 96
    %v1804 = vpop.permute.xlu0 %1803
    %1805 = vrot.lane.b32.xlu0 %v1798, 96
    %v1806 = vpop.permute.xlu0 %1805
    %v1809 = vmul.f32 %v1799, %v1804
    %v1810 = vmul.f32 %v1800, %v1806
    %v1811 = vmul.f32 %v1763, %v1577
    %v1812 = vmul.f32 %v1778, %v1578
    %v1813 = vadd.f32 %v1809, %v1811
    %v1814 = vadd.f32 %v1810, %v1812
    %v1817 = vrot.slane %v1707, 7
    %v1818 = vsel %vm401, %v1817, %v1706
    %1819 = vrot.lane.b32.xlu0 %v1818, 96
    %v1820 = vpop.permute.xlu0 %1819
    %s1822 = scalar_lea.vmem [#allocation4], 12
    %1823 = vst.msk [vmem:[%s1822] sm:$0x3] %vm406, %v1820
    %v1826 = vrot.slane %v1814, 7
    %v1827 = vsel %vm401, %v1826, %v1813
    %1828 = vrot.lane.b32.xlu0 %v1827, 96
    %v1829 = vpop.permute.xlu0 %1828
    %s1831 = scalar_lea.vmem [#allocation5], 2
    %1832 = vst.msk [vmem:[%s1831] sm:$0x3] %vm406, %v1829
    %v1833 = vld [vmem:[#allocation2 + $0x7] sm:$0x1]
    %v1834 = vld [vmem:[#allocation2 + $0xf] sm:$0x1]
    %v1835 = vld [vmem:[#allocation3] sm:$0x1]
    %v1836 = vld [vmem:[#allocation3 + $0x8] sm:$0x1]
    %v1837 = vpack.c.bf16 %v1706, %v1706
    %v1838 = vpack.c.bf16 %v1707, %v1707
    %v1841 = vunpack.c.l.b16 %v1837
    %v1842 = vunpack.c.l.b16 %v1838
    %v1843 = vrot.slane %v1842, 7
    %v1844 = vsel %vm401, %v1843, %v1841
    %v1845 = vpack.c.b16 %v1844, %v1844
    %1846 = vrot.lane.b32.xlu0 %v1845, 96
    %v1847 = vpop.permute.xlu0 %1846
    %v1849 = vsel %vm193, %v1847, 0
    %1851 = vmatpush.bf16.msra.mxu0 0
    %1852 = vmatpush.bf16.msra.mxu0 0
    %1853 = vmatpush.bf16.msra.mxu0 0
    %1854 = vmatpush.bf16.msra.mxu0 0
    %1855 = vmatpush.bf16.msra.mxu0 0
    %1856 = vmatpush.bf16.msra.mxu0 0
    %1857 = vmatpush.bf16.msra.mxu0 %v190
    %1858 = vmatpush.bf16.msra.mxu0 %v189
    %1859 = vmatmul.bf16.gmra.mxu0 %v1849
    %v1860 = vpop.f32.mrf.mxu0
    %v1861 = vadd.f32 %v179, %v1860
    %v1862 = vpop.f32.mrf.mxu0
    %1863 = vdwg.mxu0
    %v1865 = vrot.slane %v1861, 1
    %v1868 = vadd.f32 %v1833, %v1861
    %v1869 = vadd.f32 %v1834, %v1865
    %v1870 = vxor.u32 %v1868, 2147483648
    %v1871 = vxor.u32 %v1869, 2147483648
    %v1872 = vmul.f32 %v1870, 1.442695
    %v1873 = vpow.pop %v1872
    %v1874 = vmul.f32 %v1871, 1.442695
    %v1875 = vpow.pop %v1874
    %v1876 = vadd.f32 %v1873, 1.0
    %v1877 = vadd.f32 %v1875, 1.0
    %v1878 = vrcp.pop %v1876
    %v1879 = vmul.f32 %v1876, %v1878
    %v1880 = vsub.f32 1.0, %v1879
    %v1881 = vmul.f32 %v1878, %v1880
    %v1882 = vadd.f32 %v1878, %v1881
    %vm1883 = vweird.f32 %v1876
    %vm1884 = vweird.f32 %v1878
    %vm1885 = vmor %vm1883, %vm1884
    %v1886 = vsel %vm1885, %v1878, %v1882
    %v1887 = vand.u32 2147483647, %v1876
    %vm1888 = vcmp.eq.f32.partialorder %v1887, 8.507059e+37
    %v1889 = vand.u32 %v1876, 2147483648
    %v1890 = vor.u32 1.1754944e-38, %v1889
    %v1891 = vsel %vm1888, %v1890, %v1886
    %v1892 = vmul.f32 1.0, %v1891
    %v1893 = vrcp.pop %v1877
    %v1894 = vmul.f32 %v1877, %v1893
    %v1895 = vsub.f32 1.0, %v1894
    %v1896 = vmul.f32 %v1893, %v1895
    %v1897 = vadd.f32 %v1893, %v1896
    %vm1898 = vweird.f32 %v1877
    %vm1899 = vweird.f32 %v1893
    %vm1900 = vmor %vm1898, %vm1899
    %v1901 = vsel %vm1900, %v1893, %v1897
    %v1902 = vand.u32 2147483647, %v1877
    %vm1903 = vcmp.eq.f32.partialorder %v1902, 8.507059e+37
    %v1904 = vand.u32 %v1877, 2147483648
    %v1905 = vor.u32 1.1754944e-38, %v1904
    %v1906 = vsel %vm1903, %v1905, %v1901
    %v1907 = vmul.f32 1.0, %v1906
    %1908 = vrot.lane.b32.xlu0 %v1861, 64
    %v1909 = vpop.permute.xlu0 %1908
    %1910 = vrot.lane.b32.xlu0 %v1865, 64
    %v1911 = vpop.permute.xlu0 %1910
    %v1914 = vmul.f32 %v1892, %v1909
    %v1915 = vmul.f32 %v1907, %v1911
    %1918 = vrot.lane.b32.xlu0 %v1914, 64
    %v1919 = vpop.permute.xlu0 %1918
    %1920 = vrot.lane.b32.xlu0 %v1915, 64
    %v1921 = vpop.permute.xlu0 %1920
    %v1924 = vadd.f32 %v1833, %v1919
    %v1925 = vadd.f32 %v1834, %v1921
    %v1926 = vtanh.pop %v1924
    %v1927 = vtanh.pop %v1925
    %v1928 = vsub.f32 1.0, %v1892
    %v1929 = vsub.f32 1.0, %v1907
    %1932 = vrot.lane.b32.xlu0 %v1926, 96
    %v1933 = vpop.permute.xlu0 %1932
    %1934 = vrot.lane.b32.xlu0 %v1927, 96
    %v1935 = vpop.permute.xlu0 %1934
    %v1938 = vmul.f32 %v1928, %v1933
    %v1939 = vmul.f32 %v1929, %v1935
    %v1940 = vmul.f32 %v1892, %v1706
    %v1941 = vmul.f32 %v1907, %v1707
    %v1942 = vadd.f32 %v1938, %v1940
    %v1943 = vadd.f32 %v1939, %v1941
    %v1944 = vpack.c.bf16 %v1813, %v1813
    %v1945 = vpack.c.bf16 %v1814, %v1814
    %v1948 = vunpack.c.l.b16 %v1944
    %v1949 = vunpack.c.l.b16 %v1945
    %v1950 = vrot.slane %v1949, 7
    %v1951 = vsel %vm401, %v1950, %v1948
    %v1952 = vpack.c.b16 %v1951, %v1951
    %1953 = vrot.lane.b32.xlu0 %v1952, 96
    %v1954 = vpop.permute.xlu0 %1953
    %v1956 = vsel %vm193, %v1954, 0
    %1958 = vmatpush.bf16.msra.mxu0 0
    %1959 = vmatpush.bf16.msra.mxu0 0
    %1960 = vmatpush.bf16.msra.mxu0 0
    %1961 = vmatpush.bf16.msra.mxu0 0
    %1962 = vmatpush.bf16.msra.mxu0 0
    %1963 = vmatpush.bf16.msra.mxu0 0
    %1964 = vmatpush.bf16.msra.mxu0 %v302
    %1965 = vmatpush.bf16.msra.mxu0 %v301
    %1966 = vmatmul.bf16.gmra.mxu0 %v1956
    %v1967 = vpop.f32.mrf.mxu0
    %v1968 = vadd.f32 %v291, %v1967
    %v1969 = vpop.f32.mrf.mxu0
    %1970 = vdwg.mxu0
    %v1972 = vrot.slane %v1968, 1
    %v1975 = vadd.f32 %v1835, %v1968
    %v1976 = vadd.f32 %v1836, %v1972
    %v1977 = vxor.u32 %v1975, 2147483648
    %v1978 = vxor.u32 %v1976, 2147483648
    %v1979 = vmul.f32 %v1977, 1.442695
    %v1980 = vpow.pop %v1979
    %v1981 = vmul.f32 %v1978, 1.442695
    %v1982 = vpow.pop %v1981
    %v1983 = vadd.f32 %v1980, 1.0
    %v1984 = vadd.f32 %v1982, 1.0
    %v1985 = vrcp.pop %v1983
    %v1986 = vmul.f32 %v1983, %v1985
    %v1987 = vsub.f32 1.0, %v1986
    %v1988 = vmul.f32 %v1985, %v1987
    %v1989 = vadd.f32 %v1985, %v1988
    %vm1990 = vweird.f32 %v1983
    %vm1991 = vweird.f32 %v1985
    %vm1992 = vmor %vm1990, %vm1991
    %v1993 = vsel %vm1992, %v1985, %v1989
    %v1994 = vand.u32 2147483647, %v1983
    %vm1995 = vcmp.eq.f32.partialorder %v1994, 8.507059e+37
    %v1996 = vand.u32 %v1983, 2147483648
    %v1997 = vor.u32 1.1754944e-38, %v1996
    %v1998 = vsel %vm1995, %v1997, %v1993
    %v1999 = vmul.f32 1.0, %v1998
    %v2000 = vrcp.pop %v1984
    %v2001 = vmul.f32 %v1984, %v2000
    %v2002 = vsub.f32 1.0, %v2001
    %v2003 = vmul.f32 %v2000, %v2002
    %v2004 = vadd.f32 %v2000, %v2003
    %vm2005 = vweird.f32 %v1984
    %vm2006 = vweird.f32 %v2000
    %vm2007 = vmor %vm2005, %vm2006
    %v2008 = vsel %vm2007, %v2000, %v2004
    %v2009 = vand.u32 2147483647, %v1984
    %vm2010 = vcmp.eq.f32.partialorder %v2009, 8.507059e+37
    %v2011 = vand.u32 %v1984, 2147483648
    %v2012 = vor.u32 1.1754944e-38, %v2011
    %v2013 = vsel %vm2010, %v2012, %v2008
    %v2014 = vmul.f32 1.0, %v2013
    %2015 = vrot.lane.b32.xlu0 %v1968, 64
    %v2016 = vpop.permute.xlu0 %2015
    %2017 = vrot.lane.b32.xlu0 %v1972, 64
    %v2018 = vpop.permute.xlu0 %2017
    %v2021 = vmul.f32 %v1999, %v2016
    %v2022 = vmul.f32 %v2014, %v2018
    %2025 = vrot.lane.b32.xlu0 %v2021, 64
    %v2026 = vpop.permute.xlu0 %2025
    %2027 = vrot.lane.b32.xlu0 %v2022, 64
    %v2028 = vpop.permute.xlu0 %2027
    %v2031 = vadd.f32 %v1835, %v2026
    %v2032 = vadd.f32 %v1836, %v2028
    %v2033 = vtanh.pop %v2031
    %v2034 = vtanh.pop %v2032
    %v2035 = vsub.f32 1.0, %v1999
    %v2036 = vsub.f32 1.0, %v2014
    %2039 = vrot.lane.b32.xlu0 %v2033, 96
    %v2040 = vpop.permute.xlu0 %2039
    %2041 = vrot.lane.b32.xlu0 %v2034, 96
    %v2042 = vpop.permute.xlu0 %2041
    %v2045 = vmul.f32 %v2035, %v2040
    %v2046 = vmul.f32 %v2036, %v2042
    %v2047 = vmul.f32 %v1999, %v1813
    %v2048 = vmul.f32 %v2014, %v1814
    %v2049 = vadd.f32 %v2045, %v2047
    %v2050 = vadd.f32 %v2046, %v2048
    %v2053 = vrot.slane %v1943, 7
    %v2054 = vsel %vm401, %v2053, %v1942
    %2055 = vrot.lane.b32.xlu0 %v2054, 96
    %v2056 = vpop.permute.xlu0 %2055
    %s2058 = scalar_lea.vmem [#allocation4], 14
    %2059 = vst.msk [vmem:[%s2058] sm:$0x3] %vm406, %v2056
    %v2062 = vrot.slane %v2050, 7
    %v2063 = vsel %vm401, %v2062, %v2049
    %2064 = vrot.lane.b32.xlu0 %v2063, 96
    %v2065 = vpop.permute.xlu0 %2064
    %2067 = vst.msk [vmem:[#allocation5] sm:$0x3] %vm406, %v2065
    %v2068 = vld [vmem:[%s10] sm:$0xf]
    %v2069 = vld [vmem:[%s10 + $0x4] sm:$0xf]
    %v2070 = vld [vmem:[%s10 + $0x8] sm:$0xf]
    %v2071 = vld [vmem:[%s10 + $0xc] sm:$0xf]
    %v2072 = vld [vmem:[%s11] sm:$0xf]
    %v2073 = vld [vmem:[%s11 + $0x4] sm:$0xf]
    %v2074 = vld [vmem:[%s11 + $0x8] sm:$0xf]
    %v2075 = vld [vmem:[%s11 + $0xc] sm:$0xf]
    %v2076 = vld [vmem:[%s12] sm:$0x1]
    %v2077 = vld [vmem:[%s13] sm:$0x1]
    %v2078 = vld [vmem:[#allocation6] sm:$0x1]
    %v2079 = vlaneseq
    %v2080 = vand.u32 %v2079, 127
    %v2081 = vld [vmem:[#allocation4] sm:$0x3]
    %v2082 = vpack.c.bf16 %v2081, %v2081
    %v2083 = vld [vmem:[#allocation5] sm:$0x3]
    %v2084 = vpack.c.bf16 %v2083, %v2083
    %v2089 = vunpack.c.l.b16 %v2072
    %v2090 = vunpack.c.l.b16 %v2073
    %v2091 = vunpack.c.l.b16 %v2074
    %v2092 = vunpack.c.l.b16 %v2075
    %v2093 = vpack.c.b16 %v2090, %v2089
    %v2094 = vpack.c.b16 %v2092, %v2091
    %v2098 = vsel %vm193, %v2084, 0
    %2100 = vmatpush.bf16.msra.mxu0 0
    %2101 = vmatpush.bf16.msra.mxu0 0
    %2102 = vmatpush.bf16.msra.mxu0 0
    %2103 = vmatpush.bf16.msra.mxu0 0
    %2104 = vmatpush.bf16.msra.mxu0 0
    %2105 = vmatpush.bf16.msra.mxu0 0
    %2106 = vmatpush.bf16.msra.mxu0 %v2094
    %2107 = vmatpush.bf16.msra.mxu0 %v2093
    %2108 = vmatmul.bf16.gmra.mxu0 %v2098
    %v2109 = vpop.f32.mrf.mxu0
    %v2110 = vadd.f32 0.0, %v2109
    %v2111 = vpop.f32.mrf.mxu0
    %2112 = vdwg.mxu0
    %v2117 = vunpack.c.l.b16 %v2068
    %v2118 = vunpack.c.l.b16 %v2069
    %v2119 = vunpack.c.l.b16 %v2070
    %v2120 = vunpack.c.l.b16 %v2071
    %v2121 = vpack.c.b16 %v2118, %v2117
    %v2122 = vpack.c.b16 %v2120, %v2119
    %v2126 = vsel %vm193, %v2082, 0
    %2128 = vmatpush.bf16.msra.mxu0 0
    %2129 = vmatpush.bf16.msra.mxu0 0
    %2130 = vmatpush.bf16.msra.mxu0 0
    %2131 = vmatpush.bf16.msra.mxu0 0
    %2132 = vmatpush.bf16.msra.mxu0 0
    %2133 = vmatpush.bf16.msra.mxu0 0
    %2134 = vmatpush.bf16.msra.mxu0 %v2122
    %2135 = vmatpush.bf16.msra.mxu0 %v2121
    %2136 = vmatmul.bf16.gmra.mxu0 %v2126
    %v2137 = vpop.f32.mrf.mxu0
    %v2138 = vadd.f32 %v2110, %v2137
    %v2139 = vpop.f32.mrf.mxu0
    %2140 = vdwg.mxu0
    %v2142 = vperm.slane %v2076, 0
    %v2144 = vadd.f32 %v2138, %v2142
    %v2145 = vtanh.pop %v2144
    %v2147 = vperm.slane %v2077, 0
    %v2149 = vmul.f32 %v2145, %v2147
    %v2150 = vsel %vm406, %v2149, 0.0
    %2151 = vadd.xlane.f32.xlu0 %v2150
    %v2152 = vpop.xlane.xlu0 %2151
    %v2154 = vperm.slane %v2078, 0
    %v2156 = vadd.f32 %v2152, %v2154
    %vm2157 = vcmp.eq.s32.totalorder %v2080, 0
    %2159 = vset.pattern.permute.xlu0 0
    %2160 = vperm.xlu0 %2159, %v2156
    %v2161 = vpop.permute.xlu0 %2160
    %v2163 = vsel %vm2157, %v2161, 0.0
    %v2164 = vld [vmem:[%s642] sm:$0x3]
    %v2165 = vpack.c.bf16 %v2164, %v2164
    %v2166 = vld [vmem:[%s1831] sm:$0x3]
    %v2167 = vpack.c.bf16 %v2166, %v2166
    %v2169 = vsel %vm193, %v2167, 0
    %2171 = vmatpush.bf16.msra.mxu0 0
    %2172 = vmatpush.bf16.msra.mxu0 0
    %2173 = vmatpush.bf16.msra.mxu0 0
    %2174 = vmatpush.bf16.msra.mxu0 0
    %2175 = vmatpush.bf16.msra.mxu0 0
    %2176 = vmatpush.bf16.msra.mxu0 0
    %2177 = vmatpush.bf16.msra.mxu0 %v2094
    %2178 = vmatpush.bf16.msra.mxu0 %v2093
    %2179 = vmatmul.bf16.gmra.mxu0 %v2169
    %v2180 = vpop.f32.mrf.mxu0
    %v2181 = vadd.f32 0.0, %v2180
    %v2182 = vpop.f32.mrf.mxu0
    %2183 = vdwg.mxu0
    %v2185 = vsel %vm193, %v2165, 0
    %2187 = vmatpush.bf16.msra.mxu0 0
    %2188 = vmatpush.bf16.msra.mxu0 0
    %2189 = vmatpush.bf16.msra.mxu0 0
    %2190 = vmatpush.bf16.msra.mxu0 0
    %2191 = vmatpush.bf16.msra.mxu0 0
    %2192 = vmatpush.bf16.msra.mxu0 0
    %2193 = vmatpush.bf16.msra.mxu0 %v2122
    %2194 = vmatpush.bf16.msra.mxu0 %v2121
    %2195 = vmatmul.bf16.gmra.mxu0 %v2185
    %v2196 = vpop.f32.mrf.mxu0
    %v2197 = vadd.f32 %v2181, %v2196
    %v2198 = vpop.f32.mrf.mxu0
    %2199 = vdwg.mxu0
    %v2200 = vadd.f32 %v2197, %v2142
    %v2201 = vtanh.pop %v2200
    %v2202 = vmul.f32 %v2201, %v2147
    %v2203 = vsel %vm406, %v2202, 0.0
    %2204 = vadd.xlane.f32.xlu0 %v2203
    %v2205 = vpop.xlane.xlu0 %2204
    %v2206 = vadd.f32 %v2205, %v2154
    %vm2207 = vcmp.eq.s32.totalorder %v2080, 1
    %2209 = vset.pattern.permute.xlu0 0
    %2210 = vperm.xlu0 %2209, %v2206
    %v2211 = vpop.permute.xlu0 %2210
    %v2213 = vsel %vm2207, %v2211, %v2163
    %v2214 = vld [vmem:[%s878] sm:$0x3]
    %v2215 = vpack.c.bf16 %v2214, %v2214
    %v2216 = vld [vmem:[%s1595] sm:$0x3]
    %v2217 = vpack.c.bf16 %v2216, %v2216
    %v2219 = vsel %vm193, %v2217, 0
    %2221 = vmatpush.bf16.msra.mxu0 0
    %2222 = vmatpush.bf16.msra.mxu0 0
    %2223 = vmatpush.bf16.msra.mxu0 0
    %2224 = vmatpush.bf16.msra.mxu0 0
    %2225 = vmatpush.bf16.msra.mxu0 0
    %2226 = vmatpush.bf16.msra.mxu0 0
    %2227 = vmatpush.bf16.msra.mxu0 %v2094
    %2228 = vmatpush.bf16.msra.mxu0 %v2093
    %2229 = vmatmul.bf16.gmra.mxu0 %v2219
    %v2230 = vpop.f32.mrf.mxu0
    %v2231 = vadd.f32 0.0, %v2230
    %v2232 = vpop.f32.mrf.mxu0
    %2233 = vdwg.mxu0
    %v2235 = vsel %vm193, %v2215, 0
    %2237 = vmatpush.bf16.msra.mxu0 0
    %2238 = vmatpush.bf16.msra.mxu0 0
    %2239 = vmatpush.bf16.msra.mxu0 0
    %2240 = vmatpush.bf16.msra.mxu0 0
    %2241 = vmatpush.bf16.msra.mxu0 0
    %2242 = vmatpush.bf16.msra.mxu0 0
    %2243 = vmatpush.bf16.msra.mxu0 %v2122
    %2244 = vmatpush.bf16.msra.mxu0 %v2121
    %2245 = vmatmul.bf16.gmra.mxu0 %v2235
    %v2246 = vpop.f32.mrf.mxu0
    %v2247 = vadd.f32 %v2231, %v2246
    %v2248 = vpop.f32.mrf.mxu0
    %2249 = vdwg.mxu0
    %v2250 = vadd.f32 %v2247, %v2142
    %v2251 = vtanh.pop %v2250
    %v2252 = vmul.f32 %v2251, %v2147
    %v2253 = vsel %vm406, %v2252, 0.0
    %2254 = vadd.xlane.f32.xlu0 %v2253
    %v2255 = vpop.xlane.xlu0 %2254
    %v2256 = vadd.f32 %v2255, %v2154
    %vm2257 = vcmp.eq.s32.totalorder %v2080, 2
    %2259 = vset.pattern.permute.xlu0 0
    %2260 = vperm.xlu0 %2259, %v2256
    %v2261 = vpop.permute.xlu0 %2260
    %v2263 = vsel %vm2257, %v2261, %v2213
    %v2264 = vld [vmem:[%s1114] sm:$0x3]
    %v2265 = vpack.c.bf16 %v2264, %v2264
    %v2266 = vld [vmem:[%s1359] sm:$0x3]
    %v2267 = vpack.c.bf16 %v2266, %v2266
    %v2269 = vsel %vm193, %v2267, 0
    %2271 = vmatpush.bf16.msra.mxu0 0
    %2272 = vmatpush.bf16.msra.mxu0 0
    %2273 = vmatpush.bf16.msra.mxu0 0
    %2274 = vmatpush.bf16.msra.mxu0 0
    %2275 = vmatpush.bf16.msra.mxu0 0
    %2276 = vmatpush.bf16.msra.mxu0 0
    %2277 = vmatpush.bf16.msra.mxu0 %v2094
    %2278 = vmatpush.bf16.msra.mxu0 %v2093
    %2279 = vmatmul.bf16.gmra.mxu0 %v2269
    %v2280 = vpop.f32.mrf.mxu0
    %v2281 = vadd.f32 0.0, %v2280
    %v2282 = vpop.f32.mrf.mxu0
    %2283 = vdwg.mxu0
    %v2285 = vsel %vm193, %v2265, 0
    %2287 = vmatpush.bf16.msra.mxu0 0
    %2288 = vmatpush.bf16.msra.mxu0 0
    %2289 = vmatpush.bf16.msra.mxu0 0
    %2290 = vmatpush.bf16.msra.mxu0 0
    %2291 = vmatpush.bf16.msra.mxu0 0
    %2292 = vmatpush.bf16.msra.mxu0 0
    %2293 = vmatpush.bf16.msra.mxu0 %v2122
    %2294 = vmatpush.bf16.msra.mxu0 %v2121
    %2295 = vmatmul.bf16.gmra.mxu0 %v2285
    %v2296 = vpop.f32.mrf.mxu0
    %v2297 = vadd.f32 %v2281, %v2296
    %v2298 = vpop.f32.mrf.mxu0
    %2299 = vdwg.mxu0
    %v2300 = vadd.f32 %v2297, %v2142
    %v2301 = vtanh.pop %v2300
    %v2302 = vmul.f32 %v2301, %v2147
    %v2303 = vsel %vm406, %v2302, 0.0
    %2304 = vadd.xlane.f32.xlu0 %v2303
    %v2305 = vpop.xlane.xlu0 %2304
    %v2306 = vadd.f32 %v2305, %v2154
    %vm2307 = vcmp.eq.s32.totalorder %v2080, 3
    %2309 = vset.pattern.permute.xlu0 0
    %2310 = vperm.xlu0 %2309, %v2306
    %v2311 = vpop.permute.xlu0 %2310
    %v2313 = vsel %vm2307, %v2311, %v2263
    %v2314 = vld [vmem:[%s1350] sm:$0x3]
    %v2315 = vpack.c.bf16 %v2314, %v2314
    %v2316 = vld [vmem:[%s1123] sm:$0x3]
    %v2317 = vpack.c.bf16 %v2316, %v2316
    %v2319 = vsel %vm193, %v2317, 0
    %2321 = vmatpush.bf16.msra.mxu0 0
    %2322 = vmatpush.bf16.msra.mxu0 0
    %2323 = vmatpush.bf16.msra.mxu0 0
    %2324 = vmatpush.bf16.msra.mxu0 0
    %2325 = vmatpush.bf16.msra.mxu0 0
    %2326 = vmatpush.bf16.msra.mxu0 0
    %2327 = vmatpush.bf16.msra.mxu0 %v2094
    %2328 = vmatpush.bf16.msra.mxu0 %v2093
    %2329 = vmatmul.bf16.gmra.mxu0 %v2319
    %v2330 = vpop.f32.mrf.mxu0
    %v2331 = vadd.f32 0.0, %v2330
    %v2332 = vpop.f32.mrf.mxu0
    %2333 = vdwg.mxu0
    %v2335 = vsel %vm193, %v2315, 0
    %2337 = vmatpush.bf16.msra.mxu0 0
    %2338 = vmatpush.bf16.msra.mxu0 0
    %2339 = vmatpush.bf16.msra.mxu0 0
    %2340 = vmatpush.bf16.msra.mxu0 0
    %2341 = vmatpush.bf16.msra.mxu0 0
    %2342 = vmatpush.bf16.msra.mxu0 0
    %2343 = vmatpush.bf16.msra.mxu0 %v2122
    %2344 = vmatpush.bf16.msra.mxu0 %v2121
    %2345 = vmatmul.bf16.gmra.mxu0 %v2335
    %v2346 = vpop.f32.mrf.mxu0
    %v2347 = vadd.f32 %v2331, %v2346
    %v2348 = vpop.f32.mrf.mxu0
    %2349 = vdwg.mxu0
    %v2350 = vadd.f32 %v2347, %v2142
    %v2351 = vtanh.pop %v2350
    %v2352 = vmul.f32 %v2351, %v2147
    %v2353 = vsel %vm406, %v2352, 0.0
    %2354 = vadd.xlane.f32.xlu0 %v2353
    %v2355 = vpop.xlane.xlu0 %2354
    %v2356 = vadd.f32 %v2355, %v2154
    %vm2357 = vcmp.eq.s32.totalorder %v2080, 4
    %2359 = vset.pattern.permute.xlu0 0
    %2360 = vperm.xlu0 %2359, %v2356
    %v2361 = vpop.permute.xlu0 %2360
    %v2363 = vsel %vm2357, %v2361, %v2313
    %v2364 = vld [vmem:[%s1586] sm:$0x3]
    %v2365 = vpack.c.bf16 %v2364, %v2364
    %v2366 = vld [vmem:[%s887] sm:$0x3]
    %v2367 = vpack.c.bf16 %v2366, %v2366
    %v2369 = vsel %vm193, %v2367, 0
    %2371 = vmatpush.bf16.msra.mxu0 0
    %2372 = vmatpush.bf16.msra.mxu0 0
    %2373 = vmatpush.bf16.msra.mxu0 0
    %2374 = vmatpush.bf16.msra.mxu0 0
    %2375 = vmatpush.bf16.msra.mxu0 0
    %2376 = vmatpush.bf16.msra.mxu0 0
    %2377 = vmatpush.bf16.msra.mxu0 %v2094
    %2378 = vmatpush.bf16.msra.mxu0 %v2093
    %2379 = vmatmul.bf16.gmra.mxu0 %v2369
    %v2380 = vpop.f32.mrf.mxu0
    %v2381 = vadd.f32 0.0, %v2380
    %v2382 = vpop.f32.mrf.mxu0
    %2383 = vdwg.mxu0
    %v2385 = vsel %vm193, %v2365, 0
    %2387 = vmatpush.bf16.msra.mxu0 0
    %2388 = vmatpush.bf16.msra.mxu0 0
    %2389 = vmatpush.bf16.msra.mxu0 0
    %2390 = vmatpush.bf16.msra.mxu0 0
    %2391 = vmatpush.bf16.msra.mxu0 0
    %2392 = vmatpush.bf16.msra.mxu0 0
    %2393 = vmatpush.bf16.msra.mxu0 %v2122
    %2394 = vmatpush.bf16.msra.mxu0 %v2121
    %2395 = vmatmul.bf16.gmra.mxu0 %v2385
    %v2396 = vpop.f32.mrf.mxu0
    %v2397 = vadd.f32 %v2381, %v2396
    %v2398 = vpop.f32.mrf.mxu0
    %2399 = vdwg.mxu0
    %v2400 = vadd.f32 %v2397, %v2142
    %v2401 = vtanh.pop %v2400
    %v2402 = vmul.f32 %v2401, %v2147
    %v2403 = vsel %vm406, %v2402, 0.0
    %2404 = vadd.xlane.f32.xlu0 %v2403
    %v2405 = vpop.xlane.xlu0 %2404
    %v2406 = vadd.f32 %v2405, %v2154
    %vm2407 = vcmp.eq.s32.totalorder %v2080, 5
    %2409 = vset.pattern.permute.xlu0 0
    %2410 = vperm.xlu0 %2409, %v2406
    %v2411 = vpop.permute.xlu0 %2410
    %v2413 = vsel %vm2407, %v2411, %v2363
    %v2414 = vld [vmem:[%s1822] sm:$0x3]
    %v2415 = vpack.c.bf16 %v2414, %v2414
    %v2416 = vld [vmem:[%s651] sm:$0x3]
    %v2417 = vpack.c.bf16 %v2416, %v2416
    %v2419 = vsel %vm193, %v2417, 0
    %2421 = vmatpush.bf16.msra.mxu0 0
    %2422 = vmatpush.bf16.msra.mxu0 0
    %2423 = vmatpush.bf16.msra.mxu0 0
    %2424 = vmatpush.bf16.msra.mxu0 0
    %2425 = vmatpush.bf16.msra.mxu0 0
    %2426 = vmatpush.bf16.msra.mxu0 0
    %2427 = vmatpush.bf16.msra.mxu0 %v2094
    %2428 = vmatpush.bf16.msra.mxu0 %v2093
    %2429 = vmatmul.bf16.gmra.mxu0 %v2419
    %v2430 = vpop.f32.mrf.mxu0
    %v2431 = vadd.f32 0.0, %v2430
    %v2432 = vpop.f32.mrf.mxu0
    %2433 = vdwg.mxu0
    %v2435 = vsel %vm193, %v2415, 0
    %2437 = vmatpush.bf16.msra.mxu0 0
    %2438 = vmatpush.bf16.msra.mxu0 0
    %2439 = vmatpush.bf16.msra.mxu0 0
    %2440 = vmatpush.bf16.msra.mxu0 0
    %2441 = vmatpush.bf16.msra.mxu0 0
    %2442 = vmatpush.bf16.msra.mxu0 0
    %2443 = vmatpush.bf16.msra.mxu0 %v2122
    %2444 = vmatpush.bf16.msra.mxu0 %v2121
    %2445 = vmatmul.bf16.gmra.mxu0 %v2435
    %v2446 = vpop.f32.mrf.mxu0
    %v2447 = vadd.f32 %v2431, %v2446
    %v2448 = vpop.f32.mrf.mxu0
    %2449 = vdwg.mxu0
    %v2450 = vadd.f32 %v2447, %v2142
    %v2451 = vtanh.pop %v2450
    %v2452 = vmul.f32 %v2451, %v2147
    %v2453 = vsel %vm406, %v2452, 0.0
    %2454 = vadd.xlane.f32.xlu0 %v2453
    %v2455 = vpop.xlane.xlu0 %2454
    %v2456 = vadd.f32 %v2455, %v2154
    %vm2457 = vcmp.eq.s32.totalorder %v2080, 6
    %2459 = vset.pattern.permute.xlu0 0
    %2460 = vperm.xlu0 %2459, %v2456
    %v2461 = vpop.permute.xlu0 %2460
    %v2463 = vsel %vm2457, %v2461, %v2413
    %v2464 = vld [vmem:[%s2058] sm:$0x3]
    %v2465 = vpack.c.bf16 %v2464, %v2464
    %v2466 = vld [vmem:[%s415] sm:$0x3]
    %v2467 = vpack.c.bf16 %v2466, %v2466
    %v2469 = vsel %vm193, %v2467, 0
    %2471 = vmatpush.bf16.msra.mxu0 0
    %2472 = vmatpush.bf16.msra.mxu0 0
    %2473 = vmatpush.bf16.msra.mxu0 0
    %2474 = vmatpush.bf16.msra.mxu0 0
    %2475 = vmatpush.bf16.msra.mxu0 0
    %2476 = vmatpush.bf16.msra.mxu0 0
    %2477 = vmatpush.bf16.msra.mxu0 %v2094
    %2478 = vmatpush.bf16.msra.mxu0 %v2093
    %2479 = vmatmul.bf16.gmra.mxu0 %v2469
    %v2480 = vpop.f32.mrf.mxu0
    %v2481 = vadd.f32 0.0, %v2480
    %v2482 = vpop.f32.mrf.mxu0
    %2483 = vdwg.mxu0
    %v2485 = vsel %vm193, %v2465, 0
    %2487 = vmatpush.bf16.msra.mxu0 0
    %2488 = vmatpush.bf16.msra.mxu0 0
    %2489 = vmatpush.bf16.msra.mxu0 0
    %2490 = vmatpush.bf16.msra.mxu0 0
    %2491 = vmatpush.bf16.msra.mxu0 0
    %2492 = vmatpush.bf16.msra.mxu0 0
    %2493 = vmatpush.bf16.msra.mxu0 %v2122
    %2494 = vmatpush.bf16.msra.mxu0 %v2121
    %2495 = vmatmul.bf16.gmra.mxu0 %v2485
    %v2496 = vpop.f32.mrf.mxu0
    %v2497 = vadd.f32 %v2481, %v2496
    %v2498 = vpop.f32.mrf.mxu0
    %2499 = vdwg.mxu0
    %v2500 = vadd.f32 %v2497, %v2142
    %v2501 = vtanh.pop %v2500
    %v2502 = vmul.f32 %v2501, %v2147
    %v2503 = vsel %vm406, %v2502, 0.0
    %2504 = vadd.xlane.f32.xlu0 %v2503
    %v2505 = vpop.xlane.xlu0 %2504
    %v2506 = vadd.f32 %v2505, %v2154
    %vm2507 = vcmp.eq.s32.totalorder %v2080, 7
    %2509 = vset.pattern.permute.xlu0 0
    %2510 = vperm.xlu0 %2509, %v2506
    %v2511 = vpop.permute.xlu0 %2510
    %v2513 = vsel %vm2507, %v2511, %v2463
    %v2514 = vld [vmem:[%s1] sm:$0x3]
    %vm2515 = vcmp.gt.f32.partialorder %v2514, 0.0
    %v2516 = vsel %vm2515, -inf, %v2513
    %vm2517 = vcmask 58368
    %v2518 = vsel %vm2517, %v2516, -inf
    %2519 = vmax.xlane.f32.xlu0 %v2518
    %v2520 = vpop.xlane.xlu0 %2519
    %v2521 = vsub.f32 %v2516, %v2520
    %v2522 = vmul.f32 %v2521, 1.442695
    %v2523 = vpow.pop %v2522
    %v2524 = vsel %vm2517, %v2523, 0.0
    %2525 = vadd.xlane.f32.xlu0 %v2524
    %v2526 = vpop.xlane.xlu0 %2525
    %v2527 = vrcp.pop %v2526
    %v2528 = vmul.f32 %v2523, %v2527
    %2530 = vset.pattern.permute.xlu0 0
    %2531 = vperm.xlu0 %2530, %v2528
    %v2532 = vpop.permute.xlu0 %2531
    %v2534 = vmul.f32 %v2532, %v2081
    %v2535 = vadd.f32 %v2534, 0.0
    %v2536 = vmul.f32 %v2532, %v2083
    %v2537 = vadd.f32 %v2536, 0.0
    %2538 = vset.pattern.permute.xlu0 1
    %2539 = vperm.xlu0 %2538, %v2528
    %v2540 = vpop.permute.xlu0 %2539
    %v2542 = vmul.f32 %v2540, %v2164
    %v2543 = vadd.f32 %v2535, %v2542
    %v2544 = vmul.f32 %v2540, %v2166
    %v2545 = vadd.f32 %v2537, %v2544
    %2546 = vset.pattern.permute.xlu0 2
    %2547 = vperm.xlu0 %2546, %v2528
    %v2548 = vpop.permute.xlu0 %2547
    %v2550 = vmul.f32 %v2548, %v2214
    %v2551 = vadd.f32 %v2543, %v2550
    %v2552 = vmul.f32 %v2548, %v2216
    %v2553 = vadd.f32 %v2545, %v2552
    %2554 = vset.pattern.permute.xlu0 3
    %2555 = vperm.xlu0 %2554, %v2528
    %v2556 = vpop.permute.xlu0 %2555
    %v2558 = vmul.f32 %v2556, %v2264
    %v2559 = vadd.f32 %v2551, %v2558
    %v2560 = vmul.f32 %v2556, %v2266
    %v2561 = vadd.f32 %v2553, %v2560
    %2562 = vset.pattern.permute.xlu0 4
    %2563 = vperm.xlu0 %2562, %v2528
    %v2564 = vpop.permute.xlu0 %2563
    %v2566 = vmul.f32 %v2564, %v2314
    %v2567 = vadd.f32 %v2559, %v2566
    %v2568 = vmul.f32 %v2564, %v2316
    %v2569 = vadd.f32 %v2561, %v2568
    %2570 = vset.pattern.permute.xlu0 5
    %2571 = vperm.xlu0 %2570, %v2528
    %v2572 = vpop.permute.xlu0 %2571
    %v2574 = vmul.f32 %v2572, %v2364
    %v2575 = vadd.f32 %v2567, %v2574
    %v2576 = vmul.f32 %v2572, %v2366
    %v2577 = vadd.f32 %v2569, %v2576
    %2578 = vset.pattern.permute.xlu0 6
    %2579 = vperm.xlu0 %2578, %v2528
    %v2580 = vpop.permute.xlu0 %2579
    %v2582 = vmul.f32 %v2580, %v2414
    %v2583 = vadd.f32 %v2575, %v2582
    %v2584 = vmul.f32 %v2580, %v2416
    %v2585 = vadd.f32 %v2577, %v2584
    %2586 = vset.pattern.permute.xlu0 7
    %2587 = vperm.xlu0 %2586, %v2528
    %v2588 = vpop.permute.xlu0 %2587
    %v2590 = vmul.f32 %v2588, %v2464
    %v2591 = vadd.f32 %v2583, %v2590
    %v2592 = vmul.f32 %v2588, %v2466
    %v2593 = vadd.f32 %v2585, %v2592
    %2594 = vst.msk [vmem:[#allocation7] sm:$0x3] %vm406, %v2591
    %2596 = vrot.lane.b32.xlu0 %v2593, 32
    %v2597 = vpop.permute.xlu0 %2596
    %vm2599 = vcmask 517376
    %2600 = vst.msk [vmem:[#allocation7] sm:$0x3] %vm2599, %v2597
    // Predicated region
    $region62: #{get_embd_forward.5} parent=1 // pred_check
      _
    $region63: #{get_embd_forward.5} parent=1 // pred_check_branch
      %2602 = sbr.rel (0) target = $region65
    $region64: #{get_embd_forward.5} parent=1 // pred_region
      %2604 = vsyncadd [#allocation8], 0
      %s2606 = sshll.u32 [#allocation7], 4
      %s2607 = int_to_ptr.vmem [resolvable:$true] %s2606
      %s2608 = sshll.u32 %s15, 4
      %s2609 = int_to_ptr.hbm [resolvable:$true] %s2608
      %2611 = dma.vmem_to_hbm [thread:$0]  %s2607, 32, %s2609, [#allocation8]
    $region65: #{get_embd_forward.5} parent=1 // pred_fallthru
      _
    // Predicated region
    $region66: #{get_embd_forward.5} parent=1 // pred_check
      _
    $region67: #{get_embd_forward.5} parent=1 // pred_check_branch
      %2613 = sbr.rel (0) target = $region69
    $region68: #{get_embd_forward.5} parent=1 // pred_region
      %2615 = dma.done [#allocation8], 32
    $region69: #{get_embd_forward.5} parent=1 // pred_fallthru
      _
    %2616 = vsyncpa [#allocation8], 1

// kernel: get_embd_forward.4
$region0: #{get_embd_forward.4}
  #allocation0 [shape = 'u32[]', space=smem, size = 0x4, offset = 0x4, fixed_abs, tag = 'smem constant byte address 0x4 - core index']
  #allocation1 [shape = 'u32[72,128]{1,0:T(1,128)}', space=vmem, size = 0x9000, scoped, tag = 'internal scratch']
  %s0 = inlined_call_operand.vmem [shape: bf16[48,5,8], index: 0, kind: input, shape index: {}]
  %s1 = inlined_call_operand.vmem [shape: bf16[48,5,8], index: 1, kind: input, shape index: {}]
  %s2 = inlined_call_operand.vmem [shape: bf16[48,5,8], index: 2, kind: input, shape index: {}]
  %s3 = inlined_call_operand.vmem [shape: f32[48,5], index: 3, kind: input, shape index: {}]
  %s4 = inlined_call_operand.vmem [shape: f32[48,8], index: 4, kind: output, shape index: {}]
  %s5 = sld [smem:[#allocation0]]
  $region26: #{get_embd_forward.4} parent=0
    _
  %s7 = ssub.s32 1, %s5
  %s8 = scalar_select 0, %s7, %s5
  // Predicated region
  $region2: #{get_embd_forward.4} parent=0 // pred_check
    _
  $region3: #{get_embd_forward.4} parent=0 // pred_check_branch
    %10 = sbr.rel (0) target = $region5
  $region4: #{get_embd_forward.4} parent=0 // pred_region
    _
  $region5: #{get_embd_forward.4} parent=0 // pred_fallthru
    _
  // Predicated region
  $region6: #{get_embd_forward.4} parent=0 // pred_check
    _
  $region7: #{get_embd_forward.4} parent=0 // pred_check_branch
    %12 = sbr.rel (0) target = $region9
  $region8: #{get_embd_forward.4} parent=0 // pred_region
    _
  $region9: #{get_embd_forward.4} parent=0 // pred_fallthru
    _
  // Predicated region
  $region10: #{get_embd_forward.4} parent=0 // pred_check
    _
  $region11: #{get_embd_forward.4} parent=0 // pred_check_branch
    %14 = sbr.rel (0) target = $region13
  $region12: #{get_embd_forward.4} parent=0 // pred_region
    _
  $region13: #{get_embd_forward.4} parent=0 // pred_fallthru
    _
  // Predicated region
  $region14: #{get_embd_forward.4} parent=0 // pred_check
    _
  $region15: #{get_embd_forward.4} parent=0 // pred_check_branch
    %16 = sbr.rel (0) target = $region17
  $region16: #{get_embd_forward.4} parent=0 // pred_region
    _
  $region17: #{get_embd_forward.4} parent=0 // pred_fallthru
    _
  %v18 = vld [vmem:[%s0] sm:$0x7]
  %v19 = vld [vmem:[%s0 + $0x4] sm:$0x7]
  %v20 = vld [vmem:[%s0 + $0x8] sm:$0x7]
  %v21 = vld [vmem:[%s0 + $0xc] sm:$0x7]
  %v22 = vld [vmem:[%s0 + $0x10] sm:$0x7]
  %v23 = vld [vmem:[%s0 + $0x14] sm:$0x7]
  %v24 = vld [vmem:[%s0 + $0x18] sm:$0x7]
  %v25 = vld [vmem:[%s0 + $0x1c] sm:$0x7]
  %v26 = vld [vmem:[%s0 + $0x20] sm:$0x7]
  %v27 = vld [vmem:[%s0 + $0x24] sm:$0x7]
  %v28 = vld [vmem:[%s0 + $0x28] sm:$0x7]
  %v29 = vld [vmem:[%s0 + $0x2c] sm:$0x7]
  %v30 = vld [vmem:[%s0 + $0x30] sm:$0x7]
  %v31 = vld [vmem:[%s0 + $0x34] sm:$0x7]
  %v32 = vld [vmem:[%s0 + $0x38] sm:$0x7]
  %v33 = vld [vmem:[%s0 + $0x3c] sm:$0x7]
  %v34 = vld [vmem:[%s0 + $0x40] sm:$0x7]
  %v35 = vld [vmem:[%s0 + $0x44] sm:$0x7]
  %v36 = vld [vmem:[%s0 + $0x48] sm:$0x7]
  %v37 = vld [vmem:[%s0 + $0x4c] sm:$0x7]
  %v38 = vld [vmem:[%s0 + $0x50] sm:$0x7]
  %v39 = vld [vmem:[%s0 + $0x54] sm:$0x7]
  %v40 = vld [vmem:[%s0 + $0x58] sm:$0x7]
  %v41 = vld [vmem:[%s0 + $0x5c] sm:$0x7]
  %v42 = vld [vmem:[%s0 + $0x60] sm:$0x7]
  %v43 = vld [vmem:[%s0 + $0x64] sm:$0x7]
  %v44 = vld [vmem:[%s0 + $0x68] sm:$0x7]
  %v45 = vld [vmem:[%s0 + $0x6c] sm:$0x7]
  %v46 = vld [vmem:[%s0 + $0x70] sm:$0x7]
  %v47 = vld [vmem:[%s0 + $0x74] sm:$0x7]
  %v48 = vld [vmem:[%s0 + $0x78] sm:$0x7]
  %v49 = vld [vmem:[%s0 + $0x7c] sm:$0x7]
  %v50 = vld [vmem:[%s0 + $0x80] sm:$0x7]
  %v51 = vld [vmem:[%s0 + $0x84] sm:$0x7]
  %v52 = vld [vmem:[%s0 + $0x88] sm:$0x7]
  %v53 = vld [vmem:[%s0 + $0x8c] sm:$0x7]
  %v54 = vld [vmem:[%s0 + $0x90] sm:$0x7]
  %v55 = vld [vmem:[%s0 + $0x94] sm:$0x7]
  %v56 = vld [vmem:[%s0 + $0x98] sm:$0x7]
  %v57 = vld [vmem:[%s0 + $0x9c] sm:$0x7]
  %v58 = vld [vmem:[%s0 + $0xa0] sm:$0x7]
  %v59 = vld [vmem:[%s0 + $0xa4] sm:$0x7]
  %v60 = vld [vmem:[%s0 + $0xa8] sm:$0x7]
  %v61 = vld [vmem:[%s0 + $0xac] sm:$0x7]
  %v62 = vld [vmem:[%s0 + $0xb0] sm:$0x7]
  %v63 = vld [vmem:[%s0 + $0xb4] sm:$0x7]
  %v64 = vld [vmem:[%s0 + $0xb8] sm:$0x7]
  %v65 = vld [vmem:[%s0 + $0xbc] sm:$0x7]
  %v66 = vld [vmem:[%s1] sm:$0x7]
  %v67 = vld [vmem:[%s1 + $0x4] sm:$0x7]
  %v68 = vld [vmem:[%s1 + $0x8] sm:$0x7]
  %v69 = vld [vmem:[%s1 + $0xc] sm:$0x7]
  %v70 = vld [vmem:[%s1 + $0x10] sm:$0x7]
  %v71 = vld [vmem:[%s1 + $0x14] sm:$0x7]
  %v72 = vld [vmem:[%s1 + $0x18] sm:$0x7]
  %v73 = vld [vmem:[%s1 + $0x1c] sm:$0x7]
  %v74 = vld [vmem:[%s1 + $0x20] sm:$0x7]
  %v75 = vld [vmem:[%s1 + $0x24] sm:$0x7]
  %v76 = vld [vmem:[%s1 + $0x28] sm:$0x7]
  %v77 = vld [vmem:[%s1 + $0x2c] sm:$0x7]
  %v78 = vld [vmem:[%s1 + $0x30] sm:$0x7]
  %v79 = vld [vmem:[%s1 + $0x34] sm:$0x7]
  %v80 = vld [vmem:[%s1 + $0x38] sm:$0x7]
  %v81 = vld [vmem:[%s1 + $0x3c] sm:$0x7]
  %v82 = vld [vmem:[%s1 + $0x40] sm:$0x7]
  %v83 = vld [vmem:[%s1 + $0x44] sm:$0x7]
  %v84 = vld [vmem:[%s1 + $0x48] sm:$0x7]
  %v85 = vld [vmem:[%s1 + $0x4c] sm:$0x7]
  %v86 = vld [vmem:[%s1 + $0x50] sm:$0x7]
  %v87 = vld [vmem:[%s1 + $0x54] sm:$0x7]
  %v88 = vld [vmem:[%s1 + $0x58] sm:$0x7]
  %v89 = vld [vmem:[%s1 + $0x5c] sm:$0x7]
  %v90 = vld [vmem:[%s1 + $0x60] sm:$0x7]
  %v91 = vld [vmem:[%s1 + $0x64] sm:$0x7]
  %v92 = vld [vmem:[%s1 + $0x68] sm:$0x7]
  %v93 = vld [vmem:[%s1 + $0x6c] sm:$0x7]
  %v94 = vld [vmem:[%s1 + $0x70] sm:$0x7]
  %v95 = vld [vmem:[%s1 + $0x74] sm:$0x7]
  %v96 = vld [vmem:[%s1 + $0x78] sm:$0x7]
  %v97 = vld [vmem:[%s1 + $0x7c] sm:$0x7]
  %v98 = vld [vmem:[%s1 + $0x80] sm:$0x7]
  %v99 = vld [vmem:[%s1 + $0x84] sm:$0x7]
  %v100 = vld [vmem:[%s1 + $0x88] sm:$0x7]
  %v101 = vld [vmem:[%s1 + $0x8c] sm:$0x7]
  %v102 = vld [vmem:[%s1 + $0x90] sm:$0x7]
  %v103 = vld [vmem:[%s1 + $0x94] sm:$0x7]
  %v104 = vld [vmem:[%s1 + $0x98] sm:$0x7]
  %v105 = vld [vmem:[%s1 + $0x9c] sm:$0x7]
  %v106 = vld [vmem:[%s1 + $0xa0] sm:$0x7]
  %v107 = vld [vmem:[%s1 + $0xa4] sm:$0x7]
  %v108 = vld [vmem:[%s1 + $0xa8] sm:$0x7]
  %v109 = vld [vmem:[%s1 + $0xac] sm:$0x7]
  %v110 = vld [vmem:[%s1 + $0xb0] sm:$0x7]
  %v111 = vld [vmem:[%s1 + $0xb4] sm:$0x7]
  %v112 = vld [vmem:[%s1 + $0xb8] sm:$0x7]
  %v113 = vld [vmem:[%s1 + $0xbc] sm:$0x7]
  %v114 = vld [vmem:[%s2] sm:$0x7]
  %v115 = vld [vmem:[%s2 + $0x4] sm:$0x7]
  %v116 = vld [vmem:[%s2 + $0x8] sm:$0x7]
  %v117 = vld [vmem:[%s2 + $0xc] sm:$0x7]
  %v118 = vld [vmem:[%s2 + $0x10] sm:$0x7]
  %v119 = vld [vmem:[%s2 + $0x14] sm:$0x7]
  %v120 = vld [vmem:[%s2 + $0x18] sm:$0x7]
  %v121 = vld [vmem:[%s2 + $0x1c] sm:$0x7]
  %v122 = vld [vmem:[%s2 + $0x20] sm:$0x7]
  %v123 = vld [vmem:[%s2 + $0x24] sm:$0x7]
  %v124 = vld [vmem:[%s2 + $0x28] sm:$0x7]
  %v125 = vld [vmem:[%s2 + $0x2c] sm:$0x7]
  %v126 = vld [vmem:[%s2 + $0x30] sm:$0x7]
  %v127 = vld [vmem:[%s2 + $0x34] sm:$0x7]
  %v128 = vld [vmem:[%s2 + $0x38] sm:$0x7]
  %v129 = vld [vmem:[%s2 + $0x3c] sm:$0x7]
  %v130 = vld [vmem:[%s2 + $0x40] sm:$0x7]
  %v131 = vld [vmem:[%s2 + $0x44] sm:$0x7]
  %v132 = vld [vmem:[%s2 + $0x48] sm:$0x7]
  %v133 = vld [vmem:[%s2 + $0x4c] sm:$0x7]
  %v134 = vld [vmem:[%s2 + $0x50] sm:$0x7]
  %v135 = vld [vmem:[%s2 + $0x54] sm:$0x7]
  %v136 = vld [vmem:[%s2 + $0x58] sm:$0x7]
  %v137 = vld [vmem:[%s2 + $0x5c] sm:$0x7]
  %v138 = vld [vmem:[%s2 + $0x60] sm:$0x7]
  %v139 = vld [vmem:[%s2 + $0x64] sm:$0x7]
  %v140 = vld [vmem:[%s2 + $0x68] sm:$0x7]
  %v141 = vld [vmem:[%s2 + $0x6c] sm:$0x7]
  %v142 = vld [vmem:[%s2 + $0x70] sm:$0x7]
  %v143 = vld [vmem:[%s2 + $0x74] sm:$0x7]
  %v144 = vld [vmem:[%s2 + $0x78] sm:$0x7]
  %v145 = vld [vmem:[%s2 + $0x7c] sm:$0x7]
  %v146 = vld [vmem:[%s2 + $0x80] sm:$0x7]
  %v147 = vld [vmem:[%s2 + $0x84] sm:$0x7]
  %v148 = vld [vmem:[%s2 + $0x88] sm:$0x7]
  %v149 = vld [vmem:[%s2 + $0x8c] sm:$0x7]
  %v150 = vld [vmem:[%s2 + $0x90] sm:$0x7]
  %v151 = vld [vmem:[%s2 + $0x94] sm:$0x7]
  %v152 = vld [vmem:[%s2 + $0x98] sm:$0x7]
  %v153 = vld [vmem:[%s2 + $0x9c] sm:$0x7]
  %v154 = vld [vmem:[%s2 + $0xa0] sm:$0x7]
  %v155 = vld [vmem:[%s2 + $0xa4] sm:$0x7]
  %v156 = vld [vmem:[%s2 + $0xa8] sm:$0x7]
  %v157 = vld [vmem:[%s2 + $0xac] sm:$0x7]
  %v158 = vld [vmem:[%s2 + $0xb0] sm:$0x7]
  %v159 = vld [vmem:[%s2 + $0xb4] sm:$0x7]
  %v160 = vld [vmem:[%s2 + $0xb8] sm:$0x7]
  %v161 = vld [vmem:[%s2 + $0xbc] sm:$0x7]
  %v162 = vld [vmem:[%s3] sm:$0xff]
  %v163 = vld [vmem:[%s3 + $0x8] sm:$0xff]
  %v164 = vld [vmem:[%s3 + $0x10] sm:$0xff]
  %v165 = vld [vmem:[%s3 + $0x18] sm:$0xff]
  %v166 = vld [vmem:[%s3 + $0x20] sm:$0xff]
  %v167 = vld [vmem:[%s3 + $0x28] sm:$0xff]
  %vm168 = vcmask 64512
  %v170 = vsel %vm168, %v18, 0
  %v173 = vsel %vm168, %v66, 0
  %175 = vmatpush.bf16.xpose.msra.mxu0 0
  %176 = vmatpush.bf16.xpose.msra.mxu0 0
  %177 = vmatpush.bf16.xpose.msra.mxu0 0
  %178 = vmatpush.bf16.xpose.msra.mxu0 0
  %179 = vmatpush.bf16.xpose.msra.mxu0 0
  %180 = vmatpush.bf16.xpose.msra.mxu0 0
  %181 = vmatpush.bf16.xpose.msra.mxu0 0
  %182 = vmatpush.bf16.xpose.msra.mxu0 %v173
  %183 = vmatmul.bf16.gmra.mxu0 %v170
  %v184 = vpop.f32.mrf.mxu0
  %v185 = vadd.f32 0.0, %v184
  %v186 = vpop.f32.mrf.mxu0
  %187 = vdwg.mxu0
  %v189 = vsel %vm168, %v19, 0
  %v192 = vsel %vm168, %v67, 0
  %194 = vmatpush.bf16.xpose.msra.mxu0 0
  %195 = vmatpush.bf16.xpose.msra.mxu0 0
  %196 = vmatpush.bf16.xpose.msra.mxu0 0
  %197 = vmatpush.bf16.xpose.msra.mxu0 0
  %198 = vmatpush.bf16.xpose.msra.mxu0 0
  %199 = vmatpush.bf16.xpose.msra.mxu0 0
  %200 = vmatpush.bf16.xpose.msra.mxu0 0
  %201 = vmatpush.bf16.xpose.msra.mxu0 %v192
  %202 = vmatmul.bf16.gmra.mxu0 %v189
  %v203 = vpop.f32.mrf.mxu0
  %v204 = vadd.f32 0.0, %v203
  %v205 = vpop.f32.mrf.mxu0
  %206 = vdwg.mxu0
  %v208 = vsel %vm168, %v20, 0
  %v211 = vsel %vm168, %v68, 0
  %213 = vmatpush.bf16.xpose.msra.mxu0 0
  %214 = vmatpush.bf16.xpose.msra.mxu0 0
  %215 = vmatpush.bf16.xpose.msra.mxu0 0
  %216 = vmatpush.bf16.xpose.msra.mxu0 0
  %217 = vmatpush.bf16.xpose.msra.mxu0 0
  %218 = vmatpush.bf16.xpose.msra.mxu0 0
  %219 = vmatpush.bf16.xpose.msra.mxu0 0
  %220 = vmatpush.bf16.xpose.msra.mxu0 %v211
  %221 = vmatmul.bf16.gmra.mxu0 %v208
  %v222 = vpop.f32.mrf.mxu0
  %v223 = vadd.f32 0.0, %v222
  %v224 = vpop.f32.mrf.mxu0
  %225 = vdwg.mxu0
  %v227 = vsel %vm168, %v21, 0
  %v230 = vsel %vm168, %v69, 0
  %232 = vmatpush.bf16.xpose.msra.mxu0 0
  %233 = vmatpush.bf16.xpose.msra.mxu0 0
  %234 = vmatpush.bf16.xpose.msra.mxu0 0
  %235 = vmatpush.bf16.xpose.msra.mxu0 0
  %236 = vmatpush.bf16.xpose.msra.mxu0 0
  %237 = vmatpush.bf16.xpose.msra.mxu0 0
  %238 = vmatpush.bf16.xpose.msra.mxu0 0
  %239 = vmatpush.bf16.xpose.msra.mxu0 %v230
  %240 = vmatmul.bf16.gmra.mxu0 %v227
  %v241 = vpop.f32.mrf.mxu0
  %v242 = vadd.f32 0.0, %v241
  %v243 = vpop.f32.mrf.mxu0
  %244 = vdwg.mxu0
  %v246 = vsel %vm168, %v22, 0
  %v249 = vsel %vm168, %v70, 0
  %251 = vmatpush.bf16.xpose.msra.mxu0 0
  %252 = vmatpush.bf16.xpose.msra.mxu0 0
  %253 = vmatpush.bf16.xpose.msra.mxu0 0
  %254 = vmatpush.bf16.xpose.msra.mxu0 0
  %255 = vmatpush.bf16.xpose.msra.mxu0 0
  %256 = vmatpush.bf16.xpose.msra.mxu0 0
  %257 = vmatpush.bf16.xpose.msra.mxu0 0
  %258 = vmatpush.bf16.xpose.msra.mxu0 %v249
  %259 = vmatmul.bf16.gmra.mxu0 %v246
  %v260 = vpop.f32.mrf.mxu0
  %v261 = vadd.f32 0.0, %v260
  %v262 = vpop.f32.mrf.mxu0
  %263 = vdwg.mxu0
  %v265 = vsel %vm168, %v23, 0
  %v268 = vsel %vm168, %v71, 0
  %270 = vmatpush.bf16.xpose.msra.mxu0 0
  %271 = vmatpush.bf16.xpose.msra.mxu0 0
  %272 = vmatpush.bf16.xpose.msra.mxu0 0
  %273 = vmatpush.bf16.xpose.msra.mxu0 0
  %274 = vmatpush.bf16.xpose.msra.mxu0 0
  %275 = vmatpush.bf16.xpose.msra.mxu0 0
  %276 = vmatpush.bf16.xpose.msra.mxu0 0
  %277 = vmatpush.bf16.xpose.msra.mxu0 %v268
  %278 = vmatmul.bf16.gmra.mxu0 %v265
  %v279 = vpop.f32.mrf.mxu0
  %v280 = vadd.f32 0.0, %v279
  %v281 = vpop.f32.mrf.mxu0
  %282 = vdwg.mxu0
  %v284 = vsel %vm168, %v24, 0
  %v287 = vsel %vm168, %v72, 0
  %289 = vmatpush.bf16.xpose.msra.mxu0 0
  %290 = vmatpush.bf16.xpose.msra.mxu0 0
  %291 = vmatpush.bf16.xpose.msra.mxu0 0
  %292 = vmatpush.bf16.xpose.msra.mxu0 0
  %293 = vmatpush.bf16.xpose.msra.mxu0 0
  %294 = vmatpush.bf16.xpose.msra.mxu0 0
  %295 = vmatpush.bf16.xpose.msra.mxu0 0
  %296 = vmatpush.bf16.xpose.msra.mxu0 %v287
  %297 = vmatmul.bf16.gmra.mxu0 %v284
  %v298 = vpop.f32.mrf.mxu0
  %v299 = vadd.f32 0.0, %v298
  %v300 = vpop.f32.mrf.mxu0
  %301 = vdwg.mxu0
  %v303 = vsel %vm168, %v25, 0
  %v306 = vsel %vm168, %v73, 0
  %308 = vmatpush.bf16.xpose.msra.mxu0 0
  %309 = vmatpush.bf16.xpose.msra.mxu0 0
  %310 = vmatpush.bf16.xpose.msra.mxu0 0
  %311 = vmatpush.bf16.xpose.msra.mxu0 0
  %312 = vmatpush.bf16.xpose.msra.mxu0 0
  %313 = vmatpush.bf16.xpose.msra.mxu0 0
  %314 = vmatpush.bf16.xpose.msra.mxu0 0
  %315 = vmatpush.bf16.xpose.msra.mxu0 %v306
  %316 = vmatmul.bf16.gmra.mxu0 %v303
  %v317 = vpop.f32.mrf.mxu0
  %v318 = vadd.f32 0.0, %v317
  %v319 = vpop.f32.mrf.mxu0
  %320 = vdwg.mxu0
  %v322 = vsel %vm168, %v26, 0
  %v325 = vsel %vm168, %v74, 0
  %327 = vmatpush.bf16.xpose.msra.mxu0 0
  %328 = vmatpush.bf16.xpose.msra.mxu0 0
  %329 = vmatpush.bf16.xpose.msra.mxu0 0
  %330 = vmatpush.bf16.xpose.msra.mxu0 0
  %331 = vmatpush.bf16.xpose.msra.mxu0 0
  %332 = vmatpush.bf16.xpose.msra.mxu0 0
  %333 = vmatpush.bf16.xpose.msra.mxu0 0
  %334 = vmatpush.bf16.xpose.msra.mxu0 %v325
  %335 = vmatmul.bf16.gmra.mxu0 %v322
  %v336 = vpop.f32.mrf.mxu0
  %v337 = vadd.f32 0.0, %v336
  %v338 = vpop.f32.mrf.mxu0
  %339 = vdwg.mxu0
  %v341 = vsel %vm168, %v27, 0
  %v344 = vsel %vm168, %v75, 0
  %346 = vmatpush.bf16.xpose.msra.mxu0 0
  %347 = vmatpush.bf16.xpose.msra.mxu0 0
  %348 = vmatpush.bf16.xpose.msra.mxu0 0
  %349 = vmatpush.bf16.xpose.msra.mxu0 0
  %350 = vmatpush.bf16.xpose.msra.mxu0 0
  %351 = vmatpush.bf16.xpose.msra.mxu0 0
  %352 = vmatpush.bf16.xpose.msra.mxu0 0
  %353 = vmatpush.bf16.xpose.msra.mxu0 %v344
  %354 = vmatmul.bf16.gmra.mxu0 %v341
  %v355 = vpop.f32.mrf.mxu0
  %v356 = vadd.f32 0.0, %v355
  %v357 = vpop.f32.mrf.mxu0
  %358 = vdwg.mxu0
  %v360 = vsel %vm168, %v28, 0
  %v363 = vsel %vm168, %v76, 0
  %365 = vmatpush.bf16.xpose.msra.mxu0 0
  %366 = vmatpush.bf16.xpose.msra.mxu0 0
  %367 = vmatpush.bf16.xpose.msra.mxu0 0
  %368 = vmatpush.bf16.xpose.msra.mxu0 0
  %369 = vmatpush.bf16.xpose.msra.mxu0 0
  %370 = vmatpush.bf16.xpose.msra.mxu0 0
  %371 = vmatpush.bf16.xpose.msra.mxu0 0
  %372 = vmatpush.bf16.xpose.msra.mxu0 %v363
  %373 = vmatmul.bf16.gmra.mxu0 %v360
  %v374 = vpop.f32.mrf.mxu0
  %v375 = vadd.f32 0.0, %v374
  %v376 = vpop.f32.mrf.mxu0
  %377 = vdwg.mxu0
  %v379 = vsel %vm168, %v29, 0
  %v382 = vsel %vm168, %v77, 0
  %384 = vmatpush.bf16.xpose.msra.mxu0 0
  %385 = vmatpush.bf16.xpose.msra.mxu0 0
  %386 = vmatpush.bf16.xpose.msra.mxu0 0
  %387 = vmatpush.bf16.xpose.msra.mxu0 0
  %388 = vmatpush.bf16.xpose.msra.mxu0 0
  %389 = vmatpush.bf16.xpose.msra.mxu0 0
  %390 = vmatpush.bf16.xpose.msra.mxu0 0
  %391 = vmatpush.bf16.xpose.msra.mxu0 %v382
  %392 = vmatmul.bf16.gmra.mxu0 %v379
  %v393 = vpop.f32.mrf.mxu0
  %v394 = vadd.f32 0.0, %v393
  %v395 = vpop.f32.mrf.mxu0
  %396 = vdwg.mxu0
  %v398 = vsel %vm168, %v30, 0
  %v401 = vsel %vm168, %v78, 0
  %403 = vmatpush.bf16.xpose.msra.mxu0 0
  %404 = vmatpush.bf16.xpose.msra.mxu0 0
  %405 = vmatpush.bf16.xpose.msra.mxu0 0
  %406 = vmatpush.bf16.xpose.msra.mxu0 0
  %407 = vmatpush.bf16.xpose.msra.mxu0 0
  %408 = vmatpush.bf16.xpose.msra.mxu0 0
  %409 = vmatpush.bf16.xpose.msra.mxu0 0
  %410 = vmatpush.bf16.xpose.msra.mxu0 %v401
  %411 = vmatmul.bf16.gmra.mxu0 %v398
  %v412 = vpop.f32.mrf.mxu0
  %v413 = vadd.f32 0.0, %v412
  %v414 = vpop.f32.mrf.mxu0
  %415 = vdwg.mxu0
  %v417 = vsel %vm168, %v31, 0
  %v420 = vsel %vm168, %v79, 0
  %422 = vmatpush.bf16.xpose.msra.mxu0 0
  %423 = vmatpush.bf16.xpose.msra.mxu0 0
  %424 = vmatpush.bf16.xpose.msra.mxu0 0
  %425 = vmatpush.bf16.xpose.msra.mxu0 0
  %426 = vmatpush.bf16.xpose.msra.mxu0 0
  %427 = vmatpush.bf16.xpose.msra.mxu0 0
  %428 = vmatpush.bf16.xpose.msra.mxu0 0
  %429 = vmatpush.bf16.xpose.msra.mxu0 %v420
  %430 = vmatmul.bf16.gmra.mxu0 %v417
  %v431 = vpop.f32.mrf.mxu0
  %v432 = vadd.f32 0.0, %v431
  %v433 = vpop.f32.mrf.mxu0
  %434 = vdwg.mxu0
  %v436 = vsel %vm168, %v32, 0
  %v439 = vsel %vm168, %v80, 0
  %441 = vmatpush.bf16.xpose.msra.mxu0 0
  %442 = vmatpush.bf16.xpose.msra.mxu0 0
  %443 = vmatpush.bf16.xpose.msra.mxu0 0
  %444 = vmatpush.bf16.xpose.msra.mxu0 0
  %445 = vmatpush.bf16.xpose.msra.mxu0 0
  %446 = vmatpush.bf16.xpose.msra.mxu0 0
  %447 = vmatpush.bf16.xpose.msra.mxu0 0
  %448 = vmatpush.bf16.xpose.msra.mxu0 %v439
  %449 = vmatmul.bf16.gmra.mxu0 %v436
  %v450 = vpop.f32.mrf.mxu0
  %v451 = vadd.f32 0.0, %v450
  %v452 = vpop.f32.mrf.mxu0
  %453 = vdwg.mxu0
  %v455 = vsel %vm168, %v33, 0
  %v458 = vsel %vm168, %v81, 0
  %460 = vmatpush.bf16.xpose.msra.mxu0 0
  %461 = vmatpush.bf16.xpose.msra.mxu0 0
  %462 = vmatpush.bf16.xpose.msra.mxu0 0
  %463 = vmatpush.bf16.xpose.msra.mxu0 0
  %464 = vmatpush.bf16.xpose.msra.mxu0 0
  %465 = vmatpush.bf16.xpose.msra.mxu0 0
  %466 = vmatpush.bf16.xpose.msra.mxu0 0
  %467 = vmatpush.bf16.xpose.msra.mxu0 %v458
  %468 = vmatmul.bf16.gmra.mxu0 %v455
  %v469 = vpop.f32.mrf.mxu0
  %v470 = vadd.f32 0.0, %v469
  %v471 = vpop.f32.mrf.mxu0
  %472 = vdwg.mxu0
  %v474 = vsel %vm168, %v34, 0
  %v477 = vsel %vm168, %v82, 0
  %479 = vmatpush.bf16.xpose.msra.mxu0 0
  %480 = vmatpush.bf16.xpose.msra.mxu0 0
  %481 = vmatpush.bf16.xpose.msra.mxu0 0
  %482 = vmatpush.bf16.xpose.msra.mxu0 0
  %483 = vmatpush.bf16.xpose.msra.mxu0 0
  %484 = vmatpush.bf16.xpose.msra.mxu0 0
  %485 = vmatpush.bf16.xpose.msra.mxu0 0
  %486 = vmatpush.bf16.xpose.msra.mxu0 %v477
  %487 = vmatmul.bf16.gmra.mxu0 %v474
  %v488 = vpop.f32.mrf.mxu0
  %v489 = vadd.f32 0.0, %v488
  %v490 = vpop.f32.mrf.mxu0
  %491 = vdwg.mxu0
  %v493 = vsel %vm168, %v35, 0
  %v496 = vsel %vm168, %v83, 0
  %498 = vmatpush.bf16.xpose.msra.mxu0 0
  %499 = vmatpush.bf16.xpose.msra.mxu0 0
  %500 = vmatpush.bf16.xpose.msra.mxu0 0
  %501 = vmatpush.bf16.xpose.msra.mxu0 0
  %502 = vmatpush.bf16.xpose.msra.mxu0 0
  %503 = vmatpush.bf16.xpose.msra.mxu0 0
  %504 = vmatpush.bf16.xpose.msra.mxu0 0
  %505 = vmatpush.bf16.xpose.msra.mxu0 %v496
  %506 = vmatmul.bf16.gmra.mxu0 %v493
  %v507 = vpop.f32.mrf.mxu0
  %v508 = vadd.f32 0.0, %v507
  %v509 = vpop.f32.mrf.mxu0
  %510 = vdwg.mxu0
  %v512 = vsel %vm168, %v36, 0
  %v515 = vsel %vm168, %v84, 0
  %517 = vmatpush.bf16.xpose.msra.mxu0 0
  %518 = vmatpush.bf16.xpose.msra.mxu0 0
  %519 = vmatpush.bf16.xpose.msra.mxu0 0
  %520 = vmatpush.bf16.xpose.msra.mxu0 0
  %521 = vmatpush.bf16.xpose.msra.mxu0 0
  %522 = vmatpush.bf16.xpose.msra.mxu0 0
  %523 = vmatpush.bf16.xpose.msra.mxu0 0
  %524 = vmatpush.bf16.xpose.msra.mxu0 %v515
  %525 = vmatmul.bf16.gmra.mxu0 %v512
  %v526 = vpop.f32.mrf.mxu0
  %v527 = vadd.f32 0.0, %v526
  %v528 = vpop.f32.mrf.mxu0
  %529 = vdwg.mxu0
  %v531 = vsel %vm168, %v37, 0
  %v534 = vsel %vm168, %v85, 0
  %536 = vmatpush.bf16.xpose.msra.mxu0 0
  %537 = vmatpush.bf16.xpose.msra.mxu0 0
  %538 = vmatpush.bf16.xpose.msra.mxu0 0
  %539 = vmatpush.bf16.xpose.msra.mxu0 0
  %540 = vmatpush.bf16.xpose.msra.mxu0 0
  %541 = vmatpush.bf16.xpose.msra.mxu0 0
  %542 = vmatpush.bf16.xpose.msra.mxu0 0
  %543 = vmatpush.bf16.xpose.msra.mxu0 %v534
  %544 = vmatmul.bf16.gmra.mxu0 %v531
  %v545 = vpop.f32.mrf.mxu0
  %v546 = vadd.f32 0.0, %v545
  %v547 = vpop.f32.mrf.mxu0
  %548 = vdwg.mxu0
  %v550 = vsel %vm168, %v38, 0
  %v553 = vsel %vm168, %v86, 0
  %555 = vmatpush.bf16.xpose.msra.mxu0 0
  %556 = vmatpush.bf16.xpose.msra.mxu0 0
  %557 = vmatpush.bf16.xpose.msra.mxu0 0
  %558 = vmatpush.bf16.xpose.msra.mxu0 0
  %559 = vmatpush.bf16.xpose.msra.mxu0 0
  %560 = vmatpush.bf16.xpose.msra.mxu0 0
  %561 = vmatpush.bf16.xpose.msra.mxu0 0
  %562 = vmatpush.bf16.xpose.msra.mxu0 %v553
  %563 = vmatmul.bf16.gmra.mxu0 %v550
  %v564 = vpop.f32.mrf.mxu0
  %v565 = vadd.f32 0.0, %v564
  %v566 = vpop.f32.mrf.mxu0
  %567 = vdwg.mxu0
  %v569 = vsel %vm168, %v39, 0
  %v572 = vsel %vm168, %v87, 0
  %574 = vmatpush.bf16.xpose.msra.mxu0 0
  %575 = vmatpush.bf16.xpose.msra.mxu0 0
  %576 = vmatpush.bf16.xpose.msra.mxu0 0
  %577 = vmatpush.bf16.xpose.msra.mxu0 0
  %578 = vmatpush.bf16.xpose.msra.mxu0 0
  %579 = vmatpush.bf16.xpose.msra.mxu0 0
  %580 = vmatpush.bf16.xpose.msra.mxu0 0
  %581 = vmatpush.bf16.xpose.msra.mxu0 %v572
  %582 = vmatmul.bf16.gmra.mxu0 %v569
  %v583 = vpop.f32.mrf.mxu0
  %v584 = vadd.f32 0.0, %v583
  %v585 = vpop.f32.mrf.mxu0
  %586 = vdwg.mxu0
  %v588 = vsel %vm168, %v40, 0
  %v591 = vsel %vm168, %v88, 0
  %593 = vmatpush.bf16.xpose.msra.mxu0 0
  %594 = vmatpush.bf16.xpose.msra.mxu0 0
  %595 = vmatpush.bf16.xpose.msra.mxu0 0
  %596 = vmatpush.bf16.xpose.msra.mxu0 0
  %597 = vmatpush.bf16.xpose.msra.mxu0 0
  %598 = vmatpush.bf16.xpose.msra.mxu0 0
  %599 = vmatpush.bf16.xpose.msra.mxu0 0
  %600 = vmatpush.bf16.xpose.msra.mxu0 %v591
  %601 = vmatmul.bf16.gmra.mxu0 %v588
  %v602 = vpop.f32.mrf.mxu0
  %v603 = vadd.f32 0.0, %v602
  %v604 = vpop.f32.mrf.mxu0
  %605 = vdwg.mxu0
  %v607 = vsel %vm168, %v41, 0
  %v610 = vsel %vm168, %v89, 0
  %612 = vmatpush.bf16.xpose.msra.mxu0 0
  %613 = vmatpush.bf16.xpose.msra.mxu0 0
  %614 = vmatpush.bf16.xpose.msra.mxu0 0
  %615 = vmatpush.bf16.xpose.msra.mxu0 0
  %616 = vmatpush.bf16.xpose.msra.mxu0 0
  %617 = vmatpush.bf16.xpose.msra.mxu0 0
  %618 = vmatpush.bf16.xpose.msra.mxu0 0
  %619 = vmatpush.bf16.xpose.msra.mxu0 %v610
  %620 = vmatmul.bf16.gmra.mxu0 %v607
  %v621 = vpop.f32.mrf.mxu0
  %v622 = vadd.f32 0.0, %v621
  %v623 = vpop.f32.mrf.mxu0
  %624 = vdwg.mxu0
  %v626 = vsel %vm168, %v42, 0
  %v629 = vsel %vm168, %v90, 0
  %631 = vmatpush.bf16.xpose.msra.mxu0 0
  %632 = vmatpush.bf16.xpose.msra.mxu0 0
  %633 = vmatpush.bf16.xpose.msra.mxu0 0
  %634 = vmatpush.bf16.xpose.msra.mxu0 0
  %635 = vmatpush.bf16.xpose.msra.mxu0 0
  %636 = vmatpush.bf16.xpose.msra.mxu0 0
  %637 = vmatpush.bf16.xpose.msra.mxu0 0
  %638 = vmatpush.bf16.xpose.msra.mxu0 %v629
  %639 = vmatmul.bf16.gmra.mxu0 %v626
  %v640 = vpop.f32.mrf.mxu0
  %v641 = vadd.f32 0.0, %v640
  %v642 = vpop.f32.mrf.mxu0
  %643 = vdwg.mxu0
  %v645 = vsel %vm168, %v43, 0
  %v648 = vsel %vm168, %v91, 0
  %650 = vmatpush.bf16.xpose.msra.mxu0 0
  %651 = vmatpush.bf16.xpose.msra.mxu0 0
  %652 = vmatpush.bf16.xpose.msra.mxu0 0
  %653 = vmatpush.bf16.xpose.msra.mxu0 0
  %654 = vmatpush.bf16.xpose.msra.mxu0 0
  %655 = vmatpush.bf16.xpose.msra.mxu0 0
  %656 = vmatpush.bf16.xpose.msra.mxu0 0
  %657 = vmatpush.bf16.xpose.msra.mxu0 %v648
  %658 = vmatmul.bf16.gmra.mxu0 %v645
  %v659 = vpop.f32.mrf.mxu0
  %v660 = vadd.f32 0.0, %v659
  %v661 = vpop.f32.mrf.mxu0
  %662 = vdwg.mxu0
  %v664 = vsel %vm168, %v44, 0
  %v667 = vsel %vm168, %v92, 0
  %669 = vmatpush.bf16.xpose.msra.mxu0 0
  %670 = vmatpush.bf16.xpose.msra.mxu0 0
  %671 = vmatpush.bf16.xpose.msra.mxu0 0
  %672 = vmatpush.bf16.xpose.msra.mxu0 0
  %673 = vmatpush.bf16.xpose.msra.mxu0 0
  %674 = vmatpush.bf16.xpose.msra.mxu0 0
  %675 = vmatpush.bf16.xpose.msra.mxu0 0
  %676 = vmatpush.bf16.xpose.msra.mxu0 %v667
  %677 = vmatmul.bf16.gmra.mxu0 %v664
  %v678 = vpop.f32.mrf.mxu0
  %v679 = vadd.f32 0.0, %v678
  %v680 = vpop.f32.mrf.mxu0
  %681 = vdwg.mxu0
  %v683 = vsel %vm168, %v45, 0
  %v686 = vsel %vm168, %v93, 0
  %688 = vmatpush.bf16.xpose.msra.mxu0 0
  %689 = vmatpush.bf16.xpose.msra.mxu0 0
  %690 = vmatpush.bf16.xpose.msra.mxu0 0
  %691 = vmatpush.bf16.xpose.msra.mxu0 0
  %692 = vmatpush.bf16.xpose.msra.mxu0 0
  %693 = vmatpush.bf16.xpose.msra.mxu0 0
  %694 = vmatpush.bf16.xpose.msra.mxu0 0
  %695 = vmatpush.bf16.xpose.msra.mxu0 %v686
  %696 = vmatmul.bf16.gmra.mxu0 %v683
  %v697 = vpop.f32.mrf.mxu0
  %v698 = vadd.f32 0.0, %v697
  %v699 = vpop.f32.mrf.mxu0
  %700 = vdwg.mxu0
  %v702 = vsel %vm168, %v46, 0
  %v705 = vsel %vm168, %v94, 0
  %707 = vmatpush.bf16.xpose.msra.mxu0 0
  %708 = vmatpush.bf16.xpose.msra.mxu0 0
  %709 = vmatpush.bf16.xpose.msra.mxu0 0
  %710 = vmatpush.bf16.xpose.msra.mxu0 0
  %711 = vmatpush.bf16.xpose.msra.mxu0 0
  %712 = vmatpush.bf16.xpose.msra.mxu0 0
  %713 = vmatpush.bf16.xpose.msra.mxu0 0
  %714 = vmatpush.bf16.xpose.msra.mxu0 %v705
  %715 = vmatmul.bf16.gmra.mxu0 %v702
  %v716 = vpop.f32.mrf.mxu0
  %v717 = vadd.f32 0.0, %v716
  %v718 = vpop.f32.mrf.mxu0
  %719 = vdwg.mxu0
  %v721 = vsel %vm168, %v47, 0
  %v724 = vsel %vm168, %v95, 0
  %726 = vmatpush.bf16.xpose.msra.mxu0 0
  %727 = vmatpush.bf16.xpose.msra.mxu0 0
  %728 = vmatpush.bf16.xpose.msra.mxu0 0
  %729 = vmatpush.bf16.xpose.msra.mxu0 0
  %730 = vmatpush.bf16.xpose.msra.mxu0 0
  %731 = vmatpush.bf16.xpose.msra.mxu0 0
  %732 = vmatpush.bf16.xpose.msra.mxu0 0
  %733 = vmatpush.bf16.xpose.msra.mxu0 %v724
  %734 = vmatmul.bf16.gmra.mxu0 %v721
  %v735 = vpop.f32.mrf.mxu0
  %v736 = vadd.f32 0.0, %v735
  %v737 = vpop.f32.mrf.mxu0
  %738 = vdwg.mxu0
  %v740 = vsel %vm168, %v48, 0
  %v743 = vsel %vm168, %v96, 0
  %745 = vmatpush.bf16.xpose.msra.mxu0 0
  %746 = vmatpush.bf16.xpose.msra.mxu0 0
  %747 = vmatpush.bf16.xpose.msra.mxu0 0
  %748 = vmatpush.bf16.xpose.msra.mxu0 0
  %749 = vmatpush.bf16.xpose.msra.mxu0 0
  %750 = vmatpush.bf16.xpose.msra.mxu0 0
  %751 = vmatpush.bf16.xpose.msra.mxu0 0
  %752 = vmatpush.bf16.xpose.msra.mxu0 %v743
  %753 = vmatmul.bf16.gmra.mxu0 %v740
  %v754 = vpop.f32.mrf.mxu0
  %v755 = vadd.f32 0.0, %v754
  %v756 = vpop.f32.mrf.mxu0
  %757 = vdwg.mxu0
  %v759 = vsel %vm168, %v49, 0
  %v762 = vsel %vm168, %v97, 0
  %764 = vmatpush.bf16.xpose.msra.mxu0 0
  %765 = vmatpush.bf16.xpose.msra.mxu0 0
  %766 = vmatpush.bf16.xpose.msra.mxu0 0
  %767 = vmatpush.bf16.xpose.msra.mxu0 0
  %768 = vmatpush.bf16.xpose.msra.mxu0 0
  %769 = vmatpush.bf16.xpose.msra.mxu0 0
  %770 = vmatpush.bf16.xpose.msra.mxu0 0
  %771 = vmatpush.bf16.xpose.msra.mxu0 %v762
  %772 = vmatmul.bf16.gmra.mxu0 %v759
  %v773 = vpop.f32.mrf.mxu0
  %v774 = vadd.f32 0.0, %v773
  %v775 = vpop.f32.mrf.mxu0
  %776 = vdwg.mxu0
  %v778 = vsel %vm168, %v50, 0
  %v781 = vsel %vm168, %v98, 0
  %783 = vmatpush.bf16.xpose.msra.mxu0 0
  %784 = vmatpush.bf16.xpose.msra.mxu0 0
  %785 = vmatpush.bf16.xpose.msra.mxu0 0
  %786 = vmatpush.bf16.xpose.msra.mxu0 0
  %787 = vmatpush.bf16.xpose.msra.mxu0 0
  %788 = vmatpush.bf16.xpose.msra.mxu0 0
  %789 = vmatpush.bf16.xpose.msra.mxu0 0
  %790 = vmatpush.bf16.xpose.msra.mxu0 %v781
  %791 = vmatmul.bf16.gmra.mxu0 %v778
  %v792 = vpop.f32.mrf.mxu0
  %v793 = vadd.f32 0.0, %v792
  %v794 = vpop.f32.mrf.mxu0
  %795 = vdwg.mxu0
  %v797 = vsel %vm168, %v51, 0
  %v800 = vsel %vm168, %v99, 0
  %802 = vmatpush.bf16.xpose.msra.mxu0 0
  %803 = vmatpush.bf16.xpose.msra.mxu0 0
  %804 = vmatpush.bf16.xpose.msra.mxu0 0
  %805 = vmatpush.bf16.xpose.msra.mxu0 0
  %806 = vmatpush.bf16.xpose.msra.mxu0 0
  %807 = vmatpush.bf16.xpose.msra.mxu0 0
  %808 = vmatpush.bf16.xpose.msra.mxu0 0
  %809 = vmatpush.bf16.xpose.msra.mxu0 %v800
  %810 = vmatmul.bf16.gmra.mxu0 %v797
  %v811 = vpop.f32.mrf.mxu0
  %v812 = vadd.f32 0.0, %v811
  %v813 = vpop.f32.mrf.mxu0
  %814 = vdwg.mxu0
  %v816 = vsel %vm168, %v52, 0
  %v819 = vsel %vm168, %v100, 0
  %821 = vmatpush.bf16.xpose.msra.mxu0 0
  %822 = vmatpush.bf16.xpose.msra.mxu0 0
  %823 = vmatpush.bf16.xpose.msra.mxu0 0
  %824 = vmatpush.bf16.xpose.msra.mxu0 0
  %825 = vmatpush.bf16.xpose.msra.mxu0 0
  %826 = vmatpush.bf16.xpose.msra.mxu0 0
  %827 = vmatpush.bf16.xpose.msra.mxu0 0
  %828 = vmatpush.bf16.xpose.msra.mxu0 %v819
  %829 = vmatmul.bf16.gmra.mxu0 %v816
  %v830 = vpop.f32.mrf.mxu0
  %v831 = vadd.f32 0.0, %v830
  %v832 = vpop.f32.mrf.mxu0
  %833 = vdwg.mxu0
  %v835 = vsel %vm168, %v53, 0
  %v838 = vsel %vm168, %v101, 0
  %840 = vmatpush.bf16.xpose.msra.mxu0 0
  %841 = vmatpush.bf16.xpose.msra.mxu0 0
  %842 = vmatpush.bf16.xpose.msra.mxu0 0
  %843 = vmatpush.bf16.xpose.msra.mxu0 0
  %844 = vmatpush.bf16.xpose.msra.mxu0 0
  %845 = vmatpush.bf16.xpose.msra.mxu0 0
  %846 = vmatpush.bf16.xpose.msra.mxu0 0
  %847 = vmatpush.bf16.xpose.msra.mxu0 %v838
  %848 = vmatmul.bf16.gmra.mxu0 %v835
  %v849 = vpop.f32.mrf.mxu0
  %v850 = vadd.f32 0.0, %v849
  %v851 = vpop.f32.mrf.mxu0
  %852 = vdwg.mxu0
  %v854 = vsel %vm168, %v54, 0
  %v857 = vsel %vm168, %v102, 0
  %859 = vmatpush.bf16.xpose.msra.mxu0 0
  %860 = vmatpush.bf16.xpose.msra.mxu0 0
  %861 = vmatpush.bf16.xpose.msra.mxu0 0
  %862 = vmatpush.bf16.xpose.msra.mxu0 0
  %863 = vmatpush.bf16.xpose.msra.mxu0 0
  %864 = vmatpush.bf16.xpose.msra.mxu0 0
  %865 = vmatpush.bf16.xpose.msra.mxu0 0
  %866 = vmatpush.bf16.xpose.msra.mxu0 %v857
  %867 = vmatmul.bf16.gmra.mxu0 %v854
  %v868 = vpop.f32.mrf.mxu0
  %v869 = vadd.f32 0.0, %v868
  %v870 = vpop.f32.mrf.mxu0
  %871 = vdwg.mxu0
  %v873 = vsel %vm168, %v55, 0
  %v876 = vsel %vm168, %v103, 0
  %878 = vmatpush.bf16.xpose.msra.mxu0 0
  %879 = vmatpush.bf16.xpose.msra.mxu0 0
  %880 = vmatpush.bf16.xpose.msra.mxu0 0
  %881 = vmatpush.bf16.xpose.msra.mxu0 0
  %882 = vmatpush.bf16.xpose.msra.mxu0 0
  %883 = vmatpush.bf16.xpose.msra.mxu0 0
  %884 = vmatpush.bf16.xpose.msra.mxu0 0
  %885 = vmatpush.bf16.xpose.msra.mxu0 %v876
  %886 = vmatmul.bf16.gmra.mxu0 %v873
  %v887 = vpop.f32.mrf.mxu0
  %v888 = vadd.f32 0.0, %v887
  %v889 = vpop.f32.mrf.mxu0
  %890 = vdwg.mxu0
  %v892 = vsel %vm168, %v56, 0
  %v895 = vsel %vm168, %v104, 0
  %897 = vmatpush.bf16.xpose.msra.mxu0 0
  %898 = vmatpush.bf16.xpose.msra.mxu0 0
  %899 = vmatpush.bf16.xpose.msra.mxu0 0
  %900 = vmatpush.bf16.xpose.msra.mxu0 0
  %901 = vmatpush.bf16.xpose.msra.mxu0 0
  %902 = vmatpush.bf16.xpose.msra.mxu0 0
  %903 = vmatpush.bf16.xpose.msra.mxu0 0
  %904 = vmatpush.bf16.xpose.msra.mxu0 %v895
  %905 = vmatmul.bf16.gmra.mxu0 %v892
  %v906 = vpop.f32.mrf.mxu0
  %v907 = vadd.f32 0.0, %v906
  %v908 = vpop.f32.mrf.mxu0
  %909 = vdwg.mxu0
  %v911 = vsel %vm168, %v57, 0
  %v914 = vsel %vm168, %v105, 0
  %916 = vmatpush.bf16.xpose.msra.mxu0 0
  %917 = vmatpush.bf16.xpose.msra.mxu0 0
  %918 = vmatpush.bf16.xpose.msra.mxu0 0
  %919 = vmatpush.bf16.xpose.msra.mxu0 0
  %920 = vmatpush.bf16.xpose.msra.mxu0 0
  %921 = vmatpush.bf16.xpose.msra.mxu0 0
  %922 = vmatpush.bf16.xpose.msra.mxu0 0
  %923 = vmatpush.bf16.xpose.msra.mxu0 %v914
  %924 = vmatmul.bf16.gmra.mxu0 %v911
  %v925 = vpop.f32.mrf.mxu0
  %v926 = vadd.f32 0.0, %v925
  %v927 = vpop.f32.mrf.mxu0
  %928 = vdwg.mxu0
  %v930 = vsel %vm168, %v58, 0
  %v933 = vsel %vm168, %v106, 0
  %935 = vmatpush.bf16.xpose.msra.mxu0 0
  %936 = vmatpush.bf16.xpose.msra.mxu0 0
  %937 = vmatpush.bf16.xpose.msra.mxu0 0
  %938 = vmatpush.bf16.xpose.msra.mxu0 0
  %939 = vmatpush.bf16.xpose.msra.mxu0 0
  %940 = vmatpush.bf16.xpose.msra.mxu0 0
  %941 = vmatpush.bf16.xpose.msra.mxu0 0
  %942 = vmatpush.bf16.xpose.msra.mxu0 %v933
  %943 = vmatmul.bf16.gmra.mxu0 %v930
  %v944 = vpop.f32.mrf.mxu0
  %v945 = vadd.f32 0.0, %v944
  %v946 = vpop.f32.mrf.mxu0
  %947 = vdwg.mxu0
  %v949 = vsel %vm168, %v59, 0
  %v952 = vsel %vm168, %v107, 0
  %954 = vmatpush.bf16.xpose.msra.mxu0 0
  %955 = vmatpush.bf16.xpose.msra.mxu0 0
  %956 = vmatpush.bf16.xpose.msra.mxu0 0
  %957 = vmatpush.bf16.xpose.msra.mxu0 0
  %958 = vmatpush.bf16.xpose.msra.mxu0 0
  %959 = vmatpush.bf16.xpose.msra.mxu0 0
  %960 = vmatpush.bf16.xpose.msra.mxu0 0
  %961 = vmatpush.bf16.xpose.msra.mxu0 %v952
  %962 = vmatmul.bf16.gmra.mxu0 %v949
  %v963 = vpop.f32.mrf.mxu0
  %v964 = vadd.f32 0.0, %v963
  %v965 = vpop.f32.mrf.mxu0
  %966 = vdwg.mxu0
  %v968 = vsel %vm168, %v60, 0
  %v971 = vsel %vm168, %v108, 0
  %973 = vmatpush.bf16.xpose.msra.mxu0 0
  %974 = vmatpush.bf16.xpose.msra.mxu0 0
  %975 = vmatpush.bf16.xpose.msra.mxu0 0
  %976 = vmatpush.bf16.xpose.msra.mxu0 0
  %977 = vmatpush.bf16.xpose.msra.mxu0 0
  %978 = vmatpush.bf16.xpose.msra.mxu0 0
  %979 = vmatpush.bf16.xpose.msra.mxu0 0
  %980 = vmatpush.bf16.xpose.msra.mxu0 %v971
  %981 = vmatmul.bf16.gmra.mxu0 %v968
  %v982 = vpop.f32.mrf.mxu0
  %v983 = vadd.f32 0.0, %v982
  %v984 = vpop.f32.mrf.mxu0
  %985 = vdwg.mxu0
  %v987 = vsel %vm168, %v61, 0
  %v990 = vsel %vm168, %v109, 0
  %992 = vmatpush.bf16.xpose.msra.mxu0 0
  %993 = vmatpush.bf16.xpose.msra.mxu0 0
  %994 = vmatpush.bf16.xpose.msra.mxu0 0
  %995 = vmatpush.bf16.xpose.msra.mxu0 0
  %996 = vmatpush.bf16.xpose.msra.mxu0 0
  %997 = vmatpush.bf16.xpose.msra.mxu0 0
  %998 = vmatpush.bf16.xpose.msra.mxu0 0
  %999 = vmatpush.bf16.xpose.msra.mxu0 %v990
  %1000 = vmatmul.bf16.gmra.mxu0 %v987
  %v1001 = vpop.f32.mrf.mxu0
  %v1002 = vadd.f32 0.0, %v1001
  %v1003 = vpop.f32.mrf.mxu0
  %1004 = vdwg.mxu0
  %v1006 = vsel %vm168, %v62, 0
  %v1009 = vsel %vm168, %v110, 0
  %1011 = vmatpush.bf16.xpose.msra.mxu0 0
  %1012 = vmatpush.bf16.xpose.msra.mxu0 0
  %1013 = vmatpush.bf16.xpose.msra.mxu0 0
  %1014 = vmatpush.bf16.xpose.msra.mxu0 0
  %1015 = vmatpush.bf16.xpose.msra.mxu0 0
  %1016 = vmatpush.bf16.xpose.msra.mxu0 0
  %1017 = vmatpush.bf16.xpose.msra.mxu0 0
  %1018 = vmatpush.bf16.xpose.msra.mxu0 %v1009
  %1019 = vmatmul.bf16.gmra.mxu0 %v1006
  %v1020 = vpop.f32.mrf.mxu0
  %v1021 = vadd.f32 0.0, %v1020
  %v1022 = vpop.f32.mrf.mxu0
  %1023 = vdwg.mxu0
  %v1025 = vsel %vm168, %v63, 0
  %v1028 = vsel %vm168, %v111, 0
  %1030 = vmatpush.bf16.xpose.msra.mxu0 0
  %1031 = vmatpush.bf16.xpose.msra.mxu0 0
  %1032 = vmatpush.bf16.xpose.msra.mxu0 0
  %1033 = vmatpush.bf16.xpose.msra.mxu0 0
  %1034 = vmatpush.bf16.xpose.msra.mxu0 0
  %1035 = vmatpush.bf16.xpose.msra.mxu0 0
  %1036 = vmatpush.bf16.xpose.msra.mxu0 0
  %1037 = vmatpush.bf16.xpose.msra.mxu0 %v1028
  %1038 = vmatmul.bf16.gmra.mxu0 %v1025
  %v1039 = vpop.f32.mrf.mxu0
  %v1040 = vadd.f32 0.0, %v1039
  %v1041 = vpop.f32.mrf.mxu0
  %1042 = vdwg.mxu0
  %v1044 = vsel %vm168, %v64, 0
  %v1047 = vsel %vm168, %v112, 0
  %1049 = vmatpush.bf16.xpose.msra.mxu0 0
  %1050 = vmatpush.bf16.xpose.msra.mxu0 0
  %1051 = vmatpush.bf16.xpose.msra.mxu0 0
  %1052 = vmatpush.bf16.xpose.msra.mxu0 0
  %1053 = vmatpush.bf16.xpose.msra.mxu0 0
  %1054 = vmatpush.bf16.xpose.msra.mxu0 0
  %1055 = vmatpush.bf16.xpose.msra.mxu0 0
  %1056 = vmatpush.bf16.xpose.msra.mxu0 %v1047
  %1057 = vmatmul.bf16.gmra.mxu0 %v1044
  %v1058 = vpop.f32.mrf.mxu0
  %v1059 = vadd.f32 0.0, %v1058
  %v1060 = vpop.f32.mrf.mxu0
  %1061 = vdwg.mxu0
  %v1063 = vsel %vm168, %v65, 0
  %v1066 = vsel %vm168, %v113, 0
  %1068 = vmatpush.bf16.xpose.msra.mxu0 0
  %1069 = vmatpush.bf16.xpose.msra.mxu0 0
  %1070 = vmatpush.bf16.xpose.msra.mxu0 0
  %1071 = vmatpush.bf16.xpose.msra.mxu0 0
  %1072 = vmatpush.bf16.xpose.msra.mxu0 0
  %1073 = vmatpush.bf16.xpose.msra.mxu0 0
  %1074 = vmatpush.bf16.xpose.msra.mxu0 0
  %1075 = vmatpush.bf16.xpose.msra.mxu0 %v1066
  %1076 = vmatmul.bf16.gmra.mxu0 %v1063
  %v1077 = vpop.f32.mrf.mxu0
  %v1078 = vadd.f32 0.0, %v1077
  %v1079 = vpop.f32.mrf.mxu0
  %1080 = vdwg.mxu0
  %v1081 = vmul.f32 %v185, 0.70710677
  %v1082 = vmul.f32 %v204, 0.70710677
  %v1083 = vmul.f32 %v223, 0.70710677
  %v1084 = vmul.f32 %v242, 0.70710677
  %v1085 = vmul.f32 %v261, 0.70710677
  %v1086 = vmul.f32 %v280, 0.70710677
  %v1087 = vmul.f32 %v299, 0.70710677
  %v1088 = vmul.f32 %v318, 0.70710677
  %v1089 = vmul.f32 %v337, 0.70710677
  %v1090 = vmul.f32 %v356, 0.70710677
  %v1091 = vmul.f32 %v375, 0.70710677
  %v1092 = vmul.f32 %v394, 0.70710677
  %v1093 = vmul.f32 %v413, 0.70710677
  %v1094 = vmul.f32 %v432, 0.70710677
  %v1095 = vmul.f32 %v451, 0.70710677
  %v1096 = vmul.f32 %v470, 0.70710677
  %v1097 = vmul.f32 %v489, 0.70710677
  %v1098 = vmul.f32 %v508, 0.70710677
  %v1099 = vmul.f32 %v527, 0.70710677
  %v1100 = vmul.f32 %v546, 0.70710677
  %v1101 = vmul.f32 %v565, 0.70710677
  %v1102 = vmul.f32 %v584, 0.70710677
  %v1103 = vmul.f32 %v603, 0.70710677
  %v1104 = vmul.f32 %v622, 0.70710677
  %v1105 = vmul.f32 %v641, 0.70710677
  %v1106 = vmul.f32 %v660, 0.70710677
  %v1107 = vmul.f32 %v679, 0.70710677
  %v1108 = vmul.f32 %v698, 0.70710677
  %v1109 = vmul.f32 %v717, 0.70710677
  %v1110 = vmul.f32 %v736, 0.70710677
  %v1111 = vmul.f32 %v755, 0.70710677
  %v1112 = vmul.f32 %v774, 0.70710677
  %v1113 = vmul.f32 %v793, 0.70710677
  %v1114 = vmul.f32 %v812, 0.70710677
  %v1115 = vmul.f32 %v831, 0.70710677
  %v1116 = vmul.f32 %v850, 0.70710677
  %v1117 = vmul.f32 %v869, 0.70710677
  %v1118 = vmul.f32 %v888, 0.70710677
  %v1119 = vmul.f32 %v907, 0.70710677
  %v1120 = vmul.f32 %v926, 0.70710677
  %v1121 = vmul.f32 %v945, 0.70710677
  %v1122 = vmul.f32 %v964, 0.70710677
  %v1123 = vmul.f32 %v983, 0.70710677
  %v1124 = vmul.f32 %v1002, 0.70710677
  %v1125 = vmul.f32 %v1021, 0.70710677
  %v1126 = vmul.f32 %v1040, 0.70710677
  %v1127 = vmul.f32 %v1059, 0.70710677
  %v1128 = vmul.f32 %v1078, 0.70710677
  %v1135 = vrot.slane %v162, 1
  %v1136 = vrot.slane %v162, 2
  %v1137 = vrot.slane %v162, 3
  %v1138 = vrot.slane %v162, 4
  %v1139 = vrot.slane %v162, 5
  %v1140 = vrot.slane %v162, 6
  %v1141 = vrot.slane %v162, 7
  %v1142 = vrot.slane %v163, 1
  %v1143 = vrot.slane %v163, 2
  %v1144 = vrot.slane %v163, 3
  %v1145 = vrot.slane %v163, 4
  %v1146 = vrot.slane %v163, 5
  %v1147 = vrot.slane %v163, 6
  %v1148 = vrot.slane %v163, 7
  %v1149 = vrot.slane %v164, 1
  %v1150 = vrot.slane %v164, 2
  %v1151 = vrot.slane %v164, 3
  %v1152 = vrot.slane %v164, 4
  %v1153 = vrot.slane %v164, 5
  %v1154 = vrot.slane %v164, 6
  %v1155 = vrot.slane %v164, 7
  %v1156 = vrot.slane %v165, 1
  %v1157 = vrot.slane %v165, 2
  %v1158 = vrot.slane %v165, 3
  %v1159 = vrot.slane %v165, 4
  %v1160 = vrot.slane %v165, 5
  %v1161 = vrot.slane %v165, 6
  %v1162 = vrot.slane %v165, 7
  %v1163 = vrot.slane %v166, 1
  %v1164 = vrot.slane %v166, 2
  %v1165 = vrot.slane %v166, 3
  %v1166 = vrot.slane %v166, 4
  %v1167 = vrot.slane %v166, 5
  %v1168 = vrot.slane %v166, 6
  %v1169 = vrot.slane %v166, 7
  %v1170 = vrot.slane %v167, 1
  %v1171 = vrot.slane %v167, 2
  %v1172 = vrot.slane %v167, 3
  %v1173 = vrot.slane %v167, 4
  %v1174 = vrot.slane %v167, 5
  %v1175 = vrot.slane %v167, 6
  %v1176 = vrot.slane %v167, 7
  %vm1219 = vcmp.gt.f32.partialorder %v162, 0.0
  %vm1220 = vcmp.gt.f32.partialorder %v1135, 0.0
  %vm1221 = vcmp.gt.f32.partialorder %v1136, 0.0
  %vm1222 = vcmp.gt.f32.partialorder %v1137, 0.0
  %vm1223 = vcmp.gt.f32.partialorder %v1138, 0.0
  %vm1224 = vcmp.gt.f32.partialorder %v1139, 0.0
  %vm1225 = vcmp.gt.f32.partialorder %v1140, 0.0
  %vm1226 = vcmp.gt.f32.partialorder %v1141, 0.0
  %vm1227 = vcmp.gt.f32.partialorder %v163, 0.0
  %vm1228 = vcmp.gt.f32.partialorder %v1142, 0.0
  %vm1229 = vcmp.gt.f32.partialorder %v1143, 0.0
  %vm1230 = vcmp.gt.f32.partialorder %v1144, 0.0
  %vm1231 = vcmp.gt.f32.partialorder %v1145, 0.0
  %vm1232 = vcmp.gt.f32.partialorder %v1146, 0.0
  %vm1233 = vcmp.gt.f32.partialorder %v1147, 0.0
  %vm1234 = vcmp.gt.f32.partialorder %v1148, 0.0
  %vm1235 = vcmp.gt.f32.partialorder %v164, 0.0
  %vm1236 = vcmp.gt.f32.partialorder %v1149, 0.0
  %vm1237 = vcmp.gt.f32.partialorder %v1150, 0.0
  %vm1238 = vcmp.gt.f32.partialorder %v1151, 0.0
  %vm1239 = vcmp.gt.f32.partialorder %v1152, 0.0
  %vm1240 = vcmp.gt.f32.partialorder %v1153, 0.0
  %vm1241 = vcmp.gt.f32.partialorder %v1154, 0.0
  %vm1242 = vcmp.gt.f32.partialorder %v1155, 0.0
  %vm1243 = vcmp.gt.f32.partialorder %v165, 0.0
  %vm1244 = vcmp.gt.f32.partialorder %v1156, 0.0
  %vm1245 = vcmp.gt.f32.partialorder %v1157, 0.0
  %vm1246 = vcmp.gt.f32.partialorder %v1158, 0.0
  %vm1247 = vcmp.gt.f32.partialorder %v1159, 0.0
  %vm1248 = vcmp.gt.f32.partialorder %v1160, 0.0
  %vm1249 = vcmp.gt.f32.partialorder %v1161, 0.0
  %vm1250 = vcmp.gt.f32.partialorder %v1162, 0.0
  %vm1251 = vcmp.gt.f32.partialorder %v166, 0.0
  %vm1252 = vcmp.gt.f32.partialorder %v1163, 0.0
  %vm1253 = vcmp.gt.f32.partialorder %v1164, 0.0
  %vm1254 = vcmp.gt.f32.partialorder %v1165, 0.0
  %vm1255 = vcmp.gt.f32.partialorder %v1166, 0.0
  %vm1256 = vcmp.gt.f32.partialorder %v1167, 0.0
  %vm1257 = vcmp.gt.f32.partialorder %v1168, 0.0
  %vm1258 = vcmp.gt.f32.partialorder %v1169, 0.0
  %vm1259 = vcmp.gt.f32.partialorder %v167, 0.0
  %vm1260 = vcmp.gt.f32.partialorder %v1170, 0.0
  %vm1261 = vcmp.gt.f32.partialorder %v1171, 0.0
  %vm1262 = vcmp.gt.f32.partialorder %v1172, 0.0
  %vm1263 = vcmp.gt.f32.partialorder %v1173, 0.0
  %vm1264 = vcmp.gt.f32.partialorder %v1174, 0.0
  %vm1265 = vcmp.gt.f32.partialorder %v1175, 0.0
  %vm1266 = vcmp.gt.f32.partialorder %v1176, 0.0
  %v1267 = vsel %vm1219, 1, 0
  %v1268 = vsel %vm1220, 1, 0
  %v1269 = vsel %vm1221, 1, 0
  %v1270 = vsel %vm1222, 1, 0
  %v1271 = vsel %vm1223, 1, 0
  %v1272 = vsel %vm1224, 1, 0
  %v1273 = vsel %vm1225, 1, 0
  %v1274 = vsel %vm1226, 1, 0
  %v1275 = vsel %vm1227, 1, 0
  %v1276 = vsel %vm1228, 1, 0
  %v1277 = vsel %vm1229, 1, 0
  %v1278 = vsel %vm1230, 1, 0
  %v1279 = vsel %vm1231, 1, 0
  %v1280 = vsel %vm1232, 1, 0
  %v1281 = vsel %vm1233, 1, 0
  %v1282 = vsel %vm1234, 1, 0
  %v1283 = vsel %vm1235, 1, 0
  %v1284 = vsel %vm1236, 1, 0
  %v1285 = vsel %vm1237, 1, 0
  %v1286 = vsel %vm1238, 1, 0
  %v1287 = vsel %vm1239, 1, 0
  %v1288 = vsel %vm1240, 1, 0
  %v1289 = vsel %vm1241, 1, 0
  %v1290 = vsel %vm1242, 1, 0
  %v1291 = vsel %vm1243, 1, 0
  %v1292 = vsel %vm1244, 1, 0
  %v1293 = vsel %vm1245, 1, 0
  %v1294 = vsel %vm1246, 1, 0
  %v1295 = vsel %vm1247, 1, 0
  %v1296 = vsel %vm1248, 1, 0
  %v1297 = vsel %vm1249, 1, 0
  %v1298 = vsel %vm1250, 1, 0
  %v1299 = vsel %vm1251, 1, 0
  %v1300 = vsel %vm1252, 1, 0
  %v1301 = vsel %vm1253, 1, 0
  %v1302 = vsel %vm1254, 1, 0
  %v1303 = vsel %vm1255, 1, 0
  %v1304 = vsel %vm1256, 1, 0
  %v1305 = vsel %vm1257, 1, 0
  %v1306 = vsel %vm1258, 1, 0
  %v1307 = vsel %vm1259, 1, 0
  %v1308 = vsel %vm1260, 1, 0
  %v1309 = vsel %vm1261, 1, 0
  %v1310 = vsel %vm1262, 1, 0
  %v1311 = vsel %vm1263, 1, 0
  %v1312 = vsel %vm1264, 1, 0
  %v1313 = vsel %vm1265, 1, 0
  %v1314 = vsel %vm1266, 1, 0
  %v1315 = vperm.slane %v1267, 0
  %v1316 = vperm.slane %v1268, 0
  %v1317 = vperm.slane %v1269, 0
  %v1318 = vperm.slane %v1270, 0
  %v1319 = vperm.slane %v1271, 0
  %v1320 = vperm.slane %v1272, 0
  %v1321 = vperm.slane %v1273, 0
  %v1322 = vperm.slane %v1274, 0
  %v1323 = vperm.slane %v1275, 0
  %v1324 = vperm.slane %v1276, 0
  %v1325 = vperm.slane %v1277, 0
  %v1326 = vperm.slane %v1278, 0
  %v1327 = vperm.slane %v1279, 0
  %v1328 = vperm.slane %v1280, 0
  %v1329 = vperm.slane %v1281, 0
  %v1330 = vperm.slane %v1282, 0
  %v1331 = vperm.slane %v1283, 0
  %v1332 = vperm.slane %v1284, 0
  %v1333 = vperm.slane %v1285, 0
  %v1334 = vperm.slane %v1286, 0
  %v1335 = vperm.slane %v1287, 0
  %v1336 = vperm.slane %v1288, 0
  %v1337 = vperm.slane %v1289, 0
  %v1338 = vperm.slane %v1290, 0
  %v1339 = vperm.slane %v1291, 0
  %v1340 = vperm.slane %v1292, 0
  %v1341 = vperm.slane %v1293, 0
  %v1342 = vperm.slane %v1294, 0
  %v1343 = vperm.slane %v1295, 0
  %v1344 = vperm.slane %v1296, 0
  %v1345 = vperm.slane %v1297, 0
  %v1346 = vperm.slane %v1298, 0
  %v1347 = vperm.slane %v1299, 0
  %v1348 = vperm.slane %v1300, 0
  %v1349 = vperm.slane %v1301, 0
  %v1350 = vperm.slane %v1302, 0
  %v1351 = vperm.slane %v1303, 0
  %v1352 = vperm.slane %v1304, 0
  %v1353 = vperm.slane %v1305, 0
  %v1354 = vperm.slane %v1306, 0
  %v1355 = vperm.slane %v1307, 0
  %v1356 = vperm.slane %v1308, 0
  %v1357 = vperm.slane %v1309, 0
  %v1358 = vperm.slane %v1310, 0
  %v1359 = vperm.slane %v1311, 0
  %v1360 = vperm.slane %v1312, 0
  %v1361 = vperm.slane %v1313, 0
  %v1362 = vperm.slane %v1314, 0
  %vm1363 = vcmp.eq.s32.totalorder %v1315, 1
  %vm1364 = vcmp.eq.s32.totalorder %v1316, 1
  %vm1365 = vcmp.eq.s32.totalorder %v1317, 1
  %vm1366 = vcmp.eq.s32.totalorder %v1318, 1
  %vm1367 = vcmp.eq.s32.totalorder %v1319, 1
  %vm1368 = vcmp.eq.s32.totalorder %v1320, 1
  %vm1369 = vcmp.eq.s32.totalorder %v1321, 1
  %vm1370 = vcmp.eq.s32.totalorder %v1322, 1
  %vm1371 = vcmp.eq.s32.totalorder %v1323, 1
  %vm1372 = vcmp.eq.s32.totalorder %v1324, 1
  %vm1373 = vcmp.eq.s32.totalorder %v1325, 1
  %vm1374 = vcmp.eq.s32.totalorder %v1326, 1
  %vm1375 = vcmp.eq.s32.totalorder %v1327, 1
  %vm1376 = vcmp.eq.s32.totalorder %v1328, 1
  %vm1377 = vcmp.eq.s32.totalorder %v1329, 1
  %vm1378 = vcmp.eq.s32.totalorder %v1330, 1
  %vm1379 = vcmp.eq.s32.totalorder %v1331, 1
  %vm1380 = vcmp.eq.s32.totalorder %v1332, 1
  %vm1381 = vcmp.eq.s32.totalorder %v1333, 1
  %vm1382 = vcmp.eq.s32.totalorder %v1334, 1
  %vm1383 = vcmp.eq.s32.totalorder %v1335, 1
  %vm1384 = vcmp.eq.s32.totalorder %v1336, 1
  %vm1385 = vcmp.eq.s32.totalorder %v1337, 1
  %vm1386 = vcmp.eq.s32.totalorder %v1338, 1
  %vm1387 = vcmp.eq.s32.totalorder %v1339, 1
  %vm1388 = vcmp.eq.s32.totalorder %v1340, 1
  %vm1389 = vcmp.eq.s32.totalorder %v1341, 1
  %vm1390 = vcmp.eq.s32.totalorder %v1342, 1
  %vm1391 = vcmp.eq.s32.totalorder %v1343, 1
  %vm1392 = vcmp.eq.s32.totalorder %v1344, 1
  %vm1393 = vcmp.eq.s32.totalorder %v1345, 1
  %vm1394 = vcmp.eq.s32.totalorder %v1346, 1
  %vm1395 = vcmp.eq.s32.totalorder %v1347, 1
  %vm1396 = vcmp.eq.s32.totalorder %v1348, 1
  %vm1397 = vcmp.eq.s32.totalorder %v1349, 1
  %vm1398 = vcmp.eq.s32.totalorder %v1350, 1
  %vm1399 = vcmp.eq.s32.totalorder %v1351, 1
  %vm1400 = vcmp.eq.s32.totalorder %v1352, 1
  %vm1401 = vcmp.eq.s32.totalorder %v1353, 1
  %vm1402 = vcmp.eq.s32.totalorder %v1354, 1
  %vm1403 = vcmp.eq.s32.totalorder %v1355, 1
  %vm1404 = vcmp.eq.s32.totalorder %v1356, 1
  %vm1405 = vcmp.eq.s32.totalorder %v1357, 1
  %vm1406 = vcmp.eq.s32.totalorder %v1358, 1
  %vm1407 = vcmp.eq.s32.totalorder %v1359, 1
  %vm1408 = vcmp.eq.s32.totalorder %v1360, 1
  %vm1409 = vcmp.eq.s32.totalorder %v1361, 1
  %vm1410 = vcmp.eq.s32.totalorder %v1362, 1
  %v1411 = vsel %vm1363, %v1081, -inf
  %v1412 = vsel %vm1364, %v1082, -inf
  %v1413 = vsel %vm1365, %v1083, -inf
  %v1414 = vsel %vm1366, %v1084, -inf
  %v1415 = vsel %vm1367, %v1085, -inf
  %v1416 = vsel %vm1368, %v1086, -inf
  %v1417 = vsel %vm1369, %v1087, -inf
  %v1418 = vsel %vm1370, %v1088, -inf
  %v1419 = vsel %vm1371, %v1089, -inf
  %v1420 = vsel %vm1372, %v1090, -inf
  %v1421 = vsel %vm1373, %v1091, -inf
  %v1422 = vsel %vm1374, %v1092, -inf
  %v1423 = vsel %vm1375, %v1093, -inf
  %v1424 = vsel %vm1376, %v1094, -inf
  %v1425 = vsel %vm1377, %v1095, -inf
  %v1426 = vsel %vm1378, %v1096, -inf
  %v1427 = vsel %vm1379, %v1097, -inf
  %v1428 = vsel %vm1380, %v1098, -inf
  %v1429 = vsel %vm1381, %v1099, -inf
  %v1430 = vsel %vm1382, %v1100, -inf
  %v1431 = vsel %vm1383, %v1101, -inf
  %v1432 = vsel %vm1384, %v1102, -inf
  %v1433 = vsel %vm1385, %v1103, -inf
  %v1434 = vsel %vm1386, %v1104, -inf
  %v1435 = vsel %vm1387, %v1105, -inf
  %v1436 = vsel %vm1388, %v1106, -inf
  %v1437 = vsel %vm1389, %v1107, -inf
  %v1438 = vsel %vm1390, %v1108, -inf
  %v1439 = vsel %vm1391, %v1109, -inf
  %v1440 = vsel %vm1392, %v1110, -inf
  %v1441 = vsel %vm1393, %v1111, -inf
  %v1442 = vsel %vm1394, %v1112, -inf
  %v1443 = vsel %vm1395, %v1113, -inf
  %v1444 = vsel %vm1396, %v1114, -inf
  %v1445 = vsel %vm1397, %v1115, -inf
  %v1446 = vsel %vm1398, %v1116, -inf
  %v1447 = vsel %vm1399, %v1117, -inf
  %v1448 = vsel %vm1400, %v1118, -inf
  %v1449 = vsel %vm1401, %v1119, -inf
  %v1450 = vsel %vm1402, %v1120, -inf
  %v1451 = vsel %vm1403, %v1121, -inf
  %v1452 = vsel %vm1404, %v1122, -inf
  %v1453 = vsel %vm1405, %v1123, -inf
  %v1454 = vsel %vm1406, %v1124, -inf
  %v1455 = vsel %vm1407, %v1125, -inf
  %v1456 = vsel %vm1408, %v1126, -inf
  %v1457 = vsel %vm1409, %v1127, -inf
  %v1458 = vsel %vm1410, %v1128, -inf
  %vm1459 = vcmask 39936
  %v1460 = vsel %vm1459, %v162, -inf
  %1461 = vmax.xlane.f32.xlu0 %v1460
  %v1462 = vpop.xlane.xlu0 %1461
  %v1463 = vsel %vm1459, %v163, -inf
  %1464 = vmax.xlane.f32.xlu0 %v1463
  %v1465 = vpop.xlane.xlu0 %1464
  %v1466 = vsel %vm1459, %v164, -inf
  %1467 = vmax.xlane.f32.xlu0 %v1466
  %v1468 = vpop.xlane.xlu0 %1467
  %v1469 = vsel %vm1459, %v165, -inf
  %1470 = vmax.xlane.f32.xlu0 %v1469
  %v1471 = vpop.xlane.xlu0 %1470
  %v1472 = vsel %vm1459, %v166, -inf
  %1473 = vmax.xlane.f32.xlu0 %v1472
  %v1474 = vpop.xlane.xlu0 %1473
  %v1475 = vsel %vm1459, %v167, -inf
  %1476 = vmax.xlane.f32.xlu0 %v1475
  %v1477 = vpop.xlane.xlu0 %1476
  %vm1478 = vcmp.gt.f32.partialorder %v1462, 0.0
  %vm1479 = vcmp.gt.f32.partialorder %v1465, 0.0
  %vm1480 = vcmp.gt.f32.partialorder %v1468, 0.0
  %vm1481 = vcmp.gt.f32.partialorder %v1471, 0.0
  %vm1482 = vcmp.gt.f32.partialorder %v1474, 0.0
  %vm1483 = vcmp.gt.f32.partialorder %v1477, 0.0
  %v1484 = vsel %vm1478, 1, 0
  %v1485 = vsel %vm1479, 1, 0
  %v1486 = vsel %vm1480, 1, 0
  %v1487 = vsel %vm1481, 1, 0
  %v1488 = vsel %vm1482, 1, 0
  %v1489 = vsel %vm1483, 1, 0
  %v1490 = vperm.slane %v1484, 0
  %v1491 = vperm.slane %v1484, 1
  %v1492 = vperm.slane %v1484, 2
  %v1493 = vperm.slane %v1484, 3
  %v1494 = vperm.slane %v1484, 4
  %v1495 = vperm.slane %v1484, 5
  %v1496 = vperm.slane %v1484, 6
  %v1497 = vperm.slane %v1484, 7
  %v1498 = vperm.slane %v1485, 0
  %v1499 = vperm.slane %v1485, 1
  %v1500 = vperm.slane %v1485, 2
  %v1501 = vperm.slane %v1485, 3
  %v1502 = vperm.slane %v1485, 4
  %v1503 = vperm.slane %v1485, 5
  %v1504 = vperm.slane %v1485, 6
  %v1505 = vperm.slane %v1485, 7
  %v1506 = vperm.slane %v1486, 0
  %v1507 = vperm.slane %v1486, 1
  %v1508 = vperm.slane %v1486, 2
  %v1509 = vperm.slane %v1486, 3
  %v1510 = vperm.slane %v1486, 4
  %v1511 = vperm.slane %v1486, 5
  %v1512 = vperm.slane %v1486, 6
  %v1513 = vperm.slane %v1486, 7
  %v1514 = vperm.slane %v1487, 0
  %v1515 = vperm.slane %v1487, 1
  %v1516 = vperm.slane %v1487, 2
  %v1517 = vperm.slane %v1487, 3
  %v1518 = vperm.slane %v1487, 4
  %v1519 = vperm.slane %v1487, 5
  %v1520 = vperm.slane %v1487, 6
  %v1521 = vperm.slane %v1487, 7
  %v1522 = vperm.slane %v1488, 0
  %v1523 = vperm.slane %v1488, 1
  %v1524 = vperm.slane %v1488, 2
  %v1525 = vperm.slane %v1488, 3
  %v1526 = vperm.slane %v1488, 4
  %v1527 = vperm.slane %v1488, 5
  %v1528 = vperm.slane %v1488, 6
  %v1529 = vperm.slane %v1488, 7
  %v1530 = vperm.slane %v1489, 0
  %v1531 = vperm.slane %v1489, 1
  %v1532 = vperm.slane %v1489, 2
  %v1533 = vperm.slane %v1489, 3
  %v1534 = vperm.slane %v1489, 4
  %v1535 = vperm.slane %v1489, 5
  %v1536 = vperm.slane %v1489, 6
  %v1537 = vperm.slane %v1489, 7
  %vm1538 = vcmp.ne.s32.totalorder %v1490, 0
  %vm1539 = vcmp.ne.s32.totalorder %v1491, 0
  %vm1540 = vcmp.ne.s32.totalorder %v1492, 0
  %vm1541 = vcmp.ne.s32.totalorder %v1493, 0
  %vm1542 = vcmp.ne.s32.totalorder %v1494, 0
  %vm1543 = vcmp.ne.s32.totalorder %v1495, 0
  %vm1544 = vcmp.ne.s32.totalorder %v1496, 0
  %vm1545 = vcmp.ne.s32.totalorder %v1497, 0
  %vm1546 = vcmp.ne.s32.totalorder %v1498, 0
  %vm1547 = vcmp.ne.s32.totalorder %v1499, 0
  %vm1548 = vcmp.ne.s32.totalorder %v1500, 0
  %vm1549 = vcmp.ne.s32.totalorder %v1501, 0
  %vm1550 = vcmp.ne.s32.totalorder %v1502, 0
  %vm1551 = vcmp.ne.s32.totalorder %v1503, 0
  %vm1552 = vcmp.ne.s32.totalorder %v1504, 0
  %vm1553 = vcmp.ne.s32.totalorder %v1505, 0
  %vm1554 = vcmp.ne.s32.totalorder %v1506, 0
  %vm1555 = vcmp.ne.s32.totalorder %v1507, 0
  %vm1556 = vcmp.ne.s32.totalorder %v1508, 0
  %vm1557 = vcmp.ne.s32.totalorder %v1509, 0
  %vm1558 = vcmp.ne.s32.totalorder %v1510, 0
  %vm1559 = vcmp.ne.s32.totalorder %v1511, 0
  %vm1560 = vcmp.ne.s32.totalorder %v1512, 0
  %vm1561 = vcmp.ne.s32.totalorder %v1513, 0
  %vm1562 = vcmp.ne.s32.totalorder %v1514, 0
  %vm1563 = vcmp.ne.s32.totalorder %v1515, 0
  %vm1564 = vcmp.ne.s32.totalorder %v1516, 0
  %vm1565 = vcmp.ne.s32.totalorder %v1517, 0
  %vm1566 = vcmp.ne.s32.totalorder %v1518, 0
  %vm1567 = vcmp.ne.s32.totalorder %v1519, 0
  %vm1568 = vcmp.ne.s32.totalorder %v1520, 0
  %vm1569 = vcmp.ne.s32.totalorder %v1521, 0
  %vm1570 = vcmp.ne.s32.totalorder %v1522, 0
  %vm1571 = vcmp.ne.s32.totalorder %v1523, 0
  %vm1572 = vcmp.ne.s32.totalorder %v1524, 0
  %vm1573 = vcmp.ne.s32.totalorder %v1525, 0
  %vm1574 = vcmp.ne.s32.totalorder %v1526, 0
  %vm1575 = vcmp.ne.s32.totalorder %v1527, 0
  %vm1576 = vcmp.ne.s32.totalorder %v1528, 0
  %vm1577 = vcmp.ne.s32.totalorder %v1529, 0
  %vm1578 = vcmp.ne.s32.totalorder %v1530, 0
  %vm1579 = vcmp.ne.s32.totalorder %v1531, 0
  %vm1580 = vcmp.ne.s32.totalorder %v1532, 0
  %vm1581 = vcmp.ne.s32.totalorder %v1533, 0
  %vm1582 = vcmp.ne.s32.totalorder %v1534, 0
  %vm1583 = vcmp.ne.s32.totalorder %v1535, 0
  %vm1584 = vcmp.ne.s32.totalorder %v1536, 0
  %vm1585 = vcmp.ne.s32.totalorder %v1537, 0
  %v1586 = vsel %vm1538, 1, 0
  %v1587 = vsel %vm1539, 1, 0
  %v1588 = vsel %vm1540, 1, 0
  %v1589 = vsel %vm1541, 1, 0
  %v1590 = vsel %vm1542, 1, 0
  %v1591 = vsel %vm1543, 1, 0
  %v1592 = vsel %vm1544, 1, 0
  %v1593 = vsel %vm1545, 1, 0
  %v1594 = vsel %vm1546, 1, 0
  %v1595 = vsel %vm1547, 1, 0
  %v1596 = vsel %vm1548, 1, 0
  %v1597 = vsel %vm1549, 1, 0
  %v1598 = vsel %vm1550, 1, 0
  %v1599 = vsel %vm1551, 1, 0
  %v1600 = vsel %vm1552, 1, 0
  %v1601 = vsel %vm1553, 1, 0
  %v1602 = vsel %vm1554, 1, 0
  %v1603 = vsel %vm1555, 1, 0
  %v1604 = vsel %vm1556, 1, 0
  %v1605 = vsel %vm1557, 1, 0
  %v1606 = vsel %vm1558, 1, 0
  %v1607 = vsel %vm1559, 1, 0
  %v1608 = vsel %vm1560, 1, 0
  %v1609 = vsel %vm1561, 1, 0
  %v1610 = vsel %vm1562, 1, 0
  %v1611 = vsel %vm1563, 1, 0
  %v1612 = vsel %vm1564, 1, 0
  %v1613 = vsel %vm1565, 1, 0
  %v1614 = vsel %vm1566, 1, 0
  %v1615 = vsel %vm1567, 1, 0
  %v1616 = vsel %vm1568, 1, 0
  %v1617 = vsel %vm1569, 1, 0
  %v1618 = vsel %vm1570, 1, 0
  %v1619 = vsel %vm1571, 1, 0
  %v1620 = vsel %vm1572, 1, 0
  %v1621 = vsel %vm1573, 1, 0
  %v1622 = vsel %vm1574, 1, 0
  %v1623 = vsel %vm1575, 1, 0
  %v1624 = vsel %vm1576, 1, 0
  %v1625 = vsel %vm1577, 1, 0
  %v1626 = vsel %vm1578, 1, 0
  %v1627 = vsel %vm1579, 1, 0
  %v1628 = vsel %vm1580, 1, 0
  %v1629 = vsel %vm1581, 1, 0
  %v1630 = vsel %vm1582, 1, 0
  %v1631 = vsel %vm1583, 1, 0
  %v1632 = vsel %vm1584, 1, 0
  %v1633 = vsel %vm1585, 1, 0
  %vm1634 = vcmp.eq.s32.totalorder %v1586, 1
  %vm1635 = vcmp.eq.s32.totalorder %v1587, 1
  %vm1636 = vcmp.eq.s32.totalorder %v1588, 1
  %vm1637 = vcmp.eq.s32.totalorder %v1589, 1
  %vm1638 = vcmp.eq.s32.totalorder %v1590, 1
  %vm1639 = vcmp.eq.s32.totalorder %v1591, 1
  %vm1640 = vcmp.eq.s32.totalorder %v1592, 1
  %vm1641 = vcmp.eq.s32.totalorder %v1593, 1
  %vm1642 = vcmp.eq.s32.totalorder %v1594, 1
  %vm1643 = vcmp.eq.s32.totalorder %v1595, 1
  %vm1644 = vcmp.eq.s32.totalorder %v1596, 1
  %vm1645 = vcmp.eq.s32.totalorder %v1597, 1
  %vm1646 = vcmp.eq.s32.totalorder %v1598, 1
  %vm1647 = vcmp.eq.s32.totalorder %v1599, 1
  %vm1648 = vcmp.eq.s32.totalorder %v1600, 1
  %vm1649 = vcmp.eq.s32.totalorder %v1601, 1
  %vm1650 = vcmp.eq.s32.totalorder %v1602, 1
  %vm1651 = vcmp.eq.s32.totalorder %v1603, 1
  %vm1652 = vcmp.eq.s32.totalorder %v1604, 1
  %vm1653 = vcmp.eq.s32.totalorder %v1605, 1
  %vm1654 = vcmp.eq.s32.totalorder %v1606, 1
  %vm1655 = vcmp.eq.s32.totalorder %v1607, 1
  %vm1656 = vcmp.eq.s32.totalorder %v1608, 1
  %vm1657 = vcmp.eq.s32.totalorder %v1609, 1
  %vm1658 = vcmp.eq.s32.totalorder %v1610, 1
  %vm1659 = vcmp.eq.s32.totalorder %v1611, 1
  %vm1660 = vcmp.eq.s32.totalorder %v1612, 1
  %vm1661 = vcmp.eq.s32.totalorder %v1613, 1
  %vm1662 = vcmp.eq.s32.totalorder %v1614, 1
  %vm1663 = vcmp.eq.s32.totalorder %v1615, 1
  %vm1664 = vcmp.eq.s32.totalorder %v1616, 1
  %vm1665 = vcmp.eq.s32.totalorder %v1617, 1
  %vm1666 = vcmp.eq.s32.totalorder %v1618, 1
  %vm1667 = vcmp.eq.s32.totalorder %v1619, 1
  %vm1668 = vcmp.eq.s32.totalorder %v1620, 1
  %vm1669 = vcmp.eq.s32.totalorder %v1621, 1
  %vm1670 = vcmp.eq.s32.totalorder %v1622, 1
  %vm1671 = vcmp.eq.s32.totalorder %v1623, 1
  %vm1672 = vcmp.eq.s32.totalorder %v1624, 1
  %vm1673 = vcmp.eq.s32.totalorder %v1625, 1
  %vm1674 = vcmp.eq.s32.totalorder %v1626, 1
  %vm1675 = vcmp.eq.s32.totalorder %v1627, 1
  %vm1676 = vcmp.eq.s32.totalorder %v1628, 1
  %vm1677 = vcmp.eq.s32.totalorder %v1629, 1
  %vm1678 = vcmp.eq.s32.totalorder %v1630, 1
  %vm1679 = vcmp.eq.s32.totalorder %v1631, 1
  %vm1680 = vcmp.eq.s32.totalorder %v1632, 1
  %vm1681 = vcmp.eq.s32.totalorder %v1633, 1
  %v1682 = vsel %vm1634, %v1411, 1.0
  %v1683 = vsel %vm1635, %v1412, 1.0
  %v1684 = vsel %vm1636, %v1413, 1.0
  %v1685 = vsel %vm1637, %v1414, 1.0
  %v1686 = vsel %vm1638, %v1415, 1.0
  %v1687 = vsel %vm1639, %v1416, 1.0
  %v1688 = vsel %vm1640, %v1417, 1.0
  %v1689 = vsel %vm1641, %v1418, 1.0
  %v1690 = vsel %vm1642, %v1419, 1.0
  %v1691 = vsel %vm1643, %v1420, 1.0
  %v1692 = vsel %vm1644, %v1421, 1.0
  %v1693 = vsel %vm1645, %v1422, 1.0
  %v1694 = vsel %vm1646, %v1423, 1.0
  %v1695 = vsel %vm1647, %v1424, 1.0
  %v1696 = vsel %vm1648, %v1425, 1.0
  %v1697 = vsel %vm1649, %v1426, 1.0
  %v1698 = vsel %vm1650, %v1427, 1.0
  %v1699 = vsel %vm1651, %v1428, 1.0
  %v1700 = vsel %vm1652, %v1429, 1.0
  %v1701 = vsel %vm1653, %v1430, 1.0
  %v1702 = vsel %vm1654, %v1431, 1.0
  %v1703 = vsel %vm1655, %v1432, 1.0
  %v1704 = vsel %vm1656, %v1433, 1.0
  %v1705 = vsel %vm1657, %v1434, 1.0
  %v1706 = vsel %vm1658, %v1435, 1.0
  %v1707 = vsel %vm1659, %v1436, 1.0
  %v1708 = vsel %vm1660, %v1437, 1.0
  %v1709 = vsel %vm1661, %v1438, 1.0
  %v1710 = vsel %vm1662, %v1439, 1.0
  %v1711 = vsel %vm1663, %v1440, 1.0
  %v1712 = vsel %vm1664, %v1441, 1.0
  %v1713 = vsel %vm1665, %v1442, 1.0
  %v1714 = vsel %vm1666, %v1443, 1.0
  %v1715 = vsel %vm1667, %v1444, 1.0
  %v1716 = vsel %vm1668, %v1445, 1.0
  %v1717 = vsel %vm1669, %v1446, 1.0
  %v1718 = vsel %vm1670, %v1447, 1.0
  %v1719 = vsel %vm1671, %v1448, 1.0
  %v1720 = vsel %vm1672, %v1449, 1.0
  %v1721 = vsel %vm1673, %v1450, 1.0
  %v1722 = vsel %vm1674, %v1451, 1.0
  %v1723 = vsel %vm1675, %v1452, 1.0
  %v1724 = vsel %vm1676, %v1453, 1.0
  %v1725 = vsel %vm1677, %v1454, 1.0
  %v1726 = vsel %vm1678, %v1455, 1.0
  %v1727 = vsel %vm1679, %v1456, 1.0
  %v1728 = vsel %vm1680, %v1457, 1.0
  %v1729 = vsel %vm1681, %v1458, 1.0
  %vm1730 = vcmask 36864
  %v1731 = vsel %vm1730, %v1682, -inf
  %1732 = vmax.xlane.f32.xlu0 %v1731
  %v1733 = vpop.xlane.xlu0 %1732
  %v1734 = vsel %vm1730, %v1683, -inf
  %1735 = vmax.xlane.f32.xlu0 %v1734
  %v1736 = vpop.xlane.xlu0 %1735
  %v1737 = vsel %vm1730, %v1684, -inf
  %1738 = vmax.xlane.f32.xlu0 %v1737
  %v1739 = vpop.xlane.xlu0 %1738
  %v1740 = vsel %vm1730, %v1685, -inf
  %1741 = vmax.xlane.f32.xlu0 %v1740
  %v1742 = vpop.xlane.xlu0 %1741
  %v1743 = vsel %vm1730, %v1686, -inf
  %1744 = vmax.xlane.f32.xlu0 %v1743
  %v1745 = vpop.xlane.xlu0 %1744
  %v1746 = vsel %vm1730, %v1687, -inf
  %1747 = vmax.xlane.f32.xlu0 %v1746
  %v1748 = vpop.xlane.xlu0 %1747
  %v1749 = vsel %vm1730, %v1688, -inf
  %1750 = vmax.xlane.f32.xlu0 %v1749
  %v1751 = vpop.xlane.xlu0 %1750
  %v1752 = vsel %vm1730, %v1689, -inf
  %1753 = vmax.xlane.f32.xlu0 %v1752
  %v1754 = vpop.xlane.xlu0 %1753
  %v1755 = vsel %vm1730, %v1690, -inf
  %1756 = vmax.xlane.f32.xlu0 %v1755
  %v1757 = vpop.xlane.xlu0 %1756
  %v1758 = vsel %vm1730, %v1691, -inf
  %1759 = vmax.xlane.f32.xlu0 %v1758
  %v1760 = vpop.xlane.xlu0 %1759
  %v1761 = vsel %vm1730, %v1692, -inf
  %1762 = vmax.xlane.f32.xlu0 %v1761
  %v1763 = vpop.xlane.xlu0 %1762
  %v1764 = vsel %vm1730, %v1693, -inf
  %1765 = vmax.xlane.f32.xlu0 %v1764
  %v1766 = vpop.xlane.xlu0 %1765
  %v1767 = vsel %vm1730, %v1694, -inf
  %1768 = vmax.xlane.f32.xlu0 %v1767
  %v1769 = vpop.xlane.xlu0 %1768
  %v1770 = vsel %vm1730, %v1695, -inf
  %1771 = vmax.xlane.f32.xlu0 %v1770
  %v1772 = vpop.xlane.xlu0 %1771
  %v1773 = vsel %vm1730, %v1696, -inf
  %1774 = vmax.xlane.f32.xlu0 %v1773
  %v1775 = vpop.xlane.xlu0 %1774
  %v1776 = vsel %vm1730, %v1697, -inf
  %1777 = vmax.xlane.f32.xlu0 %v1776
  %v1778 = vpop.xlane.xlu0 %1777
  %v1779 = vsel %vm1730, %v1698, -inf
  %1780 = vmax.xlane.f32.xlu0 %v1779
  %v1781 = vpop.xlane.xlu0 %1780
  %v1782 = vsel %vm1730, %v1699, -inf
  %1783 = vmax.xlane.f32.xlu0 %v1782
  %v1784 = vpop.xlane.xlu0 %1783
  %v1785 = vsel %vm1730, %v1700, -inf
  %1786 = vmax.xlane.f32.xlu0 %v1785
  %v1787 = vpop.xlane.xlu0 %1786
  %v1788 = vsel %vm1730, %v1701, -inf
  %1789 = vmax.xlane.f32.xlu0 %v1788
  %v1790 = vpop.xlane.xlu0 %1789
  %v1791 = vsel %vm1730, %v1702, -inf
  %1792 = vmax.xlane.f32.xlu0 %v1791
  %v1793 = vpop.xlane.xlu0 %1792
  %v1794 = vsel %vm1730, %v1703, -inf
  %1795 = vmax.xlane.f32.xlu0 %v1794
  %v1796 = vpop.xlane.xlu0 %1795
  %v1797 = vsel %vm1730, %v1704, -inf
  %1798 = vmax.xlane.f32.xlu0 %v1797
  %v1799 = vpop.xlane.xlu0 %1798
  %v1800 = vsel %vm1730, %v1705, -inf
  %1801 = vmax.xlane.f32.xlu0 %v1800
  %v1802 = vpop.xlane.xlu0 %1801
  %v1803 = vsel %vm1730, %v1706, -inf
  %1804 = vmax.xlane.f32.xlu0 %v1803
  %v1805 = vpop.xlane.xlu0 %1804
  %v1806 = vsel %vm1730, %v1707, -inf
  %1807 = vmax.xlane.f32.xlu0 %v1806
  %v1808 = vpop.xlane.xlu0 %1807
  %v1809 = vsel %vm1730, %v1708, -inf
  %1810 = vmax.xlane.f32.xlu0 %v1809
  %v1811 = vpop.xlane.xlu0 %1810
  %v1812 = vsel %vm1730, %v1709, -inf
  %1813 = vmax.xlane.f32.xlu0 %v1812
  %v1814 = vpop.xlane.xlu0 %1813
  %v1815 = vsel %vm1730, %v1710, -inf
  %1816 = vmax.xlane.f32.xlu0 %v1815
  %v1817 = vpop.xlane.xlu0 %1816
  %v1818 = vsel %vm1730, %v1711, -inf
  %1819 = vmax.xlane.f32.xlu0 %v1818
  %v1820 = vpop.xlane.xlu0 %1819
  %v1821 = vsel %vm1730, %v1712, -inf
  %1822 = vmax.xlane.f32.xlu0 %v1821
  %v1823 = vpop.xlane.xlu0 %1822
  %v1824 = vsel %vm1730, %v1713, -inf
  %1825 = vmax.xlane.f32.xlu0 %v1824
  %v1826 = vpop.xlane.xlu0 %1825
  %v1827 = vsel %vm1730, %v1714, -inf
  %1828 = vmax.xlane.f32.xlu0 %v1827
  %v1829 = vpop.xlane.xlu0 %1828
  %v1830 = vsel %vm1730, %v1715, -inf
  %1831 = vmax.xlane.f32.xlu0 %v1830
  %v1832 = vpop.xlane.xlu0 %1831
  %v1833 = vsel %vm1730, %v1716, -inf
  %1834 = vmax.xlane.f32.xlu0 %v1833
  %v1835 = vpop.xlane.xlu0 %1834
  %v1836 = vsel %vm1730, %v1717, -inf
  %1837 = vmax.xlane.f32.xlu0 %v1836
  %v1838 = vpop.xlane.xlu0 %1837
  %v1839 = vsel %vm1730, %v1718, -inf
  %1840 = vmax.xlane.f32.xlu0 %v1839
  %v1841 = vpop.xlane.xlu0 %1840
  %v1842 = vsel %vm1730, %v1719, -inf
  %1843 = vmax.xlane.f32.xlu0 %v1842
  %v1844 = vpop.xlane.xlu0 %1843
  %v1845 = vsel %vm1730, %v1720, -inf
  %1846 = vmax.xlane.f32.xlu0 %v1845
  %v1847 = vpop.xlane.xlu0 %1846
  %v1848 = vsel %vm1730, %v1721, -inf
  %1849 = vmax.xlane.f32.xlu0 %v1848
  %v1850 = vpop.xlane.xlu0 %1849
  %v1851 = vsel %vm1730, %v1722, -inf
  %1852 = vmax.xlane.f32.xlu0 %v1851
  %v1853 = vpop.xlane.xlu0 %1852
  %v1854 = vsel %vm1730, %v1723, -inf
  %1855 = vmax.xlane.f32.xlu0 %v1854
  %v1856 = vpop.xlane.xlu0 %1855
  %v1857 = vsel %vm1730, %v1724, -inf
  %1858 = vmax.xlane.f32.xlu0 %v1857
  %v1859 = vpop.xlane.xlu0 %1858
  %v1860 = vsel %vm1730, %v1725, -inf
  %1861 = vmax.xlane.f32.xlu0 %v1860
  %v1862 = vpop.xlane.xlu0 %1861
  %v1863 = vsel %vm1730, %v1726, -inf
  %1864 = vmax.xlane.f32.xlu0 %v1863
  %v1865 = vpop.xlane.xlu0 %1864
  %v1866 = vsel %vm1730, %v1727, -inf
  %1867 = vmax.xlane.f32.xlu0 %v1866
  %v1868 = vpop.xlane.xlu0 %1867
  %v1869 = vsel %vm1730, %v1728, -inf
  %1870 = vmax.xlane.f32.xlu0 %v1869
  %v1871 = vpop.xlane.xlu0 %1870
  %v1872 = vsel %vm1730, %v1729, -inf
  %1873 = vmax.xlane.f32.xlu0 %v1872
  %v1874 = vpop.xlane.xlu0 %1873
  %v1875 = vsub.f32 %v1682, %v1733
  %v1876 = vsub.f32 %v1683, %v1736
  %v1877 = vsub.f32 %v1684, %v1739
  %v1878 = vsub.f32 %v1685, %v1742
  %v1879 = vsub.f32 %v1686, %v1745
  %v1880 = vsub.f32 %v1687, %v1748
  %v1881 = vsub.f32 %v1688, %v1751
  %v1882 = vsub.f32 %v1689, %v1754
  %v1883 = vsub.f32 %v1690, %v1757
  %v1884 = vsub.f32 %v1691, %v1760
  %v1885 = vsub.f32 %v1692, %v1763
  %v1886 = vsub.f32 %v1693, %v1766
  %v1887 = vsub.f32 %v1694, %v1769
  %v1888 = vsub.f32 %v1695, %v1772
  %v1889 = vsub.f32 %v1696, %v1775
  %v1890 = vsub.f32 %v1697, %v1778
  %v1891 = vsub.f32 %v1698, %v1781
  %v1892 = vsub.f32 %v1699, %v1784
  %v1893 = vsub.f32 %v1700, %v1787
  %v1894 = vsub.f32 %v1701, %v1790
  %v1895 = vsub.f32 %v1702, %v1793
  %v1896 = vsub.f32 %v1703, %v1796
  %v1897 = vsub.f32 %v1704, %v1799
  %v1898 = vsub.f32 %v1705, %v1802
  %v1899 = vsub.f32 %v1706, %v1805
  %v1900 = vsub.f32 %v1707, %v1808
  %v1901 = vsub.f32 %v1708, %v1811
  %v1902 = vsub.f32 %v1709, %v1814
  %v1903 = vsub.f32 %v1710, %v1817
  %v1904 = vsub.f32 %v1711, %v1820
  %v1905 = vsub.f32 %v1712, %v1823
  %v1906 = vsub.f32 %v1713, %v1826
  %v1907 = vsub.f32 %v1714, %v1829
  %v1908 = vsub.f32 %v1715, %v1832
  %v1909 = vsub.f32 %v1716, %v1835
  %v1910 = vsub.f32 %v1717, %v1838
  %v1911 = vsub.f32 %v1718, %v1841
  %v1912 = vsub.f32 %v1719, %v1844
  %v1913 = vsub.f32 %v1720, %v1847
  %v1914 = vsub.f32 %v1721, %v1850
  %v1915 = vsub.f32 %v1722, %v1853
  %v1916 = vsub.f32 %v1723, %v1856
  %v1917 = vsub.f32 %v1724, %v1859
  %v1918 = vsub.f32 %v1725, %v1862
  %v1919 = vsub.f32 %v1726, %v1865
  %v1920 = vsub.f32 %v1727, %v1868
  %v1921 = vsub.f32 %v1728, %v1871
  %v1922 = vsub.f32 %v1729, %v1874
  %v1923 = vmul.f32 %v1875, 1.442695
  %v1924 = vpow.pop %v1923
  %v1925 = vmul.f32 %v1876, 1.442695
  %v1926 = vpow.pop %v1925
  %v1927 = vmul.f32 %v1877, 1.442695
  %v1928 = vpow.pop %v1927
  %v1929 = vmul.f32 %v1878, 1.442695
  %v1930 = vpow.pop %v1929
  %v1931 = vmul.f32 %v1879, 1.442695
  %v1932 = vpow.pop %v1931
  %v1933 = vmul.f32 %v1880, 1.442695
  %v1934 = vpow.pop %v1933
  %v1935 = vmul.f32 %v1881, 1.442695
  %v1936 = vpow.pop %v1935
  %v1937 = vmul.f32 %v1882, 1.442695
  %v1938 = vpow.pop %v1937
  %v1939 = vmul.f32 %v1883, 1.442695
  %v1940 = vpow.pop %v1939
  %v1941 = vmul.f32 %v1884, 1.442695
  %v1942 = vpow.pop %v1941
  %v1943 = vmul.f32 %v1885, 1.442695
  %v1944 = vpow.pop %v1943
  %v1945 = vmul.f32 %v1886, 1.442695
  %v1946 = vpow.pop %v1945
  %v1947 = vmul.f32 %v1887, 1.442695
  %v1948 = vpow.pop %v1947
  %v1949 = vmul.f32 %v1888, 1.442695
  %v1950 = vpow.pop %v1949
  %v1951 = vmul.f32 %v1889, 1.442695
  %v1952 = vpow.pop %v1951
  %v1953 = vmul.f32 %v1890, 1.442695
  %v1954 = vpow.pop %v1953
  %v1955 = vmul.f32 %v1891, 1.442695
  %v1956 = vpow.pop %v1955
  %v1957 = vmul.f32 %v1892, 1.442695
  %v1958 = vpow.pop %v1957
  %v1959 = vmul.f32 %v1893, 1.442695
  %v1960 = vpow.pop %v1959
  %v1961 = vmul.f32 %v1894, 1.442695
  %v1962 = vpow.pop %v1961
  %v1963 = vmul.f32 %v1895, 1.442695
  %v1964 = vpow.pop %v1963
  %v1965 = vmul.f32 %v1896, 1.442695
  %v1966 = vpow.pop %v1965
  %v1967 = vmul.f32 %v1897, 1.442695
  %v1968 = vpow.pop %v1967
  %v1969 = vmul.f32 %v1898, 1.442695
  %v1970 = vpow.pop %v1969
  %v1971 = vmul.f32 %v1899, 1.442695
  %v1972 = vpow.pop %v1971
  %v1973 = vmul.f32 %v1900, 1.442695
  %v1974 = vpow.pop %v1973
  %v1975 = vmul.f32 %v1901, 1.442695
  %v1976 = vpow.pop %v1975
  %v1977 = vmul.f32 %v1902, 1.442695
  %v1978 = vpow.pop %v1977
  %v1979 = vmul.f32 %v1903, 1.442695
  %v1980 = vpow.pop %v1979
  %v1981 = vmul.f32 %v1904, 1.442695
  %v1982 = vpow.pop %v1981
  %v1983 = vmul.f32 %v1905, 1.442695
  %v1984 = vpow.pop %v1983
  %v1985 = vmul.f32 %v1906, 1.442695
  %v1986 = vpow.pop %v1985
  %v1987 = vmul.f32 %v1907, 1.442695
  %v1988 = vpow.pop %v1987
  %v1989 = vmul.f32 %v1908, 1.442695
  %v1990 = vpow.pop %v1989
  %v1991 = vmul.f32 %v1909, 1.442695
  %v1992 = vpow.pop %v1991
  %v1993 = vmul.f32 %v1910, 1.442695
  %v1994 = vpow.pop %v1993
  %v1995 = vmul.f32 %v1911, 1.442695
  %v1996 = vpow.pop %v1995
  %v1997 = vmul.f32 %v1912, 1.442695
  %v1998 = vpow.pop %v1997
  %v1999 = vmul.f32 %v1913, 1.442695
  %v2000 = vpow.pop %v1999
  %v2001 = vmul.f32 %v1914, 1.442695
  %v2002 = vpow.pop %v2001
  %v2003 = vmul.f32 %v1915, 1.442695
  %v2004 = vpow.pop %v2003
  %v2005 = vmul.f32 %v1916, 1.442695
  %v2006 = vpow.pop %v2005
  %v2007 = vmul.f32 %v1917, 1.442695
  %v2008 = vpow.pop %v2007
  %v2009 = vmul.f32 %v1918, 1.442695
  %v2010 = vpow.pop %v2009
  %v2011 = vmul.f32 %v1919, 1.442695
  %v2012 = vpow.pop %v2011
  %v2013 = vmul.f32 %v1920, 1.442695
  %v2014 = vpow.pop %v2013
  %v2015 = vmul.f32 %v1921, 1.442695
  %v2016 = vpow.pop %v2015
  %v2017 = vmul.f32 %v1922, 1.442695
  %v2018 = vpow.pop %v2017
  %v2019 = vsel %vm1730, %v1924, 0.0
  %2020 = vadd.xlane.f32.xlu0 %v2019
  %v2021 = vpop.xlane.xlu0 %2020
  %v2022 = vsel %vm1730, %v1926, 0.0
  %2023 = vadd.xlane.f32.xlu0 %v2022
  %v2024 = vpop.xlane.xlu0 %2023
  %v2025 = vsel %vm1730, %v1928, 0.0
  %2026 = vadd.xlane.f32.xlu0 %v2025
  %v2027 = vpop.xlane.xlu0 %2026
  %v2028 = vsel %vm1730, %v1930, 0.0
  %2029 = vadd.xlane.f32.xlu0 %v2028
  %v2030 = vpop.xlane.xlu0 %2029
  %v2031 = vsel %vm1730, %v1932, 0.0
  %2032 = vadd.xlane.f32.xlu0 %v2031
  %v2033 = vpop.xlane.xlu0 %2032
  %v2034 = vsel %vm1730, %v1934, 0.0
  %2035 = vadd.xlane.f32.xlu0 %v2034
  %v2036 = vpop.xlane.xlu0 %2035
  %v2037 = vsel %vm1730, %v1936, 0.0
  %2038 = vadd.xlane.f32.xlu0 %v2037
  %v2039 = vpop.xlane.xlu0 %2038
  %v2040 = vsel %vm1730, %v1938, 0.0
  %2041 = vadd.xlane.f32.xlu0 %v2040
  %v2042 = vpop.xlane.xlu0 %2041
  %v2043 = vsel %vm1730, %v1940, 0.0
  %2044 = vadd.xlane.f32.xlu0 %v2043
  %v2045 = vpop.xlane.xlu0 %2044
  %v2046 = vsel %vm1730, %v1942, 0.0
  %2047 = vadd.xlane.f32.xlu0 %v2046
  %v2048 = vpop.xlane.xlu0 %2047
  %v2049 = vsel %vm1730, %v1944, 0.0
  %2050 = vadd.xlane.f32.xlu0 %v2049
  %v2051 = vpop.xlane.xlu0 %2050
  %v2052 = vsel %vm1730, %v1946, 0.0
  %2053 = vadd.xlane.f32.xlu0 %v2052
  %v2054 = vpop.xlane.xlu0 %2053
  %v2055 = vsel %vm1730, %v1948, 0.0
  %2056 = vadd.xlane.f32.xlu0 %v2055
  %v2057 = vpop.xlane.xlu0 %2056
  %v2058 = vsel %vm1730, %v1950, 0.0
  %2059 = vadd.xlane.f32.xlu0 %v2058
  %v2060 = vpop.xlane.xlu0 %2059
  %v2061 = vsel %vm1730, %v1952, 0.0
  %2062 = vadd.xlane.f32.xlu0 %v2061
  %v2063 = vpop.xlane.xlu0 %2062
  %v2064 = vsel %vm1730, %v1954, 0.0
  %2065 = vadd.xlane.f32.xlu0 %v2064
  %v2066 = vpop.xlane.xlu0 %2065
  %v2067 = vsel %vm1730, %v1956, 0.0
  %2068 = vadd.xlane.f32.xlu0 %v2067
  %v2069 = vpop.xlane.xlu0 %2068
  %v2070 = vsel %vm1730, %v1958, 0.0
  %2071 = vadd.xlane.f32.xlu0 %v2070
  %v2072 = vpop.xlane.xlu0 %2071
  %v2073 = vsel %vm1730, %v1960, 0.0
  %2074 = vadd.xlane.f32.xlu0 %v2073
  %v2075 = vpop.xlane.xlu0 %2074
  %v2076 = vsel %vm1730, %v1962, 0.0
  %2077 = vadd.xlane.f32.xlu0 %v2076
  %v2078 = vpop.xlane.xlu0 %2077
  %v2079 = vsel %vm1730, %v1964, 0.0
  %2080 = vadd.xlane.f32.xlu0 %v2079
  %v2081 = vpop.xlane.xlu0 %2080
  %v2082 = vsel %vm1730, %v1966, 0.0
  %2083 = vadd.xlane.f32.xlu0 %v2082
  %v2084 = vpop.xlane.xlu0 %2083
  %v2085 = vsel %vm1730, %v1968, 0.0
  %2086 = vadd.xlane.f32.xlu0 %v2085
  %v2087 = vpop.xlane.xlu0 %2086
  %v2088 = vsel %vm1730, %v1970, 0.0
  %2089 = vadd.xlane.f32.xlu0 %v2088
  %v2090 = vpop.xlane.xlu0 %2089
  %v2091 = vsel %vm1730, %v1972, 0.0
  %2092 = vadd.xlane.f32.xlu0 %v2091
  %v2093 = vpop.xlane.xlu0 %2092
  %v2094 = vsel %vm1730, %v1974, 0.0
  %2095 = vadd.xlane.f32.xlu0 %v2094
  %v2096 = vpop.xlane.xlu0 %2095
  %v2097 = vsel %vm1730, %v1976, 0.0
  %2098 = vadd.xlane.f32.xlu0 %v2097
  %v2099 = vpop.xlane.xlu0 %2098
  %v2100 = vsel %vm1730, %v1978, 0.0
  %2101 = vadd.xlane.f32.xlu0 %v2100
  %v2102 = vpop.xlane.xlu0 %2101
  %v2103 = vsel %vm1730, %v1980, 0.0
  %2104 = vadd.xlane.f32.xlu0 %v2103
  %v2105 = vpop.xlane.xlu0 %2104
  %v2106 = vsel %vm1730, %v1982, 0.0
  %2107 = vadd.xlane.f32.xlu0 %v2106
  %v2108 = vpop.xlane.xlu0 %2107
  %v2109 = vsel %vm1730, %v1984, 0.0
  %2110 = vadd.xlane.f32.xlu0 %v2109
  %v2111 = vpop.xlane.xlu0 %2110
  %v2112 = vsel %vm1730, %v1986, 0.0
  %2113 = vadd.xlane.f32.xlu0 %v2112
  %v2114 = vpop.xlane.xlu0 %2113
  %v2115 = vsel %vm1730, %v1988, 0.0
  %2116 = vadd.xlane.f32.xlu0 %v2115
  %v2117 = vpop.xlane.xlu0 %2116
  %v2118 = vsel %vm1730, %v1990, 0.0
  %2119 = vadd.xlane.f32.xlu0 %v2118
  %v2120 = vpop.xlane.xlu0 %2119
  %v2121 = vsel %vm1730, %v1992, 0.0
  %2122 = vadd.xlane.f32.xlu0 %v2121
  %v2123 = vpop.xlane.xlu0 %2122
  %v2124 = vsel %vm1730, %v1994, 0.0
  %2125 = vadd.xlane.f32.xlu0 %v2124
  %v2126 = vpop.xlane.xlu0 %2125
  %v2127 = vsel %vm1730, %v1996, 0.0
  %2128 = vadd.xlane.f32.xlu0 %v2127
  %v2129 = vpop.xlane.xlu0 %2128
  %v2130 = vsel %vm1730, %v1998, 0.0
  %2131 = vadd.xlane.f32.xlu0 %v2130
  %v2132 = vpop.xlane.xlu0 %2131
  %v2133 = vsel %vm1730, %v2000, 0.0
  %2134 = vadd.xlane.f32.xlu0 %v2133
  %v2135 = vpop.xlane.xlu0 %2134
  %v2136 = vsel %vm1730, %v2002, 0.0
  %2137 = vadd.xlane.f32.xlu0 %v2136
  %v2138 = vpop.xlane.xlu0 %2137
  %v2139 = vsel %vm1730, %v2004, 0.0
  %2140 = vadd.xlane.f32.xlu0 %v2139
  %v2141 = vpop.xlane.xlu0 %2140
  %v2142 = vsel %vm1730, %v2006, 0.0
  %2143 = vadd.xlane.f32.xlu0 %v2142
  %v2144 = vpop.xlane.xlu0 %2143
  %v2145 = vsel %vm1730, %v2008, 0.0
  %2146 = vadd.xlane.f32.xlu0 %v2145
  %v2147 = vpop.xlane.xlu0 %2146
  %v2148 = vsel %vm1730, %v2010, 0.0
  %2149 = vadd.xlane.f32.xlu0 %v2148
  %v2150 = vpop.xlane.xlu0 %2149
  %v2151 = vsel %vm1730, %v2012, 0.0
  %2152 = vadd.xlane.f32.xlu0 %v2151
  %v2153 = vpop.xlane.xlu0 %2152
  %v2154 = vsel %vm1730, %v2014, 0.0
  %2155 = vadd.xlane.f32.xlu0 %v2154
  %v2156 = vpop.xlane.xlu0 %2155
  %v2157 = vsel %vm1730, %v2016, 0.0
  %2158 = vadd.xlane.f32.xlu0 %v2157
  %v2159 = vpop.xlane.xlu0 %2158
  %v2160 = vsel %vm1730, %v2018, 0.0
  %2161 = vadd.xlane.f32.xlu0 %v2160
  %v2162 = vpop.xlane.xlu0 %2161
  %v2163 = vrcp.pop %v2021
  %v2164 = vrcp.pop %v2024
  %v2165 = vrcp.pop %v2027
  %v2166 = vrcp.pop %v2030
  %v2167 = vrcp.pop %v2033
  %v2168 = vrcp.pop %v2036
  %v2169 = vrcp.pop %v2039
  %v2170 = vrcp.pop %v2042
  %v2171 = vrcp.pop %v2045
  %v2172 = vrcp.pop %v2048
  %v2173 = vrcp.pop %v2051
  %v2174 = vrcp.pop %v2054
  %v2175 = vrcp.pop %v2057
  %v2176 = vrcp.pop %v2060
  %v2177 = vrcp.pop %v2063
  %v2178 = vrcp.pop %v2066
  %v2179 = vrcp.pop %v2069
  %v2180 = vrcp.pop %v2072
  %v2181 = vrcp.pop %v2075
  %v2182 = vrcp.pop %v2078
  %v2183 = vrcp.pop %v2081
  %v2184 = vrcp.pop %v2084
  %v2185 = vrcp.pop %v2087
  %v2186 = vrcp.pop %v2090
  %v2187 = vrcp.pop %v2093
  %v2188 = vrcp.pop %v2096
  %v2189 = vrcp.pop %v2099
  %v2190 = vrcp.pop %v2102
  %v2191 = vrcp.pop %v2105
  %v2192 = vrcp.pop %v2108
  %v2193 = vrcp.pop %v2111
  %v2194 = vrcp.pop %v2114
  %v2195 = vrcp.pop %v2117
  %v2196 = vrcp.pop %v2120
  %v2197 = vrcp.pop %v2123
  %v2198 = vrcp.pop %v2126
  %v2199 = vrcp.pop %v2129
  %v2200 = vrcp.pop %v2132
  %v2201 = vrcp.pop %v2135
  %v2202 = vrcp.pop %v2138
  %v2203 = vrcp.pop %v2141
  %v2204 = vrcp.pop %v2144
  %v2205 = vrcp.pop %v2147
  %v2206 = vrcp.pop %v2150
  %v2207 = vrcp.pop %v2153
  %v2208 = vrcp.pop %v2156
  %v2209 = vrcp.pop %v2159
  %v2210 = vrcp.pop %v2162
  %v2211 = vmul.f32 %v1924, %v2163
  %v2212 = vmul.f32 %v1926, %v2164
  %v2213 = vmul.f32 %v1928, %v2165
  %v2214 = vmul.f32 %v1930, %v2166
  %v2215 = vmul.f32 %v1932, %v2167
  %v2216 = vmul.f32 %v1934, %v2168
  %v2217 = vmul.f32 %v1936, %v2169
  %v2218 = vmul.f32 %v1938, %v2170
  %v2219 = vmul.f32 %v1940, %v2171
  %v2220 = vmul.f32 %v1942, %v2172
  %v2221 = vmul.f32 %v1944, %v2173
  %v2222 = vmul.f32 %v1946, %v2174
  %v2223 = vmul.f32 %v1948, %v2175
  %v2224 = vmul.f32 %v1950, %v2176
  %v2225 = vmul.f32 %v1952, %v2177
  %v2226 = vmul.f32 %v1954, %v2178
  %v2227 = vmul.f32 %v1956, %v2179
  %v2228 = vmul.f32 %v1958, %v2180
  %v2229 = vmul.f32 %v1960, %v2181
  %v2230 = vmul.f32 %v1962, %v2182
  %v2231 = vmul.f32 %v1964, %v2183
  %v2232 = vmul.f32 %v1966, %v2184
  %v2233 = vmul.f32 %v1968, %v2185
  %v2234 = vmul.f32 %v1970, %v2186
  %v2235 = vmul.f32 %v1972, %v2187
  %v2236 = vmul.f32 %v1974, %v2188
  %v2237 = vmul.f32 %v1976, %v2189
  %v2238 = vmul.f32 %v1978, %v2190
  %v2239 = vmul.f32 %v1980, %v2191
  %v2240 = vmul.f32 %v1982, %v2192
  %v2241 = vmul.f32 %v1984, %v2193
  %v2242 = vmul.f32 %v1986, %v2194
  %v2243 = vmul.f32 %v1988, %v2195
  %v2244 = vmul.f32 %v1990, %v2196
  %v2245 = vmul.f32 %v1992, %v2197
  %v2246 = vmul.f32 %v1994, %v2198
  %v2247 = vmul.f32 %v1996, %v2199
  %v2248 = vmul.f32 %v1998, %v2200
  %v2249 = vmul.f32 %v2000, %v2201
  %v2250 = vmul.f32 %v2002, %v2202
  %v2251 = vmul.f32 %v2004, %v2203
  %v2252 = vmul.f32 %v2006, %v2204
  %v2253 = vmul.f32 %v2008, %v2205
  %v2254 = vmul.f32 %v2010, %v2206
  %v2255 = vmul.f32 %v2012, %v2207
  %v2256 = vmul.f32 %v2014, %v2208
  %v2257 = vmul.f32 %v2016, %v2209
  %v2258 = vmul.f32 %v2018, %v2210
  %v2259 = vpack.c.bf16 %v2211, %v2211
  %v2260 = vpack.c.bf16 %v2212, %v2212
  %v2261 = vpack.c.bf16 %v2213, %v2213
  %v2262 = vpack.c.bf16 %v2214, %v2214
  %v2263 = vpack.c.bf16 %v2215, %v2215
  %v2264 = vpack.c.bf16 %v2216, %v2216
  %v2265 = vpack.c.bf16 %v2217, %v2217
  %v2266 = vpack.c.bf16 %v2218, %v2218
  %v2267 = vpack.c.bf16 %v2219, %v2219
  %v2268 = vpack.c.bf16 %v2220, %v2220
  %v2269 = vpack.c.bf16 %v2221, %v2221
  %v2270 = vpack.c.bf16 %v2222, %v2222
  %v2271 = vpack.c.bf16 %v2223, %v2223
  %v2272 = vpack.c.bf16 %v2224, %v2224
  %v2273 = vpack.c.bf16 %v2225, %v2225
  %v2274 = vpack.c.bf16 %v2226, %v2226
  %v2275 = vpack.c.bf16 %v2227, %v2227
  %v2276 = vpack.c.bf16 %v2228, %v2228
  %v2277 = vpack.c.bf16 %v2229, %v2229
  %v2278 = vpack.c.bf16 %v2230, %v2230
  %v2279 = vpack.c.bf16 %v2231, %v2231
  %v2280 = vpack.c.bf16 %v2232, %v2232
  %v2281 = vpack.c.bf16 %v2233, %v2233
  %v2282 = vpack.c.bf16 %v2234, %v2234
  %v2283 = vpack.c.bf16 %v2235, %v2235
  %v2284 = vpack.c.bf16 %v2236, %v2236
  %v2285 = vpack.c.bf16 %v2237, %v2237
  %v2286 = vpack.c.bf16 %v2238, %v2238
  %v2287 = vpack.c.bf16 %v2239, %v2239
  %v2288 = vpack.c.bf16 %v2240, %v2240
  %v2289 = vpack.c.bf16 %v2241, %v2241
  %v2290 = vpack.c.bf16 %v2242, %v2242
  %v2291 = vpack.c.bf16 %v2243, %v2243
  %v2292 = vpack.c.bf16 %v2244, %v2244
  %v2293 = vpack.c.bf16 %v2245, %v2245
  %v2294 = vpack.c.bf16 %v2246, %v2246
  %v2295 = vpack.c.bf16 %v2247, %v2247
  %v2296 = vpack.c.bf16 %v2248, %v2248
  %v2297 = vpack.c.bf16 %v2249, %v2249
  %v2298 = vpack.c.bf16 %v2250, %v2250
  %v2299 = vpack.c.bf16 %v2251, %v2251
  %v2300 = vpack.c.bf16 %v2252, %v2252
  %v2301 = vpack.c.bf16 %v2253, %v2253
  %v2302 = vpack.c.bf16 %v2254, %v2254
  %v2303 = vpack.c.bf16 %v2255, %v2255
  %v2304 = vpack.c.bf16 %v2256, %v2256
  %v2305 = vpack.c.bf16 %v2257, %v2257
  %v2306 = vpack.c.bf16 %v2258, %v2258
  %v2308 = vsel %vm1459, %v2259, 0
  %vm2310 = vcmask 1041408
  %vm2311 = vcmask 1042432
  %v2312 = vsel %vm2310, 4294967295, 65535
  %v2313 = vsel %vm2311, %v2312, 0
  %v2315 = vand.u32 %v114, %v2313
  %2317 = vmatpush.bf16.msra.mxu0 0
  %2318 = vmatpush.bf16.msra.mxu0 0
  %2319 = vmatpush.bf16.msra.mxu0 0
  %2320 = vmatpush.bf16.msra.mxu0 0
  %2321 = vmatpush.bf16.msra.mxu0 0
  %2322 = vmatpush.bf16.msra.mxu0 0
  %2323 = vmatpush.bf16.msra.mxu0 0
  %2324 = vmatpush.bf16.msra.mxu0 %v2315
  %2325 = vmatmul.bf16.gmra.mxu0 %v2308
  %v2326 = vpop.f32.mrf.mxu0
  %v2327 = vadd.f32 0.0, %v2326
  %v2328 = vpop.f32.mrf.mxu0
  %2329 = vdwg.mxu0
  %v2331 = vsel %vm1459, %v2260, 0
  %v2334 = vand.u32 %v115, %v2313
  %2336 = vmatpush.bf16.msra.mxu0 0
  %2337 = vmatpush.bf16.msra.mxu0 0
  %2338 = vmatpush.bf16.msra.mxu0 0
  %2339 = vmatpush.bf16.msra.mxu0 0
  %2340 = vmatpush.bf16.msra.mxu0 0
  %2341 = vmatpush.bf16.msra.mxu0 0
  %2342 = vmatpush.bf16.msra.mxu0 0
  %2343 = vmatpush.bf16.msra.mxu0 %v2334
  %2344 = vmatmul.bf16.gmra.mxu0 %v2331
  %v2345 = vpop.f32.mrf.mxu0
  %v2346 = vadd.f32 0.0, %v2345
  %v2347 = vpop.f32.mrf.mxu0
  %2348 = vdwg.mxu0
  %v2350 = vsel %vm1459, %v2261, 0
  %v2353 = vand.u32 %v116, %v2313
  %2355 = vmatpush.bf16.msra.mxu0 0
  %2356 = vmatpush.bf16.msra.mxu0 0
  %2357 = vmatpush.bf16.msra.mxu0 0
  %2358 = vmatpush.bf16.msra.mxu0 0
  %2359 = vmatpush.bf16.msra.mxu0 0
  %2360 = vmatpush.bf16.msra.mxu0 0
  %2361 = vmatpush.bf16.msra.mxu0 0
  %2362 = vmatpush.bf16.msra.mxu0 %v2353
  %2363 = vmatmul.bf16.gmra.mxu0 %v2350
  %v2364 = vpop.f32.mrf.mxu0
  %v2365 = vadd.f32 0.0, %v2364
  %v2366 = vpop.f32.mrf.mxu0
  %2367 = vdwg.mxu0
  %v2369 = vsel %vm1459, %v2262, 0
  %v2372 = vand.u32 %v117, %v2313
  %2374 = vmatpush.bf16.msra.mxu0 0
  %2375 = vmatpush.bf16.msra.mxu0 0
  %2376 = vmatpush.bf16.msra.mxu0 0
  %2377 = vmatpush.bf16.msra.mxu0 0
  %2378 = vmatpush.bf16.msra.mxu0 0
  %2379 = vmatpush.bf16.msra.mxu0 0
  %2380 = vmatpush.bf16.msra.mxu0 0
  %2381 = vmatpush.bf16.msra.mxu0 %v2372
  %2382 = vmatmul.bf16.gmra.mxu0 %v2369
  %v2383 = vpop.f32.mrf.mxu0
  %v2384 = vadd.f32 0.0, %v2383
  %v2385 = vpop.f32.mrf.mxu0
  %2386 = vdwg.mxu0
  %v2388 = vsel %vm1459, %v2263, 0
  %v2391 = vand.u32 %v118, %v2313
  %2393 = vmatpush.bf16.msra.mxu0 0
  %2394 = vmatpush.bf16.msra.mxu0 0
  %2395 = vmatpush.bf16.msra.mxu0 0
  %2396 = vmatpush.bf16.msra.mxu0 0
  %2397 = vmatpush.bf16.msra.mxu0 0
  %2398 = vmatpush.bf16.msra.mxu0 0
  %2399 = vmatpush.bf16.msra.mxu0 0
  %2400 = vmatpush.bf16.msra.mxu0 %v2391
  %2401 = vmatmul.bf16.gmra.mxu0 %v2388
  %v2402 = vpop.f32.mrf.mxu0
  %v2403 = vadd.f32 0.0, %v2402
  %v2404 = vpop.f32.mrf.mxu0
  %2405 = vdwg.mxu0
  %v2407 = vsel %vm1459, %v2264, 0
  %v2410 = vand.u32 %v119, %v2313
  %2412 = vmatpush.bf16.msra.mxu0 0
  %2413 = vmatpush.bf16.msra.mxu0 0
  %2414 = vmatpush.bf16.msra.mxu0 0
  %2415 = vmatpush.bf16.msra.mxu0 0
  %2416 = vmatpush.bf16.msra.mxu0 0
  %2417 = vmatpush.bf16.msra.mxu0 0
  %2418 = vmatpush.bf16.msra.mxu0 0
  %2419 = vmatpush.bf16.msra.mxu0 %v2410
  %2420 = vmatmul.bf16.gmra.mxu0 %v2407
  %v2421 = vpop.f32.mrf.mxu0
  %v2422 = vadd.f32 0.0, %v2421
  %v2423 = vpop.f32.mrf.mxu0
  %2424 = vdwg.mxu0
  %v2426 = vsel %vm1459, %v2265, 0
  %v2429 = vand.u32 %v120, %v2313
  %2431 = vmatpush.bf16.msra.mxu0 0
  %2432 = vmatpush.bf16.msra.mxu0 0
  %2433 = vmatpush.bf16.msra.mxu0 0
  %2434 = vmatpush.bf16.msra.mxu0 0
  %2435 = vmatpush.bf16.msra.mxu0 0
  %2436 = vmatpush.bf16.msra.mxu0 0
  %2437 = vmatpush.bf16.msra.mxu0 0
  %2438 = vmatpush.bf16.msra.mxu0 %v2429
  %2439 = vmatmul.bf16.gmra.mxu0 %v2426
  %v2440 = vpop.f32.mrf.mxu0
  %v2441 = vadd.f32 0.0, %v2440
  %v2442 = vpop.f32.mrf.mxu0
  %2443 = vdwg.mxu0
  %v2445 = vsel %vm1459, %v2266, 0
  %v2448 = vand.u32 %v121, %v2313
  %2450 = vmatpush.bf16.msra.mxu0 0
  %2451 = vmatpush.bf16.msra.mxu0 0
  %2452 = vmatpush.bf16.msra.mxu0 0
  %2453 = vmatpush.bf16.msra.mxu0 0
  %2454 = vmatpush.bf16.msra.mxu0 0
  %2455 = vmatpush.bf16.msra.mxu0 0
  %2456 = vmatpush.bf16.msra.mxu0 0
  %2457 = vmatpush.bf16.msra.mxu0 %v2448
  %2458 = vmatmul.bf16.gmra.mxu0 %v2445
  %v2459 = vpop.f32.mrf.mxu0
  %v2460 = vadd.f32 0.0, %v2459
  %v2461 = vpop.f32.mrf.mxu0
  %2462 = vdwg.mxu0
  %v2464 = vsel %vm1459, %v2267, 0
  %v2467 = vand.u32 %v122, %v2313
  %2469 = vmatpush.bf16.msra.mxu0 0
  %2470 = vmatpush.bf16.msra.mxu0 0
  %2471 = vmatpush.bf16.msra.mxu0 0
  %2472 = vmatpush.bf16.msra.mxu0 0
  %2473 = vmatpush.bf16.msra.mxu0 0
  %2474 = vmatpush.bf16.msra.mxu0 0
  %2475 = vmatpush.bf16.msra.mxu0 0
  %2476 = vmatpush.bf16.msra.mxu0 %v2467
  %2477 = vmatmul.bf16.gmra.mxu0 %v2464
  %v2478 = vpop.f32.mrf.mxu0
  %v2479 = vadd.f32 0.0, %v2478
  %v2480 = vpop.f32.mrf.mxu0
  %2481 = vdwg.mxu0
  %v2483 = vsel %vm1459, %v2268, 0
  %v2486 = vand.u32 %v123, %v2313
  %2488 = vmatpush.bf16.msra.mxu0 0
  %2489 = vmatpush.bf16.msra.mxu0 0
  %2490 = vmatpush.bf16.msra.mxu0 0
  %2491 = vmatpush.bf16.msra.mxu0 0
  %2492 = vmatpush.bf16.msra.mxu0 0
  %2493 = vmatpush.bf16.msra.mxu0 0
  %2494 = vmatpush.bf16.msra.mxu0 0
  %2495 = vmatpush.bf16.msra.mxu0 %v2486
  %2496 = vmatmul.bf16.gmra.mxu0 %v2483
  %v2497 = vpop.f32.mrf.mxu0
  %v2498 = vadd.f32 0.0, %v2497
  %v2499 = vpop.f32.mrf.mxu0
  %2500 = vdwg.mxu0
  %v2502 = vsel %vm1459, %v2269, 0
  %v2505 = vand.u32 %v124, %v2313
  %2507 = vmatpush.bf16.msra.mxu0 0
  %2508 = vmatpush.bf16.msra.mxu0 0
  %2509 = vmatpush.bf16.msra.mxu0 0
  %2510 = vmatpush.bf16.msra.mxu0 0
  %2511 = vmatpush.bf16.msra.mxu0 0
  %2512 = vmatpush.bf16.msra.mxu0 0
  %2513 = vmatpush.bf16.msra.mxu0 0
  %2514 = vmatpush.bf16.msra.mxu0 %v2505
  %2515 = vmatmul.bf16.gmra.mxu0 %v2502
  %v2516 = vpop.f32.mrf.mxu0
  %v2517 = vadd.f32 0.0, %v2516
  %v2518 = vpop.f32.mrf.mxu0
  %2519 = vdwg.mxu0
  %v2521 = vsel %vm1459, %v2270, 0
  %v2524 = vand.u32 %v125, %v2313
  %2526 = vmatpush.bf16.msra.mxu0 0
  %2527 = vmatpush.bf16.msra.mxu0 0
  %2528 = vmatpush.bf16.msra.mxu0 0
  %2529 = vmatpush.bf16.msra.mxu0 0
  %2530 = vmatpush.bf16.msra.mxu0 0
  %2531 = vmatpush.bf16.msra.mxu0 0
  %2532 = vmatpush.bf16.msra.mxu0 0
  %2533 = vmatpush.bf16.msra.mxu0 %v2524
  %2534 = vmatmul.bf16.gmra.mxu0 %v2521
  %v2535 = vpop.f32.mrf.mxu0
  %v2536 = vadd.f32 0.0, %v2535
  %v2537 = vpop.f32.mrf.mxu0
  %2538 = vdwg.mxu0
  %v2540 = vsel %vm1459, %v2271, 0
  %v2543 = vand.u32 %v126, %v2313
  %2545 = vmatpush.bf16.msra.mxu0 0
  %2546 = vmatpush.bf16.msra.mxu0 0
  %2547 = vmatpush.bf16.msra.mxu0 0
  %2548 = vmatpush.bf16.msra.mxu0 0
  %2549 = vmatpush.bf16.msra.mxu0 0
  %2550 = vmatpush.bf16.msra.mxu0 0
  %2551 = vmatpush.bf16.msra.mxu0 0
  %2552 = vmatpush.bf16.msra.mxu0 %v2543
  %2553 = vmatmul.bf16.gmra.mxu0 %v2540
  %v2554 = vpop.f32.mrf.mxu0
  %v2555 = vadd.f32 0.0, %v2554
  %v2556 = vpop.f32.mrf.mxu0
  %2557 = vdwg.mxu0
  %v2559 = vsel %vm1459, %v2272, 0
  %v2562 = vand.u32 %v127, %v2313
  %2564 = vmatpush.bf16.msra.mxu0 0
  %2565 = vmatpush.bf16.msra.mxu0 0
  %2566 = vmatpush.bf16.msra.mxu0 0
  %2567 = vmatpush.bf16.msra.mxu0 0
  %2568 = vmatpush.bf16.msra.mxu0 0
  %2569 = vmatpush.bf16.msra.mxu0 0
  %2570 = vmatpush.bf16.msra.mxu0 0
  %2571 = vmatpush.bf16.msra.mxu0 %v2562
  %2572 = vmatmul.bf16.gmra.mxu0 %v2559
  %v2573 = vpop.f32.mrf.mxu0
  %v2574 = vadd.f32 0.0, %v2573
  %v2575 = vpop.f32.mrf.mxu0
  %2576 = vdwg.mxu0
  %v2578 = vsel %vm1459, %v2273, 0
  %v2581 = vand.u32 %v128, %v2313
  %2583 = vmatpush.bf16.msra.mxu0 0
  %2584 = vmatpush.bf16.msra.mxu0 0
  %2585 = vmatpush.bf16.msra.mxu0 0
  %2586 = vmatpush.bf16.msra.mxu0 0
  %2587 = vmatpush.bf16.msra.mxu0 0
  %2588 = vmatpush.bf16.msra.mxu0 0
  %2589 = vmatpush.bf16.msra.mxu0 0
  %2590 = vmatpush.bf16.msra.mxu0 %v2581
  %2591 = vmatmul.bf16.gmra.mxu0 %v2578
  %v2592 = vpop.f32.mrf.mxu0
  %v2593 = vadd.f32 0.0, %v2592
  %v2594 = vpop.f32.mrf.mxu0
  %2595 = vdwg.mxu0
  %v2597 = vsel %vm1459, %v2274, 0
  %v2600 = vand.u32 %v129, %v2313
  %2602 = vmatpush.bf16.msra.mxu0 0
  %2603 = vmatpush.bf16.msra.mxu0 0
  %2604 = vmatpush.bf16.msra.mxu0 0
  %2605 = vmatpush.bf16.msra.mxu0 0
  %2606 = vmatpush.bf16.msra.mxu0 0
  %2607 = vmatpush.bf16.msra.mxu0 0
  %2608 = vmatpush.bf16.msra.mxu0 0
  %2609 = vmatpush.bf16.msra.mxu0 %v2600
  %2610 = vmatmul.bf16.gmra.mxu0 %v2597
  %v2611 = vpop.f32.mrf.mxu0
  %v2612 = vadd.f32 0.0, %v2611
  %v2613 = vpop.f32.mrf.mxu0
  %2614 = vdwg.mxu0
  %v2616 = vsel %vm1459, %v2275, 0
  %v2619 = vand.u32 %v130, %v2313
  %2621 = vmatpush.bf16.msra.mxu0 0
  %2622 = vmatpush.bf16.msra.mxu0 0
  %2623 = vmatpush.bf16.msra.mxu0 0
  %2624 = vmatpush.bf16.msra.mxu0 0
  %2625 = vmatpush.bf16.msra.mxu0 0
  %2626 = vmatpush.bf16.msra.mxu0 0
  %2627 = vmatpush.bf16.msra.mxu0 0
  %2628 = vmatpush.bf16.msra.mxu0 %v2619
  %2629 = vmatmul.bf16.gmra.mxu0 %v2616
  %v2630 = vpop.f32.mrf.mxu0
  %v2631 = vadd.f32 0.0, %v2630
  %v2632 = vpop.f32.mrf.mxu0
  %2633 = vdwg.mxu0
  %v2635 = vsel %vm1459, %v2276, 0
  %v2638 = vand.u32 %v131, %v2313
  %2640 = vmatpush.bf16.msra.mxu0 0
  %2641 = vmatpush.bf16.msra.mxu0 0
  %2642 = vmatpush.bf16.msra.mxu0 0
  %2643 = vmatpush.bf16.msra.mxu0 0
  %2644 = vmatpush.bf16.msra.mxu0 0
  %2645 = vmatpush.bf16.msra.mxu0 0
  %2646 = vmatpush.bf16.msra.mxu0 0
  %2647 = vmatpush.bf16.msra.mxu0 %v2638
  %2648 = vmatmul.bf16.gmra.mxu0 %v2635
  %v2649 = vpop.f32.mrf.mxu0
  %v2650 = vadd.f32 0.0, %v2649
  %v2651 = vpop.f32.mrf.mxu0
  %2652 = vdwg.mxu0
  %v2654 = vsel %vm1459, %v2277, 0
  %v2657 = vand.u32 %v132, %v2313
  %2659 = vmatpush.bf16.msra.mxu0 0
  %2660 = vmatpush.bf16.msra.mxu0 0
  %2661 = vmatpush.bf16.msra.mxu0 0
  %2662 = vmatpush.bf16.msra.mxu0 0
  %2663 = vmatpush.bf16.msra.mxu0 0
  %2664 = vmatpush.bf16.msra.mxu0 0
  %2665 = vmatpush.bf16.msra.mxu0 0
  %2666 = vmatpush.bf16.msra.mxu0 %v2657
  %2667 = vmatmul.bf16.gmra.mxu0 %v2654
  %v2668 = vpop.f32.mrf.mxu0
  %v2669 = vadd.f32 0.0, %v2668
  %v2670 = vpop.f32.mrf.mxu0
  %2671 = vdwg.mxu0
  %v2673 = vsel %vm1459, %v2278, 0
  %v2676 = vand.u32 %v133, %v2313
  %2678 = vmatpush.bf16.msra.mxu0 0
  %2679 = vmatpush.bf16.msra.mxu0 0
  %2680 = vmatpush.bf16.msra.mxu0 0
  %2681 = vmatpush.bf16.msra.mxu0 0
  %2682 = vmatpush.bf16.msra.mxu0 0
  %2683 = vmatpush.bf16.msra.mxu0 0
  %2684 = vmatpush.bf16.msra.mxu0 0
  %2685 = vmatpush.bf16.msra.mxu0 %v2676
  %2686 = vmatmul.bf16.gmra.mxu0 %v2673
  %v2687 = vpop.f32.mrf.mxu0
  %v2688 = vadd.f32 0.0, %v2687
  %v2689 = vpop.f32.mrf.mxu0
  %2690 = vdwg.mxu0
  %v2692 = vsel %vm1459, %v2279, 0
  %v2695 = vand.u32 %v134, %v2313
  %2697 = vmatpush.bf16.msra.mxu0 0
  %2698 = vmatpush.bf16.msra.mxu0 0
  %2699 = vmatpush.bf16.msra.mxu0 0
  %2700 = vmatpush.bf16.msra.mxu0 0
  %2701 = vmatpush.bf16.msra.mxu0 0
  %2702 = vmatpush.bf16.msra.mxu0 0
  %2703 = vmatpush.bf16.msra.mxu0 0
  %2704 = vmatpush.bf16.msra.mxu0 %v2695
  %2705 = vmatmul.bf16.gmra.mxu0 %v2692
  %v2706 = vpop.f32.mrf.mxu0
  %v2707 = vadd.f32 0.0, %v2706
  %v2708 = vpop.f32.mrf.mxu0
  %2709 = vdwg.mxu0
  %v2711 = vsel %vm1459, %v2280, 0
  %v2714 = vand.u32 %v135, %v2313
  %2716 = vmatpush.bf16.msra.mxu0 0
  %2717 = vmatpush.bf16.msra.mxu0 0
  %2718 = vmatpush.bf16.msra.mxu0 0
  %2719 = vmatpush.bf16.msra.mxu0 0
  %2720 = vmatpush.bf16.msra.mxu0 0
  %2721 = vmatpush.bf16.msra.mxu0 0
  %2722 = vmatpush.bf16.msra.mxu0 0
  %2723 = vmatpush.bf16.msra.mxu0 %v2714
  %2724 = vmatmul.bf16.gmra.mxu0 %v2711
  %v2725 = vpop.f32.mrf.mxu0
  %v2726 = vadd.f32 0.0, %v2725
  %v2727 = vpop.f32.mrf.mxu0
  %2728 = vdwg.mxu0
  %v2730 = vsel %vm1459, %v2281, 0
  %v2733 = vand.u32 %v136, %v2313
  %2735 = vmatpush.bf16.msra.mxu0 0
  %2736 = vmatpush.bf16.msra.mxu0 0
  %2737 = vmatpush.bf16.msra.mxu0 0
  %2738 = vmatpush.bf16.msra.mxu0 0
  %2739 = vmatpush.bf16.msra.mxu0 0
  %2740 = vmatpush.bf16.msra.mxu0 0
  %2741 = vmatpush.bf16.msra.mxu0 0
  %2742 = vmatpush.bf16.msra.mxu0 %v2733
  %2743 = vmatmul.bf16.gmra.mxu0 %v2730
  %v2744 = vpop.f32.mrf.mxu0
  %v2745 = vadd.f32 0.0, %v2744
  %v2746 = vpop.f32.mrf.mxu0
  %2747 = vdwg.mxu0
  %v2749 = vsel %vm1459, %v2282, 0
  %v2752 = vand.u32 %v137, %v2313
  %2754 = vmatpush.bf16.msra.mxu0 0
  %2755 = vmatpush.bf16.msra.mxu0 0
  %2756 = vmatpush.bf16.msra.mxu0 0
  %2757 = vmatpush.bf16.msra.mxu0 0
  %2758 = vmatpush.bf16.msra.mxu0 0
  %2759 = vmatpush.bf16.msra.mxu0 0
  %2760 = vmatpush.bf16.msra.mxu0 0
  %2761 = vmatpush.bf16.msra.mxu0 %v2752
  %2762 = vmatmul.bf16.gmra.mxu0 %v2749
  %v2763 = vpop.f32.mrf.mxu0
  %v2764 = vadd.f32 0.0, %v2763
  %v2765 = vpop.f32.mrf.mxu0
  %2766 = vdwg.mxu0
  %v2768 = vsel %vm1459, %v2283, 0
  %v2771 = vand.u32 %v138, %v2313
  %2773 = vmatpush.bf16.msra.mxu0 0
  %2774 = vmatpush.bf16.msra.mxu0 0
  %2775 = vmatpush.bf16.msra.mxu0 0
  %2776 = vmatpush.bf16.msra.mxu0 0
  %2777 = vmatpush.bf16.msra.mxu0 0
  %2778 = vmatpush.bf16.msra.mxu0 0
  %2779 = vmatpush.bf16.msra.mxu0 0
  %2780 = vmatpush.bf16.msra.mxu0 %v2771
  %2781 = vmatmul.bf16.gmra.mxu0 %v2768
  %v2782 = vpop.f32.mrf.mxu0
  %v2783 = vadd.f32 0.0, %v2782
  %v2784 = vpop.f32.mrf.mxu0
  %2785 = vdwg.mxu0
  %v2787 = vsel %vm1459, %v2284, 0
  %v2790 = vand.u32 %v139, %v2313
  %2792 = vmatpush.bf16.msra.mxu0 0
  %2793 = vmatpush.bf16.msra.mxu0 0
  %2794 = vmatpush.bf16.msra.mxu0 0
  %2795 = vmatpush.bf16.msra.mxu0 0
  %2796 = vmatpush.bf16.msra.mxu0 0
  %2797 = vmatpush.bf16.msra.mxu0 0
  %2798 = vmatpush.bf16.msra.mxu0 0
  %2799 = vmatpush.bf16.msra.mxu0 %v2790
  %2800 = vmatmul.bf16.gmra.mxu0 %v2787
  %v2801 = vpop.f32.mrf.mxu0
  %v2802 = vadd.f32 0.0, %v2801
  %v2803 = vpop.f32.mrf.mxu0
  %2804 = vdwg.mxu0
  %v2806 = vsel %vm1459, %v2285, 0
  %v2809 = vand.u32 %v140, %v2313
  %2811 = vmatpush.bf16.msra.mxu0 0
  %2812 = vmatpush.bf16.msra.mxu0 0
  %2813 = vmatpush.bf16.msra.mxu0 0
  %2814 = vmatpush.bf16.msra.mxu0 0
  %2815 = vmatpush.bf16.msra.mxu0 0
  %2816 = vmatpush.bf16.msra.mxu0 0
  %2817 = vmatpush.bf16.msra.mxu0 0
  %2818 = vmatpush.bf16.msra.mxu0 %v2809
  %2819 = vmatmul.bf16.gmra.mxu0 %v2806
  %v2820 = vpop.f32.mrf.mxu0
  %v2821 = vadd.f32 0.0, %v2820
  %v2822 = vpop.f32.mrf.mxu0
  %2823 = vdwg.mxu0
  %v2825 = vsel %vm1459, %v2286, 0
  %v2828 = vand.u32 %v141, %v2313
  %2830 = vmatpush.bf16.msra.mxu0 0
  %2831 = vmatpush.bf16.msra.mxu0 0
  %2832 = vmatpush.bf16.msra.mxu0 0
  %2833 = vmatpush.bf16.msra.mxu0 0
  %2834 = vmatpush.bf16.msra.mxu0 0
  %2835 = vmatpush.bf16.msra.mxu0 0
  %2836 = vmatpush.bf16.msra.mxu0 0
  %2837 = vmatpush.bf16.msra.mxu0 %v2828
  %2838 = vmatmul.bf16.gmra.mxu0 %v2825
  %v2839 = vpop.f32.mrf.mxu0
  %v2840 = vadd.f32 0.0, %v2839
  %v2841 = vpop.f32.mrf.mxu0
  %2842 = vdwg.mxu0
  %v2844 = vsel %vm1459, %v2287, 0
  %v2847 = vand.u32 %v142, %v2313
  %2849 = vmatpush.bf16.msra.mxu0 0
  %2850 = vmatpush.bf16.msra.mxu0 0
  %2851 = vmatpush.bf16.msra.mxu0 0
  %2852 = vmatpush.bf16.msra.mxu0 0
  %2853 = vmatpush.bf16.msra.mxu0 0
  %2854 = vmatpush.bf16.msra.mxu0 0
  %2855 = vmatpush.bf16.msra.mxu0 0
  %2856 = vmatpush.bf16.msra.mxu0 %v2847
  %2857 = vmatmul.bf16.gmra.mxu0 %v2844
  %v2858 = vpop.f32.mrf.mxu0
  %v2859 = vadd.f32 0.0, %v2858
  %v2860 = vpop.f32.mrf.mxu0
  %2861 = vdwg.mxu0
  %v2863 = vsel %vm1459, %v2288, 0
  %v2866 = vand.u32 %v143, %v2313
  %2868 = vmatpush.bf16.msra.mxu0 0
  %2869 = vmatpush.bf16.msra.mxu0 0
  %2870 = vmatpush.bf16.msra.mxu0 0
  %2871 = vmatpush.bf16.msra.mxu0 0
  %2872 = vmatpush.bf16.msra.mxu0 0
  %2873 = vmatpush.bf16.msra.mxu0 0
  %2874 = vmatpush.bf16.msra.mxu0 0
  %2875 = vmatpush.bf16.msra.mxu0 %v2866
  %2876 = vmatmul.bf16.gmra.mxu0 %v2863
  %v2877 = vpop.f32.mrf.mxu0
  %v2878 = vadd.f32 0.0, %v2877
  %v2879 = vpop.f32.mrf.mxu0
  %2880 = vdwg.mxu0
  %v2882 = vsel %vm1459, %v2289, 0
  %v2885 = vand.u32 %v144, %v2313
  %2887 = vmatpush.bf16.msra.mxu0 0
  %2888 = vmatpush.bf16.msra.mxu0 0
  %2889 = vmatpush.bf16.msra.mxu0 0
  %2890 = vmatpush.bf16.msra.mxu0 0
  %2891 = vmatpush.bf16.msra.mxu0 0
  %2892 = vmatpush.bf16.msra.mxu0 0
  %2893 = vmatpush.bf16.msra.mxu0 0
  %2894 = vmatpush.bf16.msra.mxu0 %v2885
  %2895 = vmatmul.bf16.gmra.mxu0 %v2882
  %v2896 = vpop.f32.mrf.mxu0
  %v2897 = vadd.f32 0.0, %v2896
  %v2898 = vpop.f32.mrf.mxu0
  %2899 = vdwg.mxu0
  %v2901 = vsel %vm1459, %v2290, 0
  %v2904 = vand.u32 %v145, %v2313
  %2906 = vmatpush.bf16.msra.mxu0 0
  %2907 = vmatpush.bf16.msra.mxu0 0
  %2908 = vmatpush.bf16.msra.mxu0 0
  %2909 = vmatpush.bf16.msra.mxu0 0
  %2910 = vmatpush.bf16.msra.mxu0 0
  %2911 = vmatpush.bf16.msra.mxu0 0
  %2912 = vmatpush.bf16.msra.mxu0 0
  %2913 = vmatpush.bf16.msra.mxu0 %v2904
  %2914 = vmatmul.bf16.gmra.mxu0 %v2901
  %v2915 = vpop.f32.mrf.mxu0
  %v2916 = vadd.f32 0.0, %v2915
  %v2917 = vpop.f32.mrf.mxu0
  %2918 = vdwg.mxu0
  %v2920 = vsel %vm1459, %v2291, 0
  %v2923 = vand.u32 %v146, %v2313
  %2925 = vmatpush.bf16.msra.mxu0 0
  %2926 = vmatpush.bf16.msra.mxu0 0
  %2927 = vmatpush.bf16.msra.mxu0 0
  %2928 = vmatpush.bf16.msra.mxu0 0
  %2929 = vmatpush.bf16.msra.mxu0 0
  %2930 = vmatpush.bf16.msra.mxu0 0
  %2931 = vmatpush.bf16.msra.mxu0 0
  %2932 = vmatpush.bf16.msra.mxu0 %v2923
  %2933 = vmatmul.bf16.gmra.mxu0 %v2920
  %v2934 = vpop.f32.mrf.mxu0
  %v2935 = vadd.f32 0.0, %v2934
  %v2936 = vpop.f32.mrf.mxu0
  %2937 = vdwg.mxu0
  %v2939 = vsel %vm1459, %v2292, 0
  %v2942 = vand.u32 %v147, %v2313
  %2944 = vmatpush.bf16.msra.mxu0 0
  %2945 = vmatpush.bf16.msra.mxu0 0
  %2946 = vmatpush.bf16.msra.mxu0 0
  %2947 = vmatpush.bf16.msra.mxu0 0
  %2948 = vmatpush.bf16.msra.mxu0 0
  %2949 = vmatpush.bf16.msra.mxu0 0
  %2950 = vmatpush.bf16.msra.mxu0 0
  %2951 = vmatpush.bf16.msra.mxu0 %v2942
  %2952 = vmatmul.bf16.gmra.mxu0 %v2939
  %v2953 = vpop.f32.mrf.mxu0
  %v2954 = vadd.f32 0.0, %v2953
  %v2955 = vpop.f32.mrf.mxu0
  %2956 = vdwg.mxu0
  %v2958 = vsel %vm1459, %v2293, 0
  %v2961 = vand.u32 %v148, %v2313
  %2963 = vmatpush.bf16.msra.mxu0 0
  %2964 = vmatpush.bf16.msra.mxu0 0
  %2965 = vmatpush.bf16.msra.mxu0 0
  %2966 = vmatpush.bf16.msra.mxu0 0
  %2967 = vmatpush.bf16.msra.mxu0 0
  %2968 = vmatpush.bf16.msra.mxu0 0
  %2969 = vmatpush.bf16.msra.mxu0 0
  %2970 = vmatpush.bf16.msra.mxu0 %v2961
  %2971 = vmatmul.bf16.gmra.mxu0 %v2958
  %v2972 = vpop.f32.mrf.mxu0
  %v2973 = vadd.f32 0.0, %v2972
  %v2974 = vpop.f32.mrf.mxu0
  %2975 = vdwg.mxu0
  %v2977 = vsel %vm1459, %v2294, 0
  %v2980 = vand.u32 %v149, %v2313
  %2982 = vmatpush.bf16.msra.mxu0 0
  %2983 = vmatpush.bf16.msra.mxu0 0
  %2984 = vmatpush.bf16.msra.mxu0 0
  %2985 = vmatpush.bf16.msra.mxu0 0
  %2986 = vmatpush.bf16.msra.mxu0 0
  %2987 = vmatpush.bf16.msra.mxu0 0
  %2988 = vmatpush.bf16.msra.mxu0 0
  %2989 = vmatpush.bf16.msra.mxu0 %v2980
  %2990 = vmatmul.bf16.gmra.mxu0 %v2977
  %v2991 = vpop.f32.mrf.mxu0
  %v2992 = vadd.f32 0.0, %v2991
  %v2993 = vpop.f32.mrf.mxu0
  %2994 = vdwg.mxu0
  %v2996 = vsel %vm1459, %v2295, 0
  %v2999 = vand.u32 %v150, %v2313
  %3001 = vmatpush.bf16.msra.mxu0 0
  %3002 = vmatpush.bf16.msra.mxu0 0
  %3003 = vmatpush.bf16.msra.mxu0 0
  %3004 = vmatpush.bf16.msra.mxu0 0
  %3005 = vmatpush.bf16.msra.mxu0 0
  %3006 = vmatpush.bf16.msra.mxu0 0
  %3007 = vmatpush.bf16.msra.mxu0 0
  %3008 = vmatpush.bf16.msra.mxu0 %v2999
  %3009 = vmatmul.bf16.gmra.mxu0 %v2996
  %v3010 = vpop.f32.mrf.mxu0
  %v3011 = vadd.f32 0.0, %v3010
  %v3012 = vpop.f32.mrf.mxu0
  %3013 = vdwg.mxu0
  %v3015 = vsel %vm1459, %v2296, 0
  %v3018 = vand.u32 %v151, %v2313
  %3020 = vmatpush.bf16.msra.mxu0 0
  %3021 = vmatpush.bf16.msra.mxu0 0
  %3022 = vmatpush.bf16.msra.mxu0 0
  %3023 = vmatpush.bf16.msra.mxu0 0
  %3024 = vmatpush.bf16.msra.mxu0 0
  %3025 = vmatpush.bf16.msra.mxu0 0
  %3026 = vmatpush.bf16.msra.mxu0 0
  %3027 = vmatpush.bf16.msra.mxu0 %v3018
  %3028 = vmatmul.bf16.gmra.mxu0 %v3015
  %v3029 = vpop.f32.mrf.mxu0
  %v3030 = vadd.f32 0.0, %v3029
  %v3031 = vpop.f32.mrf.mxu0
  %3032 = vdwg.mxu0
  %v3034 = vsel %vm1459, %v2297, 0
  %v3037 = vand.u32 %v152, %v2313
  %3039 = vmatpush.bf16.msra.mxu0 0
  %3040 = vmatpush.bf16.msra.mxu0 0
  %3041 = vmatpush.bf16.msra.mxu0 0
  %3042 = vmatpush.bf16.msra.mxu0 0
  %3043 = vmatpush.bf16.msra.mxu0 0
  %3044 = vmatpush.bf16.msra.mxu0 0
  %3045 = vmatpush.bf16.msra.mxu0 0
  %3046 = vmatpush.bf16.msra.mxu0 %v3037
  %3047 = vmatmul.bf16.gmra.mxu0 %v3034
  %v3048 = vpop.f32.mrf.mxu0
  %v3049 = vadd.f32 0.0, %v3048
  %v3050 = vpop.f32.mrf.mxu0
  %3051 = vdwg.mxu0
  %v3053 = vsel %vm1459, %v2298, 0
  %v3056 = vand.u32 %v153, %v2313
  %3058 = vmatpush.bf16.msra.mxu0 0
  %3059 = vmatpush.bf16.msra.mxu0 0
  %3060 = vmatpush.bf16.msra.mxu0 0
  %3061 = vmatpush.bf16.msra.mxu0 0
  %3062 = vmatpush.bf16.msra.mxu0 0
  %3063 = vmatpush.bf16.msra.mxu0 0
  %3064 = vmatpush.bf16.msra.mxu0 0
  %3065 = vmatpush.bf16.msra.mxu0 %v3056
  %3066 = vmatmul.bf16.gmra.mxu0 %v3053
  %v3067 = vpop.f32.mrf.mxu0
  %v3068 = vadd.f32 0.0, %v3067
  %v3069 = vpop.f32.mrf.mxu0
  %3070 = vdwg.mxu0
  %v3072 = vsel %vm1459, %v2299, 0
  %v3075 = vand.u32 %v154, %v2313
  %3077 = vmatpush.bf16.msra.mxu0 0
  %3078 = vmatpush.bf16.msra.mxu0 0
  %3079 = vmatpush.bf16.msra.mxu0 0
  %3080 = vmatpush.bf16.msra.mxu0 0
  %3081 = vmatpush.bf16.msra.mxu0 0
  %3082 = vmatpush.bf16.msra.mxu0 0
  %3083 = vmatpush.bf16.msra.mxu0 0
  %3084 = vmatpush.bf16.msra.mxu0 %v3075
  %3085 = vmatmul.bf16.gmra.mxu0 %v3072
  %v3086 = vpop.f32.mrf.mxu0
  %v3087 = vadd.f32 0.0, %v3086
  %v3088 = vpop.f32.mrf.mxu0
  %3089 = vdwg.mxu0
  %v3091 = vsel %vm1459, %v2300, 0
  %v3094 = vand.u32 %v155, %v2313
  %3096 = vmatpush.bf16.msra.mxu0 0
  %3097 = vmatpush.bf16.msra.mxu0 0
  %3098 = vmatpush.bf16.msra.mxu0 0
  %3099 = vmatpush.bf16.msra.mxu0 0
  %3100 = vmatpush.bf16.msra.mxu0 0
  %3101 = vmatpush.bf16.msra.mxu0 0
  %3102 = vmatpush.bf16.msra.mxu0 0
  %3103 = vmatpush.bf16.msra.mxu0 %v3094
  %3104 = vmatmul.bf16.gmra.mxu0 %v3091
  %v3105 = vpop.f32.mrf.mxu0
  %v3106 = vadd.f32 0.0, %v3105
  %v3107 = vpop.f32.mrf.mxu0
  %3108 = vdwg.mxu0
  %v3110 = vsel %vm1459, %v2301, 0
  %v3113 = vand.u32 %v156, %v2313
  %3115 = vmatpush.bf16.msra.mxu0 0
  %3116 = vmatpush.bf16.msra.mxu0 0
  %3117 = vmatpush.bf16.msra.mxu0 0
  %3118 = vmatpush.bf16.msra.mxu0 0
  %3119 = vmatpush.bf16.msra.mxu0 0
  %3120 = vmatpush.bf16.msra.mxu0 0
  %3121 = vmatpush.bf16.msra.mxu0 0
  %3122 = vmatpush.bf16.msra.mxu0 %v3113
  %3123 = vmatmul.bf16.gmra.mxu0 %v3110
  %v3124 = vpop.f32.mrf.mxu0
  %v3125 = vadd.f32 0.0, %v3124
  %v3126 = vpop.f32.mrf.mxu0
  %3127 = vdwg.mxu0
  %v3129 = vsel %vm1459, %v2302, 0
  %v3132 = vand.u32 %v157, %v2313
  %3134 = vmatpush.bf16.msra.mxu0 0
  %3135 = vmatpush.bf16.msra.mxu0 0
  %3136 = vmatpush.bf16.msra.mxu0 0
  %3137 = vmatpush.bf16.msra.mxu0 0
  %3138 = vmatpush.bf16.msra.mxu0 0
  %3139 = vmatpush.bf16.msra.mxu0 0
  %3140 = vmatpush.bf16.msra.mxu0 0
  %3141 = vmatpush.bf16.msra.mxu0 %v3132
  %3142 = vmatmul.bf16.gmra.mxu0 %v3129
  %v3143 = vpop.f32.mrf.mxu0
  %v3144 = vadd.f32 0.0, %v3143
  %v3145 = vpop.f32.mrf.mxu0
  %3146 = vdwg.mxu0
  %v3148 = vsel %vm1459, %v2303, 0
  %v3151 = vand.u32 %v158, %v2313
  %3153 = vmatpush.bf16.msra.mxu0 0
  %3154 = vmatpush.bf16.msra.mxu0 0
  %3155 = vmatpush.bf16.msra.mxu0 0
  %3156 = vmatpush.bf16.msra.mxu0 0
  %3157 = vmatpush.bf16.msra.mxu0 0
  %3158 = vmatpush.bf16.msra.mxu0 0
  %3159 = vmatpush.bf16.msra.mxu0 0
  %3160 = vmatpush.bf16.msra.mxu0 %v3151
  %3161 = vmatmul.bf16.gmra.mxu0 %v3148
  %v3162 = vpop.f32.mrf.mxu0
  %v3163 = vadd.f32 0.0, %v3162
  %v3164 = vpop.f32.mrf.mxu0
  %3165 = vdwg.mxu0
  %v3167 = vsel %vm1459, %v2304, 0
  %v3170 = vand.u32 %v159, %v2313
  %3172 = vmatpush.bf16.msra.mxu0 0
  %3173 = vmatpush.bf16.msra.mxu0 0
  %3174 = vmatpush.bf16.msra.mxu0 0
  %3175 = vmatpush.bf16.msra.mxu0 0
  %3176 = vmatpush.bf16.msra.mxu0 0
  %3177 = vmatpush.bf16.msra.mxu0 0
  %3178 = vmatpush.bf16.msra.mxu0 0
  %3179 = vmatpush.bf16.msra.mxu0 %v3170
  %3180 = vmatmul.bf16.gmra.mxu0 %v3167
  %v3181 = vpop.f32.mrf.mxu0
  %v3182 = vadd.f32 0.0, %v3181
  %v3183 = vpop.f32.mrf.mxu0
  %3184 = vdwg.mxu0
  %v3186 = vsel %vm1459, %v2305, 0
  %v3189 = vand.u32 %v160, %v2313
  %3191 = vmatpush.bf16.msra.mxu0 0
  %3192 = vmatpush.bf16.msra.mxu0 0
  %3193 = vmatpush.bf16.msra.mxu0 0
  %3194 = vmatpush.bf16.msra.mxu0 0
  %3195 = vmatpush.bf16.msra.mxu0 0
  %3196 = vmatpush.bf16.msra.mxu0 0
  %3197 = vmatpush.bf16.msra.mxu0 0
  %3198 = vmatpush.bf16.msra.mxu0 %v3189
  %3199 = vmatmul.bf16.gmra.mxu0 %v3186
  %v3200 = vpop.f32.mrf.mxu0
  %v3201 = vadd.f32 0.0, %v3200
  %v3202 = vpop.f32.mrf.mxu0
  %3203 = vdwg.mxu0
  %v3205 = vsel %vm1459, %v2306, 0
  %v3208 = vand.u32 %v161, %v2313
  %3210 = vmatpush.bf16.msra.mxu0 0
  %3211 = vmatpush.bf16.msra.mxu0 0
  %3212 = vmatpush.bf16.msra.mxu0 0
  %3213 = vmatpush.bf16.msra.mxu0 0
  %3214 = vmatpush.bf16.msra.mxu0 0
  %3215 = vmatpush.bf16.msra.mxu0 0
  %3216 = vmatpush.bf16.msra.mxu0 0
  %3217 = vmatpush.bf16.msra.mxu0 %v3208
  %3218 = vmatmul.bf16.gmra.mxu0 %v3205
  %v3219 = vpop.f32.mrf.mxu0
  %v3220 = vadd.f32 0.0, %v3219
  %v3221 = vpop.f32.mrf.mxu0
  %3222 = vdwg.mxu0
  %v3223 = vperm.slane %v162, 0
  %v3224 = vlaneseq
  %v3225 = vshrl.u32 %v3224, 7
  %3227 = vset.pattern.permute.xlu0 %v3225
  %3228 = vperm.xlu0 %3227, %v3223
  %v3229 = vpop.permute.xlu0 %3228
  %v3230 = vperm.slane %v162, 1
  %v3231 = vlaneseq
  %v3232 = vshrl.u32 %v3231, 7
  %3234 = vset.pattern.permute.xlu0 %v3232
  %3235 = vperm.xlu0 %3234, %v3230
  %v3236 = vpop.permute.xlu0 %3235
  %v3237 = vperm.slane %v162, 2
  %v3238 = vlaneseq
  %v3239 = vshrl.u32 %v3238, 7
  %3241 = vset.pattern.permute.xlu0 %v3239
  %3242 = vperm.xlu0 %3241, %v3237
  %v3243 = vpop.permute.xlu0 %3242
  %v3244 = vperm.slane %v162, 3
  %v3245 = vlaneseq
  %v3246 = vshrl.u32 %v3245, 7
  %3248 = vset.pattern.permute.xlu0 %v3246
  %3249 = vperm.xlu0 %3248, %v3244
  %v3250 = vpop.permute.xlu0 %3249
  %v3251 = vperm.slane %v162, 4
  %v3252 = vlaneseq
  %v3253 = vshrl.u32 %v3252, 7
  %3255 = vset.pattern.permute.xlu0 %v3253
  %3256 = vperm.xlu0 %3255, %v3251
  %v3257 = vpop.permute.xlu0 %3256
  %v3258 = vperm.slane %v162, 5
  %v3259 = vlaneseq
  %v3260 = vshrl.u32 %v3259, 7
  %3262 = vset.pattern.permute.xlu0 %v3260
  %3263 = vperm.xlu0 %3262, %v3258
  %v3264 = vpop.permute.xlu0 %3263
  %v3265 = vperm.slane %v162, 6
  %v3266 = vlaneseq
  %v3267 = vshrl.u32 %v3266, 7
  %3269 = vset.pattern.permute.xlu0 %v3267
  %3270 = vperm.xlu0 %3269, %v3265
  %v3271 = vpop.permute.xlu0 %3270
  %v3272 = vperm.slane %v162, 7
  %v3273 = vlaneseq
  %v3274 = vshrl.u32 %v3273, 7
  %3276 = vset.pattern.permute.xlu0 %v3274
  %3277 = vperm.xlu0 %3276, %v3272
  %v3278 = vpop.permute.xlu0 %3277
  %v3279 = vperm.slane %v163, 0
  %v3280 = vlaneseq
  %v3281 = vshrl.u32 %v3280, 7
  %3283 = vset.pattern.permute.xlu0 %v3281
  %3284 = vperm.xlu0 %3283, %v3279
  %v3285 = vpop.permute.xlu0 %3284
  %v3286 = vperm.slane %v163, 1
  %v3287 = vlaneseq
  %v3288 = vshrl.u32 %v3287, 7
  %3290 = vset.pattern.permute.xlu0 %v3288
  %3291 = vperm.xlu0 %3290, %v3286
  %v3292 = vpop.permute.xlu0 %3291
  %v3293 = vperm.slane %v163, 2
  %v3294 = vlaneseq
  %v3295 = vshrl.u32 %v3294, 7
  %3297 = vset.pattern.permute.xlu0 %v3295
  %3298 = vperm.xlu0 %3297, %v3293
  %v3299 = vpop.permute.xlu0 %3298
  %v3300 = vperm.slane %v163, 3
  %v3301 = vlaneseq
  %v3302 = vshrl.u32 %v3301, 7
  %3304 = vset.pattern.permute.xlu0 %v3302
  %3305 = vperm.xlu0 %3304, %v3300
  %v3306 = vpop.permute.xlu0 %3305
  %v3307 = vperm.slane %v163, 4
  %v3308 = vlaneseq
  %v3309 = vshrl.u32 %v3308, 7
  %3311 = vset.pattern.permute.xlu0 %v3309
  %3312 = vperm.xlu0 %3311, %v3307
  %v3313 = vpop.permute.xlu0 %3312
  %v3314 = vperm.slane %v163, 5
  %v3315 = vlaneseq
  %v3316 = vshrl.u32 %v3315, 7
  %3318 = vset.pattern.permute.xlu0 %v3316
  %3319 = vperm.xlu0 %3318, %v3314
  %v3320 = vpop.permute.xlu0 %3319
  %v3321 = vperm.slane %v163, 6
  %v3322 = vlaneseq
  %v3323 = vshrl.u32 %v3322, 7
  %3325 = vset.pattern.permute.xlu0 %v3323
  %3326 = vperm.xlu0 %3325, %v3321
  %v3327 = vpop.permute.xlu0 %3326
  %v3328 = vperm.slane %v163, 7
  %v3329 = vlaneseq
  %v3330 = vshrl.u32 %v3329, 7
  %3332 = vset.pattern.permute.xlu0 %v3330
  %3333 = vperm.xlu0 %3332, %v3328
  %v3334 = vpop.permute.xlu0 %3333
  %v3335 = vperm.slane %v164, 0
  %v3336 = vlaneseq
  %v3337 = vshrl.u32 %v3336, 7
  %3339 = vset.pattern.permute.xlu0 %v3337
  %3340 = vperm.xlu0 %3339, %v3335
  %v3341 = vpop.permute.xlu0 %3340
  %v3342 = vperm.slane %v164, 1
  %v3343 = vlaneseq
  %v3344 = vshrl.u32 %v3343, 7
  %3346 = vset.pattern.permute.xlu0 %v3344
  %3347 = vperm.xlu0 %3346, %v3342
  %v3348 = vpop.permute.xlu0 %3347
  %v3349 = vperm.slane %v164, 2
  %v3350 = vlaneseq
  %v3351 = vshrl.u32 %v3350, 7
  %3353 = vset.pattern.permute.xlu0 %v3351
  %3354 = vperm.xlu0 %3353, %v3349
  %v3355 = vpop.permute.xlu0 %3354
  %v3356 = vperm.slane %v164, 3
  %v3357 = vlaneseq
  %v3358 = vshrl.u32 %v3357, 7
  %3360 = vset.pattern.permute.xlu0 %v3358
  %3361 = vperm.xlu0 %3360, %v3356
  %v3362 = vpop.permute.xlu0 %3361
  %v3363 = vperm.slane %v164, 4
  %v3364 = vlaneseq
  %v3365 = vshrl.u32 %v3364, 7
  %3367 = vset.pattern.permute.xlu0 %v3365
  %3368 = vperm.xlu0 %3367, %v3363
  %v3369 = vpop.permute.xlu0 %3368
  %v3370 = vperm.slane %v164, 5
  %v3371 = vlaneseq
  %v3372 = vshrl.u32 %v3371, 7
  %3374 = vset.pattern.permute.xlu0 %v3372
  %3375 = vperm.xlu0 %3374, %v3370
  %v3376 = vpop.permute.xlu0 %3375
  %v3377 = vperm.slane %v164, 6
  %v3378 = vlaneseq
  %v3379 = vshrl.u32 %v3378, 7
  %3381 = vset.pattern.permute.xlu0 %v3379
  %3382 = vperm.xlu0 %3381, %v3377
  %v3383 = vpop.permute.xlu0 %3382
  %v3384 = vperm.slane %v164, 7
  %v3385 = vlaneseq
  %v3386 = vshrl.u32 %v3385, 7
  %3388 = vset.pattern.permute.xlu0 %v3386
  %3389 = vperm.xlu0 %3388, %v3384
  %v3390 = vpop.permute.xlu0 %3389
  %v3391 = vperm.slane %v165, 0
  %v3392 = vlaneseq
  %v3393 = vshrl.u32 %v3392, 7
  %3395 = vset.pattern.permute.xlu0 %v3393
  %3396 = vperm.xlu0 %3395, %v3391
  %v3397 = vpop.permute.xlu0 %3396
  %v3398 = vperm.slane %v165, 1
  %v3399 = vlaneseq
  %v3400 = vshrl.u32 %v3399, 7
  %3402 = vset.pattern.permute.xlu0 %v3400
  %3403 = vperm.xlu0 %3402, %v3398
  %v3404 = vpop.permute.xlu0 %3403
  %v3405 = vperm.slane %v165, 2
  %v3406 = vlaneseq
  %v3407 = vshrl.u32 %v3406, 7
  %3409 = vset.pattern.permute.xlu0 %v3407
  %3410 = vperm.xlu0 %3409, %v3405
  %v3411 = vpop.permute.xlu0 %3410
  %v3412 = vperm.slane %v165, 3
  %v3413 = vlaneseq
  %v3414 = vshrl.u32 %v3413, 7
  %3416 = vset.pattern.permute.xlu0 %v3414
  %3417 = vperm.xlu0 %3416, %v3412
  %v3418 = vpop.permute.xlu0 %3417
  %v3419 = vperm.slane %v165, 4
  %v3420 = vlaneseq
  %v3421 = vshrl.u32 %v3420, 7
  %3423 = vset.pattern.permute.xlu0 %v3421
  %3424 = vperm.xlu0 %3423, %v3419
  %v3425 = vpop.permute.xlu0 %3424
  %v3426 = vperm.slane %v165, 5
  %v3427 = vlaneseq
  %v3428 = vshrl.u32 %v3427, 7
  %3430 = vset.pattern.permute.xlu0 %v3428
  %3431 = vperm.xlu0 %3430, %v3426
  %v3432 = vpop.permute.xlu0 %3431
  %v3433 = vperm.slane %v165, 6
  %v3434 = vlaneseq
  %v3435 = vshrl.u32 %v3434, 7
  %3437 = vset.pattern.permute.xlu0 %v3435
  %3438 = vperm.xlu0 %3437, %v3433
  %v3439 = vpop.permute.xlu0 %3438
  %v3440 = vperm.slane %v165, 7
  %v3441 = vlaneseq
  %v3442 = vshrl.u32 %v3441, 7
  %3444 = vset.pattern.permute.xlu0 %v3442
  %3445 = vperm.xlu0 %3444, %v3440
  %v3446 = vpop.permute.xlu0 %3445
  %v3447 = vperm.slane %v166, 0
  %v3448 = vlaneseq
  %v3449 = vshrl.u32 %v3448, 7
  %3451 = vset.pattern.permute.xlu0 %v3449
  %3452 = vperm.xlu0 %3451, %v3447
  %v3453 = vpop.permute.xlu0 %3452
  %v3454 = vperm.slane %v166, 1
  %v3455 = vlaneseq
  %v3456 = vshrl.u32 %v3455, 7
  %3458 = vset.pattern.permute.xlu0 %v3456
  %3459 = vperm.xlu0 %3458, %v3454
  %v3460 = vpop.permute.xlu0 %3459
  %v3461 = vperm.slane %v166, 2
  %v3462 = vlaneseq
  %v3463 = vshrl.u32 %v3462, 7
  %3465 = vset.pattern.permute.xlu0 %v3463
  %3466 = vperm.xlu0 %3465, %v3461
  %v3467 = vpop.permute.xlu0 %3466
  %v3468 = vperm.slane %v166, 3
  %v3469 = vlaneseq
  %v3470 = vshrl.u32 %v3469, 7
  %3472 = vset.pattern.permute.xlu0 %v3470
  %3473 = vperm.xlu0 %3472, %v3468
  %v3474 = vpop.permute.xlu0 %3473
  %v3475 = vperm.slane %v166, 4
  %v3476 = vlaneseq
  %v3477 = vshrl.u32 %v3476, 7
  %3479 = vset.pattern.permute.xlu0 %v3477
  %3480 = vperm.xlu0 %3479, %v3475
  %v3481 = vpop.permute.xlu0 %3480
  %v3482 = vperm.slane %v166, 5
  %v3483 = vlaneseq
  %v3484 = vshrl.u32 %v3483, 7
  %3486 = vset.pattern.permute.xlu0 %v3484
  %3487 = vperm.xlu0 %3486, %v3482
  %v3488 = vpop.permute.xlu0 %3487
  %v3489 = vperm.slane %v166, 6
  %v3490 = vlaneseq
  %v3491 = vshrl.u32 %v3490, 7
  %3493 = vset.pattern.permute.xlu0 %v3491
  %3494 = vperm.xlu0 %3493, %v3489
  %v3495 = vpop.permute.xlu0 %3494
  %v3496 = vperm.slane %v166, 7
  %v3497 = vlaneseq
  %v3498 = vshrl.u32 %v3497, 7
  %3500 = vset.pattern.permute.xlu0 %v3498
  %3501 = vperm.xlu0 %3500, %v3496
  %v3502 = vpop.permute.xlu0 %3501
  %v3503 = vperm.slane %v167, 0
  %v3504 = vlaneseq
  %v3505 = vshrl.u32 %v3504, 7
  %3507 = vset.pattern.permute.xlu0 %v3505
  %3508 = vperm.xlu0 %3507, %v3503
  %v3509 = vpop.permute.xlu0 %3508
  %v3510 = vperm.slane %v167, 1
  %v3511 = vlaneseq
  %v3512 = vshrl.u32 %v3511, 7
  %3514 = vset.pattern.permute.xlu0 %v3512
  %3515 = vperm.xlu0 %3514, %v3510
  %v3516 = vpop.permute.xlu0 %3515
  %v3517 = vperm.slane %v167, 2
  %v3518 = vlaneseq
  %v3519 = vshrl.u32 %v3518, 7
  %3521 = vset.pattern.permute.xlu0 %v3519
  %3522 = vperm.xlu0 %3521, %v3517
  %v3523 = vpop.permute.xlu0 %3522
  %v3524 = vperm.slane %v167, 3
  %v3525 = vlaneseq
  %v3526 = vshrl.u32 %v3525, 7
  %3528 = vset.pattern.permute.xlu0 %v3526
  %3529 = vperm.xlu0 %3528, %v3524
  %v3530 = vpop.permute.xlu0 %3529
  %v3531 = vperm.slane %v167, 4
  %v3532 = vlaneseq
  %v3533 = vshrl.u32 %v3532, 7
  %3535 = vset.pattern.permute.xlu0 %v3533
  %3536 = vperm.xlu0 %3535, %v3531
  %v3537 = vpop.permute.xlu0 %3536
  %v3538 = vperm.slane %v167, 5
  %v3539 = vlaneseq
  %v3540 = vshrl.u32 %v3539, 7
  %3542 = vset.pattern.permute.xlu0 %v3540
  %3543 = vperm.xlu0 %3542, %v3538
  %v3544 = vpop.permute.xlu0 %3543
  %v3545 = vperm.slane %v167, 6
  %v3546 = vlaneseq
  %v3547 = vshrl.u32 %v3546, 7
  %3549 = vset.pattern.permute.xlu0 %v3547
  %3550 = vperm.xlu0 %3549, %v3545
  %v3551 = vpop.permute.xlu0 %3550
  %v3552 = vperm.slane %v167, 7
  %v3553 = vlaneseq
  %v3554 = vshrl.u32 %v3553, 7
  %3556 = vset.pattern.permute.xlu0 %v3554
  %3557 = vperm.xlu0 %3556, %v3552
  %v3558 = vpop.permute.xlu0 %3557
  %v3559 = vmul.f32 %v2327, %v3229
  %v3560 = vmul.f32 %v2346, %v3236
  %v3561 = vmul.f32 %v2365, %v3243
  %v3562 = vmul.f32 %v2384, %v3250
  %v3563 = vmul.f32 %v2403, %v3257
  %v3564 = vmul.f32 %v2422, %v3264
  %v3565 = vmul.f32 %v2441, %v3271
  %v3566 = vmul.f32 %v2460, %v3278
  %v3567 = vmul.f32 %v2479, %v3285
  %v3568 = vmul.f32 %v2498, %v3292
  %v3569 = vmul.f32 %v2517, %v3299
  %v3570 = vmul.f32 %v2536, %v3306
  %v3571 = vmul.f32 %v2555, %v3313
  %v3572 = vmul.f32 %v2574, %v3320
  %v3573 = vmul.f32 %v2593, %v3327
  %v3574 = vmul.f32 %v2612, %v3334
  %v3575 = vmul.f32 %v2631, %v3341
  %v3576 = vmul.f32 %v2650, %v3348
  %v3577 = vmul.f32 %v2669, %v3355
  %v3578 = vmul.f32 %v2688, %v3362
  %v3579 = vmul.f32 %v2707, %v3369
  %v3580 = vmul.f32 %v2726, %v3376
  %v3581 = vmul.f32 %v2745, %v3383
  %v3582 = vmul.f32 %v2764, %v3390
  %v3583 = vmul.f32 %v2783, %v3397
  %v3584 = vmul.f32 %v2802, %v3404
  %v3585 = vmul.f32 %v2821, %v3411
  %v3586 = vmul.f32 %v2840, %v3418
  %v3587 = vmul.f32 %v2859, %v3425
  %v3588 = vmul.f32 %v2878, %v3432
  %v3589 = vmul.f32 %v2897, %v3439
  %v3590 = vmul.f32 %v2916, %v3446
  %v3591 = vmul.f32 %v2935, %v3453
  %v3592 = vmul.f32 %v2954, %v3460
  %v3593 = vmul.f32 %v2973, %v3467
  %v3594 = vmul.f32 %v2992, %v3474
  %v3595 = vmul.f32 %v3011, %v3481
  %v3596 = vmul.f32 %v3030, %v3488
  %v3597 = vmul.f32 %v3049, %v3495
  %v3598 = vmul.f32 %v3068, %v3502
  %v3599 = vmul.f32 %v3087, %v3509
  %v3600 = vmul.f32 %v3106, %v3516
  %v3601 = vmul.f32 %v3125, %v3523
  %v3602 = vmul.f32 %v3144, %v3530
  %v3603 = vmul.f32 %v3163, %v3537
  %v3604 = vmul.f32 %v3182, %v3544
  %v3605 = vmul.f32 %v3201, %v3551
  %v3606 = vmul.f32 %v3220, %v3558
  %vm3607 = vcmask 61440
  %v3608 = vsel %vm3607, %v3559, 0.0
  %v3609 = vrot.slane %v3608, 4
  %v3610 = vadd.f32 %v3608, %v3609
  %v3611 = vrot.slane %v3610, 2
  %v3612 = vadd.f32 %v3610, %v3611
  %v3613 = vrot.slane %v3612, 1
  %v3614 = vadd.f32 %v3612, %v3613
  %v3615 = vsel %vm3607, %v3560, 0.0
  %v3616 = vrot.slane %v3615, 4
  %v3617 = vadd.f32 %v3615, %v3616
  %v3618 = vrot.slane %v3617, 2
  %v3619 = vadd.f32 %v3617, %v3618
  %v3620 = vrot.slane %v3619, 1
  %v3621 = vadd.f32 %v3619, %v3620
  %v3622 = vsel %vm3607, %v3561, 0.0
  %v3623 = vrot.slane %v3622, 4
  %v3624 = vadd.f32 %v3622, %v3623
  %v3625 = vrot.slane %v3624, 2
  %v3626 = vadd.f32 %v3624, %v3625
  %v3627 = vrot.slane %v3626, 1
  %v3628 = vadd.f32 %v3626, %v3627
  %v3629 = vsel %vm3607, %v3562, 0.0
  %v3630 = vrot.slane %v3629, 4
  %v3631 = vadd.f32 %v3629, %v3630
  %v3632 = vrot.slane %v3631, 2
  %v3633 = vadd.f32 %v3631, %v3632
  %v3634 = vrot.slane %v3633, 1
  %v3635 = vadd.f32 %v3633, %v3634
  %v3636 = vsel %vm3607, %v3563, 0.0
  %v3637 = vrot.slane %v3636, 4
  %v3638 = vadd.f32 %v3636, %v3637
  %v3639 = vrot.slane %v3638, 2
  %v3640 = vadd.f32 %v3638, %v3639
  %v3641 = vrot.slane %v3640, 1
  %v3642 = vadd.f32 %v3640, %v3641
  %v3643 = vsel %vm3607, %v3564, 0.0
  %v3644 = vrot.slane %v3643, 4
  %v3645 = vadd.f32 %v3643, %v3644
  %v3646 = vrot.slane %v3645, 2
  %v3647 = vadd.f32 %v3645, %v3646
  %v3648 = vrot.slane %v3647, 1
  %v3649 = vadd.f32 %v3647, %v3648
  %v3650 = vsel %vm3607, %v3565, 0.0
  %v3651 = vrot.slane %v3650, 4
  %v3652 = vadd.f32 %v3650, %v3651
  %v3653 = vrot.slane %v3652, 2
  %v3654 = vadd.f32 %v3652, %v3653
  %v3655 = vrot.slane %v3654, 1
  %v3656 = vadd.f32 %v3654, %v3655
  %v3657 = vsel %vm3607, %v3566, 0.0
  %v3658 = vrot.slane %v3657, 4
  %v3659 = vadd.f32 %v3657, %v3658
  %v3660 = vrot.slane %v3659, 2
  %v3661 = vadd.f32 %v3659, %v3660
  %v3662 = vrot.slane %v3661, 1
  %v3663 = vadd.f32 %v3661, %v3662
  %v3664 = vsel %vm3607, %v3567, 0.0
  %v3665 = vrot.slane %v3664, 4
  %v3666 = vadd.f32 %v3664, %v3665
  %v3667 = vrot.slane %v3666, 2
  %v3668 = vadd.f32 %v3666, %v3667
  %v3669 = vrot.slane %v3668, 1
  %v3670 = vadd.f32 %v3668, %v3669
  %v3671 = vsel %vm3607, %v3568, 0.0
  %v3672 = vrot.slane %v3671, 4
  %v3673 = vadd.f32 %v3671, %v3672
  %v3674 = vrot.slane %v3673, 2
  %v3675 = vadd.f32 %v3673, %v3674
  %v3676 = vrot.slane %v3675, 1
  %v3677 = vadd.f32 %v3675, %v3676
  %v3678 = vsel %vm3607, %v3569, 0.0
  %v3679 = vrot.slane %v3678, 4
  %v3680 = vadd.f32 %v3678, %v3679
  %v3681 = vrot.slane %v3680, 2
  %v3682 = vadd.f32 %v3680, %v3681
  %v3683 = vrot.slane %v3682, 1
  %v3684 = vadd.f32 %v3682, %v3683
  %v3685 = vsel %vm3607, %v3570, 0.0
  %v3686 = vrot.slane %v3685, 4
  %v3687 = vadd.f32 %v3685, %v3686
  %v3688 = vrot.slane %v3687, 2
  %v3689 = vadd.f32 %v3687, %v3688
  %v3690 = vrot.slane %v3689, 1
  %v3691 = vadd.f32 %v3689, %v3690
  %v3692 = vsel %vm3607, %v3571, 0.0
  %v3693 = vrot.slane %v3692, 4
  %v3694 = vadd.f32 %v3692, %v3693
  %v3695 = vrot.slane %v3694, 2
  %v3696 = vadd.f32 %v3694, %v3695
  %v3697 = vrot.slane %v3696, 1
  %v3698 = vadd.f32 %v3696, %v3697
  %v3699 = vsel %vm3607, %v3572, 0.0
  %v3700 = vrot.slane %v3699, 4
  %v3701 = vadd.f32 %v3699, %v3700
  %v3702 = vrot.slane %v3701, 2
  %v3703 = vadd.f32 %v3701, %v3702
  %v3704 = vrot.slane %v3703, 1
  %v3705 = vadd.f32 %v3703, %v3704
  %v3706 = vsel %vm3607, %v3573, 0.0
  %v3707 = vrot.slane %v3706, 4
  %v3708 = vadd.f32 %v3706, %v3707
  %v3709 = vrot.slane %v3708, 2
  %v3710 = vadd.f32 %v3708, %v3709
  %v3711 = vrot.slane %v3710, 1
  %v3712 = vadd.f32 %v3710, %v3711
  %v3713 = vsel %vm3607, %v3574, 0.0
  %v3714 = vrot.slane %v3713, 4
  %v3715 = vadd.f32 %v3713, %v3714
  %v3716 = vrot.slane %v3715, 2
  %v3717 = vadd.f32 %v3715, %v3716
  %v3718 = vrot.slane %v3717, 1
  %v3719 = vadd.f32 %v3717, %v3718
  %v3720 = vsel %vm3607, %v3575, 0.0
  %v3721 = vrot.slane %v3720, 4
  %v3722 = vadd.f32 %v3720, %v3721
  %v3723 = vrot.slane %v3722, 2
  %v3724 = vadd.f32 %v3722, %v3723
  %v3725 = vrot.slane %v3724, 1
  %v3726 = vadd.f32 %v3724, %v3725
  %v3727 = vsel %vm3607, %v3576, 0.0
  %v3728 = vrot.slane %v3727, 4
  %v3729 = vadd.f32 %v3727, %v3728
  %v3730 = vrot.slane %v3729, 2
  %v3731 = vadd.f32 %v3729, %v3730
  %v3732 = vrot.slane %v3731, 1
  %v3733 = vadd.f32 %v3731, %v3732
  %v3734 = vsel %vm3607, %v3577, 0.0
  %v3735 = vrot.slane %v3734, 4
  %v3736 = vadd.f32 %v3734, %v3735
  %v3737 = vrot.slane %v3736, 2
  %v3738 = vadd.f32 %v3736, %v3737
  %v3739 = vrot.slane %v3738, 1
  %v3740 = vadd.f32 %v3738, %v3739
  %v3741 = vsel %vm3607, %v3578, 0.0
  %v3742 = vrot.slane %v3741, 4
  %v3743 = vadd.f32 %v3741, %v3742
  %v3744 = vrot.slane %v3743, 2
  %v3745 = vadd.f32 %v3743, %v3744
  %v3746 = vrot.slane %v3745, 1
  %v3747 = vadd.f32 %v3745, %v3746
  %v3748 = vsel %vm3607, %v3579, 0.0
  %v3749 = vrot.slane %v3748, 4
  %v3750 = vadd.f32 %v3748, %v3749
  %v3751 = vrot.slane %v3750, 2
  %v3752 = vadd.f32 %v3750, %v3751
  %v3753 = vrot.slane %v3752, 1
  %v3754 = vadd.f32 %v3752, %v3753
  %v3755 = vsel %vm3607, %v3580, 0.0
  %v3756 = vrot.slane %v3755, 4
  %v3757 = vadd.f32 %v3755, %v3756
  %v3758 = vrot.slane %v3757, 2
  %v3759 = vadd.f32 %v3757, %v3758
  %v3760 = vrot.slane %v3759, 1
  %v3761 = vadd.f32 %v3759, %v3760
  %v3762 = vsel %vm3607, %v3581, 0.0
  %v3763 = vrot.slane %v3762, 4
  %v3764 = vadd.f32 %v3762, %v3763
  %v3765 = vrot.slane %v3764, 2
  %v3766 = vadd.f32 %v3764, %v3765
  %v3767 = vrot.slane %v3766, 1
  %v3768 = vadd.f32 %v3766, %v3767
  %v3769 = vsel %vm3607, %v3582, 0.0
  %v3770 = vrot.slane %v3769, 4
  %v3771 = vadd.f32 %v3769, %v3770
  %v3772 = vrot.slane %v3771, 2
  %v3773 = vadd.f32 %v3771, %v3772
  %v3774 = vrot.slane %v3773, 1
  %v3775 = vadd.f32 %v3773, %v3774
  %v3776 = vsel %vm3607, %v3583, 0.0
  %v3777 = vrot.slane %v3776, 4
  %v3778 = vadd.f32 %v3776, %v3777
  %v3779 = vrot.slane %v3778, 2
  %v3780 = vadd.f32 %v3778, %v3779
  %v3781 = vrot.slane %v3780, 1
  %v3782 = vadd.f32 %v3780, %v3781
  %v3783 = vsel %vm3607, %v3584, 0.0
  %v3784 = vrot.slane %v3783, 4
  %v3785 = vadd.f32 %v3783, %v3784
  %v3786 = vrot.slane %v3785, 2
  %v3787 = vadd.f32 %v3785, %v3786
  %v3788 = vrot.slane %v3787, 1
  %v3789 = vadd.f32 %v3787, %v3788
  %v3790 = vsel %vm3607, %v3585, 0.0
  %v3791 = vrot.slane %v3790, 4
  %v3792 = vadd.f32 %v3790, %v3791
  %v3793 = vrot.slane %v3792, 2
  %v3794 = vadd.f32 %v3792, %v3793
  %v3795 = vrot.slane %v3794, 1
  %v3796 = vadd.f32 %v3794, %v3795
  %v3797 = vsel %vm3607, %v3586, 0.0
  %v3798 = vrot.slane %v3797, 4
  %v3799 = vadd.f32 %v3797, %v3798
  %v3800 = vrot.slane %v3799, 2
  %v3801 = vadd.f32 %v3799, %v3800
  %v3802 = vrot.slane %v3801, 1
  %v3803 = vadd.f32 %v3801, %v3802
  %v3804 = vsel %vm3607, %v3587, 0.0
  %v3805 = vrot.slane %v3804, 4
  %v3806 = vadd.f32 %v3804, %v3805
  %v3807 = vrot.slane %v3806, 2
  %v3808 = vadd.f32 %v3806, %v3807
  %v3809 = vrot.slane %v3808, 1
  %v3810 = vadd.f32 %v3808, %v3809
  %v3811 = vsel %vm3607, %v3588, 0.0
  %v3812 = vrot.slane %v3811, 4
  %v3813 = vadd.f32 %v3811, %v3812
  %v3814 = vrot.slane %v3813, 2
  %v3815 = vadd.f32 %v3813, %v3814
  %v3816 = vrot.slane %v3815, 1
  %v3817 = vadd.f32 %v3815, %v3816
  %v3818 = vsel %vm3607, %v3589, 0.0
  %v3819 = vrot.slane %v3818, 4
  %v3820 = vadd.f32 %v3818, %v3819
  %v3821 = vrot.slane %v3820, 2
  %v3822 = vadd.f32 %v3820, %v3821
  %v3823 = vrot.slane %v3822, 1
  %v3824 = vadd.f32 %v3822, %v3823
  %v3825 = vsel %vm3607, %v3590, 0.0
  %v3826 = vrot.slane %v3825, 4
  %v3827 = vadd.f32 %v3825, %v3826
  %v3828 = vrot.slane %v3827, 2
  %v3829 = vadd.f32 %v3827, %v3828
  %v3830 = vrot.slane %v3829, 1
  %v3831 = vadd.f32 %v3829, %v3830
  %v3832 = vsel %vm3607, %v3591, 0.0
  %v3833 = vrot.slane %v3832, 4
  %v3834 = vadd.f32 %v3832, %v3833
  %v3835 = vrot.slane %v3834, 2
  %v3836 = vadd.f32 %v3834, %v3835
  %v3837 = vrot.slane %v3836, 1
  %v3838 = vadd.f32 %v3836, %v3837
  %v3839 = vsel %vm3607, %v3592, 0.0
  %v3840 = vrot.slane %v3839, 4
  %v3841 = vadd.f32 %v3839, %v3840
  %v3842 = vrot.slane %v3841, 2
  %v3843 = vadd.f32 %v3841, %v3842
  %v3844 = vrot.slane %v3843, 1
  %v3845 = vadd.f32 %v3843, %v3844
  %v3846 = vsel %vm3607, %v3593, 0.0
  %v3847 = vrot.slane %v3846, 4
  %v3848 = vadd.f32 %v3846, %v3847
  %v3849 = vrot.slane %v3848, 2
  %v3850 = vadd.f32 %v3848, %v3849
  %v3851 = vrot.slane %v3850, 1
  %v3852 = vadd.f32 %v3850, %v3851
  %v3853 = vsel %vm3607, %v3594, 0.0
  %v3854 = vrot.slane %v3853, 4
  %v3855 = vadd.f32 %v3853, %v3854
  %v3856 = vrot.slane %v3855, 2
  %v3857 = vadd.f32 %v3855, %v3856
  %v3858 = vrot.slane %v3857, 1
  %v3859 = vadd.f32 %v3857, %v3858
  %v3860 = vsel %vm3607, %v3595, 0.0
  %v3861 = vrot.slane %v3860, 4
  %v3862 = vadd.f32 %v3860, %v3861
  %v3863 = vrot.slane %v3862, 2
  %v3864 = vadd.f32 %v3862, %v3863
  %v3865 = vrot.slane %v3864, 1
  %v3866 = vadd.f32 %v3864, %v3865
  %v3867 = vsel %vm3607, %v3596, 0.0
  %v3868 = vrot.slane %v3867, 4
  %v3869 = vadd.f32 %v3867, %v3868
  %v3870 = vrot.slane %v3869, 2
  %v3871 = vadd.f32 %v3869, %v3870
  %v3872 = vrot.slane %v3871, 1
  %v3873 = vadd.f32 %v3871, %v3872
  %v3874 = vsel %vm3607, %v3597, 0.0
  %v3875 = vrot.slane %v3874, 4
  %v3876 = vadd.f32 %v3874, %v3875
  %v3877 = vrot.slane %v3876, 2
  %v3878 = vadd.f32 %v3876, %v3877
  %v3879 = vrot.slane %v3878, 1
  %v3880 = vadd.f32 %v3878, %v3879
  %v3881 = vsel %vm3607, %v3598, 0.0
  %v3882 = vrot.slane %v3881, 4
  %v3883 = vadd.f32 %v3881, %v3882
  %v3884 = vrot.slane %v3883, 2
  %v3885 = vadd.f32 %v3883, %v3884
  %v3886 = vrot.slane %v3885, 1
  %v3887 = vadd.f32 %v3885, %v3886
  %v3888 = vsel %vm3607, %v3599, 0.0
  %v3889 = vrot.slane %v3888, 4
  %v3890 = vadd.f32 %v3888, %v3889
  %v3891 = vrot.slane %v3890, 2
  %v3892 = vadd.f32 %v3890, %v3891
  %v3893 = vrot.slane %v3892, 1
  %v3894 = vadd.f32 %v3892, %v3893
  %v3895 = vsel %vm3607, %v3600, 0.0
  %v3896 = vrot.slane %v3895, 4
  %v3897 = vadd.f32 %v3895, %v3896
  %v3898 = vrot.slane %v3897, 2
  %v3899 = vadd.f32 %v3897, %v3898
  %v3900 = vrot.slane %v3899, 1
  %v3901 = vadd.f32 %v3899, %v3900
  %v3902 = vsel %vm3607, %v3601, 0.0
  %v3903 = vrot.slane %v3902, 4
  %v3904 = vadd.f32 %v3902, %v3903
  %v3905 = vrot.slane %v3904, 2
  %v3906 = vadd.f32 %v3904, %v3905
  %v3907 = vrot.slane %v3906, 1
  %v3908 = vadd.f32 %v3906, %v3907
  %v3909 = vsel %vm3607, %v3602, 0.0
  %v3910 = vrot.slane %v3909, 4
  %v3911 = vadd.f32 %v3909, %v3910
  %v3912 = vrot.slane %v3911, 2
  %v3913 = vadd.f32 %v3911, %v3912
  %v3914 = vrot.slane %v3913, 1
  %v3915 = vadd.f32 %v3913, %v3914
  %v3916 = vsel %vm3607, %v3603, 0.0
  %v3917 = vrot.slane %v3916, 4
  %v3918 = vadd.f32 %v3916, %v3917
  %v3919 = vrot.slane %v3918, 2
  %v3920 = vadd.f32 %v3918, %v3919
  %v3921 = vrot.slane %v3920, 1
  %v3922 = vadd.f32 %v3920, %v3921
  %v3923 = vsel %vm3607, %v3604, 0.0
  %v3924 = vrot.slane %v3923, 4
  %v3925 = vadd.f32 %v3923, %v3924
  %v3926 = vrot.slane %v3925, 2
  %v3927 = vadd.f32 %v3925, %v3926
  %v3928 = vrot.slane %v3927, 1
  %v3929 = vadd.f32 %v3927, %v3928
  %v3930 = vsel %vm3607, %v3605, 0.0
  %v3931 = vrot.slane %v3930, 4
  %v3932 = vadd.f32 %v3930, %v3931
  %v3933 = vrot.slane %v3932, 2
  %v3934 = vadd.f32 %v3932, %v3933
  %v3935 = vrot.slane %v3934, 1
  %v3936 = vadd.f32 %v3934, %v3935
  %v3937 = vsel %vm3607, %v3606, 0.0
  %v3938 = vrot.slane %v3937, 4
  %v3939 = vadd.f32 %v3937, %v3938
  %v3940 = vrot.slane %v3939, 2
  %v3941 = vadd.f32 %v3939, %v3940
  %v3942 = vrot.slane %v3941, 1
  %v3943 = vadd.f32 %v3941, %v3942
  %v3944 = vsel %vm1459, %v162, 0.0
  %3945 = vadd.xlane.f32.xlu0 %v3944
  %v3946 = vpop.xlane.xlu0 %3945
  %v3947 = vsel %vm1459, %v163, 0.0
  %3948 = vadd.xlane.f32.xlu0 %v3947
  %v3949 = vpop.xlane.xlu0 %3948
  %v3950 = vsel %vm1459, %v164, 0.0
  %3951 = vadd.xlane.f32.xlu0 %v3950
  %v3952 = vpop.xlane.xlu0 %3951
  %v3953 = vsel %vm1459, %v165, 0.0
  %3954 = vadd.xlane.f32.xlu0 %v3953
  %v3955 = vpop.xlane.xlu0 %3954
  %v3956 = vsel %vm1459, %v166, 0.0
  %3957 = vadd.xlane.f32.xlu0 %v3956
  %v3958 = vpop.xlane.xlu0 %3957
  %v3959 = vsel %vm1459, %v167, 0.0
  %3960 = vadd.xlane.f32.xlu0 %v3959
  %v3961 = vpop.xlane.xlu0 %3960
  %v3962 = vsel %vm1478, %v3946, 10.0
  %v3963 = vsel %vm1479, %v3949, 10.0
  %v3964 = vsel %vm1480, %v3952, 10.0
  %v3965 = vsel %vm1481, %v3955, 10.0
  %v3966 = vsel %vm1482, %v3958, 10.0
  %v3967 = vsel %vm1483, %v3961, 10.0
  %v3968 = vrcp.pop %v3962
  %v3969 = vrcp.pop %v3963
  %v3970 = vrcp.pop %v3964
  %v3971 = vrcp.pop %v3965
  %v3972 = vrcp.pop %v3966
  %v3973 = vrcp.pop %v3967
  %v3980 = vrot.slane %v3968, 1
  %v3981 = vrot.slane %v3968, 2
  %v3982 = vrot.slane %v3968, 3
  %v3983 = vrot.slane %v3968, 4
  %v3984 = vrot.slane %v3968, 5
  %v3985 = vrot.slane %v3968, 6
  %v3986 = vrot.slane %v3968, 7
  %v3987 = vrot.slane %v3969, 1
  %v3988 = vrot.slane %v3969, 2
  %v3989 = vrot.slane %v3969, 3
  %v3990 = vrot.slane %v3969, 4
  %v3991 = vrot.slane %v3969, 5
  %v3992 = vrot.slane %v3969, 6
  %v3993 = vrot.slane %v3969, 7
  %v3994 = vrot.slane %v3970, 1
  %v3995 = vrot.slane %v3970, 2
  %v3996 = vrot.slane %v3970, 3
  %v3997 = vrot.slane %v3970, 4
  %v3998 = vrot.slane %v3970, 5
  %v3999 = vrot.slane %v3970, 6
  %v4000 = vrot.slane %v3970, 7
  %v4001 = vrot.slane %v3971, 1
  %v4002 = vrot.slane %v3971, 2
  %v4003 = vrot.slane %v3971, 3
  %v4004 = vrot.slane %v3971, 4
  %v4005 = vrot.slane %v3971, 5
  %v4006 = vrot.slane %v3971, 6
  %v4007 = vrot.slane %v3971, 7
  %v4008 = vrot.slane %v3972, 1
  %v4009 = vrot.slane %v3972, 2
  %v4010 = vrot.slane %v3972, 3
  %v4011 = vrot.slane %v3972, 4
  %v4012 = vrot.slane %v3972, 5
  %v4013 = vrot.slane %v3972, 6
  %v4014 = vrot.slane %v3972, 7
  %v4015 = vrot.slane %v3973, 1
  %v4016 = vrot.slane %v3973, 2
  %v4017 = vrot.slane %v3973, 3
  %v4018 = vrot.slane %v3973, 4
  %v4019 = vrot.slane %v3973, 5
  %v4020 = vrot.slane %v3973, 6
  %v4021 = vrot.slane %v3973, 7
  %v4070 = vmul.f32 %v3614, %v3968
  %v4071 = vmul.f32 %v3621, %v3980
  %v4072 = vmul.f32 %v3628, %v3981
  %v4073 = vmul.f32 %v3635, %v3982
  %v4074 = vmul.f32 %v3642, %v3983
  %v4075 = vmul.f32 %v3649, %v3984
  %v4076 = vmul.f32 %v3656, %v3985
  %v4077 = vmul.f32 %v3663, %v3986
  %v4078 = vmul.f32 %v3670, %v3969
  %v4079 = vmul.f32 %v3677, %v3987
  %v4080 = vmul.f32 %v3684, %v3988
  %v4081 = vmul.f32 %v3691, %v3989
  %v4082 = vmul.f32 %v3698, %v3990
  %v4083 = vmul.f32 %v3705, %v3991
  %v4084 = vmul.f32 %v3712, %v3992
  %v4085 = vmul.f32 %v3719, %v3993
  %v4086 = vmul.f32 %v3726, %v3970
  %v4087 = vmul.f32 %v3733, %v3994
  %v4088 = vmul.f32 %v3740, %v3995
  %v4089 = vmul.f32 %v3747, %v3996
  %v4090 = vmul.f32 %v3754, %v3997
  %v4091 = vmul.f32 %v3761, %v3998
  %v4092 = vmul.f32 %v3768, %v3999
  %v4093 = vmul.f32 %v3775, %v4000
  %v4094 = vmul.f32 %v3782, %v3971
  %v4095 = vmul.f32 %v3789, %v4001
  %v4096 = vmul.f32 %v3796, %v4002
  %v4097 = vmul.f32 %v3803, %v4003
  %v4098 = vmul.f32 %v3810, %v4004
  %v4099 = vmul.f32 %v3817, %v4005
  %v4100 = vmul.f32 %v3824, %v4006
  %v4101 = vmul.f32 %v3831, %v4007
  %v4102 = vmul.f32 %v3838, %v3972
  %v4103 = vmul.f32 %v3845, %v4008
  %v4104 = vmul.f32 %v3852, %v4009
  %v4105 = vmul.f32 %v3859, %v4010
  %v4106 = vmul.f32 %v3866, %v4011
  %v4107 = vmul.f32 %v3873, %v4012
  %v4108 = vmul.f32 %v3880, %v4013
  %v4109 = vmul.f32 %v3887, %v4014
  %v4110 = vmul.f32 %v3894, %v3973
  %v4111 = vmul.f32 %v3901, %v4015
  %v4112 = vmul.f32 %v3908, %v4016
  %v4113 = vmul.f32 %v3915, %v4017
  %v4114 = vmul.f32 %v3922, %v4018
  %v4115 = vmul.f32 %v3929, %v4019
  %v4116 = vmul.f32 %v3936, %v4020
  %v4117 = vmul.f32 %v3943, %v4021
  %v4166 = vrot.slane %v4071, 7
  %vm4167 = vcmask 1041409
  %v4168 = vsel %vm4167, %v4166, %v4070
  %v4169 = vrot.slane %v4072, 6
  %vm4170 = vcmask 1042434
  %v4171 = vsel %vm4170, %v4169, %v4168
  %v4172 = vrot.slane %v4073, 5
  %vm4173 = vcmask 1043459
  %v4174 = vsel %vm4173, %v4172, %v4171
  %v4175 = vrot.slane %v4074, 4
  %vm4176 = vcmask 1044484
  %v4177 = vsel %vm4176, %v4175, %v4174
  %v4178 = vrot.slane %v4075, 3
  %vm4179 = vcmask 1045509
  %v4180 = vsel %vm4179, %v4178, %v4177
  %v4181 = vrot.slane %v4076, 2
  %vm4182 = vcmask 1046534
  %v4183 = vsel %vm4182, %v4181, %v4180
  %v4184 = vrot.slane %v4077, 1
  %vm4185 = vcmask 1047559
  %v4186 = vsel %vm4185, %v4184, %v4183
  %v4187 = vrot.slane %v4079, 7
  %v4188 = vsel %vm4167, %v4187, %v4078
  %v4189 = vrot.slane %v4080, 6
  %v4190 = vsel %vm4170, %v4189, %v4188
  %v4191 = vrot.slane %v4081, 5
  %v4192 = vsel %vm4173, %v4191, %v4190
  %v4193 = vrot.slane %v4082, 4
  %v4194 = vsel %vm4176, %v4193, %v4192
  %v4195 = vrot.slane %v4083, 3
  %v4196 = vsel %vm4179, %v4195, %v4194
  %v4197 = vrot.slane %v4084, 2
  %v4198 = vsel %vm4182, %v4197, %v4196
  %v4199 = vrot.slane %v4085, 1
  %v4200 = vsel %vm4185, %v4199, %v4198
  %v4201 = vrot.slane %v4087, 7
  %v4202 = vsel %vm4167, %v4201, %v4086
  %v4203 = vrot.slane %v4088, 6
  %v4204 = vsel %vm4170, %v4203, %v4202
  %v4205 = vrot.slane %v4089, 5
  %v4206 = vsel %vm4173, %v4205, %v4204
  %v4207 = vrot.slane %v4090, 4
  %v4208 = vsel %vm4176, %v4207, %v4206
  %v4209 = vrot.slane %v4091, 3
  %v4210 = vsel %vm4179, %v4209, %v4208
  %v4211 = vrot.slane %v4092, 2
  %v4212 = vsel %vm4182, %v4211, %v4210
  %v4213 = vrot.slane %v4093, 1
  %v4214 = vsel %vm4185, %v4213, %v4212
  %v4215 = vrot.slane %v4095, 7
  %v4216 = vsel %vm4167, %v4215, %v4094
  %v4217 = vrot.slane %v4096, 6
  %v4218 = vsel %vm4170, %v4217, %v4216
  %v4219 = vrot.slane %v4097, 5
  %v4220 = vsel %vm4173, %v4219, %v4218
  %v4221 = vrot.slane %v4098, 4
  %v4222 = vsel %vm4176, %v4221, %v4220
  %v4223 = vrot.slane %v4099, 3
  %v4224 = vsel %vm4179, %v4223, %v4222
  %v4225 = vrot.slane %v4100, 2
  %v4226 = vsel %vm4182, %v4225, %v4224
  %v4227 = vrot.slane %v4101, 1
  %v4228 = vsel %vm4185, %v4227, %v4226
  %v4229 = vrot.slane %v4103, 7
  %v4230 = vsel %vm4167, %v4229, %v4102
  %v4231 = vrot.slane %v4104, 6
  %v4232 = vsel %vm4170, %v4231, %v4230
  %v4233 = vrot.slane %v4105, 5
  %v4234 = vsel %vm4173, %v4233, %v4232
  %v4235 = vrot.slane %v4106, 4
  %v4236 = vsel %vm4176, %v4235, %v4234
  %v4237 = vrot.slane %v4107, 3
  %v4238 = vsel %vm4179, %v4237, %v4236
  %v4239 = vrot.slane %v4108, 2
  %v4240 = vsel %vm4182, %v4239, %v4238
  %v4241 = vrot.slane %v4109, 1
  %v4242 = vsel %vm4185, %v4241, %v4240
  %v4243 = vrot.slane %v4111, 7
  %v4244 = vsel %vm4167, %v4243, %v4110
  %v4245 = vrot.slane %v4112, 6
  %v4246 = vsel %vm4170, %v4245, %v4244
  %v4247 = vrot.slane %v4113, 5
  %v4248 = vsel %vm4173, %v4247, %v4246
  %v4249 = vrot.slane %v4114, 4
  %v4250 = vsel %vm4176, %v4249, %v4248
  %v4251 = vrot.slane %v4115, 3
  %v4252 = vsel %vm4179, %v4251, %v4250
  %v4253 = vrot.slane %v4116, 2
  %v4254 = vsel %vm4182, %v4253, %v4252
  %v4255 = vrot.slane %v4117, 1
  %v4256 = vsel %vm4185, %v4255, %v4254
  %4263 = vst.msk [vmem:[%s4] sm:$0xff] %vm168, %v4186
  %4264 = vst.msk [vmem:[%s4 + $0x8] sm:$0xff] %vm168, %v4200
  %4265 = vst.msk [vmem:[%s4 + $0x10] sm:$0xff] %vm168, %v4214
  %4266 = vst.msk [vmem:[%s4 + $0x18] sm:$0xff] %vm168, %v4228
  %4267 = vst.msk [vmem:[%s4 + $0x20] sm:$0xff] %vm168, %v4242
  %4268 = vst.msk [vmem:[%s4 + $0x28] sm:$0xff] %vm168, %v4256
  // Predicated region
  $region18: #{get_embd_forward.4} parent=0 // pred_check
    _
  $region19: #{get_embd_forward.4} parent=0 // pred_check_branch
    %4270 = sbr.rel (0) target = $region21
  $region20: #{get_embd_forward.4} parent=0 // pred_region
    _
  $region21: #{get_embd_forward.4} parent=0 // pred_fallthru
    _
  // Predicated region
  $region22: #{get_embd_forward.4} parent=0 // pred_check
    _
  $region23: #{get_embd_forward.4} parent=0 // pred_check_branch
    %4272 = sbr.rel (0) target = $region25
  $region24: #{get_embd_forward.4} parent=0 // pred_region
    _
  $region25: #{get_embd_forward.4} parent=0 // pred_fallthru
    _

</llo_original>
